<compile_context>
chip_gen: v7x
topology: tpu7x:2x2x1
jax: 0.10.0
libtpu: 0.0.40
codegen_flags: <defaults>
</compile_context>

<pallas_src>
import functools

import jax
import jax.numpy as jnp
import numpy as np
from jax.experimental import pallas as pl
from jax.experimental.pallas import tpu as pltpu


def _rvq_kernel(x_ref, emb_ref, qout_ref, idx_ref, *, scores_dtype=None):
    """One grid step == all n_q quantizer layers applied to one (D, TN) tile."""
    n_q, K, _ = emb_ref.shape

    x = x_ref[...]                                   # (D, TN) f32 token slab
    res = x                                          # residual carried in regs/VMEM

    # Hoisted once per tile: sublane iota over the codebook axis; broadcasting
    # against (1, TN) / (K, TN) operands below avoids rebuilding (K, TN) iotas.
    iota_k = jax.lax.broadcasted_iota(jnp.int32, (K, 1), 0)

    for q in range(n_q):                             # unrolled: n_q small & static
        emb = emb_ref[q]                             # (K, D) resident codebook

        # 0.5*||e_k||^2 recomputed from the resident codebook (sublane-aligned
        # (K, 1) result, no lane-sparse operand shipped through the pipeline).
        e2h = 0.5 * jnp.sum(emb * emb, axis=1, keepdims=True)         # (K, 1)

        # argmax_k of (e_k . r - ||e_k||^2/2) == argmin_k ||r - e_k||^2
        # (the ||r||^2 term is per-token constant and dropped).
        if scores_dtype is not None:
            scores = jnp.dot(emb.astype(scores_dtype), res.astype(scores_dtype),
                             preferred_element_type=jnp.float32) - e2h
        else:
            scores = jnp.dot(emb, res,
                             preferred_element_type=jnp.float32) - e2h  # (K, TN)

        # First-max tie-break argmax over the codebook (sublane) axis.
        # NB: a NaN residual yields the sentinel index K -> all-zero one-hot
        # (quant = 0); NaNs propagate silently, matching eval-mode tolerance.
        mx = jnp.max(scores, axis=0, keepdims=True)                    # (1, TN)
        ind = jnp.min(jnp.where(scores == mx, iota_k, K),
                      axis=0, keepdims=True)                           # (1, TN)

        # Direct static lane-dense row store: each row written exactly once,
        # no init / no read of the index block.
        idx_ref[q:q + 1, :] = ind

        # Exact one-hot dequantize on the MXU; contract the K axis of both
        # operands so no transposed codebook copy is needed.  HIGHEST keeps the
        # gathered codebook rows (and the residual chain) bit-exact.
        onehot = (iota_k == ind).astype(jnp.float32)                   # (K, TN)
        quant = jax.lax.dot_general(
            emb, onehot,
            dimension_numbers=(((0,), (0,)), ((), ())),
            preferred_element_type=jnp.float32,
            precision=jax.lax.Precision.HIGHEST)                       # (D, TN)

        res = res - quant

    # sum of all per-layer quantized values == x - final residual.
    qout_ref[...] = (x - res).astype(qout_ref.dtype)


def _round_up(x, m):
    return (x + m - 1) // m * m


def _default_vmem_limit():
    """Generation-aware VMEM budget: ~80% of physical per-core VMEM."""
    try:
        cap = pltpu.get_tpu_info().vmem_capacity_bytes
        return int(cap * 0.8)            # headroom for internal scratch / sems
    except Exception:
        return None                      # fall back to the compiler default


def residual_vq_forward(x, codebooks, *, tn_target=512, out_dtype=None,
                        scores_dtype=None, vmem_limit_bytes=None):
    """Eval-mode ResidualVectorQuantization forward.

    Args:
      x:              (B, D, N) activations (PyTorch layout: batch, dim, time).
      codebooks:      (n_q, K, D) stacked per-layer codebooks.
      tn_target:      token-tile width (keep it a multiple of 256 on v6e/v7x).
      out_dtype:      dtype of quantized_out (default f32; bf16 halves writeback).
      scores_dtype:   set to jnp.bfloat16 to run the scores matmul in bf16
                      (faster; near-tie indices may flip vs the f32 reference).
      vmem_limit_bytes: explicit VMEM budget; default derives it from the chip.

    Returns:
      quantized_out (B, D, N), indices (n_q, B, N) int32, losses (n_q, 1) f32.
    """
    B, D, N = x.shape
    n_q, K, Dc = codebooks.shape
    assert Dc == D, "codebook_dim must equal dim (project_in/out are Identity)"

    out_dtype = jnp.float32 if out_dtype is None else out_dtype

    # Pad D (sublane axis) to a multiple of 8; zero padding does not change
    # distances, indices or quantized values.
    D_pad = _round_up(D, 8)
    if N > tn_target:
        TN = tn_target                    # multiple of 128/256 -> lane-dense tiles
        N_pad = _round_up(N, TN)
    else:
        TN = N                            # full-extent block (any size is legal)
        N_pad = N

    xp = x.astype(jnp.float32)
    if (D_pad, N_pad) != (D, N):
        xp = jnp.pad(xp, ((0, 0), (0, D_pad - D), (0, N_pad - N)))
    cb = codebooks.astype(jnp.float32)
    if D_pad != D:
        cb = jnp.pad(cb, ((0, 0), (0, 0), (0, D_pad - D)))

    grid = (B, N_pad // TN)               # both axes parallel (megacore-friendly)

    if vmem_limit_bytes is None:
        vmem_limit_bytes = _default_vmem_limit()

    kernel = functools.partial(_rvq_kernel, scores_dtype=scores_dtype)

    def make_call(codebook_pipeline_mode):
        cb_kwargs = {}
        if codebook_pipeline_mode is not None:
            cb_kwargs["pipeline_mode"] = codebook_pipeline_mode
        cparams = dict(dimension_semantics=("parallel", "parallel"))
        if vmem_limit_bytes is not None:
            cparams["vmem_limit_bytes"] = int(vmem_limit_bytes)
        return pl.pallas_call(
            kernel,
            out_shape=(
                jax.ShapeDtypeStruct((B, D_pad, N_pad), out_dtype),
                jax.ShapeDtypeStruct((B, n_q, N_pad), jnp.int32),
            ),
            grid_spec=pltpu.PrefetchScalarGridSpec(
                num_scalar_prefetch=0,
                grid=grid,
                in_specs=[
                    # (D, TN) token tile of x (leading batch dim squeezed).
                    pl.BlockSpec((None, D_pad, TN), lambda b, n: (b, 0, n)),
                    # All codebooks resident in VMEM (constant block index);
                    # single-buffered when the backend supports pipeline_mode.
                    pl.BlockSpec((n_q, K, D_pad), lambda b, n: (0, 0, 0),
                                 **cb_kwargs),
                ],
                out_specs=[
                    # quantized_out tile (lane-dense).
                    pl.BlockSpec((None, D_pad, TN), lambda b, n: (b, 0, n)),
                    # per-layer indices, lane-dense rows.
                    pl.BlockSpec((None, n_q, TN), lambda b, n: (b, 0, n)),
                ],
            ),
            compiler_params=pltpu.CompilerParams(**cparams),
        )

    try:
        qout, idx = make_call(pl.Buffered(1))(xp, cb)
    except Exception:
        # Fallback if this jax/Mosaic version rejects pipeline_mode on the
        # pallas_call path: identical results, just double-buffers the
        # (constant-index) resident codebook.
        qout, idx = make_call(None)(xp, cb)

    quantized_out = qout[:, :D, :N].astype(out_dtype)
    out_indices = jnp.transpose(idx, (1, 0, 2))[:, :, :N]     # (n_q, B, N)
    out_losses = jnp.zeros((n_q, 1), jnp.float32)             # eval-mode losses
    return quantized_out, out_indices, out_losses


def _reference(x, codebooks):
    """Pure-JAX replica of the eval-mode forward for correctness checking."""
    B, D, N = x.shape
    n_q, K, _ = codebooks.shape
    xt = jnp.transpose(x, (0, 2, 1)).reshape(B * N, D)
    residual = xt
    qout = jnp.zeros_like(xt)
    inds = []
    for q in range(n_q):
        emb = codebooks[q]
        dist = -(jnp.sum(residual ** 2, axis=1, keepdims=True)
                 - 2.0 * residual @ emb.T
                 + jnp.sum(emb ** 2, axis=1)[None, :])
        ind = jnp.argmax(dist, axis=-1)
        quant = emb[ind]
        residual = residual - quant
        qout = qout + quant
        inds.append(ind)
    quantized_out = jnp.transpose(qout.reshape(B, N, D), (0, 2, 1))
    out_indices = jnp.stack(inds).reshape(n_q, B, N).astype(jnp.int32)
    return quantized_out, out_indices


def _check(B, D, N, K, n_q, seed, tn_target):
    key = jax.random.PRNGKey(seed)
    k_x, k_e = jax.random.split(key)
    x = jax.random.normal(k_x, (B, D, N), dtype=jnp.float32)
    # Deterministic codebook init matching uniform_init / kaiming_uniform_
    # (a=0, fan_in=D, gain=sqrt(2) -> bound = sqrt(6 / fan_in)).
    bound = float(np.sqrt(6.0 / D))
    codebooks = jax.random.uniform(
        k_e, (n_q, K, D), dtype=jnp.float32, minval=-bound, maxval=bound)

    quantized_out, indices, losses = residual_vq_forward(
        x, codebooks, tn_target=tn_target)
    jax.block_until_ready((quantized_out, indices, losses))

    ref_q, ref_i = _reference(x, codebooks)
    assert quantized_out.shape == (B, D, N)
    assert indices.shape == (n_q, B, N)
    assert losses.shape == (n_q, 1)
    np.testing.assert_allclose(np.asarray(quantized_out), np.asarray(ref_q),
                               rtol=1e-5, atol=1e-5)
    np.testing.assert_array_equal(np.asarray(indices), np.asarray(ref_i))


if __name__ == "__main__":
    # Small shapes consistent with the module: x is (B, dim, T).
    _check(B=2, D=32, N=8, K=64, n_q=4, seed=0, tn_target=512)
    # Exercise the tiled + padded token path (N > TN, N not a tile multiple).
    _check(B=2, D=32, N=200, K=64, n_q=2, seed=1, tn_target=128)
    print("KERNEL_OK")
</pallas_src>

<mosaic_0001>
module attributes {stable_mosaic.version = 11 : i64} {
  func.func @_rvq_kernel(%arg0: i32, %arg1: i32, %arg2: memref<1x32x8xf32, #tpu.memory_space<vmem>>, %arg3: memref<4x64x32xf32, #tpu.memory_space<vmem>>, %arg4: memref<1x32x8xf32, #tpu.memory_space<vmem>>, %arg5: memref<1x4x8xi32, #tpu.memory_space<vmem>>) attributes {dimension_semantics = [#tpu.dimension_semantics<parallel>, #tpu.dimension_semantics<parallel>], iteration_bounds = array<i64: 2, 1>, scalar_prefetch = 0 : i64, scratch_operands = 0 : i64, tpu.core_type = #tpu.core_type<tc>, window_params = [{transform_indices = @transform_0, window_bounds = array<i64: 1, 32, 8>}, {pipeline_mode = #tpu.pipeline_mode<synchronous>, transform_indices = @transform_1, window_bounds = array<i64: 4, 64, 32>}, {transform_indices = @transform_2, window_bounds = array<i64: 1, 32, 8>}, {transform_indices = @transform_3, window_bounds = array<i64: 1, 4, 8>}]} {
    %c0 = arith.constant 0 : index
    %c0_0 = arith.constant 0 : index
    %c0_1 = arith.constant 0 : index
    %0 = vector.load %arg2[%c0, %c0_0, %c0_1] : memref<1x32x8xf32, #tpu.memory_space<vmem>>, vector<1x32x8xf32>
    %1 = vector.shape_cast %0 : vector<1x32x8xf32> to vector<32x8xf32>
    %2 = tpu.iota {dimensions = array<i32: 0>} : vector<64x1xi32>
    %c0_2 = arith.constant 0 : index
    %c0_3 = arith.constant 0 : index
    %c0_4 = arith.constant 0 : index
    %3 = vector.load %arg3[%c0_2, %c0_3, %c0_4] : memref<4x64x32xf32, #tpu.memory_space<vmem>>, vector<1x64x32xf32>
    %4 = vector.shape_cast %3 : vector<1x64x32xf32> to vector<64x32xf32>
    %5 = arith.mulf %4, %4 : vector<64x32xf32>
    %cst = arith.constant dense<0.000000e+00> : vector<64xf32>
    %6 = vector.multi_reduction <add>, %5, %cst [1] : vector<64x32xf32> to vector<64xf32>
    %7 = vector.shape_cast %6 : vector<64xf32> to vector<64x1xf32>
    %cst_5 = arith.constant 5.000000e-01 : f32
    %8 = vector.broadcast %cst_5 : f32 to vector<64x1xf32>
    %9 = arith.mulf %8, %7 : vector<64x1xf32>
    %cst_6 = arith.constant dense<0.000000e+00> : vector<64x8xf32>
    %10 = tpu.matmul %4, %1, %cst_6 {dimension_numbers = #tpu.dot_dimension_numbers<[1], [0], [0], [1], [0, 0, 1, 1], [], []>} : vector<64x32xf32>, vector<32x8xf32>, vector<64x8xf32> -> vector<64x8xf32>
    %11 = vector.broadcast %9 : vector<64x1xf32> to vector<64x8xf32>
    %12 = arith.subf %10, %11 : vector<64x8xf32>
    %cst_7 = arith.constant dense<0xFF800000> : vector<8xf32>
    %13 = vector.multi_reduction <maximumf>, %12, %cst_7 [0] : vector<64x8xf32> to vector<8xf32>
    %14 = vector.shape_cast %13 : vector<8xf32> to vector<1x8xf32>
    %15 = vector.broadcast %14 : vector<1x8xf32> to vector<64x8xf32>
    %16 = arith.cmpf oeq, %12, %15 : vector<64x8xf32>
    %c64_i32 = arith.constant 64 : i32
    %17 = vector.shape_cast %2 : vector<64x1xi32> to vector<64x1xi32>
    %18 = vector.broadcast %17 : vector<64x1xi32> to vector<64x8xi32>
    %19 = vector.broadcast %c64_i32 : i32 to vector<64x8xi32>
    %20 = arith.select %16, %18, %19 : vector<64x8xi1>, vector<64x8xi32>
    %cst_8 = arith.constant dense<2147483647> : vector<8xi32>
    %21 = vector.multi_reduction <minsi>, %20, %cst_8 [0] : vector<64x8xi32> to vector<8xi32>
    %22 = vector.shape_cast %21 : vector<8xi32> to vector<1x8xi32>
    %c0_9 = arith.constant 0 : index
    %c0_10 = arith.constant 0 : index
    %c0_11 = arith.constant 0 : index
    %23 = vector.load %arg5[%c0_9, %c0_10, %c0_11] : memref<1x4x8xi32, #tpu.memory_space<vmem>>, vector<1x1x8xi32>
    %24 = vector.shape_cast %23 : vector<1x1x8xi32> to vector<1x8xi32>
    %25 = vector.shape_cast %22 : vector<1x8xi32> to vector<1x1x8xi32>
    tpu.vector_store %arg5[%c0_9, %c0_10, %c0_11], %25 {strides = array<i32>} : memref<1x4x8xi32, #tpu.memory_space<vmem>>, vector<1x1x8xi32>,
    %26 = vector.broadcast %2 : vector<64x1xi32> to vector<64x8xi32>
    %27 = vector.broadcast %22 : vector<1x8xi32> to vector<64x8xi32>
    %28 = arith.cmpi eq, %26, %27 : vector<64x8xi32>
    %29 = arith.extui %28 : vector<64x8xi1> to vector<64x8xi32>
    %30 = arith.sitofp %29 : vector<64x8xi32> to vector<64x8xf32>
    %cst_12 = arith.constant dense<0.000000e+00> : vector<32x8xf32>
    %31 = tpu.matmul %4, %30, %cst_12 {dimension_numbers = #tpu.dot_dimension_numbers<[0], [0], [1], [1], [0, 1, 1, 1], [], []>, precision = #tpu.contract_precision<fp32>} : vector<64x32xf32>, vector<64x8xf32>, vector<32x8xf32> -> vector<32x8xf32>
    %32 = arith.subf %1, %31 : vector<32x8xf32>
    %c1 = arith.constant 1 : index
    %c0_13 = arith.constant 0 : index
    %c0_14 = arith.constant 0 : index
    %33 = vector.load %arg3[%c1, %c0_13, %c0_14] : memref<4x64x32xf32, #tpu.memory_space<vmem>>, vector<1x64x32xf32>
    %34 = vector.shape_cast %33 : vector<1x64x32xf32> to vector<64x32xf32>
    %35 = arith.mulf %34, %34 : vector<64x32xf32>
    %cst_15 = arith.constant dense<0.000000e+00> : vector<64xf32>
    %36 = vector.multi_reduction <add>, %35, %cst_15 [1] : vector<64x32xf32> to vector<64xf32>
    %37 = vector.shape_cast %36 : vector<64xf32> to vector<64x1xf32>
    %cst_16 = arith.constant 5.000000e-01 : f32
    %38 = vector.broadcast %cst_16 : f32 to vector<64x1xf32>
    %39 = arith.mulf %38, %37 : vector<64x1xf32>
    %cst_17 = arith.constant dense<0.000000e+00> : vector<64x8xf32>
    %40 = tpu.matmul %34, %32, %cst_17 {dimension_numbers = #tpu.dot_dimension_numbers<[1], [0], [0], [1], [0, 0, 1, 1], [], []>} : vector<64x32xf32>, vector<32x8xf32>, vector<64x8xf32> -> vector<64x8xf32>
    %41 = vector.broadcast %39 : vector<64x1xf32> to vector<64x8xf32>
    %42 = arith.subf %40, %41 : vector<64x8xf32>
    %cst_18 = arith.constant dense<0xFF800000> : vector<8xf32>
    %43 = vector.multi_reduction <maximumf>, %42, %cst_18 [0] : vector<64x8xf32> to vector<8xf32>
    %44 = vector.shape_cast %43 : vector<8xf32> to vector<1x8xf32>
    %45 = vector.broadcast %44 : vector<1x8xf32> to vector<64x8xf32>
    %46 = arith.cmpf oeq, %42, %45 : vector<64x8xf32>
    %c64_i32_19 = arith.constant 64 : i32
    %47 = vector.shape_cast %2 : vector<64x1xi32> to vector<64x1xi32>
    %48 = vector.broadcast %47 : vector<64x1xi32> to vector<64x8xi32>
    %49 = vector.broadcast %c64_i32_19 : i32 to vector<64x8xi32>
    %50 = arith.select %46, %48, %49 : vector<64x8xi1>, vector<64x8xi32>
    %cst_20 = arith.constant dense<2147483647> : vector<8xi32>
    %51 = vector.multi_reduction <minsi>, %50, %cst_20 [0] : vector<64x8xi32> to vector<8xi32>
    %52 = vector.shape_cast %51 : vector<8xi32> to vector<1x8xi32>
    %c0_21 = arith.constant 0 : index
    %c1_22 = arith.constant 1 : index
    %c0_23 = arith.constant 0 : index
    %53 = vector.load %arg5[%c0_21, %c1_22, %c0_23] : memref<1x4x8xi32, #tpu.memory_space<vmem>>, vector<1x1x8xi32>
    %54 = vector.shape_cast %53 : vector<1x1x8xi32> to vector<1x8xi32>
    %55 = vector.shape_cast %52 : vector<1x8xi32> to vector<1x1x8xi32>
    tpu.vector_store %arg5[%c0_21, %c1_22, %c0_23], %55 {strides = array<i32>} : memref<1x4x8xi32, #tpu.memory_space<vmem>>, vector<1x1x8xi32>,
    %56 = vector.broadcast %2 : vector<64x1xi32> to vector<64x8xi32>
    %57 = vector.broadcast %52 : vector<1x8xi32> to vector<64x8xi32>
    %58 = arith.cmpi eq, %56, %57 : vector<64x8xi32>
    %59 = arith.extui %58 : vector<64x8xi1> to vector<64x8xi32>
    %60 = arith.sitofp %59 : vector<64x8xi32> to vector<64x8xf32>
    %cst_24 = arith.constant dense<0.000000e+00> : vector<32x8xf32>
    %61 = tpu.matmul %34, %60, %cst_24 {dimension_numbers = #tpu.dot_dimension_numbers<[0], [0], [1], [1], [0, 1, 1, 1], [], []>, precision = #tpu.contract_precision<fp32>} : vector<64x32xf32>, vector<64x8xf32>, vector<32x8xf32> -> vector<32x8xf32>
    %62 = arith.subf %32, %61 : vector<32x8xf32>
    %c2 = arith.constant 2 : index
    %c0_25 = arith.constant 0 : index
    %c0_26 = arith.constant 0 : index
    %63 = vector.load %arg3[%c2, %c0_25, %c0_26] : memref<4x64x32xf32, #tpu.memory_space<vmem>>, vector<1x64x32xf32>
    %64 = vector.shape_cast %63 : vector<1x64x32xf32> to vector<64x32xf32>
    %65 = arith.mulf %64, %64 : vector<64x32xf32>
    %cst_27 = arith.constant dense<0.000000e+00> : vector<64xf32>
    %66 = vector.multi_reduction <add>, %65, %cst_27 [1] : vector<64x32xf32> to vector<64xf32>
    %67 = vector.shape_cast %66 : vector<64xf32> to vector<64x1xf32>
    %cst_28 = arith.constant 5.000000e-01 : f32
    %68 = vector.broadcast %cst_28 : f32 to vector<64x1xf32>
    %69 = arith.mulf %68, %67 : vector<64x1xf32>
    %cst_29 = arith.constant dense<0.000000e+00> : vector<64x8xf32>
    %70 = tpu.matmul %64, %62, %cst_29 {dimension_numbers = #tpu.dot_dimension_numbers<[1], [0], [0], [1], [0, 0, 1, 1], [], []>} : vector<64x32xf32>, vector<32x8xf32>, vector<64x8xf32> -> vector<64x8xf32>
    %71 = vector.broadcast %69 : vector<64x1xf32> to vector<64x8xf32>
    %72 = arith.subf %70, %71 : vector<64x8xf32>
    %cst_30 = arith.constant dense<0xFF800000> : vector<8xf32>
    %73 = vector.multi_reduction <maximumf>, %72, %cst_30 [0] : vector<64x8xf32> to vector<8xf32>
    %74 = vector.shape_cast %73 : vector<8xf32> to vector<1x8xf32>
    %75 = vector.broadcast %74 : vector<1x8xf32> to vector<64x8xf32>
    %76 = arith.cmpf oeq, %72, %75 : vector<64x8xf32>
    %c64_i32_31 = arith.constant 64 : i32
    %77 = vector.shape_cast %2 : vector<64x1xi32> to vector<64x1xi32>
    %78 = vector.broadcast %77 : vector<64x1xi32> to vector<64x8xi32>
    %79 = vector.broadcast %c64_i32_31 : i32 to vector<64x8xi32>
    %80 = arith.select %76, %78, %79 : vector<64x8xi1>, vector<64x8xi32>
    %cst_32 = arith.constant dense<2147483647> : vector<8xi32>
    %81 = vector.multi_reduction <minsi>, %80, %cst_32 [0] : vector<64x8xi32> to vector<8xi32>
    %82 = vector.shape_cast %81 : vector<8xi32> to vector<1x8xi32>
    %c0_33 = arith.constant 0 : index
    %c2_34 = arith.constant 2 : index
    %c0_35 = arith.constant 0 : index
    %83 = vector.load %arg5[%c0_33, %c2_34, %c0_35] : memref<1x4x8xi32, #tpu.memory_space<vmem>>, vector<1x1x8xi32>
    %84 = vector.shape_cast %83 : vector<1x1x8xi32> to vector<1x8xi32>
    %85 = vector.shape_cast %82 : vector<1x8xi32> to vector<1x1x8xi32>
    tpu.vector_store %arg5[%c0_33, %c2_34, %c0_35], %85 {strides = array<i32>} : memref<1x4x8xi32, #tpu.memory_space<vmem>>, vector<1x1x8xi32>,
    %86 = vector.broadcast %2 : vector<64x1xi32> to vector<64x8xi32>
    %87 = vector.broadcast %82 : vector<1x8xi32> to vector<64x8xi32>
    %88 = arith.cmpi eq, %86, %87 : vector<64x8xi32>
    %89 = arith.extui %88 : vector<64x8xi1> to vector<64x8xi32>
    %90 = arith.sitofp %89 : vector<64x8xi32> to vector<64x8xf32>
    %cst_36 = arith.constant dense<0.000000e+00> : vector<32x8xf32>
    %91 = tpu.matmul %64, %90, %cst_36 {dimension_numbers = #tpu.dot_dimension_numbers<[0], [0], [1], [1], [0, 1, 1, 1], [], []>, precision = #tpu.contract_precision<fp32>} : vector<64x32xf32>, vector<64x8xf32>, vector<32x8xf32> -> vector<32x8xf32>
    %92 = arith.subf %62, %91 : vector<32x8xf32>
    %c3 = arith.constant 3 : index
    %c0_37 = arith.constant 0 : index
    %c0_38 = arith.constant 0 : index
    %93 = vector.load %arg3[%c3, %c0_37, %c0_38] : memref<4x64x32xf32, #tpu.memory_space<vmem>>, vector<1x64x32xf32>
    %94 = vector.shape_cast %93 : vector<1x64x32xf32> to vector<64x32xf32>
    %95 = arith.mulf %94, %94 : vector<64x32xf32>
    %cst_39 = arith.constant dense<0.000000e+00> : vector<64xf32>
    %96 = vector.multi_reduction <add>, %95, %cst_39 [1] : vector<64x32xf32> to vector<64xf32>
    %97 = vector.shape_cast %96 : vector<64xf32> to vector<64x1xf32>
    %cst_40 = arith.constant 5.000000e-01 : f32
    %98 = vector.broadcast %cst_40 : f32 to vector<64x1xf32>
    %99 = arith.mulf %98, %97 : vector<64x1xf32>
    %cst_41 = arith.constant dense<0.000000e+00> : vector<64x8xf32>
    %100 = tpu.matmul %94, %92, %cst_41 {dimension_numbers = #tpu.dot_dimension_numbers<[1], [0], [0], [1], [0, 0, 1, 1], [], []>} : vector<64x32xf32>, vector<32x8xf32>, vector<64x8xf32> -> vector<64x8xf32>
    %101 = vector.broadcast %99 : vector<64x1xf32> to vector<64x8xf32>
    %102 = arith.subf %100, %101 : vector<64x8xf32>
    %cst_42 = arith.constant dense<0xFF800000> : vector<8xf32>
    %103 = vector.multi_reduction <maximumf>, %102, %cst_42 [0] : vector<64x8xf32> to vector<8xf32>
    %104 = vector.shape_cast %103 : vector<8xf32> to vector<1x8xf32>
    %105 = vector.broadcast %104 : vector<1x8xf32> to vector<64x8xf32>
    %106 = arith.cmpf oeq, %102, %105 : vector<64x8xf32>
    %c64_i32_43 = arith.constant 64 : i32
    %107 = vector.shape_cast %2 : vector<64x1xi32> to vector<64x1xi32>
    %108 = vector.broadcast %107 : vector<64x1xi32> to vector<64x8xi32>
    %109 = vector.broadcast %c64_i32_43 : i32 to vector<64x8xi32>
    %110 = arith.select %106, %108, %109 : vector<64x8xi1>, vector<64x8xi32>
    %cst_44 = arith.constant dense<2147483647> : vector<8xi32>
    %111 = vector.multi_reduction <minsi>, %110, %cst_44 [0] : vector<64x8xi32> to vector<8xi32>
    %112 = vector.shape_cast %111 : vector<8xi32> to vector<1x8xi32>
    %c0_45 = arith.constant 0 : index
    %c3_46 = arith.constant 3 : index
    %c0_47 = arith.constant 0 : index
    %113 = vector.load %arg5[%c0_45, %c3_46, %c0_47] : memref<1x4x8xi32, #tpu.memory_space<vmem>>, vector<1x1x8xi32>
    %114 = vector.shape_cast %113 : vector<1x1x8xi32> to vector<1x8xi32>
    %115 = vector.shape_cast %112 : vector<1x8xi32> to vector<1x1x8xi32>
    tpu.vector_store %arg5[%c0_45, %c3_46, %c0_47], %115 {strides = array<i32>} : memref<1x4x8xi32, #tpu.memory_space<vmem>>, vector<1x1x8xi32>,
    %116 = vector.broadcast %2 : vector<64x1xi32> to vector<64x8xi32>
    %117 = vector.broadcast %112 : vector<1x8xi32> to vector<64x8xi32>
    %118 = arith.cmpi eq, %116, %117 : vector<64x8xi32>
    %119 = arith.extui %118 : vector<64x8xi1> to vector<64x8xi32>
    %120 = arith.sitofp %119 : vector<64x8xi32> to vector<64x8xf32>
    %cst_48 = arith.constant dense<0.000000e+00> : vector<32x8xf32>
    %121 = tpu.matmul %94, %120, %cst_48 {dimension_numbers = #tpu.dot_dimension_numbers<[0], [0], [1], [1], [0, 1, 1, 1], [], []>, precision = #tpu.contract_precision<fp32>} : vector<64x32xf32>, vector<64x8xf32>, vector<32x8xf32> -> vector<32x8xf32>
    %122 = arith.subf %92, %121 : vector<32x8xf32>
    %123 = arith.subf %1, %122 : vector<32x8xf32>
    %c0_49 = arith.constant 0 : index
    %c0_50 = arith.constant 0 : index
    %c0_51 = arith.constant 0 : index
    %124 = vector.load %arg4[%c0_49, %c0_50, %c0_51] : memref<1x32x8xf32, #tpu.memory_space<vmem>>, vector<1x32x8xf32>
    %125 = vector.shape_cast %124 : vector<1x32x8xf32> to vector<32x8xf32>
    %126 = vector.shape_cast %123 : vector<32x8xf32> to vector<1x32x8xf32>
    tpu.vector_store %arg4[%c0_49, %c0_50, %c0_51], %126 {strides = array<i32>} : memref<1x32x8xf32, #tpu.memory_space<vmem>>, vector<1x32x8xf32>,
    return
  }
  func.func @transform_0(%arg0: i32, %arg1: i32) -> (i32, i32, i32) {
    %c0_i32 = arith.constant 0 : i32
    %c0_i32_0 = arith.constant 0 : i32
    return %arg0, %c0_i32, %arg1 : i32, i32, i32
  }
  func.func @transform_1(%arg0: i32, %arg1: i32) -> (i32, i32, i32) {
    %c0_i32 = arith.constant 0 : i32
    %c0_i32_0 = arith.constant 0 : i32
    %c0_i32_1 = arith.constant 0 : i32
    %c0_i32_2 = arith.constant 0 : i32
    return %c0_i32, %c0_i32_0, %c0_i32_1 : i32, i32, i32
  }
  func.func @transform_2(%arg0: i32, %arg1: i32) -> (i32, i32, i32) {
    %c0_i32 = arith.constant 0 : i32
    %c0_i32_0 = arith.constant 0 : i32
    return %arg0, %c0_i32, %arg1 : i32, i32, i32
  }
  func.func @transform_3(%arg0: i32, %arg1: i32) -> (i32, i32, i32) {
    %c0_i32 = arith.constant 0 : i32
    %c0_i32_0 = arith.constant 0 : i32
    return %arg0, %c0_i32, %arg1 : i32, i32, i32
  }
}

module attributes {stable_mosaic.version = 11 : i64} {
  func.func @_rvq_kernel(%arg0: i32, %arg1: i32, %arg2: memref<1x32x8xf32, #tpu.memory_space<vmem>>, %arg3: memref<4x64x32xf32, #tpu.memory_space<vmem>>, %arg4: memref<1x32x8xf32, #tpu.memory_space<vmem>>, %arg5: memref<1x4x8xi32, #tpu.memory_space<vmem>>) attributes {dimension_semantics = [#tpu.dimension_semantics<parallel>, #tpu.dimension_semantics<parallel>], iteration_bounds = array<i64: 2, 1>, scalar_prefetch = 0 : i64, scratch_operands = 0 : i64, tpu.core_type = #tpu.core_type<tc>, window_params = [{transform_indices = @transform_0, window_bounds = array<i64: 1, 32, 8>}, {pipeline_mode = #tpu.pipeline_mode<synchronous>, transform_indices = @transform_1, window_bounds = array<i64: 4, 64, 32>}, {transform_indices = @transform_2, window_bounds = array<i64: 1, 32, 8>}, {transform_indices = @transform_3, window_bounds = array<i64: 1, 4, 8>}]} {
    %c0 = arith.constant 0 : index
    %c0_0 = arith.constant 0 : index
    %c0_1 = arith.constant 0 : index
    %0 = vector.load %arg2[%c0, %c0_0, %c0_1] : memref<1x32x8xf32, #tpu.memory_space<vmem>>, vector<1x32x8xf32>
    %1 = vector.shape_cast %0 : vector<1x32x8xf32> to vector<32x8xf32>
    %2 = tpu.iota {dimensions = array<i32: 0>} : vector<64x1xi32>
    %c0_2 = arith.constant 0 : index
    %c0_3 = arith.constant 0 : index
    %c0_4 = arith.constant 0 : index
    %3 = vector.load %arg3[%c0_2, %c0_3, %c0_4] : memref<4x64x32xf32, #tpu.memory_space<vmem>>, vector<1x64x32xf32>
    %4 = vector.shape_cast %3 : vector<1x64x32xf32> to vector<64x32xf32>
    %5 = arith.mulf %4, %4 : vector<64x32xf32>
    %cst = arith.constant dense<0.000000e+00> : vector<64xf32>
    %6 = vector.multi_reduction <add>, %5, %cst [1] : vector<64x32xf32> to vector<64xf32>
    %7 = vector.shape_cast %6 : vector<64xf32> to vector<64x1xf32>
    %cst_5 = arith.constant 5.000000e-01 : f32
    %8 = vector.broadcast %cst_5 : f32 to vector<64x1xf32>
    %9 = arith.mulf %8, %7 : vector<64x1xf32>
    %cst_6 = arith.constant dense<0.000000e+00> : vector<64x8xf32>
    %10 = tpu.matmul %4, %1, %cst_6 {dimension_numbers = #tpu.dot_dimension_numbers<[1], [0], [0], [1], [0, 0, 1, 1], [], []>} : vector<64x32xf32>, vector<32x8xf32>, vector<64x8xf32> -> vector<64x8xf32>
    %11 = vector.broadcast %9 : vector<64x1xf32> to vector<64x8xf32>
    %12 = arith.subf %10, %11 : vector<64x8xf32>
    %cst_7 = arith.constant dense<0xFF800000> : vector<8xf32>
    %13 = vector.multi_reduction <maximumf>, %12, %cst_7 [0] : vector<64x8xf32> to vector<8xf32>
    %14 = vector.shape_cast %13 : vector<8xf32> to vector<1x8xf32>
    %15 = vector.broadcast %14 : vector<1x8xf32> to vector<64x8xf32>
    %16 = arith.cmpf oeq, %12, %15 : vector<64x8xf32>
    %c64_i32 = arith.constant 64 : i32
    %17 = vector.shape_cast %2 : vector<64x1xi32> to vector<64x1xi32>
    %18 = vector.broadcast %17 : vector<64x1xi32> to vector<64x8xi32>
    %19 = vector.broadcast %c64_i32 : i32 to vector<64x8xi32>
    %20 = arith.select %16, %18, %19 : vector<64x8xi1>, vector<64x8xi32>
    %cst_8 = arith.constant dense<2147483647> : vector<8xi32>
    %21 = vector.multi_reduction <minsi>, %20, %cst_8 [0] : vector<64x8xi32> to vector<8xi32>
    %22 = vector.shape_cast %21 : vector<8xi32> to vector<1x8xi32>
    %c0_9 = arith.constant 0 : index
    %c0_10 = arith.constant 0 : index
    %c0_11 = arith.constant 0 : index
    %23 = vector.load %arg5[%c0_9, %c0_10, %c0_11] : memref<1x4x8xi32, #tpu.memory_space<vmem>>, vector<1x1x8xi32>
    %24 = vector.shape_cast %23 : vector<1x1x8xi32> to vector<1x8xi32>
    %25 = vector.shape_cast %22 : vector<1x8xi32> to vector<1x1x8xi32>
    tpu.vector_store %arg5[%c0_9, %c0_10, %c0_11], %25 {strides = array<i32>} : memref<1x4x8xi32, #tpu.memory_space<vmem>>, vector<1x1x8xi32>,
    %26 = vector.broadcast %2 : vector<64x1xi32> to vector<64x8xi32>
    %27 = vector.broadcast %22 : vector<1x8xi32> to vector<64x8xi32>
    %28 = arith.cmpi eq, %26, %27 : vector<64x8xi32>
    %29 = arith.extui %28 : vector<64x8xi1> to vector<64x8xi32>
    %30 = arith.sitofp %29 : vector<64x8xi32> to vector<64x8xf32>
    %cst_12 = arith.constant dense<0.000000e+00> : vector<32x8xf32>
    %31 = tpu.matmul %4, %30, %cst_12 {dimension_numbers = #tpu.dot_dimension_numbers<[0], [0], [1], [1], [0, 1, 1, 1], [], []>, precision = #tpu.contract_precision<fp32>} : vector<64x32xf32>, vector<64x8xf32>, vector<32x8xf32> -> vector<32x8xf32>
    %32 = arith.subf %1, %31 : vector<32x8xf32>
    %c1 = arith.constant 1 : index
    %c0_13 = arith.constant 0 : index
    %c0_14 = arith.constant 0 : index
    %33 = vector.load %arg3[%c1, %c0_13, %c0_14] : memref<4x64x32xf32, #tpu.memory_space<vmem>>, vector<1x64x32xf32>
    %34 = vector.shape_cast %33 : vector<1x64x32xf32> to vector<64x32xf32>
    %35 = arith.mulf %34, %34 : vector<64x32xf32>
    %cst_15 = arith.constant dense<0.000000e+00> : vector<64xf32>
    %36 = vector.multi_reduction <add>, %35, %cst_15 [1] : vector<64x32xf32> to vector<64xf32>
    %37 = vector.shape_cast %36 : vector<64xf32> to vector<64x1xf32>
    %cst_16 = arith.constant 5.000000e-01 : f32
    %38 = vector.broadcast %cst_16 : f32 to vector<64x1xf32>
    %39 = arith.mulf %38, %37 : vector<64x1xf32>
    %cst_17 = arith.constant dense<0.000000e+00> : vector<64x8xf32>
    %40 = tpu.matmul %34, %32, %cst_17 {dimension_numbers = #tpu.dot_dimension_numbers<[1], [0], [0], [1], [0, 0, 1, 1], [], []>} : vector<64x32xf32>, vector<32x8xf32>, vector<64x8xf32> -> vector<64x8xf32>
    %41 = vector.broadcast %39 : vector<64x1xf32> to vector<64x8xf32>
    %42 = arith.subf %40, %41 : vector<64x8xf32>
    %cst_18 = arith.constant dense<0xFF800000> : vector<8xf32>
    %43 = vector.multi_reduction <maximumf>, %42, %cst_18 [0] : vector<64x8xf32> to vector<8xf32>
    %44 = vector.shape_cast %43 : vector<8xf32> to vector<1x8xf32>
    %45 = vector.broadcast %44 : vector<1x8xf32> to vector<64x8xf32>
    %46 = arith.cmpf oeq, %42, %45 : vector<64x8xf32>
    %c64_i32_19 = arith.constant 64 : i32
    %47 = vector.shape_cast %2 : vector<64x1xi32> to vector<64x1xi32>
    %48 = vector.broadcast %47 : vector<64x1xi32> to vector<64x8xi32>
    %49 = vector.broadcast %c64_i32_19 : i32 to vector<64x8xi32>
    %50 = arith.select %46, %48, %49 : vector<64x8xi1>, vector<64x8xi32>
    %cst_20 = arith.constant dense<2147483647> : vector<8xi32>
    %51 = vector.multi_reduction <minsi>, %50, %cst_20 [0] : vector<64x8xi32> to vector<8xi32>
    %52 = vector.shape_cast %51 : vector<8xi32> to vector<1x8xi32>
    %c0_21 = arith.constant 0 : index
    %c1_22 = arith.constant 1 : index
    %c0_23 = arith.constant 0 : index
    %53 = vector.load %arg5[%c0_21, %c1_22, %c0_23] : memref<1x4x8xi32, #tpu.memory_space<vmem>>, vector<1x1x8xi32>
    %54 = vector.shape_cast %53 : vector<1x1x8xi32> to vector<1x8xi32>
    %55 = vector.shape_cast %52 : vector<1x8xi32> to vector<1x1x8xi32>
    tpu.vector_store %arg5[%c0_21, %c1_22, %c0_23], %55 {strides = array<i32>} : memref<1x4x8xi32, #tpu.memory_space<vmem>>, vector<1x1x8xi32>,
    %56 = vector.broadcast %2 : vector<64x1xi32> to vector<64x8xi32>
    %57 = vector.broadcast %52 : vector<1x8xi32> to vector<64x8xi32>
    %58 = arith.cmpi eq, %56, %57 : vector<64x8xi32>
    %59 = arith.extui %58 : vector<64x8xi1> to vector<64x8xi32>
    %60 = arith.sitofp %59 : vector<64x8xi32> to vector<64x8xf32>
    %cst_24 = arith.constant dense<0.000000e+00> : vector<32x8xf32>
    %61 = tpu.matmul %34, %60, %cst_24 {dimension_numbers = #tpu.dot_dimension_numbers<[0], [0], [1], [1], [0, 1, 1, 1], [], []>, precision = #tpu.contract_precision<fp32>} : vector<64x32xf32>, vector<64x8xf32>, vector<32x8xf32> -> vector<32x8xf32>
    %62 = arith.subf %32, %61 : vector<32x8xf32>
    %c2 = arith.constant 2 : index
    %c0_25 = arith.constant 0 : index
    %c0_26 = arith.constant 0 : index
    %63 = vector.load %arg3[%c2, %c0_25, %c0_26] : memref<4x64x32xf32, #tpu.memory_space<vmem>>, vector<1x64x32xf32>
    %64 = vector.shape_cast %63 : vector<1x64x32xf32> to vector<64x32xf32>
    %65 = arith.mulf %64, %64 : vector<64x32xf32>
    %cst_27 = arith.constant dense<0.000000e+00> : vector<64xf32>
    %66 = vector.multi_reduction <add>, %65, %cst_27 [1] : vector<64x32xf32> to vector<64xf32>
    %67 = vector.shape_cast %66 : vector<64xf32> to vector<64x1xf32>
    %cst_28 = arith.constant 5.000000e-01 : f32
    %68 = vector.broadcast %cst_28 : f32 to vector<64x1xf32>
    %69 = arith.mulf %68, %67 : vector<64x1xf32>
    %cst_29 = arith.constant dense<0.000000e+00> : vector<64x8xf32>
    %70 = tpu.matmul %64, %62, %cst_29 {dimension_numbers = #tpu.dot_dimension_numbers<[1], [0], [0], [1], [0, 0, 1, 1], [], []>} : vector<64x32xf32>, vector<32x8xf32>, vector<64x8xf32> -> vector<64x8xf32>
    %71 = vector.broadcast %69 : vector<64x1xf32> to vector<64x8xf32>
    %72 = arith.subf %70, %71 : vector<64x8xf32>
    %cst_30 = arith.constant dense<0xFF800000> : vector<8xf32>
    %73 = vector.multi_reduction <maximumf>, %72, %cst_30 [0] : vector<64x8xf32> to vector<8xf32>
    %74 = vector.shape_cast %73 : vector<8xf32> to vector<1x8xf32>
    %75 = vector.broadcast %74 : vector<1x8xf32> to vector<64x8xf32>
    %76 = arith.cmpf oeq, %72, %75 : vector<64x8xf32>
    %c64_i32_31 = arith.constant 64 : i32
    %77 = vector.shape_cast %2 : vector<64x1xi32> to vector<64x1xi32>
    %78 = vector.broadcast %77 : vector<64x1xi32> to vector<64x8xi32>
    %79 = vector.broadcast %c64_i32_31 : i32 to vector<64x8xi32>
    %80 = arith.select %76, %78, %79 : vector<64x8xi1>, vector<64x8xi32>
    %cst_32 = arith.constant dense<2147483647> : vector<8xi32>
    %81 = vector.multi_reduction <minsi>, %80, %cst_32 [0] : vector<64x8xi32> to vector<8xi32>
    %82 = vector.shape_cast %81 : vector<8xi32> to vector<1x8xi32>
    %c0_33 = arith.constant 0 : index
    %c2_34 = arith.constant 2 : index
    %c0_35 = arith.constant 0 : index
    %83 = vector.load %arg5[%c0_33, %c2_34, %c0_35] : memref<1x4x8xi32, #tpu.memory_space<vmem>>, vector<1x1x8xi32>
    %84 = vector.shape_cast %83 : vector<1x1x8xi32> to vector<1x8xi32>
    %85 = vector.shape_cast %82 : vector<1x8xi32> to vector<1x1x8xi32>
    tpu.vector_store %arg5[%c0_33, %c2_34, %c0_35], %85 {strides = array<i32>} : memref<1x4x8xi32, #tpu.memory_space<vmem>>, vector<1x1x8xi32>,
    %86 = vector.broadcast %2 : vector<64x1xi32> to vector<64x8xi32>
    %87 = vector.broadcast %82 : vector<1x8xi32> to vector<64x8xi32>
    %88 = arith.cmpi eq, %86, %87 : vector<64x8xi32>
    %89 = arith.extui %88 : vector<64x8xi1> to vector<64x8xi32>
    %90 = arith.sitofp %89 : vector<64x8xi32> to vector<64x8xf32>
    %cst_36 = arith.constant dense<0.000000e+00> : vector<32x8xf32>
    %91 = tpu.matmul %64, %90, %cst_36 {dimension_numbers = #tpu.dot_dimension_numbers<[0], [0], [1], [1], [0, 1, 1, 1], [], []>, precision = #tpu.contract_precision<fp32>} : vector<64x32xf32>, vector<64x8xf32>, vector<32x8xf32> -> vector<32x8xf32>
    %92 = arith.subf %62, %91 : vector<32x8xf32>
    %c3 = arith.constant 3 : index
    %c0_37 = arith.constant 0 : index
    %c0_38 = arith.constant 0 : index
    %93 = vector.load %arg3[%c3, %c0_37, %c0_38] : memref<4x64x32xf32, #tpu.memory_space<vmem>>, vector<1x64x32xf32>
    %94 = vector.shape_cast %93 : vector<1x64x32xf32> to vector<64x32xf32>
    %95 = arith.mulf %94, %94 : vector<64x32xf32>
    %cst_39 = arith.constant dense<0.000000e+00> : vector<64xf32>
    %96 = vector.multi_reduction <add>, %95, %cst_39 [1] : vector<64x32xf32> to vector<64xf32>
    %97 = vector.shape_cast %96 : vector<64xf32> to vector<64x1xf32>
    %cst_40 = arith.constant 5.000000e-01 : f32
    %98 = vector.broadcast %cst_40 : f32 to vector<64x1xf32>
    %99 = arith.mulf %98, %97 : vector<64x1xf32>
    %cst_41 = arith.constant dense<0.000000e+00> : vector<64x8xf32>
    %100 = tpu.matmul %94, %92, %cst_41 {dimension_numbers = #tpu.dot_dimension_numbers<[1], [0], [0], [1], [0, 0, 1, 1], [], []>} : vector<64x32xf32>, vector<32x8xf32>, vector<64x8xf32> -> vector<64x8xf32>
    %101 = vector.broadcast %99 : vector<64x1xf32> to vector<64x8xf32>
    %102 = arith.subf %100, %101 : vector<64x8xf32>
    %cst_42 = arith.constant dense<0xFF800000> : vector<8xf32>
    %103 = vector.multi_reduction <maximumf>, %102, %cst_42 [0] : vector<64x8xf32> to vector<8xf32>
    %104 = vector.shape_cast %103 : vector<8xf32> to vector<1x8xf32>
    %105 = vector.broadcast %104 : vector<1x8xf32> to vector<64x8xf32>
    %106 = arith.cmpf oeq, %102, %105 : vector<64x8xf32>
    %c64_i32_43 = arith.constant 64 : i32
    %107 = vector.shape_cast %2 : vector<64x1xi32> to vector<64x1xi32>
    %108 = vector.broadcast %107 : vector<64x1xi32> to vector<64x8xi32>
    %109 = vector.broadcast %c64_i32_43 : i32 to vector<64x8xi32>
    %110 = arith.select %106, %108, %109 : vector<64x8xi1>, vector<64x8xi32>
    %cst_44 = arith.constant dense<2147483647> : vector<8xi32>
    %111 = vector.multi_reduction <minsi>, %110, %cst_44 [0] : vector<64x8xi32> to vector<8xi32>
    %112 = vector.shape_cast %111 : vector<8xi32> to vector<1x8xi32>
    %c0_45 = arith.constant 0 : index
    %c3_46 = arith.constant 3 : index
    %c0_47 = arith.constant 0 : index
    %113 = vector.load %arg5[%c0_45, %c3_46, %c0_47] : memref<1x4x8xi32, #tpu.memory_space<vmem>>, vector<1x1x8xi32>
    %114 = vector.shape_cast %113 : vector<1x1x8xi32> to vector<1x8xi32>
    %115 = vector.shape_cast %112 : vector<1x8xi32> to vector<1x1x8xi32>
    tpu.vector_store %arg5[%c0_45, %c3_46, %c0_47], %115 {strides = array<i32>} : memref<1x4x8xi32, #tpu.memory_space<vmem>>, vector<1x1x8xi32>,
    %116 = vector.broadcast %2 : vector<64x1xi32> to vector<64x8xi32>
    %117 = vector.broadcast %112 : vector<1x8xi32> to vector<64x8xi32>
    %118 = arith.cmpi eq, %116, %117 : vector<64x8xi32>
    %119 = arith.extui %118 : vector<64x8xi1> to vector<64x8xi32>
    %120 = arith.sitofp %119 : vector<64x8xi32> to vector<64x8xf32>
    %cst_48 = arith.constant dense<0.000000e+00> : vector<32x8xf32>
    %121 = tpu.matmul %94, %120, %cst_48 {dimension_numbers = #tpu.dot_dimension_numbers<[0], [0], [1], [1], [0, 1, 1, 1], [], []>, precision = #tpu.contract_precision<fp32>} : vector<64x32xf32>, vector<64x8xf32>, vector<32x8xf32> -> vector<32x8xf32>
    %122 = arith.subf %92, %121 : vector<32x8xf32>
    %123 = arith.subf %1, %122 : vector<32x8xf32>
    %c0_49 = arith.constant 0 : index
    %c0_50 = arith.constant 0 : index
    %c0_51 = arith.constant 0 : index
    %124 = vector.load %arg4[%c0_49, %c0_50, %c0_51] : memref<1x32x8xf32, #tpu.memory_space<vmem>>, vector<1x32x8xf32>
    %125 = vector.shape_cast %124 : vector<1x32x8xf32> to vector<32x8xf32>
    %126 = vector.shape_cast %123 : vector<32x8xf32> to vector<1x32x8xf32>
    tpu.vector_store %arg4[%c0_49, %c0_50, %c0_51], %126 {strides = array<i32>} : memref<1x32x8xf32, #tpu.memory_space<vmem>>, vector<1x32x8xf32>,
    return
  }
  func.func @transform_0(%arg0: i32, %arg1: i32) -> (i32, i32, i32) {
    %c0_i32 = arith.constant 0 : i32
    %c0_i32_0 = arith.constant 0 : i32
    return %arg0, %c0_i32, %arg1 : i32, i32, i32
  }
  func.func @transform_1(%arg0: i32, %arg1: i32) -> (i32, i32, i32) {
    %c0_i32 = arith.constant 0 : i32
    %c0_i32_0 = arith.constant 0 : i32
    %c0_i32_1 = arith.constant 0 : i32
    %c0_i32_2 = arith.constant 0 : i32
    return %c0_i32, %c0_i32_0, %c0_i32_1 : i32, i32, i32
  }
  func.func @transform_2(%arg0: i32, %arg1: i32) -> (i32, i32, i32) {
    %c0_i32 = arith.constant 0 : i32
    %c0_i32_0 = arith.constant 0 : i32
    return %arg0, %c0_i32, %arg1 : i32, i32, i32
  }
  func.func @transform_3(%arg0: i32, %arg1: i32) -> (i32, i32, i32) {
    %c0_i32 = arith.constant 0 : i32
    %c0_i32_0 = arith.constant 0 : i32
    return %arg0, %c0_i32, %arg1 : i32, i32, i32
  }
}

</mosaic_0001>

<llo_original>
// kernel: tpu_custom_call.1
$region0: #{tpu_custom_call.1}
  #allocation0 [shape = 'u32[]', space=smem, size = 0x4, offset = 0x4, fixed_abs, tag = 'smem constant byte address 0x4 - core index']
  #allocation1 [shape = 'u32[144,128]{1,0:T(1,128)}', space=vmem, size = 0x12000, scoped, tag = 'internal scratch']
  %s0 = inlined_call_operand.vmem [shape: f32[2,32,8], index: 0, kind: input, shape index: {}]
  %s1 = inlined_call_operand.vmem [shape: f32[4,64,32], index: 1, kind: input, shape index: {}]
  %s2 = inlined_call_operand.vmem [shape: f32[2,32,8], index: 2, kind: output, shape index: {0}]
  %s3 = inlined_call_operand.hbm [shape: s32[2,4,8], index: 3, kind: output, shape index: {1}]
  %4 = xla_tuple %s2, %s3
  %s5 = sld [smem:[#allocation0]]
  $region49: #{tpu_custom_call.1} parent=0
    _
  %s7 = ssub.s32 1, %s5
  %s8 = scalar_select 0, %s7, %s5
  $region1: #{tpu_custom_call.1} parent=0
    #allocation2 [shape = 'u8[4096]{0}', space=vmem, size = 0x1000, scoped, tag = 'output window, operand 1']
    #allocation3 [shape = 's32[2]{0}', space=sflag, size = 0x8, scoped, tag = 'scoped memory for tpu_custom_call.1']
    %9 = vsyncpa [#allocation3], 0
    %s10 = scalar_lea.sflag [#allocation3], 1
    %11 = vsyncpa %s10, 0
    loop: start=0, step=1, limit=4
    $region2: #{tpu_custom_call.1} parent=1 // loop_pre_header
      _
    $region3: #{tpu_custom_call.1} parent=1 // loop_header
      %s13 = sphi 0, %s17
      %p14 = scmp.ge.s32.totalorder %s13, 4
      %s20 = sphi 0, %s32
      %s21 = sphi 0, %s28
      %s22 = sphi 0, %s20
      %s23 = sphi 0, %s21
      %s24 = sphi 0, %s22
      %s25 = sphi 0, %s23
      %s37 = sphi 0, %s39
      %s40 = sphi 0, %s37
      %s41 = sphi 0, %s40
      %s57 = sphi 0, %s41
      %s61 = sphi 0, %s61
      %s63 = sphi 0, %s61
      %s64 = sphi 0, %s63
      %s78 = sphi 0, %s64
      %s86 = sphi 0, %s88
      %s89 = sphi 0, %s86
      %s90 = sphi 0, %s89
      %s106 = sphi 0, %s90
      %s114 = sphi 0, %s116
      %s117 = sphi 0, %s114
      %s118 = sphi 0, %s117
      %s134 = sphi 0, %s118
    $region4: #{tpu_custom_call.1} parent=1 // loop_header_branch
      %16 = sbr.rel (%p14) target = $region8
    $region5: #{tpu_custom_call.1} parent=1 // loop_body
      %s18 = ssub.s32 %s13, 1
      %s19 = ssub.s32 %s13, 2
      %s26 = sadd.s32 1, %s21
      %p27 = scmp.ge.s32.totalorder %s26, 1
      %s28 = scalar_select %p27, 0, %s26
      %s29 = sadd.s32 1, %s20
      %s30 = scalar_select %p27, %s29, %s20
      %p31 = scmp.ge.s32.totalorder %s30, 2
      %s32 = scalar_select %p31, 0, %s30
      %s33 = ssub.s32 %s20, %s32
      %s34 = ssub.s32 %s21, %s28
      %s35 = sor.u32 %s33, %s34
      %p36 = scmp.eq.s32.totalorder %s35, 0
      %s38 = sadd.s32 %s37, 1
      %s39 = scalar_select %p36, %s37, %s38
      %p42 = pneg %p36
      %p43 = scmp.eq.s32.totalorder %s13, 1
      %p44 = por %p42, %p43
      %p45 = scmp.ne.s32.totalorder %s37, %s40
      %p46 = scmp.eq.s32.totalorder %s13, 0
      %p47 = por %p45, %p46
      %p48 = scmp.ne.s32.totalorder %s37, %s40
      %p49 = scmp.eq.s32.totalorder %s18, 1
      %p50 = por %p48, %p49
      %p51 = scmp.ne.s32.totalorder %s40, %s41
      %p52 = scmp.eq.s32.totalorder %s18, 0
      %p53 = por %p51, %p52
      %p54 = scmp.ne.s32.totalorder %s40, %s41
      %p55 = scmp.eq.s32.totalorder %s19, 1
      %p56 = por %p54, %p55
      %p58 = scmp.ne.s32.totalorder %s41, %s57
      %p59 = scmp.eq.s32.totalorder %s19, 0
      %p60 = por %p58, %p59
      %s62 = sadd.s32 %s61, 1
      %p65 = scmp.eq.s32.totalorder %s13, 1
      %p66 = scmp.ne.s32.totalorder %s61, %s63
      %p67 = scmp.eq.s32.totalorder %s13, 0
      %p68 = por %p66, %p67
      %p69 = scmp.ne.s32.totalorder %s61, %s63
      %p70 = scmp.eq.s32.totalorder %s18, 1
      %p71 = por %p69, %p70
      %p72 = scmp.ne.s32.totalorder %s63, %s64
      %p73 = scmp.eq.s32.totalorder %s18, 0
      %p74 = por %p72, %p73
      %p75 = scmp.ne.s32.totalorder %s63, %s64
      %p76 = scmp.eq.s32.totalorder %s19, 1
      %p77 = por %p75, %p76
      %p79 = scmp.ne.s32.totalorder %s64, %s78
      %p80 = scmp.eq.s32.totalorder %s19, 0
      %p81 = por %p79, %p80
      %s82 = ssub.s32 %s20, %s32
      %s83 = ssub.s32 %s21, %s28
      %s84 = sor.u32 %s82, %s83
      %p85 = scmp.eq.s32.totalorder %s84, 0
      %s87 = sadd.s32 %s86, 1
      %s88 = scalar_select %p85, %s86, %s87
      %p91 = pneg %p85
      %p92 = scmp.eq.s32.totalorder %s13, 1
      %p93 = por %p91, %p92
      %p94 = scmp.ne.s32.totalorder %s86, %s89
      %p95 = scmp.eq.s32.totalorder %s13, 0
      %p96 = por %p94, %p95
      %p97 = scmp.ne.s32.totalorder %s86, %s89
      %p98 = scmp.eq.s32.totalorder %s18, 1
      %p99 = por %p97, %p98
      %p100 = scmp.ne.s32.totalorder %s89, %s90
      %p101 = scmp.eq.s32.totalorder %s18, 0
      %p102 = por %p100, %p101
      %p103 = scmp.ne.s32.totalorder %s89, %s90
      %p104 = scmp.eq.s32.totalorder %s19, 1
      %p105 = por %p103, %p104
      %p107 = scmp.ne.s32.totalorder %s90, %s106
      %p108 = scmp.eq.s32.totalorder %s19, 0
      %p109 = por %p107, %p108
      %s110 = ssub.s32 %s20, %s32
      %s111 = ssub.s32 %s21, %s28
      %s112 = sor.u32 %s110, %s111
      %p113 = scmp.eq.s32.totalorder %s112, 0
      %s115 = sadd.s32 %s114, 1
      %s116 = scalar_select %p113, %s114, %s115
      %p119 = pneg %p113
      %p120 = scmp.eq.s32.totalorder %s13, 1
      %p121 = por %p119, %p120
      %p122 = scmp.ne.s32.totalorder %s114, %s117
      %p123 = scmp.eq.s32.totalorder %s13, 0
      %p124 = por %p122, %p123
      %p125 = scmp.ne.s32.totalorder %s114, %s117
      %p126 = scmp.eq.s32.totalorder %s18, 1
      %p127 = por %p125, %p126
      %p128 = scmp.ne.s32.totalorder %s117, %s118
      %p129 = scmp.eq.s32.totalorder %s18, 0
      %p130 = por %p128, %p129
      %p131 = scmp.ne.s32.totalorder %s117, %s118
      %p132 = scmp.eq.s32.totalorder %s19, 1
      %p133 = por %p131, %p132
      %p135 = scmp.ne.s32.totalorder %s118, %s134
      %p136 = scmp.eq.s32.totalorder %s19, 0
      %p137 = por %p135, %p136
      %p138 = scmp.le.s32.totalorder 1, %s13
      %p139 = scmp.lt.s32.totalorder %s13, 3
      %p140 = pnand %p138, %p139
      %p141 = pneg %p140
      // Predicated region
      $region9: #{tpu_custom_call.1} parent=5 // pred_check
        _
      $region10: #{tpu_custom_call.1} parent=5 // pred_check_branch
        %143 = sbr.rel (%p140) target = $region12
      $region11: #{tpu_custom_call.1} parent=5 // pred_region
        %s144 = ssub.s32 %s13, 1
        // Predicated region
        $region13: #{tpu_custom_call.1} parent=11 // pred_check
          %p145 = pneg %p74
        $region14: #{tpu_custom_call.1} parent=11 // pred_check_branch
          %147 = sbr.rel (%p145) target = $region16
        $region15: #{tpu_custom_call.1} parent=11 // pred_region
          _
        $region16: #{tpu_custom_call.1} parent=11 // pred_fallthru
          _
      $region12: #{tpu_custom_call.1} parent=5 // pred_fallthru
        _
      %p148 = scmp.lt.s32.totalorder %s13, 2
      // Predicated region
      $region17: #{tpu_custom_call.1} parent=5 // pred_check
        %p149 = pneg %p148
      $region18: #{tpu_custom_call.1} parent=5 // pred_check_branch
        %151 = sbr.rel (%p149) target = $region20
      $region19: #{tpu_custom_call.1} parent=5 // pred_region
        // Predicated region
        $region21: #{tpu_custom_call.1} parent=19 // pred_check
          %p152 = pneg %p47
        $region22: #{tpu_custom_call.1} parent=19 // pred_check_branch
          %154 = sbr.rel (%p152) target = $region24
        $region23: #{tpu_custom_call.1} parent=19 // pred_region
          %p155 = scmp.lt.s32.totalorder %s20, 1
          %s156 = scalar_select %p155, %s20, 1
          %p157 = scmp.lt.s32.totalorder %s21, 0
          %s158 = scalar_select %p157, %s21, 0
          %s159 = smul.addr %s156, 4
          %s160 = sadd.s32 %s158, %s159
          %s161 = smul.addr %s160, 8
          %s162 = scalar_lea.vmem %s0, %s161
        $region24: #{tpu_custom_call.1} parent=19 // pred_fallthru
          _
      $region20: #{tpu_custom_call.1} parent=5 // pred_fallthru
        _
      %p163 = scmp.le.s32.totalorder 1, %s13
      %p164 = scmp.lt.s32.totalorder %s13, 3
      %p165 = pnand %p163, %p164
      %p166 = pneg %p165
      // Predicated region
      $region25: #{tpu_custom_call.1} parent=5 // pred_check
        _
      $region26: #{tpu_custom_call.1} parent=5 // pred_check_branch
        %168 = sbr.rel (%p165) target = $region28
      $region27: #{tpu_custom_call.1} parent=5 // pred_region
        %s169 = ssub.s32 %s13, 1
        %p170 = scmp.lt.s32.totalorder %s22, 1
        %s171 = scalar_select %p170, %s22, 1
        %p172 = scmp.lt.s32.totalorder %s23, 0
        %s173 = scalar_select %p172, %s23, 0
        %s174 = smul.addr %s171, 4
        %s175 = sadd.s32 %s173, %s174
        %s176 = smul.addr %s175, 8
        %s177 = scalar_lea.vmem %s0, %s176
        %p178 = pneg %p53
        %p179 = pneg %p50
        %p180 = pneg %p74
        %p181 = pneg %p71
        %p182 = pneg %p102
        %p183 = pneg %p99
        %p184 = scmp.lt.s32.totalorder %s22, 1
        %s185 = scalar_select %p184, %s22, 1
        %p186 = scmp.lt.s32.totalorder %s23, 0
        %s187 = scalar_select %p186, %s23, 0
        %s188 = smul.addr %s185, 4
        %s189 = sadd.s32 %s187, %s188
        %s190 = smul.addr %s189, 8
        %s191 = scalar_lea.vmem %s2, %s190
        %p192 = pneg %p130
        %p193 = pneg %p127
        %s194 = sand.u32 %s117, 1
        %s195 = scalar_lea.sflag [#allocation3], %s194
        %s196 = sand.u32 %s117, 1
        %s197 = smul.addr %s196, 4
        %s198 = scalar_lea.vmem [#allocation2], %s197
        %p199 = scmp.lt.s32.totalorder %s22, 1
        %s200 = scalar_select %p199, %s22, 1
        %p201 = scmp.lt.s32.totalorder %s23, 0
        %s202 = scalar_select %p201, %s23, 0
        %s203 = smul.addr %s200, 4
        %s204 = sadd.s32 %s202, %s203
        %s205 = smul.addr %s204, 8
        %s206 = scalar_lea.vmem %s0, %s205
        %p207 = scmp.lt.s32.totalorder %s22, 1
        %s208 = scalar_select %p207, %s22, 1
        %p209 = scmp.lt.s32.totalorder %s23, 0
        %s210 = scalar_select %p209, %s23, 0
        %s211 = smul.addr %s208, 4
        %s212 = sadd.s32 %s210, %s211
        %s213 = smul.addr %s212, 8
        %s214 = scalar_lea.vmem %s2, %s213
        %v215 = vld [vmem:[%s206] sm:$0xff]
        %v216 = vld [vmem:[%s206 + $0x8] sm:$0xff]
        %v217 = vld [vmem:[%s206 + $0x10] sm:$0xff]
        %v218 = vld [vmem:[%s206 + $0x18] sm:$0xff]
        %v219 = vlaneseq
        %v220 = vshrl.u32 %v219, 7
        %v221 = vadd.s32 %v220, 8
        %v222 = vadd.s32 %v220, 16
        %v223 = vadd.s32 %v220, 24
        %v224 = vadd.s32 %v220, 32
        %v225 = vadd.s32 %v220, 40
        %v226 = vadd.s32 %v220, 48
        %v227 = vadd.s32 %v220, 56
        %v228 = vld [vmem:[%s1] sm:$0xff]
        %v229 = vld [vmem:[%s1 + $0x8] sm:$0xff]
        %v230 = vld [vmem:[%s1 + $0x10] sm:$0xff]
        %v231 = vld [vmem:[%s1 + $0x18] sm:$0xff]
        %v232 = vld [vmem:[%s1 + $0x20] sm:$0xff]
        %v233 = vld [vmem:[%s1 + $0x28] sm:$0xff]
        %v234 = vld [vmem:[%s1 + $0x30] sm:$0xff]
        %v235 = vld [vmem:[%s1 + $0x38] sm:$0xff]
        %v236 = vmul.f32 %v228, %v228
        %v237 = vmul.f32 %v229, %v229
        %v238 = vmul.f32 %v230, %v230
        %v239 = vmul.f32 %v231, %v231
        %v240 = vmul.f32 %v232, %v232
        %v241 = vmul.f32 %v233, %v233
        %v242 = vmul.f32 %v234, %v234
        %v243 = vmul.f32 %v235, %v235
        %vm244 = vcmask 261120
        %v245 = vsel %vm244, %v236, 0.0
        %246 = vadd.xlane.f32.xlu0 %v245
        %v247 = vpop.xlane.xlu0 %246
        %v248 = vsel %vm244, %v237, 0.0
        %249 = vadd.xlane.f32.xlu0 %v248
        %v250 = vpop.xlane.xlu0 %249
        %v251 = vsel %vm244, %v238, 0.0
        %252 = vadd.xlane.f32.xlu0 %v251
        %v253 = vpop.xlane.xlu0 %252
        %v254 = vsel %vm244, %v239, 0.0
        %255 = vadd.xlane.f32.xlu0 %v254
        %v256 = vpop.xlane.xlu0 %255
        %v257 = vsel %vm244, %v240, 0.0
        %258 = vadd.xlane.f32.xlu0 %v257
        %v259 = vpop.xlane.xlu0 %258
        %v260 = vsel %vm244, %v241, 0.0
        %261 = vadd.xlane.f32.xlu0 %v260
        %v262 = vpop.xlane.xlu0 %261
        %v263 = vsel %vm244, %v242, 0.0
        %264 = vadd.xlane.f32.xlu0 %v263
        %v265 = vpop.xlane.xlu0 %264
        %v266 = vsel %vm244, %v243, 0.0
        %267 = vadd.xlane.f32.xlu0 %v266
        %v268 = vpop.xlane.xlu0 %267
        %v269 = vmul.f32 %v247, 0.5
        %v270 = vmul.f32 %v250, 0.5
        %v271 = vmul.f32 %v253, 0.5
        %v272 = vmul.f32 %v256, 0.5
        %v273 = vmul.f32 %v259, 0.5
        %v274 = vmul.f32 %v262, 0.5
        %v275 = vmul.f32 %v265, 0.5
        %v276 = vmul.f32 %v268, 0.5
        %v278 = vsel %vm244, %v228, 0
        %v281 = vsel %vm244, %v229, 0
        %v284 = vsel %vm244, %v230, 0
        %v287 = vsel %vm244, %v231, 0
        %v290 = vsel %vm244, %v232, 0
        %v293 = vsel %vm244, %v233, 0
        %v296 = vsel %vm244, %v234, 0
        %v299 = vsel %vm244, %v235, 0
        %301 = vmatprep.subr.mxu0 0.0
        %302 = vmatpush1.msra.mxu0 %v215
        %303 = vmatprep.subr.mxu0 0.0
        %304 = vmatpush1.msra.mxu0 %v216
        %305 = vmatprep.subr.mxu0 0.0
        %306 = vmatpush1.msra.mxu0 %v217
        %307 = vmatprep.subr.mxu0 0.0
        %308 = vmatpush1.msra.mxu0 %v218
        %309 = vmatprep.subr.mxu0 0.0
        %310 = vmatpush1.msra.mxu0 0.0
        %311 = vmatprep.subr.mxu0 0.0
        %312 = vmatpush1.msra.mxu0 0.0
        %313 = vmatprep.subr.mxu0 0.0
        %314 = vmatpush1.msra.mxu0 0.0
        %315 = vmatprep.subr.mxu0 0.0
        %316 = vmatpush1.msra.mxu0 0.0
        %317 = vmatprep.subr.mxu0 0.0
        %318 = vmatpush1.msra.mxu0 0.0
        %319 = vmatprep.subr.mxu0 0.0
        %320 = vmatpush1.msra.mxu0 0.0
        %321 = vmatprep.subr.mxu0 0.0
        %322 = vmatpush1.msra.mxu0 0.0
        %323 = vmatprep.subr.mxu0 0.0
        %324 = vmatpush1.msra.mxu0 0.0
        %325 = vmatprep.subr.mxu0 0.0
        %326 = vmatpush1.msra.mxu0 0.0
        %327 = vmatprep.subr.mxu0 0.0
        %328 = vmatpush1.msra.mxu0 0.0
        %329 = vmatprep.subr.mxu0 0.0
        %330 = vmatpush1.msra.mxu0 0.0
        %331 = vmatprep.subr.mxu0 0.0
        %332 = vmatpush1.msra.mxu0 0.0
        %333 = vmatprep.subr.mxu0 0.0
        %334 = vmatpush1.msra.mxu0 0.0
        %335 = vmatprep.subr.mxu0 0.0
        %336 = vmatpush1.msra.mxu0 0.0
        %337 = vmatprep.subr.mxu0 0.0
        %338 = vmatpush1.msra.mxu0 0.0
        %339 = vmatprep.subr.mxu0 0.0
        %340 = vmatpush1.msra.mxu0 0.0
        %341 = vmatprep.subr.mxu0 0.0
        %342 = vmatpush1.msra.mxu0 0.0
        %343 = vmatprep.subr.mxu0 0.0
        %344 = vmatpush1.msra.mxu0 0.0
        %345 = vmatprep.subr.mxu0 0.0
        %346 = vmatpush1.msra.mxu0 0.0
        %347 = vmatprep.subr.mxu0 0.0
        %348 = vmatpush1.msra.mxu0 0.0
        %349 = vmatprep.subr.mxu0 0.0
        %350 = vmatpush1.msra.mxu0 0.0
        %351 = vmatprep.subr.mxu0 0.0
        %352 = vmatpush1.msra.mxu0 0.0
        %353 = vmatprep.subr.mxu0 0.0
        %354 = vmatpush1.msra.mxu0 0.0
        %355 = vmatprep.subr.mxu0 0.0
        %356 = vmatpush1.msra.mxu0 0.0
        %357 = vmatprep.subr.mxu0 0.0
        %358 = vmatpush1.msra.mxu0 0.0
        %359 = vmatprep.subr.mxu0 0.0
        %360 = vmatpush1.msra.mxu0 0.0
        %361 = vmatprep.subr.mxu0 0.0
        %362 = vmatpush1.msra.mxu0 0.0
        %363 = vmatprep.subr.mxu0 0.0
        %364 = vmatpush1.msra.mxu0 0.0
        %365 = vmatprep.mubr.f32.mxu0 0.0
        %366 = vmatmul.mubr.f32.gmra.mrb[0].mxu0 %v278
        %v367 = vpop.f32.mrb[0].mxu0
        %v368 = vadd.f32 0.0, %v367
        %v369 = vpop.f32.mrb[0].mxu0
        %370 = vmatprep.mubr.f32.mxu0 0.0
        %371 = vmatmul.mubr.f32.gmra.mrb[0].mxu0 %v281
        %v372 = vpop.f32.mrb[0].mxu0
        %v373 = vadd.f32 0.0, %v372
        %v374 = vpop.f32.mrb[0].mxu0
        %375 = vmatprep.mubr.f32.mxu0 0.0
        %376 = vmatmul.mubr.f32.gmra.mrb[0].mxu0 %v284
        %v377 = vpop.f32.mrb[0].mxu0
        %v378 = vadd.f32 0.0, %v377
        %v379 = vpop.f32.mrb[0].mxu0
        %380 = vmatprep.mubr.f32.mxu0 0.0
        %381 = vmatmul.mubr.f32.gmra.mrb[0].mxu0 %v287
        %v382 = vpop.f32.mrb[0].mxu0
        %v383 = vadd.f32 0.0, %v382
        %v384 = vpop.f32.mrb[0].mxu0
        %385 = vmatprep.mubr.f32.mxu0 0.0
        %386 = vmatmul.mubr.f32.gmra.mrb[0].mxu0 %v290
        %v387 = vpop.f32.mrb[0].mxu0
        %v388 = vadd.f32 0.0, %v387
        %v389 = vpop.f32.mrb[0].mxu0
        %390 = vmatprep.mubr.f32.mxu0 0.0
        %391 = vmatmul.mubr.f32.gmra.mrb[0].mxu0 %v293
        %v392 = vpop.f32.mrb[0].mxu0
        %v393 = vadd.f32 0.0, %v392
        %v394 = vpop.f32.mrb[0].mxu0
        %395 = vmatprep.mubr.f32.mxu0 0.0
        %396 = vmatmul.mubr.f32.gmra.mrb[0].mxu0 %v296
        %v397 = vpop.f32.mrb[0].mxu0
        %v398 = vadd.f32 0.0, %v397
        %v399 = vpop.f32.mrb[0].mxu0
        %400 = vmatprep.mubr.f32.mxu0 0.0
        %401 = vmatmul.mubr.f32.gmra.mrb[0].mxu0 %v299
        %v402 = vpop.f32.mrb[0].mxu0
        %v403 = vadd.f32 0.0, %v402
        %v404 = vpop.f32.mrb[0].mxu0
        %405 = vdwg.mxu0
        %v406 = vsub.f32 %v368, %v269
        %v407 = vsub.f32 %v373, %v270
        %v408 = vsub.f32 %v378, %v271
        %v409 = vsub.f32 %v383, %v272
        %v410 = vsub.f32 %v388, %v273
        %v411 = vsub.f32 %v393, %v274
        %v412 = vsub.f32 %v398, %v275
        %v413 = vsub.f32 %v403, %v276
        %vm414 = vcmask 64512
        %v415 = vsel %vm414, %v406, -inf
        %v416 = vsel %vm414, %v407, -inf
        %v417 = vsel %vm414, %v408, -inf
        %v418 = vsel %vm414, %v409, -inf
        %v419 = vsel %vm414, %v410, -inf
        %v420 = vmax.f32 %v415, %v419
        %v421 = vsel %vm414, %v411, -inf
        %v422 = vmax.f32 %v416, %v421
        %v423 = vsel %vm414, %v412, -inf
        %v424 = vmax.f32 %v417, %v423
        %v425 = vsel %vm414, %v413, -inf
        %v426 = vmax.f32 %v418, %v425
        %v427 = vmax.f32 %v420, %v422
        %v428 = vmax.f32 %v424, %v426
        %v429 = vmax.f32 %v427, %v428
        %v430 = vrot.slane %v429, 4
        %v431 = vmax.f32 %v429, %v430
        %v432 = vrot.slane %v431, 2
        %v433 = vmax.f32 %v431, %v432
        %v434 = vrot.slane %v433, 1
        %v435 = vmax.f32 %v433, %v434
        %vm436 = vcmp.eq.f32.partialorder %v406, %v435
        %vm437 = vcmp.eq.f32.partialorder %v407, %v435
        %vm438 = vcmp.eq.f32.partialorder %v408, %v435
        %vm439 = vcmp.eq.f32.partialorder %v409, %v435
        %vm440 = vcmp.eq.f32.partialorder %v410, %v435
        %vm441 = vcmp.eq.f32.partialorder %v411, %v435
        %vm442 = vcmp.eq.f32.partialorder %v412, %v435
        %vm443 = vcmp.eq.f32.partialorder %v413, %v435
        %v444 = vsel %vm436, %v220, 64
        %v445 = vsel %vm437, %v221, 64
        %v446 = vsel %vm438, %v222, 64
        %v447 = vsel %vm439, %v223, 64
        %v448 = vsel %vm440, %v224, 64
        %v449 = vsel %vm441, %v225, 64
        %v450 = vsel %vm442, %v226, 64
        %v451 = vsel %vm443, %v227, 64
        %v452 = vsel %vm414, %v444, 2147483647
        %v453 = vsel %vm414, %v445, 2147483647
        %v454 = vsel %vm414, %v446, 2147483647
        %v455 = vsel %vm414, %v447, 2147483647
        %v456 = vsel %vm414, %v448, 2147483647
        %vm457 = vcmp.lt.s32.totalorder %v452, %v456
        %v458 = vsel %vm457, %v452, %v456
        %v459 = vsel %vm414, %v449, 2147483647
        %vm460 = vcmp.lt.s32.totalorder %v453, %v459
        %v461 = vsel %vm460, %v453, %v459
        %v462 = vsel %vm414, %v450, 2147483647
        %vm463 = vcmp.lt.s32.totalorder %v454, %v462
        %v464 = vsel %vm463, %v454, %v462
        %v465 = vsel %vm414, %v451, 2147483647
        %vm466 = vcmp.lt.s32.totalorder %v455, %v465
        %v467 = vsel %vm466, %v455, %v465
        %vm468 = vcmp.lt.s32.totalorder %v458, %v461
        %v469 = vsel %vm468, %v458, %v461
        %vm470 = vcmp.lt.s32.totalorder %v464, %v467
        %v471 = vsel %vm470, %v464, %v467
        %vm472 = vcmp.lt.s32.totalorder %v469, %v471
        %v473 = vsel %vm472, %v469, %v471
        %v474 = vrot.slane %v473, 4
        %vm475 = vcmp.lt.s32.totalorder %v473, %v474
        %v476 = vsel %vm475, %v473, %v474
        %v477 = vrot.slane %v476, 2
        %vm478 = vcmp.lt.s32.totalorder %v476, %v477
        %v479 = vsel %vm478, %v476, %v477
        %v480 = vrot.slane %v479, 1
        %vm481 = vcmp.lt.s32.totalorder %v479, %v480
        %v482 = vsel %vm481, %v479, %v480
        %vm483 = vcmask 57344
        %484 = vst.msk [vmem:[%s198] sm:$0x1] %vm483, %v482
        %vm485 = vcmp.eq.s32.totalorder %v220, %v482
        %vm486 = vcmp.eq.s32.totalorder %v221, %v482
        %vm487 = vcmp.eq.s32.totalorder %v222, %v482
        %vm488 = vcmp.eq.s32.totalorder %v223, %v482
        %vm489 = vcmp.eq.s32.totalorder %v224, %v482
        %vm490 = vcmp.eq.s32.totalorder %v225, %v482
        %vm491 = vcmp.eq.s32.totalorder %v226, %v482
        %vm492 = vcmp.eq.s32.totalorder %v227, %v482
        %v493 = vsel %vm485, 1, 0
        %v494 = vsel %vm486, 1, 0
        %v495 = vsel %vm487, 1, 0
        %v496 = vsel %vm488, 1, 0
        %v497 = vsel %vm489, 1, 0
        %v498 = vsel %vm490, 1, 0
        %v499 = vsel %vm491, 1, 0
        %v500 = vsel %vm492, 1, 0
        %v501 = vcvt.s32.f32 %v493
        %v502 = vcvt.s32.f32 %v494
        %v503 = vcvt.s32.f32 %v495
        %v504 = vcvt.s32.f32 %v496
        %v505 = vcvt.s32.f32 %v497
        %v506 = vcvt.s32.f32 %v498
        %v507 = vcvt.s32.f32 %v499
        %v508 = vcvt.s32.f32 %v500
        %509 = vxpose.xlu0.b32.start [1/16] %v228, 128
        %510 = vxpose.xlu0.b32.cont [2/16] %v229, 128
        %511 = vxpose.xlu0.b32.cont [3/16] %v230, 128
        %512 = vxpose.xlu0.b32.cont [4/16] %v231, 128
        %513 = vxpose.xlu0.b32.cont [5/16] %v232, 128
        %514 = vxpose.xlu0.b32.cont [6/16] %v233, 128
        %515 = vxpose.xlu0.b32.cont [7/16] %v234, 128
        %516 = vxpose.xlu0.b32.cont [8/16] %v235, 128
        %517 = vxpose.xlu0.b32.cont [9/16] 0.0, 128
        %518 = vxpose.xlu0.b32.cont [10/16] 0.0, 128
        %519 = vxpose.xlu0.b32.cont [11/16] 0.0, 128
        %520 = vxpose.xlu0.b32.cont [12/16] 0.0, 128
        %521 = vxpose.xlu0.b32.cont [13/16] 0.0, 128
        %522 = vxpose.xlu0.b32.cont [14/16] 0.0, 128
        %523 = vxpose.xlu0.b32.cont [15/16] 0.0, 128
        %524 = vxpose.xlu0.b32.end [16/16] 0.0, 128
        %v525 = vpop.trf.xlu0
        %v526 = vpop.trf.xlu0
        %v527 = vpop.trf.xlu0
        %v528 = vpop.trf.xlu0
        %v529 = vpop.trf.xlu0
        %v530 = vpop.trf.xlu0
        %v531 = vpop.trf.xlu0
        %v532 = vpop.trf.xlu0
        %v533 = vpop.trf.xlu0
        %v534 = vpop.trf.xlu0
        %v535 = vpop.trf.xlu0
        %v536 = vpop.trf.xlu0
        %v537 = vpop.trf.xlu0
        %v538 = vpop.trf.xlu0
        %v539 = vpop.trf.xlu0
        %v540 = vpop.trf.xlu0
        %vm541 = vcmask 523264
        %v543 = vsel %vm541, %v525, 0
        %v546 = vsel %vm541, %v526, 0
        %v549 = vsel %vm541, %v527, 0
        %v552 = vsel %vm541, %v528, 0
        %554 = vmatprep.subr.mxu0 0.0
        %v555 = vand.u32 %v501, 4294901760
        %556 = vmatpush1.msra.mxu0 %v555
        %557 = vmatprep.subr.mxu0 0.0
        %v558 = vand.u32 %v502, 4294901760
        %559 = vmatpush1.msra.mxu0 %v558
        %560 = vmatprep.subr.mxu0 0.0
        %v561 = vand.u32 %v503, 4294901760
        %562 = vmatpush1.msra.mxu0 %v561
        %563 = vmatprep.subr.mxu0 0.0
        %v564 = vand.u32 %v504, 4294901760
        %565 = vmatpush1.msra.mxu0 %v564
        %566 = vmatprep.subr.mxu0 0.0
        %v567 = vand.u32 %v505, 4294901760
        %568 = vmatpush1.msra.mxu0 %v567
        %569 = vmatprep.subr.mxu0 0.0
        %v570 = vand.u32 %v506, 4294901760
        %571 = vmatpush1.msra.mxu0 %v570
        %572 = vmatprep.subr.mxu0 0.0
        %v573 = vand.u32 %v507, 4294901760
        %574 = vmatpush1.msra.mxu0 %v573
        %575 = vmatprep.subr.mxu0 0.0
        %v576 = vand.u32 %v508, 4294901760
        %577 = vmatpush1.msra.mxu0 %v576
        %578 = vmatprep.subr.mxu0 0.0
        %579 = vmatpush1.msra.mxu0 0.0
        %580 = vmatprep.subr.mxu0 0.0
        %581 = vmatpush1.msra.mxu0 0.0
        %582 = vmatprep.subr.mxu0 0.0
        %583 = vmatpush1.msra.mxu0 0.0
        %584 = vmatprep.subr.mxu0 0.0
        %585 = vmatpush1.msra.mxu0 0.0
        %586 = vmatprep.subr.mxu0 0.0
        %587 = vmatpush1.msra.mxu0 0.0
        %588 = vmatprep.subr.mxu0 0.0
        %589 = vmatpush1.msra.mxu0 0.0
        %590 = vmatprep.subr.mxu0 0.0
        %591 = vmatpush1.msra.mxu0 0.0
        %592 = vmatprep.subr.mxu0 0.0
        %593 = vmatpush1.msra.mxu0 0.0
        %594 = vmatprep.subr.mxu0 0.0
        %595 = vmatpush1.msra.mxu0 0.0
        %596 = vmatprep.subr.mxu0 0.0
        %597 = vmatpush1.msra.mxu0 0.0
        %598 = vmatprep.subr.mxu0 0.0
        %599 = vmatpush1.msra.mxu0 0.0
        %600 = vmatprep.subr.mxu0 0.0
        %601 = vmatpush1.msra.mxu0 0.0
        %602 = vmatprep.subr.mxu0 0.0
        %603 = vmatpush1.msra.mxu0 0.0
        %604 = vmatprep.subr.mxu0 0.0
        %605 = vmatpush1.msra.mxu0 0.0
        %606 = vmatprep.subr.mxu0 0.0
        %607 = vmatpush1.msra.mxu0 0.0
        %608 = vmatprep.subr.mxu0 0.0
        %609 = vmatpush1.msra.mxu0 0.0
        %610 = vmatprep.subr.mxu0 0.0
        %611 = vmatpush1.msra.mxu0 0.0
        %612 = vmatprep.subr.mxu0 0.0
        %613 = vmatpush1.msra.mxu0 0.0
        %614 = vmatprep.subr.mxu0 0.0
        %615 = vmatpush1.msra.mxu0 0.0
        %616 = vmatprep.subr.mxu0 0.0
        %617 = vmatpush1.msra.mxu0 0.0
        %618 = vmatprep.subr.mxu0 0.0
        %619 = vmatpush1.msra.mxu0 0.0
        %620 = vmatprep.subr.mxu0 0.0
        %621 = vmatpush1.msra.mxu0 0.0
        %622 = vmatprep.subr.mxu0 0.0
        %623 = vmatpush1.msra.mxu0 0.0
        %624 = vmatprep.subr.mxu0 0.0
        %625 = vmatpush1.msra.mxu0 0.0
        %626 = vmatprep.mubr.f32.mxu0 0.0
        %v627 = vand.u32 %v543, 4294901760
        %v628 = vsub.f32 %v543, %v627
        %v629 = vand.u32 %v628, 4294901760
        %v630 = vsub.f32 %v628, %v629
        %v631 = vand.u32 %v630, 4294901760
        %632 = vmatmul.mubr.f32.gmra.mrb[0].mxu0 %v631
        %v633 = vpop.f32.mrb[0].mxu0
        %v634 = vadd.f32 0.0, %v633
        %v635 = vpop.f32.mrb[0].mxu0
        %636 = vmatprep.mubr.f32.mxu0 0.0
        %v637 = vand.u32 %v546, 4294901760
        %v638 = vsub.f32 %v546, %v637
        %v639 = vand.u32 %v638, 4294901760
        %v640 = vsub.f32 %v638, %v639
        %v641 = vand.u32 %v640, 4294901760
        %642 = vmatmul.mubr.f32.gmra.mrb[0].mxu0 %v641
        %v643 = vpop.f32.mrb[0].mxu0
        %v644 = vadd.f32 0.0, %v643
        %v645 = vpop.f32.mrb[0].mxu0
        %646 = vmatprep.mubr.f32.mxu0 0.0
        %v647 = vand.u32 %v549, 4294901760
        %v648 = vsub.f32 %v549, %v647
        %v649 = vand.u32 %v648, 4294901760
        %v650 = vsub.f32 %v648, %v649
        %v651 = vand.u32 %v650, 4294901760
        %652 = vmatmul.mubr.f32.gmra.mrb[0].mxu0 %v651
        %v653 = vpop.f32.mrb[0].mxu0
        %v654 = vadd.f32 0.0, %v653
        %v655 = vpop.f32.mrb[0].mxu0
        %656 = vmatprep.mubr.f32.mxu0 0.0
        %v657 = vand.u32 %v552, 4294901760
        %v658 = vsub.f32 %v552, %v657
        %v659 = vand.u32 %v658, 4294901760
        %v660 = vsub.f32 %v658, %v659
        %v661 = vand.u32 %v660, 4294901760
        %662 = vmatmul.mubr.f32.gmra.mrb[0].mxu0 %v661
        %v663 = vpop.f32.mrb[0].mxu0
        %v664 = vadd.f32 0.0, %v663
        %v665 = vpop.f32.mrb[0].mxu0
        %666 = vdwg.mxu0
        %667 = vmatprep.subr.mxu0 0.0
        %v668 = vand.u32 %v501, 4294901760
        %v669 = vsub.f32 %v501, %v668
        %v670 = vand.u32 %v669, 4294901760
        %v671 = vsub.f32 %v669, %v670
        %v672 = vand.u32 %v671, 4294901760
        %673 = vmatpush1.msra.mxu0 %v672
        %674 = vmatprep.subr.mxu0 0.0
        %v675 = vand.u32 %v502, 4294901760
        %v676 = vsub.f32 %v502, %v675
        %v677 = vand.u32 %v676, 4294901760
        %v678 = vsub.f32 %v676, %v677
        %v679 = vand.u32 %v678, 4294901760
        %680 = vmatpush1.msra.mxu0 %v679
        %681 = vmatprep.subr.mxu0 0.0
        %v682 = vand.u32 %v503, 4294901760
        %v683 = vsub.f32 %v503, %v682
        %v684 = vand.u32 %v683, 4294901760
        %v685 = vsub.f32 %v683, %v684
        %v686 = vand.u32 %v685, 4294901760
        %687 = vmatpush1.msra.mxu0 %v686
        %688 = vmatprep.subr.mxu0 0.0
        %v689 = vand.u32 %v504, 4294901760
        %v690 = vsub.f32 %v504, %v689
        %v691 = vand.u32 %v690, 4294901760
        %v692 = vsub.f32 %v690, %v691
        %v693 = vand.u32 %v692, 4294901760
        %694 = vmatpush1.msra.mxu0 %v693
        %695 = vmatprep.subr.mxu0 0.0
        %v696 = vand.u32 %v505, 4294901760
        %v697 = vsub.f32 %v505, %v696
        %v698 = vand.u32 %v697, 4294901760
        %v699 = vsub.f32 %v697, %v698
        %v700 = vand.u32 %v699, 4294901760
        %701 = vmatpush1.msra.mxu0 %v700
        %702 = vmatprep.subr.mxu0 0.0
        %v703 = vand.u32 %v506, 4294901760
        %v704 = vsub.f32 %v506, %v703
        %v705 = vand.u32 %v704, 4294901760
        %v706 = vsub.f32 %v704, %v705
        %v707 = vand.u32 %v706, 4294901760
        %708 = vmatpush1.msra.mxu0 %v707
        %709 = vmatprep.subr.mxu0 0.0
        %v710 = vand.u32 %v507, 4294901760
        %v711 = vsub.f32 %v507, %v710
        %v712 = vand.u32 %v711, 4294901760
        %v713 = vsub.f32 %v711, %v712
        %v714 = vand.u32 %v713, 4294901760
        %715 = vmatpush1.msra.mxu0 %v714
        %716 = vmatprep.subr.mxu0 0.0
        %v717 = vand.u32 %v508, 4294901760
        %v718 = vsub.f32 %v508, %v717
        %v719 = vand.u32 %v718, 4294901760
        %v720 = vsub.f32 %v718, %v719
        %v721 = vand.u32 %v720, 4294901760
        %722 = vmatpush1.msra.mxu0 %v721
        %723 = vmatprep.subr.mxu0 0.0
        %724 = vmatpush1.msra.mxu0 0.0
        %725 = vmatprep.subr.mxu0 0.0
        %726 = vmatpush1.msra.mxu0 0.0
        %727 = vmatprep.subr.mxu0 0.0
        %728 = vmatpush1.msra.mxu0 0.0
        %729 = vmatprep.subr.mxu0 0.0
        %730 = vmatpush1.msra.mxu0 0.0
        %731 = vmatprep.subr.mxu0 0.0
        %732 = vmatpush1.msra.mxu0 0.0
        %733 = vmatprep.subr.mxu0 0.0
        %734 = vmatpush1.msra.mxu0 0.0
        %735 = vmatprep.subr.mxu0 0.0
        %736 = vmatpush1.msra.mxu0 0.0
        %737 = vmatprep.subr.mxu0 0.0
        %738 = vmatpush1.msra.mxu0 0.0
        %739 = vmatprep.subr.mxu0 0.0
        %740 = vmatpush1.msra.mxu0 0.0
        %741 = vmatprep.subr.mxu0 0.0
        %742 = vmatpush1.msra.mxu0 0.0
        %743 = vmatprep.subr.mxu0 0.0
        %744 = vmatpush1.msra.mxu0 0.0
        %745 = vmatprep.subr.mxu0 0.0
        %746 = vmatpush1.msra.mxu0 0.0
        %747 = vmatprep.subr.mxu0 0.0
        %748 = vmatpush1.msra.mxu0 0.0
        %749 = vmatprep.subr.mxu0 0.0
        %750 = vmatpush1.msra.mxu0 0.0
        %751 = vmatprep.subr.mxu0 0.0
        %752 = vmatpush1.msra.mxu0 0.0
        %753 = vmatprep.subr.mxu0 0.0
        %754 = vmatpush1.msra.mxu0 0.0
        %755 = vmatprep.subr.mxu0 0.0
        %756 = vmatpush1.msra.mxu0 0.0
        %757 = vmatprep.subr.mxu0 0.0
        %758 = vmatpush1.msra.mxu0 0.0
        %759 = vmatprep.subr.mxu0 0.0
        %760 = vmatpush1.msra.mxu0 0.0
        %761 = vmatprep.subr.mxu0 0.0
        %762 = vmatpush1.msra.mxu0 0.0
        %763 = vmatprep.subr.mxu0 0.0
        %764 = vmatpush1.msra.mxu0 0.0
        %765 = vmatprep.subr.mxu0 0.0
        %766 = vmatpush1.msra.mxu0 0.0
        %767 = vmatprep.subr.mxu0 0.0
        %768 = vmatpush1.msra.mxu0 0.0
        %769 = vmatprep.subr.mxu0 0.0
        %770 = vmatpush1.msra.mxu0 0.0
        %771 = vmatprep.mubr.f32.mxu0 0.0
        %v772 = vand.u32 %v543, 4294901760
        %773 = vmatmul.mubr.f32.gmra.mrb[0].mxu0 %v772
        %v774 = vpop.f32.mrb[0].mxu0
        %v775 = vadd.f32 %v634, %v774
        %v776 = vpop.f32.mrb[0].mxu0
        %777 = vmatprep.mubr.f32.mxu0 0.0
        %v778 = vand.u32 %v546, 4294901760
        %779 = vmatmul.mubr.f32.gmra.mrb[0].mxu0 %v778
        %v780 = vpop.f32.mrb[0].mxu0
        %v781 = vadd.f32 %v644, %v780
        %v782 = vpop.f32.mrb[0].mxu0
        %783 = vmatprep.mubr.f32.mxu0 0.0
        %v784 = vand.u32 %v549, 4294901760
        %785 = vmatmul.mubr.f32.gmra.mrb[0].mxu0 %v784
        %v786 = vpop.f32.mrb[0].mxu0
        %v787 = vadd.f32 %v654, %v786
        %v788 = vpop.f32.mrb[0].mxu0
        %789 = vmatprep.mubr.f32.mxu0 0.0
        %v790 = vand.u32 %v552, 4294901760
        %791 = vmatmul.mubr.f32.gmra.mrb[0].mxu0 %v790
        %v792 = vpop.f32.mrb[0].mxu0
        %v793 = vadd.f32 %v664, %v792
        %v794 = vpop.f32.mrb[0].mxu0
        %795 = vdwg.mxu0
        %796 = vmatprep.subr.mxu0 0.0
        %v797 = vand.u32 %v501, 4294901760
        %v798 = vsub.f32 %v501, %v797
        %799 = vmatpush1.msra.mxu0 %v798
        %800 = vmatprep.subr.mxu0 0.0
        %v801 = vand.u32 %v502, 4294901760
        %v802 = vsub.f32 %v502, %v801
        %803 = vmatpush1.msra.mxu0 %v802
        %804 = vmatprep.subr.mxu0 0.0
        %v805 = vand.u32 %v503, 4294901760
        %v806 = vsub.f32 %v503, %v805
        %807 = vmatpush1.msra.mxu0 %v806
        %808 = vmatprep.subr.mxu0 0.0
        %v809 = vand.u32 %v504, 4294901760
        %v810 = vsub.f32 %v504, %v809
        %811 = vmatpush1.msra.mxu0 %v810
        %812 = vmatprep.subr.mxu0 0.0
        %v813 = vand.u32 %v505, 4294901760
        %v814 = vsub.f32 %v505, %v813
        %815 = vmatpush1.msra.mxu0 %v814
        %816 = vmatprep.subr.mxu0 0.0
        %v817 = vand.u32 %v506, 4294901760
        %v818 = vsub.f32 %v506, %v817
        %819 = vmatpush1.msra.mxu0 %v818
        %820 = vmatprep.subr.mxu0 0.0
        %v821 = vand.u32 %v507, 4294901760
        %v822 = vsub.f32 %v507, %v821
        %823 = vmatpush1.msra.mxu0 %v822
        %824 = vmatprep.subr.mxu0 0.0
        %v825 = vand.u32 %v508, 4294901760
        %v826 = vsub.f32 %v508, %v825
        %827 = vmatpush1.msra.mxu0 %v826
        %828 = vmatprep.subr.mxu0 0.0
        %829 = vmatpush1.msra.mxu0 0.0
        %830 = vmatprep.subr.mxu0 0.0
        %831 = vmatpush1.msra.mxu0 0.0
        %832 = vmatprep.subr.mxu0 0.0
        %833 = vmatpush1.msra.mxu0 0.0
        %834 = vmatprep.subr.mxu0 0.0
        %835 = vmatpush1.msra.mxu0 0.0
        %836 = vmatprep.subr.mxu0 0.0
        %837 = vmatpush1.msra.mxu0 0.0
        %838 = vmatprep.subr.mxu0 0.0
        %839 = vmatpush1.msra.mxu0 0.0
        %840 = vmatprep.subr.mxu0 0.0
        %841 = vmatpush1.msra.mxu0 0.0
        %842 = vmatprep.subr.mxu0 0.0
        %843 = vmatpush1.msra.mxu0 0.0
        %844 = vmatprep.subr.mxu0 0.0
        %845 = vmatpush1.msra.mxu0 0.0
        %846 = vmatprep.subr.mxu0 0.0
        %847 = vmatpush1.msra.mxu0 0.0
        %848 = vmatprep.subr.mxu0 0.0
        %849 = vmatpush1.msra.mxu0 0.0
        %850 = vmatprep.subr.mxu0 0.0
        %851 = vmatpush1.msra.mxu0 0.0
        %852 = vmatprep.subr.mxu0 0.0
        %853 = vmatpush1.msra.mxu0 0.0
        %854 = vmatprep.subr.mxu0 0.0
        %855 = vmatpush1.msra.mxu0 0.0
        %856 = vmatprep.subr.mxu0 0.0
        %857 = vmatpush1.msra.mxu0 0.0
        %858 = vmatprep.subr.mxu0 0.0
        %859 = vmatpush1.msra.mxu0 0.0
        %860 = vmatprep.subr.mxu0 0.0
        %861 = vmatpush1.msra.mxu0 0.0
        %862 = vmatprep.subr.mxu0 0.0
        %863 = vmatpush1.msra.mxu0 0.0
        %864 = vmatprep.subr.mxu0 0.0
        %865 = vmatpush1.msra.mxu0 0.0
        %866 = vmatprep.subr.mxu0 0.0
        %867 = vmatpush1.msra.mxu0 0.0
        %868 = vmatprep.subr.mxu0 0.0
        %869 = vmatpush1.msra.mxu0 0.0
        %870 = vmatprep.subr.mxu0 0.0
        %871 = vmatpush1.msra.mxu0 0.0
        %872 = vmatprep.subr.mxu0 0.0
        %873 = vmatpush1.msra.mxu0 0.0
        %874 = vmatprep.subr.mxu0 0.0
        %875 = vmatpush1.msra.mxu0 0.0
        %876 = vmatprep.mubr.f32.mxu0 0.0
        %v877 = vand.u32 %v543, 4294901760
        %v878 = vsub.f32 %v543, %v877
        %879 = vmatmul.mubr.f32.gmra.mrb[0].mxu0 %v878
        %v880 = vpop.f32.mrb[0].mxu0
        %v881 = vadd.f32 %v775, %v880
        %v882 = vpop.f32.mrb[0].mxu0
        %883 = vmatprep.mubr.f32.mxu0 0.0
        %v884 = vand.u32 %v546, 4294901760
        %v885 = vsub.f32 %v546, %v884
        %886 = vmatmul.mubr.f32.gmra.mrb[0].mxu0 %v885
        %v887 = vpop.f32.mrb[0].mxu0
        %v888 = vadd.f32 %v781, %v887
        %v889 = vpop.f32.mrb[0].mxu0
        %890 = vmatprep.mubr.f32.mxu0 0.0
        %v891 = vand.u32 %v549, 4294901760
        %v892 = vsub.f32 %v549, %v891
        %893 = vmatmul.mubr.f32.gmra.mrb[0].mxu0 %v892
        %v894 = vpop.f32.mrb[0].mxu0
        %v895 = vadd.f32 %v787, %v894
        %v896 = vpop.f32.mrb[0].mxu0
        %897 = vmatprep.mubr.f32.mxu0 0.0
        %v898 = vand.u32 %v552, 4294901760
        %v899 = vsub.f32 %v552, %v898
        %900 = vmatmul.mubr.f32.gmra.mrb[0].mxu0 %v899
        %v901 = vpop.f32.mrb[0].mxu0
        %v902 = vadd.f32 %v793, %v901
        %v903 = vpop.f32.mrb[0].mxu0
        %904 = vdwg.mxu0
        %905 = vmatprep.subr.mxu0 0.0
        %v906 = vand.u32 %v501, 4294901760
        %907 = vmatpush1.msra.mxu0 %v906
        %908 = vmatprep.subr.mxu0 0.0
        %v909 = vand.u32 %v502, 4294901760
        %910 = vmatpush1.msra.mxu0 %v909
        %911 = vmatprep.subr.mxu0 0.0
        %v912 = vand.u32 %v503, 4294901760
        %913 = vmatpush1.msra.mxu0 %v912
        %914 = vmatprep.subr.mxu0 0.0
        %v915 = vand.u32 %v504, 4294901760
        %916 = vmatpush1.msra.mxu0 %v915
        %917 = vmatprep.subr.mxu0 0.0
        %v918 = vand.u32 %v505, 4294901760
        %919 = vmatpush1.msra.mxu0 %v918
        %920 = vmatprep.subr.mxu0 0.0
        %v921 = vand.u32 %v506, 4294901760
        %922 = vmatpush1.msra.mxu0 %v921
        %923 = vmatprep.subr.mxu0 0.0
        %v924 = vand.u32 %v507, 4294901760
        %925 = vmatpush1.msra.mxu0 %v924
        %926 = vmatprep.subr.mxu0 0.0
        %v927 = vand.u32 %v508, 4294901760
        %928 = vmatpush1.msra.mxu0 %v927
        %929 = vmatprep.subr.mxu0 0.0
        %930 = vmatpush1.msra.mxu0 0.0
        %931 = vmatprep.subr.mxu0 0.0
        %932 = vmatpush1.msra.mxu0 0.0
        %933 = vmatprep.subr.mxu0 0.0
        %934 = vmatpush1.msra.mxu0 0.0
        %935 = vmatprep.subr.mxu0 0.0
        %936 = vmatpush1.msra.mxu0 0.0
        %937 = vmatprep.subr.mxu0 0.0
        %938 = vmatpush1.msra.mxu0 0.0
        %939 = vmatprep.subr.mxu0 0.0
        %940 = vmatpush1.msra.mxu0 0.0
        %941 = vmatprep.subr.mxu0 0.0
        %942 = vmatpush1.msra.mxu0 0.0
        %943 = vmatprep.subr.mxu0 0.0
        %944 = vmatpush1.msra.mxu0 0.0
        %945 = vmatprep.subr.mxu0 0.0
        %946 = vmatpush1.msra.mxu0 0.0
        %947 = vmatprep.subr.mxu0 0.0
        %948 = vmatpush1.msra.mxu0 0.0
        %949 = vmatprep.subr.mxu0 0.0
        %950 = vmatpush1.msra.mxu0 0.0
        %951 = vmatprep.subr.mxu0 0.0
        %952 = vmatpush1.msra.mxu0 0.0
        %953 = vmatprep.subr.mxu0 0.0
        %954 = vmatpush1.msra.mxu0 0.0
        %955 = vmatprep.subr.mxu0 0.0
        %956 = vmatpush1.msra.mxu0 0.0
        %957 = vmatprep.subr.mxu0 0.0
        %958 = vmatpush1.msra.mxu0 0.0
        %959 = vmatprep.subr.mxu0 0.0
        %960 = vmatpush1.msra.mxu0 0.0
        %961 = vmatprep.subr.mxu0 0.0
        %962 = vmatpush1.msra.mxu0 0.0
        %963 = vmatprep.subr.mxu0 0.0
        %964 = vmatpush1.msra.mxu0 0.0
        %965 = vmatprep.subr.mxu0 0.0
        %966 = vmatpush1.msra.mxu0 0.0
        %967 = vmatprep.subr.mxu0 0.0
        %968 = vmatpush1.msra.mxu0 0.0
        %969 = vmatprep.subr.mxu0 0.0
        %970 = vmatpush1.msra.mxu0 0.0
        %971 = vmatprep.subr.mxu0 0.0
        %972 = vmatpush1.msra.mxu0 0.0
        %973 = vmatprep.subr.mxu0 0.0
        %974 = vmatpush1.msra.mxu0 0.0
        %975 = vmatprep.subr.mxu0 0.0
        %976 = vmatpush1.msra.mxu0 0.0
        %977 = vmatprep.mubr.f32.mxu0 0.0
        %v978 = vand.u32 %v543, 4294901760
        %v979 = vsub.f32 %v543, %v978
        %v980 = vand.u32 %v979, 4294901760
        %981 = vmatmul.mubr.f32.gmra.mrb[0].mxu0 %v980
        %v982 = vpop.f32.mrb[0].mxu0
        %v983 = vadd.f32 %v881, %v982
        %v984 = vpop.f32.mrb[0].mxu0
        %985 = vmatprep.mubr.f32.mxu0 0.0
        %v986 = vand.u32 %v546, 4294901760
        %v987 = vsub.f32 %v546, %v986
        %v988 = vand.u32 %v987, 4294901760
        %989 = vmatmul.mubr.f32.gmra.mrb[0].mxu0 %v988
        %v990 = vpop.f32.mrb[0].mxu0
        %v991 = vadd.f32 %v888, %v990
        %v992 = vpop.f32.mrb[0].mxu0
        %993 = vmatprep.mubr.f32.mxu0 0.0
        %v994 = vand.u32 %v549, 4294901760
        %v995 = vsub.f32 %v549, %v994
        %v996 = vand.u32 %v995, 4294901760
        %997 = vmatmul.mubr.f32.gmra.mrb[0].mxu0 %v996
        %v998 = vpop.f32.mrb[0].mxu0
        %v999 = vadd.f32 %v895, %v998
        %v1000 = vpop.f32.mrb[0].mxu0
        %1001 = vmatprep.mubr.f32.mxu0 0.0
        %v1002 = vand.u32 %v552, 4294901760
        %v1003 = vsub.f32 %v552, %v1002
        %v1004 = vand.u32 %v1003, 4294901760
        %1005 = vmatmul.mubr.f32.gmra.mrb[0].mxu0 %v1004
        %v1006 = vpop.f32.mrb[0].mxu0
        %v1007 = vadd.f32 %v902, %v1006
        %v1008 = vpop.f32.mrb[0].mxu0
        %1009 = vdwg.mxu0
        %1010 = vmatprep.subr.mxu0 0.0
        %v1011 = vand.u32 %v501, 4294901760
        %v1012 = vsub.f32 %v501, %v1011
        %v1013 = vand.u32 %v1012, 4294901760
        %1014 = vmatpush1.msra.mxu0 %v1013
        %1015 = vmatprep.subr.mxu0 0.0
        %v1016 = vand.u32 %v502, 4294901760
        %v1017 = vsub.f32 %v502, %v1016
        %v1018 = vand.u32 %v1017, 4294901760
        %1019 = vmatpush1.msra.mxu0 %v1018
        %1020 = vmatprep.subr.mxu0 0.0
        %v1021 = vand.u32 %v503, 4294901760
        %v1022 = vsub.f32 %v503, %v1021
        %v1023 = vand.u32 %v1022, 4294901760
        %1024 = vmatpush1.msra.mxu0 %v1023
        %1025 = vmatprep.subr.mxu0 0.0
        %v1026 = vand.u32 %v504, 4294901760
        %v1027 = vsub.f32 %v504, %v1026
        %v1028 = vand.u32 %v1027, 4294901760
        %1029 = vmatpush1.msra.mxu0 %v1028
        %1030 = vmatprep.subr.mxu0 0.0
        %v1031 = vand.u32 %v505, 4294901760
        %v1032 = vsub.f32 %v505, %v1031
        %v1033 = vand.u32 %v1032, 4294901760
        %1034 = vmatpush1.msra.mxu0 %v1033
        %1035 = vmatprep.subr.mxu0 0.0
        %v1036 = vand.u32 %v506, 4294901760
        %v1037 = vsub.f32 %v506, %v1036
        %v1038 = vand.u32 %v1037, 4294901760
        %1039 = vmatpush1.msra.mxu0 %v1038
        %1040 = vmatprep.subr.mxu0 0.0
        %v1041 = vand.u32 %v507, 4294901760
        %v1042 = vsub.f32 %v507, %v1041
        %v1043 = vand.u32 %v1042, 4294901760
        %1044 = vmatpush1.msra.mxu0 %v1043
        %1045 = vmatprep.subr.mxu0 0.0
        %v1046 = vand.u32 %v508, 4294901760
        %v1047 = vsub.f32 %v508, %v1046
        %v1048 = vand.u32 %v1047, 4294901760
        %1049 = vmatpush1.msra.mxu0 %v1048
        %1050 = vmatprep.subr.mxu0 0.0
        %1051 = vmatpush1.msra.mxu0 0.0
        %1052 = vmatprep.subr.mxu0 0.0
        %1053 = vmatpush1.msra.mxu0 0.0
        %1054 = vmatprep.subr.mxu0 0.0
        %1055 = vmatpush1.msra.mxu0 0.0
        %1056 = vmatprep.subr.mxu0 0.0
        %1057 = vmatpush1.msra.mxu0 0.0
        %1058 = vmatprep.subr.mxu0 0.0
        %1059 = vmatpush1.msra.mxu0 0.0
        %1060 = vmatprep.subr.mxu0 0.0
        %1061 = vmatpush1.msra.mxu0 0.0
        %1062 = vmatprep.subr.mxu0 0.0
        %1063 = vmatpush1.msra.mxu0 0.0
        %1064 = vmatprep.subr.mxu0 0.0
        %1065 = vmatpush1.msra.mxu0 0.0
        %1066 = vmatprep.subr.mxu0 0.0
        %1067 = vmatpush1.msra.mxu0 0.0
        %1068 = vmatprep.subr.mxu0 0.0
        %1069 = vmatpush1.msra.mxu0 0.0
        %1070 = vmatprep.subr.mxu0 0.0
        %1071 = vmatpush1.msra.mxu0 0.0
        %1072 = vmatprep.subr.mxu0 0.0
        %1073 = vmatpush1.msra.mxu0 0.0
        %1074 = vmatprep.subr.mxu0 0.0
        %1075 = vmatpush1.msra.mxu0 0.0
        %1076 = vmatprep.subr.mxu0 0.0
        %1077 = vmatpush1.msra.mxu0 0.0
        %1078 = vmatprep.subr.mxu0 0.0
        %1079 = vmatpush1.msra.mxu0 0.0
        %1080 = vmatprep.subr.mxu0 0.0
        %1081 = vmatpush1.msra.mxu0 0.0
        %1082 = vmatprep.subr.mxu0 0.0
        %1083 = vmatpush1.msra.mxu0 0.0
        %1084 = vmatprep.subr.mxu0 0.0
        %1085 = vmatpush1.msra.mxu0 0.0
        %1086 = vmatprep.subr.mxu0 0.0
        %1087 = vmatpush1.msra.mxu0 0.0
        %1088 = vmatprep.subr.mxu0 0.0
        %1089 = vmatpush1.msra.mxu0 0.0
        %1090 = vmatprep.subr.mxu0 0.0
        %1091 = vmatpush1.msra.mxu0 0.0
        %1092 = vmatprep.subr.mxu0 0.0
        %1093 = vmatpush1.msra.mxu0 0.0
        %1094 = vmatprep.subr.mxu0 0.0
        %1095 = vmatpush1.msra.mxu0 0.0
        %1096 = vmatprep.subr.mxu0 0.0
        %1097 = vmatpush1.msra.mxu0 0.0
        %1098 = vmatprep.mubr.f32.mxu0 0.0
        %v1099 = vand.u32 %v543, 4294901760
        %1100 = vmatmul.mubr.f32.gmra.mrb[0].mxu0 %v1099
        %v1101 = vpop.f32.mrb[0].mxu0
        %v1102 = vadd.f32 %v983, %v1101
        %v1103 = vpop.f32.mrb[0].mxu0
        %1104 = vmatprep.mubr.f32.mxu0 0.0
        %v1105 = vand.u32 %v546, 4294901760
        %1106 = vmatmul.mubr.f32.gmra.mrb[0].mxu0 %v1105
        %v1107 = vpop.f32.mrb[0].mxu0
        %v1108 = vadd.f32 %v991, %v1107
        %v1109 = vpop.f32.mrb[0].mxu0
        %1110 = vmatprep.mubr.f32.mxu0 0.0
        %v1111 = vand.u32 %v549, 4294901760
        %1112 = vmatmul.mubr.f32.gmra.mrb[0].mxu0 %v1111
        %v1113 = vpop.f32.mrb[0].mxu0
        %v1114 = vadd.f32 %v999, %v1113
        %v1115 = vpop.f32.mrb[0].mxu0
        %1116 = vmatprep.mubr.f32.mxu0 0.0
        %v1117 = vand.u32 %v552, 4294901760
        %1118 = vmatmul.mubr.f32.gmra.mrb[0].mxu0 %v1117
        %v1119 = vpop.f32.mrb[0].mxu0
        %v1120 = vadd.f32 %v1007, %v1119
        %v1121 = vpop.f32.mrb[0].mxu0
        %1122 = vdwg.mxu0
        %1123 = vmatprep.subr.mxu0 0.0
        %v1124 = vand.u32 %v501, 4294901760
        %1125 = vmatpush1.msra.mxu0 %v1124
        %1126 = vmatprep.subr.mxu0 0.0
        %v1127 = vand.u32 %v502, 4294901760
        %1128 = vmatpush1.msra.mxu0 %v1127
        %1129 = vmatprep.subr.mxu0 0.0
        %v1130 = vand.u32 %v503, 4294901760
        %1131 = vmatpush1.msra.mxu0 %v1130
        %1132 = vmatprep.subr.mxu0 0.0
        %v1133 = vand.u32 %v504, 4294901760
        %1134 = vmatpush1.msra.mxu0 %v1133
        %1135 = vmatprep.subr.mxu0 0.0
        %v1136 = vand.u32 %v505, 4294901760
        %1137 = vmatpush1.msra.mxu0 %v1136
        %1138 = vmatprep.subr.mxu0 0.0
        %v1139 = vand.u32 %v506, 4294901760
        %1140 = vmatpush1.msra.mxu0 %v1139
        %1141 = vmatprep.subr.mxu0 0.0
        %v1142 = vand.u32 %v507, 4294901760
        %1143 = vmatpush1.msra.mxu0 %v1142
        %1144 = vmatprep.subr.mxu0 0.0
        %v1145 = vand.u32 %v508, 4294901760
        %1146 = vmatpush1.msra.mxu0 %v1145
        %1147 = vmatprep.subr.mxu0 0.0
        %1148 = vmatpush1.msra.mxu0 0.0
        %1149 = vmatprep.subr.mxu0 0.0
        %1150 = vmatpush1.msra.mxu0 0.0
        %1151 = vmatprep.subr.mxu0 0.0
        %1152 = vmatpush1.msra.mxu0 0.0
        %1153 = vmatprep.subr.mxu0 0.0
        %1154 = vmatpush1.msra.mxu0 0.0
        %1155 = vmatprep.subr.mxu0 0.0
        %1156 = vmatpush1.msra.mxu0 0.0
        %1157 = vmatprep.subr.mxu0 0.0
        %1158 = vmatpush1.msra.mxu0 0.0
        %1159 = vmatprep.subr.mxu0 0.0
        %1160 = vmatpush1.msra.mxu0 0.0
        %1161 = vmatprep.subr.mxu0 0.0
        %1162 = vmatpush1.msra.mxu0 0.0
        %1163 = vmatprep.subr.mxu0 0.0
        %1164 = vmatpush1.msra.mxu0 0.0
        %1165 = vmatprep.subr.mxu0 0.0
        %1166 = vmatpush1.msra.mxu0 0.0
        %1167 = vmatprep.subr.mxu0 0.0
        %1168 = vmatpush1.msra.mxu0 0.0
        %1169 = vmatprep.subr.mxu0 0.0
        %1170 = vmatpush1.msra.mxu0 0.0
        %1171 = vmatprep.subr.mxu0 0.0
        %1172 = vmatpush1.msra.mxu0 0.0
        %1173 = vmatprep.subr.mxu0 0.0
        %1174 = vmatpush1.msra.mxu0 0.0
        %1175 = vmatprep.subr.mxu0 0.0
        %1176 = vmatpush1.msra.mxu0 0.0
        %1177 = vmatprep.subr.mxu0 0.0
        %1178 = vmatpush1.msra.mxu0 0.0
        %1179 = vmatprep.subr.mxu0 0.0
        %1180 = vmatpush1.msra.mxu0 0.0
        %1181 = vmatprep.subr.mxu0 0.0
        %1182 = vmatpush1.msra.mxu0 0.0
        %1183 = vmatprep.subr.mxu0 0.0
        %1184 = vmatpush1.msra.mxu0 0.0
        %1185 = vmatprep.subr.mxu0 0.0
        %1186 = vmatpush1.msra.mxu0 0.0
        %1187 = vmatprep.subr.mxu0 0.0
        %1188 = vmatpush1.msra.mxu0 0.0
        %1189 = vmatprep.subr.mxu0 0.0
        %1190 = vmatpush1.msra.mxu0 0.0
        %1191 = vmatprep.subr.mxu0 0.0
        %1192 = vmatpush1.msra.mxu0 0.0
        %1193 = vmatprep.subr.mxu0 0.0
        %1194 = vmatpush1.msra.mxu0 0.0
        %1195 = vmatprep.mubr.f32.mxu0 0.0
        %v1196 = vand.u32 %v543, 4294901760
        %1197 = vmatmul.mubr.f32.gmra.mrb[0].mxu0 %v1196
        %v1198 = vpop.f32.mrb[0].mxu0
        %v1199 = vadd.f32 %v1102, %v1198
        %v1200 = vpop.f32.mrb[0].mxu0
        %1201 = vmatprep.mubr.f32.mxu0 0.0
        %v1202 = vand.u32 %v546, 4294901760
        %1203 = vmatmul.mubr.f32.gmra.mrb[0].mxu0 %v1202
        %v1204 = vpop.f32.mrb[0].mxu0
        %v1205 = vadd.f32 %v1108, %v1204
        %v1206 = vpop.f32.mrb[0].mxu0
        %1207 = vmatprep.mubr.f32.mxu0 0.0
        %v1208 = vand.u32 %v549, 4294901760
        %1209 = vmatmul.mubr.f32.gmra.mrb[0].mxu0 %v1208
        %v1210 = vpop.f32.mrb[0].mxu0
        %v1211 = vadd.f32 %v1114, %v1210
        %v1212 = vpop.f32.mrb[0].mxu0
        %1213 = vmatprep.mubr.f32.mxu0 0.0
        %v1214 = vand.u32 %v552, 4294901760
        %1215 = vmatmul.mubr.f32.gmra.mrb[0].mxu0 %v1214
        %v1216 = vpop.f32.mrb[0].mxu0
        %v1217 = vadd.f32 %v1120, %v1216
        %v1218 = vpop.f32.mrb[0].mxu0
        %1219 = vdwg.mxu0
        %v1220 = vsub.f32 %v215, %v1199
        %v1221 = vsub.f32 %v216, %v1205
        %v1222 = vsub.f32 %v217, %v1211
        %v1223 = vsub.f32 %v218, %v1217
        %s1224 = scalar_lea.vmem %s1, 64
        %v1225 = vld [vmem:[%s1224] sm:$0xff]
        %v1226 = vld [vmem:[%s1224 + $0x8] sm:$0xff]
        %v1227 = vld [vmem:[%s1224 + $0x10] sm:$0xff]
        %v1228 = vld [vmem:[%s1224 + $0x18] sm:$0xff]
        %v1229 = vld [vmem:[%s1224 + $0x20] sm:$0xff]
        %v1230 = vld [vmem:[%s1224 + $0x28] sm:$0xff]
        %v1231 = vld [vmem:[%s1224 + $0x30] sm:$0xff]
        %v1232 = vld [vmem:[%s1224 + $0x38] sm:$0xff]
        %v1233 = vmul.f32 %v1225, %v1225
        %v1234 = vmul.f32 %v1226, %v1226
        %v1235 = vmul.f32 %v1227, %v1227
        %v1236 = vmul.f32 %v1228, %v1228
        %v1237 = vmul.f32 %v1229, %v1229
        %v1238 = vmul.f32 %v1230, %v1230
        %v1239 = vmul.f32 %v1231, %v1231
        %v1240 = vmul.f32 %v1232, %v1232
        %v1241 = vsel %vm244, %v1233, 0.0
        %1242 = vadd.xlane.f32.xlu0 %v1241
        %v1243 = vpop.xlane.xlu0 %1242
        %v1244 = vsel %vm244, %v1234, 0.0
        %1245 = vadd.xlane.f32.xlu0 %v1244
        %v1246 = vpop.xlane.xlu0 %1245
        %v1247 = vsel %vm244, %v1235, 0.0
        %1248 = vadd.xlane.f32.xlu0 %v1247
        %v1249 = vpop.xlane.xlu0 %1248
        %v1250 = vsel %vm244, %v1236, 0.0
        %1251 = vadd.xlane.f32.xlu0 %v1250
        %v1252 = vpop.xlane.xlu0 %1251
        %v1253 = vsel %vm244, %v1237, 0.0
        %1254 = vadd.xlane.f32.xlu0 %v1253
        %v1255 = vpop.xlane.xlu0 %1254
        %v1256 = vsel %vm244, %v1238, 0.0
        %1257 = vadd.xlane.f32.xlu0 %v1256
        %v1258 = vpop.xlane.xlu0 %1257
        %v1259 = vsel %vm244, %v1239, 0.0
        %1260 = vadd.xlane.f32.xlu0 %v1259
        %v1261 = vpop.xlane.xlu0 %1260
        %v1262 = vsel %vm244, %v1240, 0.0
        %1263 = vadd.xlane.f32.xlu0 %v1262
        %v1264 = vpop.xlane.xlu0 %1263
        %v1265 = vmul.f32 %v1243, 0.5
        %v1266 = vmul.f32 %v1246, 0.5
        %v1267 = vmul.f32 %v1249, 0.5
        %v1268 = vmul.f32 %v1252, 0.5
        %v1269 = vmul.f32 %v1255, 0.5
        %v1270 = vmul.f32 %v1258, 0.5
        %v1271 = vmul.f32 %v1261, 0.5
        %v1272 = vmul.f32 %v1264, 0.5
        %v1274 = vsel %vm244, %v1225, 0
        %v1277 = vsel %vm244, %v1226, 0
        %v1280 = vsel %vm244, %v1227, 0
        %v1283 = vsel %vm244, %v1228, 0
        %v1286 = vsel %vm244, %v1229, 0
        %v1289 = vsel %vm244, %v1230, 0
        %v1292 = vsel %vm244, %v1231, 0
        %v1295 = vsel %vm244, %v1232, 0
        %1297 = vmatprep.subr.mxu0 0.0
        %1298 = vmatpush1.msra.mxu0 %v1220
        %1299 = vmatprep.subr.mxu0 0.0
        %1300 = vmatpush1.msra.mxu0 %v1221
        %1301 = vmatprep.subr.mxu0 0.0
        %1302 = vmatpush1.msra.mxu0 %v1222
        %1303 = vmatprep.subr.mxu0 0.0
        %1304 = vmatpush1.msra.mxu0 %v1223
        %1305 = vmatprep.subr.mxu0 0.0
        %1306 = vmatpush1.msra.mxu0 0.0
        %1307 = vmatprep.subr.mxu0 0.0
        %1308 = vmatpush1.msra.mxu0 0.0
        %1309 = vmatprep.subr.mxu0 0.0
        %1310 = vmatpush1.msra.mxu0 0.0
        %1311 = vmatprep.subr.mxu0 0.0
        %1312 = vmatpush1.msra.mxu0 0.0
        %1313 = vmatprep.subr.mxu0 0.0
        %1314 = vmatpush1.msra.mxu0 0.0
        %1315 = vmatprep.subr.mxu0 0.0
        %1316 = vmatpush1.msra.mxu0 0.0
        %1317 = vmatprep.subr.mxu0 0.0
        %1318 = vmatpush1.msra.mxu0 0.0
        %1319 = vmatprep.subr.mxu0 0.0
        %1320 = vmatpush1.msra.mxu0 0.0
        %1321 = vmatprep.subr.mxu0 0.0
        %1322 = vmatpush1.msra.mxu0 0.0
        %1323 = vmatprep.subr.mxu0 0.0
        %1324 = vmatpush1.msra.mxu0 0.0
        %1325 = vmatprep.subr.mxu0 0.0
        %1326 = vmatpush1.msra.mxu0 0.0
        %1327 = vmatprep.subr.mxu0 0.0
        %1328 = vmatpush1.msra.mxu0 0.0
        %1329 = vmatprep.subr.mxu0 0.0
        %1330 = vmatpush1.msra.mxu0 0.0
        %1331 = vmatprep.subr.mxu0 0.0
        %1332 = vmatpush1.msra.mxu0 0.0
        %1333 = vmatprep.subr.mxu0 0.0
        %1334 = vmatpush1.msra.mxu0 0.0
        %1335 = vmatprep.subr.mxu0 0.0
        %1336 = vmatpush1.msra.mxu0 0.0
        %1337 = vmatprep.subr.mxu0 0.0
        %1338 = vmatpush1.msra.mxu0 0.0
        %1339 = vmatprep.subr.mxu0 0.0
        %1340 = vmatpush1.msra.mxu0 0.0
        %1341 = vmatprep.subr.mxu0 0.0
        %1342 = vmatpush1.msra.mxu0 0.0
        %1343 = vmatprep.subr.mxu0 0.0
        %1344 = vmatpush1.msra.mxu0 0.0
        %1345 = vmatprep.subr.mxu0 0.0
        %1346 = vmatpush1.msra.mxu0 0.0
        %1347 = vmatprep.subr.mxu0 0.0
        %1348 = vmatpush1.msra.mxu0 0.0
        %1349 = vmatprep.subr.mxu0 0.0
        %1350 = vmatpush1.msra.mxu0 0.0
        %1351 = vmatprep.subr.mxu0 0.0
        %1352 = vmatpush1.msra.mxu0 0.0
        %1353 = vmatprep.subr.mxu0 0.0
        %1354 = vmatpush1.msra.mxu0 0.0
        %1355 = vmatprep.subr.mxu0 0.0
        %1356 = vmatpush1.msra.mxu0 0.0
        %1357 = vmatprep.subr.mxu0 0.0
        %1358 = vmatpush1.msra.mxu0 0.0
        %1359 = vmatprep.subr.mxu0 0.0
        %1360 = vmatpush1.msra.mxu0 0.0
        %1361 = vmatprep.mubr.f32.mxu0 0.0
        %1362 = vmatmul.mubr.f32.gmra.mrb[0].mxu0 %v1274
        %v1363 = vpop.f32.mrb[0].mxu0
        %v1364 = vadd.f32 0.0, %v1363
        %v1365 = vpop.f32.mrb[0].mxu0
        %1366 = vmatprep.mubr.f32.mxu0 0.0
        %1367 = vmatmul.mubr.f32.gmra.mrb[0].mxu0 %v1277
        %v1368 = vpop.f32.mrb[0].mxu0
        %v1369 = vadd.f32 0.0, %v1368
        %v1370 = vpop.f32.mrb[0].mxu0
        %1371 = vmatprep.mubr.f32.mxu0 0.0
        %1372 = vmatmul.mubr.f32.gmra.mrb[0].mxu0 %v1280
        %v1373 = vpop.f32.mrb[0].mxu0
        %v1374 = vadd.f32 0.0, %v1373
        %v1375 = vpop.f32.mrb[0].mxu0
        %1376 = vmatprep.mubr.f32.mxu0 0.0
        %1377 = vmatmul.mubr.f32.gmra.mrb[0].mxu0 %v1283
        %v1378 = vpop.f32.mrb[0].mxu0
        %v1379 = vadd.f32 0.0, %v1378
        %v1380 = vpop.f32.mrb[0].mxu0
        %1381 = vmatprep.mubr.f32.mxu0 0.0
        %1382 = vmatmul.mubr.f32.gmra.mrb[0].mxu0 %v1286
        %v1383 = vpop.f32.mrb[0].mxu0
        %v1384 = vadd.f32 0.0, %v1383
        %v1385 = vpop.f32.mrb[0].mxu0
        %1386 = vmatprep.mubr.f32.mxu0 0.0
        %1387 = vmatmul.mubr.f32.gmra.mrb[0].mxu0 %v1289
        %v1388 = vpop.f32.mrb[0].mxu0
        %v1389 = vadd.f32 0.0, %v1388
        %v1390 = vpop.f32.mrb[0].mxu0
        %1391 = vmatprep.mubr.f32.mxu0 0.0
        %1392 = vmatmul.mubr.f32.gmra.mrb[0].mxu0 %v1292
        %v1393 = vpop.f32.mrb[0].mxu0
        %v1394 = vadd.f32 0.0, %v1393
        %v1395 = vpop.f32.mrb[0].mxu0
        %1396 = vmatprep.mubr.f32.mxu0 0.0
        %1397 = vmatmul.mubr.f32.gmra.mrb[0].mxu0 %v1295
        %v1398 = vpop.f32.mrb[0].mxu0
        %v1399 = vadd.f32 0.0, %v1398
        %v1400 = vpop.f32.mrb[0].mxu0
        %1401 = vdwg.mxu0
        %v1402 = vsub.f32 %v1364, %v1265
        %v1403 = vsub.f32 %v1369, %v1266
        %v1404 = vsub.f32 %v1374, %v1267
        %v1405 = vsub.f32 %v1379, %v1268
        %v1406 = vsub.f32 %v1384, %v1269
        %v1407 = vsub.f32 %v1389, %v1270
        %v1408 = vsub.f32 %v1394, %v1271
        %v1409 = vsub.f32 %v1399, %v1272
        %v1410 = vsel %vm414, %v1402, -inf
        %v1411 = vsel %vm414, %v1403, -inf
        %v1412 = vsel %vm414, %v1404, -inf
        %v1413 = vsel %vm414, %v1405, -inf
        %v1414 = vsel %vm414, %v1406, -inf
        %v1415 = vmax.f32 %v1410, %v1414
        %v1416 = vsel %vm414, %v1407, -inf
        %v1417 = vmax.f32 %v1411, %v1416
        %v1418 = vsel %vm414, %v1408, -inf
        %v1419 = vmax.f32 %v1412, %v1418
        %v1420 = vsel %vm414, %v1409, -inf
        %v1421 = vmax.f32 %v1413, %v1420
        %v1422 = vmax.f32 %v1415, %v1417
        %v1423 = vmax.f32 %v1419, %v1421
        %v1424 = vmax.f32 %v1422, %v1423
        %v1425 = vrot.slane %v1424, 4
        %v1426 = vmax.f32 %v1424, %v1425
        %v1427 = vrot.slane %v1426, 2
        %v1428 = vmax.f32 %v1426, %v1427
        %v1429 = vrot.slane %v1428, 1
        %v1430 = vmax.f32 %v1428, %v1429
        %vm1431 = vcmp.eq.f32.partialorder %v1402, %v1430
        %vm1432 = vcmp.eq.f32.partialorder %v1403, %v1430
        %vm1433 = vcmp.eq.f32.partialorder %v1404, %v1430
        %vm1434 = vcmp.eq.f32.partialorder %v1405, %v1430
        %vm1435 = vcmp.eq.f32.partialorder %v1406, %v1430
        %vm1436 = vcmp.eq.f32.partialorder %v1407, %v1430
        %vm1437 = vcmp.eq.f32.partialorder %v1408, %v1430
        %vm1438 = vcmp.eq.f32.partialorder %v1409, %v1430
        %v1439 = vsel %vm1431, %v220, 64
        %v1440 = vsel %vm1432, %v221, 64
        %v1441 = vsel %vm1433, %v222, 64
        %v1442 = vsel %vm1434, %v223, 64
        %v1443 = vsel %vm1435, %v224, 64
        %v1444 = vsel %vm1436, %v225, 64
        %v1445 = vsel %vm1437, %v226, 64
        %v1446 = vsel %vm1438, %v227, 64
        %v1447 = vsel %vm414, %v1439, 2147483647
        %v1448 = vsel %vm414, %v1440, 2147483647
        %v1449 = vsel %vm414, %v1441, 2147483647
        %v1450 = vsel %vm414, %v1442, 2147483647
        %v1451 = vsel %vm414, %v1443, 2147483647
        %vm1452 = vcmp.lt.s32.totalorder %v1447, %v1451
        %v1453 = vsel %vm1452, %v1447, %v1451
        %v1454 = vsel %vm414, %v1444, 2147483647
        %vm1455 = vcmp.lt.s32.totalorder %v1448, %v1454
        %v1456 = vsel %vm1455, %v1448, %v1454
        %v1457 = vsel %vm414, %v1445, 2147483647
        %vm1458 = vcmp.lt.s32.totalorder %v1449, %v1457
        %v1459 = vsel %vm1458, %v1449, %v1457
        %v1460 = vsel %vm414, %v1446, 2147483647
        %vm1461 = vcmp.lt.s32.totalorder %v1450, %v1460
        %v1462 = vsel %vm1461, %v1450, %v1460
        %vm1463 = vcmp.lt.s32.totalorder %v1453, %v1456
        %v1464 = vsel %vm1463, %v1453, %v1456
        %vm1465 = vcmp.lt.s32.totalorder %v1459, %v1462
        %v1466 = vsel %vm1465, %v1459, %v1462
        %vm1467 = vcmp.lt.s32.totalorder %v1464, %v1466
        %v1468 = vsel %vm1467, %v1464, %v1466
        %v1469 = vrot.slane %v1468, 4
        %vm1470 = vcmp.lt.s32.totalorder %v1468, %v1469
        %v1471 = vsel %vm1470, %v1468, %v1469
        %v1472 = vrot.slane %v1471, 2
        %vm1473 = vcmp.lt.s32.totalorder %v1471, %v1472
        %v1474 = vsel %vm1473, %v1471, %v1472
        %v1475 = vrot.slane %v1474, 1
        %vm1476 = vcmp.lt.s32.totalorder %v1474, %v1475
        %v1477 = vsel %vm1476, %v1474, %v1475
        %1478 = vst.msk [vmem:[%s198 + $0x1] sm:$0x1] %vm483, %v1477
        %vm1479 = vcmp.eq.s32.totalorder %v220, %v1477
        %vm1480 = vcmp.eq.s32.totalorder %v221, %v1477
        %vm1481 = vcmp.eq.s32.totalorder %v222, %v1477
        %vm1482 = vcmp.eq.s32.totalorder %v223, %v1477
        %vm1483 = vcmp.eq.s32.totalorder %v224, %v1477
        %vm1484 = vcmp.eq.s32.totalorder %v225, %v1477
        %vm1485 = vcmp.eq.s32.totalorder %v226, %v1477
        %vm1486 = vcmp.eq.s32.totalorder %v227, %v1477
        %v1487 = vsel %vm1479, 1, 0
        %v1488 = vsel %vm1480, 1, 0
        %v1489 = vsel %vm1481, 1, 0
        %v1490 = vsel %vm1482, 1, 0
        %v1491 = vsel %vm1483, 1, 0
        %v1492 = vsel %vm1484, 1, 0
        %v1493 = vsel %vm1485, 1, 0
        %v1494 = vsel %vm1486, 1, 0
        %v1495 = vcvt.s32.f32 %v1487
        %v1496 = vcvt.s32.f32 %v1488
        %v1497 = vcvt.s32.f32 %v1489
        %v1498 = vcvt.s32.f32 %v1490
        %v1499 = vcvt.s32.f32 %v1491
        %v1500 = vcvt.s32.f32 %v1492
        %v1501 = vcvt.s32.f32 %v1493
        %v1502 = vcvt.s32.f32 %v1494
        %1503 = vxpose.xlu0.b32.start [1/16] %v1225, 128
        %1504 = vxpose.xlu0.b32.cont [2/16] %v1226, 128
        %1505 = vxpose.xlu0.b32.cont [3/16] %v1227, 128
        %1506 = vxpose.xlu0.b32.cont [4/16] %v1228, 128
        %1507 = vxpose.xlu0.b32.cont [5/16] %v1229, 128
        %1508 = vxpose.xlu0.b32.cont [6/16] %v1230, 128
        %1509 = vxpose.xlu0.b32.cont [7/16] %v1231, 128
        %1510 = vxpose.xlu0.b32.cont [8/16] %v1232, 128
        %1511 = vxpose.xlu0.b32.cont [9/16] 0.0, 128
        %1512 = vxpose.xlu0.b32.cont [10/16] 0.0, 128
        %1513 = vxpose.xlu0.b32.cont [11/16] 0.0, 128
        %1514 = vxpose.xlu0.b32.cont [12/16] 0.0, 128
        %1515 = vxpose.xlu0.b32.cont [13/16] 0.0, 128
        %1516 = vxpose.xlu0.b32.cont [14/16] 0.0, 128
        %1517 = vxpose.xlu0.b32.cont [15/16] 0.0, 128
        %1518 = vxpose.xlu0.b32.end [16/16] 0.0, 128
        %v1519 = vpop.trf.xlu0
        %v1520 = vpop.trf.xlu0
        %v1521 = vpop.trf.xlu0
        %v1522 = vpop.trf.xlu0
        %v1523 = vpop.trf.xlu0
        %v1524 = vpop.trf.xlu0
        %v1525 = vpop.trf.xlu0
        %v1526 = vpop.trf.xlu0
        %v1527 = vpop.trf.xlu0
        %v1528 = vpop.trf.xlu0
        %v1529 = vpop.trf.xlu0
        %v1530 = vpop.trf.xlu0
        %v1531 = vpop.trf.xlu0
        %v1532 = vpop.trf.xlu0
        %v1533 = vpop.trf.xlu0
        %v1534 = vpop.trf.xlu0
        %v1536 = vsel %vm541, %v1519, 0
        %v1539 = vsel %vm541, %v1520, 0
        %v1542 = vsel %vm541, %v1521, 0
        %v1545 = vsel %vm541, %v1522, 0
        %1547 = vmatprep.subr.mxu0 0.0
        %v1548 = vand.u32 %v1495, 4294901760
        %1549 = vmatpush1.msra.mxu0 %v1548
        %1550 = vmatprep.subr.mxu0 0.0
        %v1551 = vand.u32 %v1496, 4294901760
        %1552 = vmatpush1.msra.mxu0 %v1551
        %1553 = vmatprep.subr.mxu0 0.0
        %v1554 = vand.u32 %v1497, 4294901760
        %1555 = vmatpush1.msra.mxu0 %v1554
        %1556 = vmatprep.subr.mxu0 0.0
        %v1557 = vand.u32 %v1498, 4294901760
        %1558 = vmatpush1.msra.mxu0 %v1557
        %1559 = vmatprep.subr.mxu0 0.0
        %v1560 = vand.u32 %v1499, 4294901760
        %1561 = vmatpush1.msra.mxu0 %v1560
        %1562 = vmatprep.subr.mxu0 0.0
        %v1563 = vand.u32 %v1500, 4294901760
        %1564 = vmatpush1.msra.mxu0 %v1563
        %1565 = vmatprep.subr.mxu0 0.0
        %v1566 = vand.u32 %v1501, 4294901760
        %1567 = vmatpush1.msra.mxu0 %v1566
        %1568 = vmatprep.subr.mxu0 0.0
        %v1569 = vand.u32 %v1502, 4294901760
        %1570 = vmatpush1.msra.mxu0 %v1569
        %1571 = vmatprep.subr.mxu0 0.0
        %1572 = vmatpush1.msra.mxu0 0.0
        %1573 = vmatprep.subr.mxu0 0.0
        %1574 = vmatpush1.msra.mxu0 0.0
        %1575 = vmatprep.subr.mxu0 0.0
        %1576 = vmatpush1.msra.mxu0 0.0
        %1577 = vmatprep.subr.mxu0 0.0
        %1578 = vmatpush1.msra.mxu0 0.0
        %1579 = vmatprep.subr.mxu0 0.0
        %1580 = vmatpush1.msra.mxu0 0.0
        %1581 = vmatprep.subr.mxu0 0.0
        %1582 = vmatpush1.msra.mxu0 0.0
        %1583 = vmatprep.subr.mxu0 0.0
        %1584 = vmatpush1.msra.mxu0 0.0
        %1585 = vmatprep.subr.mxu0 0.0
        %1586 = vmatpush1.msra.mxu0 0.0
        %1587 = vmatprep.subr.mxu0 0.0
        %1588 = vmatpush1.msra.mxu0 0.0
        %1589 = vmatprep.subr.mxu0 0.0
        %1590 = vmatpush1.msra.mxu0 0.0
        %1591 = vmatprep.subr.mxu0 0.0
        %1592 = vmatpush1.msra.mxu0 0.0
        %1593 = vmatprep.subr.mxu0 0.0
        %1594 = vmatpush1.msra.mxu0 0.0
        %1595 = vmatprep.subr.mxu0 0.0
        %1596 = vmatpush1.msra.mxu0 0.0
        %1597 = vmatprep.subr.mxu0 0.0
        %1598 = vmatpush1.msra.mxu0 0.0
        %1599 = vmatprep.subr.mxu0 0.0
        %1600 = vmatpush1.msra.mxu0 0.0
        %1601 = vmatprep.subr.mxu0 0.0
        %1602 = vmatpush1.msra.mxu0 0.0
        %1603 = vmatprep.subr.mxu0 0.0
        %1604 = vmatpush1.msra.mxu0 0.0
        %1605 = vmatprep.subr.mxu0 0.0
        %1606 = vmatpush1.msra.mxu0 0.0
        %1607 = vmatprep.subr.mxu0 0.0
        %1608 = vmatpush1.msra.mxu0 0.0
        %1609 = vmatprep.subr.mxu0 0.0
        %1610 = vmatpush1.msra.mxu0 0.0
        %1611 = vmatprep.subr.mxu0 0.0
        %1612 = vmatpush1.msra.mxu0 0.0
        %1613 = vmatprep.subr.mxu0 0.0
        %1614 = vmatpush1.msra.mxu0 0.0
        %1615 = vmatprep.subr.mxu0 0.0
        %1616 = vmatpush1.msra.mxu0 0.0
        %1617 = vmatprep.subr.mxu0 0.0
        %1618 = vmatpush1.msra.mxu0 0.0
        %1619 = vmatprep.mubr.f32.mxu0 0.0
        %v1620 = vand.u32 %v1536, 4294901760
        %v1621 = vsub.f32 %v1536, %v1620
        %v1622 = vand.u32 %v1621, 4294901760
        %v1623 = vsub.f32 %v1621, %v1622
        %v1624 = vand.u32 %v1623, 4294901760
        %1625 = vmatmul.mubr.f32.gmra.mrb[0].mxu0 %v1624
        %v1626 = vpop.f32.mrb[0].mxu0
        %v1627 = vadd.f32 0.0, %v1626
        %v1628 = vpop.f32.mrb[0].mxu0
        %1629 = vmatprep.mubr.f32.mxu0 0.0
        %v1630 = vand.u32 %v1539, 4294901760
        %v1631 = vsub.f32 %v1539, %v1630
        %v1632 = vand.u32 %v1631, 4294901760
        %v1633 = vsub.f32 %v1631, %v1632
        %v1634 = vand.u32 %v1633, 4294901760
        %1635 = vmatmul.mubr.f32.gmra.mrb[0].mxu0 %v1634
        %v1636 = vpop.f32.mrb[0].mxu0
        %v1637 = vadd.f32 0.0, %v1636
        %v1638 = vpop.f32.mrb[0].mxu0
        %1639 = vmatprep.mubr.f32.mxu0 0.0
        %v1640 = vand.u32 %v1542, 4294901760
        %v1641 = vsub.f32 %v1542, %v1640
        %v1642 = vand.u32 %v1641, 4294901760
        %v1643 = vsub.f32 %v1641, %v1642
        %v1644 = vand.u32 %v1643, 4294901760
        %1645 = vmatmul.mubr.f32.gmra.mrb[0].mxu0 %v1644
        %v1646 = vpop.f32.mrb[0].mxu0
        %v1647 = vadd.f32 0.0, %v1646
        %v1648 = vpop.f32.mrb[0].mxu0
        %1649 = vmatprep.mubr.f32.mxu0 0.0
        %v1650 = vand.u32 %v1545, 4294901760
        %v1651 = vsub.f32 %v1545, %v1650
        %v1652 = vand.u32 %v1651, 4294901760
        %v1653 = vsub.f32 %v1651, %v1652
        %v1654 = vand.u32 %v1653, 4294901760
        %1655 = vmatmul.mubr.f32.gmra.mrb[0].mxu0 %v1654
        %v1656 = vpop.f32.mrb[0].mxu0
        %v1657 = vadd.f32 0.0, %v1656
        %v1658 = vpop.f32.mrb[0].mxu0
        %1659 = vdwg.mxu0
        %1660 = vmatprep.subr.mxu0 0.0
        %v1661 = vand.u32 %v1495, 4294901760
        %v1662 = vsub.f32 %v1495, %v1661
        %v1663 = vand.u32 %v1662, 4294901760
        %v1664 = vsub.f32 %v1662, %v1663
        %v1665 = vand.u32 %v1664, 4294901760
        %1666 = vmatpush1.msra.mxu0 %v1665
        %1667 = vmatprep.subr.mxu0 0.0
        %v1668 = vand.u32 %v1496, 4294901760
        %v1669 = vsub.f32 %v1496, %v1668
        %v1670 = vand.u32 %v1669, 4294901760
        %v1671 = vsub.f32 %v1669, %v1670
        %v1672 = vand.u32 %v1671, 4294901760
        %1673 = vmatpush1.msra.mxu0 %v1672
        %1674 = vmatprep.subr.mxu0 0.0
        %v1675 = vand.u32 %v1497, 4294901760
        %v1676 = vsub.f32 %v1497, %v1675
        %v1677 = vand.u32 %v1676, 4294901760
        %v1678 = vsub.f32 %v1676, %v1677
        %v1679 = vand.u32 %v1678, 4294901760
        %1680 = vmatpush1.msra.mxu0 %v1679
        %1681 = vmatprep.subr.mxu0 0.0
        %v1682 = vand.u32 %v1498, 4294901760
        %v1683 = vsub.f32 %v1498, %v1682
        %v1684 = vand.u32 %v1683, 4294901760
        %v1685 = vsub.f32 %v1683, %v1684
        %v1686 = vand.u32 %v1685, 4294901760
        %1687 = vmatpush1.msra.mxu0 %v1686
        %1688 = vmatprep.subr.mxu0 0.0
        %v1689 = vand.u32 %v1499, 4294901760
        %v1690 = vsub.f32 %v1499, %v1689
        %v1691 = vand.u32 %v1690, 4294901760
        %v1692 = vsub.f32 %v1690, %v1691
        %v1693 = vand.u32 %v1692, 4294901760
        %1694 = vmatpush1.msra.mxu0 %v1693
        %1695 = vmatprep.subr.mxu0 0.0
        %v1696 = vand.u32 %v1500, 4294901760
        %v1697 = vsub.f32 %v1500, %v1696
        %v1698 = vand.u32 %v1697, 4294901760
        %v1699 = vsub.f32 %v1697, %v1698
        %v1700 = vand.u32 %v1699, 4294901760
        %1701 = vmatpush1.msra.mxu0 %v1700
        %1702 = vmatprep.subr.mxu0 0.0
        %v1703 = vand.u32 %v1501, 4294901760
        %v1704 = vsub.f32 %v1501, %v1703
        %v1705 = vand.u32 %v1704, 4294901760
        %v1706 = vsub.f32 %v1704, %v1705
        %v1707 = vand.u32 %v1706, 4294901760
        %1708 = vmatpush1.msra.mxu0 %v1707
        %1709 = vmatprep.subr.mxu0 0.0
        %v1710 = vand.u32 %v1502, 4294901760
        %v1711 = vsub.f32 %v1502, %v1710
        %v1712 = vand.u32 %v1711, 4294901760
        %v1713 = vsub.f32 %v1711, %v1712
        %v1714 = vand.u32 %v1713, 4294901760
        %1715 = vmatpush1.msra.mxu0 %v1714
        %1716 = vmatprep.subr.mxu0 0.0
        %1717 = vmatpush1.msra.mxu0 0.0
        %1718 = vmatprep.subr.mxu0 0.0
        %1719 = vmatpush1.msra.mxu0 0.0
        %1720 = vmatprep.subr.mxu0 0.0
        %1721 = vmatpush1.msra.mxu0 0.0
        %1722 = vmatprep.subr.mxu0 0.0
        %1723 = vmatpush1.msra.mxu0 0.0
        %1724 = vmatprep.subr.mxu0 0.0
        %1725 = vmatpush1.msra.mxu0 0.0
        %1726 = vmatprep.subr.mxu0 0.0
        %1727 = vmatpush1.msra.mxu0 0.0
        %1728 = vmatprep.subr.mxu0 0.0
        %1729 = vmatpush1.msra.mxu0 0.0
        %1730 = vmatprep.subr.mxu0 0.0
        %1731 = vmatpush1.msra.mxu0 0.0
        %1732 = vmatprep.subr.mxu0 0.0
        %1733 = vmatpush1.msra.mxu0 0.0
        %1734 = vmatprep.subr.mxu0 0.0
        %1735 = vmatpush1.msra.mxu0 0.0
        %1736 = vmatprep.subr.mxu0 0.0
        %1737 = vmatpush1.msra.mxu0 0.0
        %1738 = vmatprep.subr.mxu0 0.0
        %1739 = vmatpush1.msra.mxu0 0.0
        %1740 = vmatprep.subr.mxu0 0.0
        %1741 = vmatpush1.msra.mxu0 0.0
        %1742 = vmatprep.subr.mxu0 0.0
        %1743 = vmatpush1.msra.mxu0 0.0
        %1744 = vmatprep.subr.mxu0 0.0
        %1745 = vmatpush1.msra.mxu0 0.0
        %1746 = vmatprep.subr.mxu0 0.0
        %1747 = vmatpush1.msra.mxu0 0.0
        %1748 = vmatprep.subr.mxu0 0.0
        %1749 = vmatpush1.msra.mxu0 0.0
        %1750 = vmatprep.subr.mxu0 0.0
        %1751 = vmatpush1.msra.mxu0 0.0
        %1752 = vmatprep.subr.mxu0 0.0
        %1753 = vmatpush1.msra.mxu0 0.0
        %1754 = vmatprep.subr.mxu0 0.0
        %1755 = vmatpush1.msra.mxu0 0.0
        %1756 = vmatprep.subr.mxu0 0.0
        %1757 = vmatpush1.msra.mxu0 0.0
        %1758 = vmatprep.subr.mxu0 0.0
        %1759 = vmatpush1.msra.mxu0 0.0
        %1760 = vmatprep.subr.mxu0 0.0
        %1761 = vmatpush1.msra.mxu0 0.0
        %1762 = vmatprep.subr.mxu0 0.0
        %1763 = vmatpush1.msra.mxu0 0.0
        %1764 = vmatprep.mubr.f32.mxu0 0.0
        %v1765 = vand.u32 %v1536, 4294901760
        %1766 = vmatmul.mubr.f32.gmra.mrb[0].mxu0 %v1765
        %v1767 = vpop.f32.mrb[0].mxu0
        %v1768 = vadd.f32 %v1627, %v1767
        %v1769 = vpop.f32.mrb[0].mxu0
        %1770 = vmatprep.mubr.f32.mxu0 0.0
        %v1771 = vand.u32 %v1539, 4294901760
        %1772 = vmatmul.mubr.f32.gmra.mrb[0].mxu0 %v1771
        %v1773 = vpop.f32.mrb[0].mxu0
        %v1774 = vadd.f32 %v1637, %v1773
        %v1775 = vpop.f32.mrb[0].mxu0
        %1776 = vmatprep.mubr.f32.mxu0 0.0
        %v1777 = vand.u32 %v1542, 4294901760
        %1778 = vmatmul.mubr.f32.gmra.mrb[0].mxu0 %v1777
        %v1779 = vpop.f32.mrb[0].mxu0
        %v1780 = vadd.f32 %v1647, %v1779
        %v1781 = vpop.f32.mrb[0].mxu0
        %1782 = vmatprep.mubr.f32.mxu0 0.0
        %v1783 = vand.u32 %v1545, 4294901760
        %1784 = vmatmul.mubr.f32.gmra.mrb[0].mxu0 %v1783
        %v1785 = vpop.f32.mrb[0].mxu0
        %v1786 = vadd.f32 %v1657, %v1785
        %v1787 = vpop.f32.mrb[0].mxu0
        %1788 = vdwg.mxu0
        %1789 = vmatprep.subr.mxu0 0.0
        %v1790 = vand.u32 %v1495, 4294901760
        %v1791 = vsub.f32 %v1495, %v1790
        %1792 = vmatpush1.msra.mxu0 %v1791
        %1793 = vmatprep.subr.mxu0 0.0
        %v1794 = vand.u32 %v1496, 4294901760
        %v1795 = vsub.f32 %v1496, %v1794
        %1796 = vmatpush1.msra.mxu0 %v1795
        %1797 = vmatprep.subr.mxu0 0.0
        %v1798 = vand.u32 %v1497, 4294901760
        %v1799 = vsub.f32 %v1497, %v1798
        %1800 = vmatpush1.msra.mxu0 %v1799
        %1801 = vmatprep.subr.mxu0 0.0
        %v1802 = vand.u32 %v1498, 4294901760
        %v1803 = vsub.f32 %v1498, %v1802
        %1804 = vmatpush1.msra.mxu0 %v1803
        %1805 = vmatprep.subr.mxu0 0.0
        %v1806 = vand.u32 %v1499, 4294901760
        %v1807 = vsub.f32 %v1499, %v1806
        %1808 = vmatpush1.msra.mxu0 %v1807
        %1809 = vmatprep.subr.mxu0 0.0
        %v1810 = vand.u32 %v1500, 4294901760
        %v1811 = vsub.f32 %v1500, %v1810
        %1812 = vmatpush1.msra.mxu0 %v1811
        %1813 = vmatprep.subr.mxu0 0.0
        %v1814 = vand.u32 %v1501, 4294901760
        %v1815 = vsub.f32 %v1501, %v1814
        %1816 = vmatpush1.msra.mxu0 %v1815
        %1817 = vmatprep.subr.mxu0 0.0
        %v1818 = vand.u32 %v1502, 4294901760
        %v1819 = vsub.f32 %v1502, %v1818
        %1820 = vmatpush1.msra.mxu0 %v1819
        %1821 = vmatprep.subr.mxu0 0.0
        %1822 = vmatpush1.msra.mxu0 0.0
        %1823 = vmatprep.subr.mxu0 0.0
        %1824 = vmatpush1.msra.mxu0 0.0
        %1825 = vmatprep.subr.mxu0 0.0
        %1826 = vmatpush1.msra.mxu0 0.0
        %1827 = vmatprep.subr.mxu0 0.0
        %1828 = vmatpush1.msra.mxu0 0.0
        %1829 = vmatprep.subr.mxu0 0.0
        %1830 = vmatpush1.msra.mxu0 0.0
        %1831 = vmatprep.subr.mxu0 0.0
        %1832 = vmatpush1.msra.mxu0 0.0
        %1833 = vmatprep.subr.mxu0 0.0
        %1834 = vmatpush1.msra.mxu0 0.0
        %1835 = vmatprep.subr.mxu0 0.0
        %1836 = vmatpush1.msra.mxu0 0.0
        %1837 = vmatprep.subr.mxu0 0.0
        %1838 = vmatpush1.msra.mxu0 0.0
        %1839 = vmatprep.subr.mxu0 0.0
        %1840 = vmatpush1.msra.mxu0 0.0
        %1841 = vmatprep.subr.mxu0 0.0
        %1842 = vmatpush1.msra.mxu0 0.0
        %1843 = vmatprep.subr.mxu0 0.0
        %1844 = vmatpush1.msra.mxu0 0.0
        %1845 = vmatprep.subr.mxu0 0.0
        %1846 = vmatpush1.msra.mxu0 0.0
        %1847 = vmatprep.subr.mxu0 0.0
        %1848 = vmatpush1.msra.mxu0 0.0
        %1849 = vmatprep.subr.mxu0 0.0
        %1850 = vmatpush1.msra.mxu0 0.0
        %1851 = vmatprep.subr.mxu0 0.0
        %1852 = vmatpush1.msra.mxu0 0.0
        %1853 = vmatprep.subr.mxu0 0.0
        %1854 = vmatpush1.msra.mxu0 0.0
        %1855 = vmatprep.subr.mxu0 0.0
        %1856 = vmatpush1.msra.mxu0 0.0
        %1857 = vmatprep.subr.mxu0 0.0
        %1858 = vmatpush1.msra.mxu0 0.0
        %1859 = vmatprep.subr.mxu0 0.0
        %1860 = vmatpush1.msra.mxu0 0.0
        %1861 = vmatprep.subr.mxu0 0.0
        %1862 = vmatpush1.msra.mxu0 0.0
        %1863 = vmatprep.subr.mxu0 0.0
        %1864 = vmatpush1.msra.mxu0 0.0
        %1865 = vmatprep.subr.mxu0 0.0
        %1866 = vmatpush1.msra.mxu0 0.0
        %1867 = vmatprep.subr.mxu0 0.0
        %1868 = vmatpush1.msra.mxu0 0.0
        %1869 = vmatprep.mubr.f32.mxu0 0.0
        %v1870 = vand.u32 %v1536, 4294901760
        %v1871 = vsub.f32 %v1536, %v1870
        %1872 = vmatmul.mubr.f32.gmra.mrb[0].mxu0 %v1871
        %v1873 = vpop.f32.mrb[0].mxu0
        %v1874 = vadd.f32 %v1768, %v1873
        %v1875 = vpop.f32.mrb[0].mxu0
        %1876 = vmatprep.mubr.f32.mxu0 0.0
        %v1877 = vand.u32 %v1539, 4294901760
        %v1878 = vsub.f32 %v1539, %v1877
        %1879 = vmatmul.mubr.f32.gmra.mrb[0].mxu0 %v1878
        %v1880 = vpop.f32.mrb[0].mxu0
        %v1881 = vadd.f32 %v1774, %v1880
        %v1882 = vpop.f32.mrb[0].mxu0
        %1883 = vmatprep.mubr.f32.mxu0 0.0
        %v1884 = vand.u32 %v1542, 4294901760
        %v1885 = vsub.f32 %v1542, %v1884
        %1886 = vmatmul.mubr.f32.gmra.mrb[0].mxu0 %v1885
        %v1887 = vpop.f32.mrb[0].mxu0
        %v1888 = vadd.f32 %v1780, %v1887
        %v1889 = vpop.f32.mrb[0].mxu0
        %1890 = vmatprep.mubr.f32.mxu0 0.0
        %v1891 = vand.u32 %v1545, 4294901760
        %v1892 = vsub.f32 %v1545, %v1891
        %1893 = vmatmul.mubr.f32.gmra.mrb[0].mxu0 %v1892
        %v1894 = vpop.f32.mrb[0].mxu0
        %v1895 = vadd.f32 %v1786, %v1894
        %v1896 = vpop.f32.mrb[0].mxu0
        %1897 = vdwg.mxu0
        %1898 = vmatprep.subr.mxu0 0.0
        %v1899 = vand.u32 %v1495, 4294901760
        %1900 = vmatpush1.msra.mxu0 %v1899
        %1901 = vmatprep.subr.mxu0 0.0
        %v1902 = vand.u32 %v1496, 4294901760
        %1903 = vmatpush1.msra.mxu0 %v1902
        %1904 = vmatprep.subr.mxu0 0.0
        %v1905 = vand.u32 %v1497, 4294901760
        %1906 = vmatpush1.msra.mxu0 %v1905
        %1907 = vmatprep.subr.mxu0 0.0
        %v1908 = vand.u32 %v1498, 4294901760
        %1909 = vmatpush1.msra.mxu0 %v1908
        %1910 = vmatprep.subr.mxu0 0.0
        %v1911 = vand.u32 %v1499, 4294901760
        %1912 = vmatpush1.msra.mxu0 %v1911
        %1913 = vmatprep.subr.mxu0 0.0
        %v1914 = vand.u32 %v1500, 4294901760
        %1915 = vmatpush1.msra.mxu0 %v1914
        %1916 = vmatprep.subr.mxu0 0.0
        %v1917 = vand.u32 %v1501, 4294901760
        %1918 = vmatpush1.msra.mxu0 %v1917
        %1919 = vmatprep.subr.mxu0 0.0
        %v1920 = vand.u32 %v1502, 4294901760
        %1921 = vmatpush1.msra.mxu0 %v1920
        %1922 = vmatprep.subr.mxu0 0.0
        %1923 = vmatpush1.msra.mxu0 0.0
        %1924 = vmatprep.subr.mxu0 0.0
        %1925 = vmatpush1.msra.mxu0 0.0
        %1926 = vmatprep.subr.mxu0 0.0
        %1927 = vmatpush1.msra.mxu0 0.0
        %1928 = vmatprep.subr.mxu0 0.0
        %1929 = vmatpush1.msra.mxu0 0.0
        %1930 = vmatprep.subr.mxu0 0.0
        %1931 = vmatpush1.msra.mxu0 0.0
        %1932 = vmatprep.subr.mxu0 0.0
        %1933 = vmatpush1.msra.mxu0 0.0
        %1934 = vmatprep.subr.mxu0 0.0
        %1935 = vmatpush1.msra.mxu0 0.0
        %1936 = vmatprep.subr.mxu0 0.0
        %1937 = vmatpush1.msra.mxu0 0.0
        %1938 = vmatprep.subr.mxu0 0.0
        %1939 = vmatpush1.msra.mxu0 0.0
        %1940 = vmatprep.subr.mxu0 0.0
        %1941 = vmatpush1.msra.mxu0 0.0
        %1942 = vmatprep.subr.mxu0 0.0
        %1943 = vmatpush1.msra.mxu0 0.0
        %1944 = vmatprep.subr.mxu0 0.0
        %1945 = vmatpush1.msra.mxu0 0.0
        %1946 = vmatprep.subr.mxu0 0.0
        %1947 = vmatpush1.msra.mxu0 0.0
        %1948 = vmatprep.subr.mxu0 0.0
        %1949 = vmatpush1.msra.mxu0 0.0
        %1950 = vmatprep.subr.mxu0 0.0
        %1951 = vmatpush1.msra.mxu0 0.0
        %1952 = vmatprep.subr.mxu0 0.0
        %1953 = vmatpush1.msra.mxu0 0.0
        %1954 = vmatprep.subr.mxu0 0.0
        %1955 = vmatpush1.msra.mxu0 0.0
        %1956 = vmatprep.subr.mxu0 0.0
        %1957 = vmatpush1.msra.mxu0 0.0
        %1958 = vmatprep.subr.mxu0 0.0
        %1959 = vmatpush1.msra.mxu0 0.0
        %1960 = vmatprep.subr.mxu0 0.0
        %1961 = vmatpush1.msra.mxu0 0.0
        %1962 = vmatprep.subr.mxu0 0.0
        %1963 = vmatpush1.msra.mxu0 0.0
        %1964 = vmatprep.subr.mxu0 0.0
        %1965 = vmatpush1.msra.mxu0 0.0
        %1966 = vmatprep.subr.mxu0 0.0
        %1967 = vmatpush1.msra.mxu0 0.0
        %1968 = vmatprep.subr.mxu0 0.0
        %1969 = vmatpush1.msra.mxu0 0.0
        %1970 = vmatprep.mubr.f32.mxu0 0.0
        %v1971 = vand.u32 %v1536, 4294901760
        %v1972 = vsub.f32 %v1536, %v1971
        %v1973 = vand.u32 %v1972, 4294901760
        %1974 = vmatmul.mubr.f32.gmra.mrb[0].mxu0 %v1973
        %v1975 = vpop.f32.mrb[0].mxu0
        %v1976 = vadd.f32 %v1874, %v1975
        %v1977 = vpop.f32.mrb[0].mxu0
        %1978 = vmatprep.mubr.f32.mxu0 0.0
        %v1979 = vand.u32 %v1539, 4294901760
        %v1980 = vsub.f32 %v1539, %v1979
        %v1981 = vand.u32 %v1980, 4294901760
        %1982 = vmatmul.mubr.f32.gmra.mrb[0].mxu0 %v1981
        %v1983 = vpop.f32.mrb[0].mxu0
        %v1984 = vadd.f32 %v1881, %v1983
        %v1985 = vpop.f32.mrb[0].mxu0
        %1986 = vmatprep.mubr.f32.mxu0 0.0
        %v1987 = vand.u32 %v1542, 4294901760
        %v1988 = vsub.f32 %v1542, %v1987
        %v1989 = vand.u32 %v1988, 4294901760
        %1990 = vmatmul.mubr.f32.gmra.mrb[0].mxu0 %v1989
        %v1991 = vpop.f32.mrb[0].mxu0
        %v1992 = vadd.f32 %v1888, %v1991
        %v1993 = vpop.f32.mrb[0].mxu0
        %1994 = vmatprep.mubr.f32.mxu0 0.0
        %v1995 = vand.u32 %v1545, 4294901760
        %v1996 = vsub.f32 %v1545, %v1995
        %v1997 = vand.u32 %v1996, 4294901760
        %1998 = vmatmul.mubr.f32.gmra.mrb[0].mxu0 %v1997
        %v1999 = vpop.f32.mrb[0].mxu0
        %v2000 = vadd.f32 %v1895, %v1999
        %v2001 = vpop.f32.mrb[0].mxu0
        %2002 = vdwg.mxu0
        %2003 = vmatprep.subr.mxu0 0.0
        %v2004 = vand.u32 %v1495, 4294901760
        %v2005 = vsub.f32 %v1495, %v2004
        %v2006 = vand.u32 %v2005, 4294901760
        %2007 = vmatpush1.msra.mxu0 %v2006
        %2008 = vmatprep.subr.mxu0 0.0
        %v2009 = vand.u32 %v1496, 4294901760
        %v2010 = vsub.f32 %v1496, %v2009
        %v2011 = vand.u32 %v2010, 4294901760
        %2012 = vmatpush1.msra.mxu0 %v2011
        %2013 = vmatprep.subr.mxu0 0.0
        %v2014 = vand.u32 %v1497, 4294901760
        %v2015 = vsub.f32 %v1497, %v2014
        %v2016 = vand.u32 %v2015, 4294901760
        %2017 = vmatpush1.msra.mxu0 %v2016
        %2018 = vmatprep.subr.mxu0 0.0
        %v2019 = vand.u32 %v1498, 4294901760
        %v2020 = vsub.f32 %v1498, %v2019
        %v2021 = vand.u32 %v2020, 4294901760
        %2022 = vmatpush1.msra.mxu0 %v2021
        %2023 = vmatprep.subr.mxu0 0.0
        %v2024 = vand.u32 %v1499, 4294901760
        %v2025 = vsub.f32 %v1499, %v2024
        %v2026 = vand.u32 %v2025, 4294901760
        %2027 = vmatpush1.msra.mxu0 %v2026
        %2028 = vmatprep.subr.mxu0 0.0
        %v2029 = vand.u32 %v1500, 4294901760
        %v2030 = vsub.f32 %v1500, %v2029
        %v2031 = vand.u32 %v2030, 4294901760
        %2032 = vmatpush1.msra.mxu0 %v2031
        %2033 = vmatprep.subr.mxu0 0.0
        %v2034 = vand.u32 %v1501, 4294901760
        %v2035 = vsub.f32 %v1501, %v2034
        %v2036 = vand.u32 %v2035, 4294901760
        %2037 = vmatpush1.msra.mxu0 %v2036
        %2038 = vmatprep.subr.mxu0 0.0
        %v2039 = vand.u32 %v1502, 4294901760
        %v2040 = vsub.f32 %v1502, %v2039
        %v2041 = vand.u32 %v2040, 4294901760
        %2042 = vmatpush1.msra.mxu0 %v2041
        %2043 = vmatprep.subr.mxu0 0.0
        %2044 = vmatpush1.msra.mxu0 0.0
        %2045 = vmatprep.subr.mxu0 0.0
        %2046 = vmatpush1.msra.mxu0 0.0
        %2047 = vmatprep.subr.mxu0 0.0
        %2048 = vmatpush1.msra.mxu0 0.0
        %2049 = vmatprep.subr.mxu0 0.0
        %2050 = vmatpush1.msra.mxu0 0.0
        %2051 = vmatprep.subr.mxu0 0.0
        %2052 = vmatpush1.msra.mxu0 0.0
        %2053 = vmatprep.subr.mxu0 0.0
        %2054 = vmatpush1.msra.mxu0 0.0
        %2055 = vmatprep.subr.mxu0 0.0
        %2056 = vmatpush1.msra.mxu0 0.0
        %2057 = vmatprep.subr.mxu0 0.0
        %2058 = vmatpush1.msra.mxu0 0.0
        %2059 = vmatprep.subr.mxu0 0.0
        %2060 = vmatpush1.msra.mxu0 0.0
        %2061 = vmatprep.subr.mxu0 0.0
        %2062 = vmatpush1.msra.mxu0 0.0
        %2063 = vmatprep.subr.mxu0 0.0
        %2064 = vmatpush1.msra.mxu0 0.0
        %2065 = vmatprep.subr.mxu0 0.0
        %2066 = vmatpush1.msra.mxu0 0.0
        %2067 = vmatprep.subr.mxu0 0.0
        %2068 = vmatpush1.msra.mxu0 0.0
        %2069 = vmatprep.subr.mxu0 0.0
        %2070 = vmatpush1.msra.mxu0 0.0
        %2071 = vmatprep.subr.mxu0 0.0
        %2072 = vmatpush1.msra.mxu0 0.0
        %2073 = vmatprep.subr.mxu0 0.0
        %2074 = vmatpush1.msra.mxu0 0.0
        %2075 = vmatprep.subr.mxu0 0.0
        %2076 = vmatpush1.msra.mxu0 0.0
        %2077 = vmatprep.subr.mxu0 0.0
        %2078 = vmatpush1.msra.mxu0 0.0
        %2079 = vmatprep.subr.mxu0 0.0
        %2080 = vmatpush1.msra.mxu0 0.0
        %2081 = vmatprep.subr.mxu0 0.0
        %2082 = vmatpush1.msra.mxu0 0.0
        %2083 = vmatprep.subr.mxu0 0.0
        %2084 = vmatpush1.msra.mxu0 0.0
        %2085 = vmatprep.subr.mxu0 0.0
        %2086 = vmatpush1.msra.mxu0 0.0
        %2087 = vmatprep.subr.mxu0 0.0
        %2088 = vmatpush1.msra.mxu0 0.0
        %2089 = vmatprep.subr.mxu0 0.0
        %2090 = vmatpush1.msra.mxu0 0.0
        %2091 = vmatprep.mubr.f32.mxu0 0.0
        %v2092 = vand.u32 %v1536, 4294901760
        %2093 = vmatmul.mubr.f32.gmra.mrb[0].mxu0 %v2092
        %v2094 = vpop.f32.mrb[0].mxu0
        %v2095 = vadd.f32 %v1976, %v2094
        %v2096 = vpop.f32.mrb[0].mxu0
        %2097 = vmatprep.mubr.f32.mxu0 0.0
        %v2098 = vand.u32 %v1539, 4294901760
        %2099 = vmatmul.mubr.f32.gmra.mrb[0].mxu0 %v2098
        %v2100 = vpop.f32.mrb[0].mxu0
        %v2101 = vadd.f32 %v1984, %v2100
        %v2102 = vpop.f32.mrb[0].mxu0
        %2103 = vmatprep.mubr.f32.mxu0 0.0
        %v2104 = vand.u32 %v1542, 4294901760
        %2105 = vmatmul.mubr.f32.gmra.mrb[0].mxu0 %v2104
        %v2106 = vpop.f32.mrb[0].mxu0
        %v2107 = vadd.f32 %v1992, %v2106
        %v2108 = vpop.f32.mrb[0].mxu0
        %2109 = vmatprep.mubr.f32.mxu0 0.0
        %v2110 = vand.u32 %v1545, 4294901760
        %2111 = vmatmul.mubr.f32.gmra.mrb[0].mxu0 %v2110
        %v2112 = vpop.f32.mrb[0].mxu0
        %v2113 = vadd.f32 %v2000, %v2112
        %v2114 = vpop.f32.mrb[0].mxu0
        %2115 = vdwg.mxu0
        %2116 = vmatprep.subr.mxu0 0.0
        %v2117 = vand.u32 %v1495, 4294901760
        %2118 = vmatpush1.msra.mxu0 %v2117
        %2119 = vmatprep.subr.mxu0 0.0
        %v2120 = vand.u32 %v1496, 4294901760
        %2121 = vmatpush1.msra.mxu0 %v2120
        %2122 = vmatprep.subr.mxu0 0.0
        %v2123 = vand.u32 %v1497, 4294901760
        %2124 = vmatpush1.msra.mxu0 %v2123
        %2125 = vmatprep.subr.mxu0 0.0
        %v2126 = vand.u32 %v1498, 4294901760
        %2127 = vmatpush1.msra.mxu0 %v2126
        %2128 = vmatprep.subr.mxu0 0.0
        %v2129 = vand.u32 %v1499, 4294901760
        %2130 = vmatpush1.msra.mxu0 %v2129
        %2131 = vmatprep.subr.mxu0 0.0
        %v2132 = vand.u32 %v1500, 4294901760
        %2133 = vmatpush1.msra.mxu0 %v2132
        %2134 = vmatprep.subr.mxu0 0.0
        %v2135 = vand.u32 %v1501, 4294901760
        %2136 = vmatpush1.msra.mxu0 %v2135
        %2137 = vmatprep.subr.mxu0 0.0
        %v2138 = vand.u32 %v1502, 4294901760
        %2139 = vmatpush1.msra.mxu0 %v2138
        %2140 = vmatprep.subr.mxu0 0.0
        %2141 = vmatpush1.msra.mxu0 0.0
        %2142 = vmatprep.subr.mxu0 0.0
        %2143 = vmatpush1.msra.mxu0 0.0
        %2144 = vmatprep.subr.mxu0 0.0
        %2145 = vmatpush1.msra.mxu0 0.0
        %2146 = vmatprep.subr.mxu0 0.0
        %2147 = vmatpush1.msra.mxu0 0.0
        %2148 = vmatprep.subr.mxu0 0.0
        %2149 = vmatpush1.msra.mxu0 0.0
        %2150 = vmatprep.subr.mxu0 0.0
        %2151 = vmatpush1.msra.mxu0 0.0
        %2152 = vmatprep.subr.mxu0 0.0
        %2153 = vmatpush1.msra.mxu0 0.0
        %2154 = vmatprep.subr.mxu0 0.0
        %2155 = vmatpush1.msra.mxu0 0.0
        %2156 = vmatprep.subr.mxu0 0.0
        %2157 = vmatpush1.msra.mxu0 0.0
        %2158 = vmatprep.subr.mxu0 0.0
        %2159 = vmatpush1.msra.mxu0 0.0
        %2160 = vmatprep.subr.mxu0 0.0
        %2161 = vmatpush1.msra.mxu0 0.0
        %2162 = vmatprep.subr.mxu0 0.0
        %2163 = vmatpush1.msra.mxu0 0.0
        %2164 = vmatprep.subr.mxu0 0.0
        %2165 = vmatpush1.msra.mxu0 0.0
        %2166 = vmatprep.subr.mxu0 0.0
        %2167 = vmatpush1.msra.mxu0 0.0
        %2168 = vmatprep.subr.mxu0 0.0
        %2169 = vmatpush1.msra.mxu0 0.0
        %2170 = vmatprep.subr.mxu0 0.0
        %2171 = vmatpush1.msra.mxu0 0.0
        %2172 = vmatprep.subr.mxu0 0.0
        %2173 = vmatpush1.msra.mxu0 0.0
        %2174 = vmatprep.subr.mxu0 0.0
        %2175 = vmatpush1.msra.mxu0 0.0
        %2176 = vmatprep.subr.mxu0 0.0
        %2177 = vmatpush1.msra.mxu0 0.0
        %2178 = vmatprep.subr.mxu0 0.0
        %2179 = vmatpush1.msra.mxu0 0.0
        %2180 = vmatprep.subr.mxu0 0.0
        %2181 = vmatpush1.msra.mxu0 0.0
        %2182 = vmatprep.subr.mxu0 0.0
        %2183 = vmatpush1.msra.mxu0 0.0
        %2184 = vmatprep.subr.mxu0 0.0
        %2185 = vmatpush1.msra.mxu0 0.0
        %2186 = vmatprep.subr.mxu0 0.0
        %2187 = vmatpush1.msra.mxu0 0.0
        %2188 = vmatprep.mubr.f32.mxu0 0.0
        %v2189 = vand.u32 %v1536, 4294901760
        %2190 = vmatmul.mubr.f32.gmra.mrb[0].mxu0 %v2189
        %v2191 = vpop.f32.mrb[0].mxu0
        %v2192 = vadd.f32 %v2095, %v2191
        %v2193 = vpop.f32.mrb[0].mxu0
        %2194 = vmatprep.mubr.f32.mxu0 0.0
        %v2195 = vand.u32 %v1539, 4294901760
        %2196 = vmatmul.mubr.f32.gmra.mrb[0].mxu0 %v2195
        %v2197 = vpop.f32.mrb[0].mxu0
        %v2198 = vadd.f32 %v2101, %v2197
        %v2199 = vpop.f32.mrb[0].mxu0
        %2200 = vmatprep.mubr.f32.mxu0 0.0
        %v2201 = vand.u32 %v1542, 4294901760
        %2202 = vmatmul.mubr.f32.gmra.mrb[0].mxu0 %v2201
        %v2203 = vpop.f32.mrb[0].mxu0
        %v2204 = vadd.f32 %v2107, %v2203
        %v2205 = vpop.f32.mrb[0].mxu0
        %2206 = vmatprep.mubr.f32.mxu0 0.0
        %v2207 = vand.u32 %v1545, 4294901760
        %2208 = vmatmul.mubr.f32.gmra.mrb[0].mxu0 %v2207
        %v2209 = vpop.f32.mrb[0].mxu0
        %v2210 = vadd.f32 %v2113, %v2209
        %v2211 = vpop.f32.mrb[0].mxu0
        %2212 = vdwg.mxu0
        %v2213 = vsub.f32 %v1220, %v2192
        %v2214 = vsub.f32 %v1221, %v2198
        %v2215 = vsub.f32 %v1222, %v2204
        %v2216 = vsub.f32 %v1223, %v2210
        %s2217 = scalar_lea.vmem %s1, 128
        %v2218 = vld [vmem:[%s2217] sm:$0xff]
        %v2219 = vld [vmem:[%s2217 + $0x8] sm:$0xff]
        %v2220 = vld [vmem:[%s2217 + $0x10] sm:$0xff]
        %v2221 = vld [vmem:[%s2217 + $0x18] sm:$0xff]
        %v2222 = vld [vmem:[%s2217 + $0x20] sm:$0xff]
        %v2223 = vld [vmem:[%s2217 + $0x28] sm:$0xff]
        %v2224 = vld [vmem:[%s2217 + $0x30] sm:$0xff]
        %v2225 = vld [vmem:[%s2217 + $0x38] sm:$0xff]
        %v2226 = vmul.f32 %v2218, %v2218
        %v2227 = vmul.f32 %v2219, %v2219
        %v2228 = vmul.f32 %v2220, %v2220
        %v2229 = vmul.f32 %v2221, %v2221
        %v2230 = vmul.f32 %v2222, %v2222
        %v2231 = vmul.f32 %v2223, %v2223
        %v2232 = vmul.f32 %v2224, %v2224
        %v2233 = vmul.f32 %v2225, %v2225
        %v2234 = vsel %vm244, %v2226, 0.0
        %2235 = vadd.xlane.f32.xlu0 %v2234
        %v2236 = vpop.xlane.xlu0 %2235
        %v2237 = vsel %vm244, %v2227, 0.0
        %2238 = vadd.xlane.f32.xlu0 %v2237
        %v2239 = vpop.xlane.xlu0 %2238
        %v2240 = vsel %vm244, %v2228, 0.0
        %2241 = vadd.xlane.f32.xlu0 %v2240
        %v2242 = vpop.xlane.xlu0 %2241
        %v2243 = vsel %vm244, %v2229, 0.0
        %2244 = vadd.xlane.f32.xlu0 %v2243
        %v2245 = vpop.xlane.xlu0 %2244
        %v2246 = vsel %vm244, %v2230, 0.0
        %2247 = vadd.xlane.f32.xlu0 %v2246
        %v2248 = vpop.xlane.xlu0 %2247
        %v2249 = vsel %vm244, %v2231, 0.0
        %2250 = vadd.xlane.f32.xlu0 %v2249
        %v2251 = vpop.xlane.xlu0 %2250
        %v2252 = vsel %vm244, %v2232, 0.0
        %2253 = vadd.xlane.f32.xlu0 %v2252
        %v2254 = vpop.xlane.xlu0 %2253
        %v2255 = vsel %vm244, %v2233, 0.0
        %2256 = vadd.xlane.f32.xlu0 %v2255
        %v2257 = vpop.xlane.xlu0 %2256
        %v2258 = vmul.f32 %v2236, 0.5
        %v2259 = vmul.f32 %v2239, 0.5
        %v2260 = vmul.f32 %v2242, 0.5
        %v2261 = vmul.f32 %v2245, 0.5
        %v2262 = vmul.f32 %v2248, 0.5
        %v2263 = vmul.f32 %v2251, 0.5
        %v2264 = vmul.f32 %v2254, 0.5
        %v2265 = vmul.f32 %v2257, 0.5
        %v2267 = vsel %vm244, %v2218, 0
        %v2270 = vsel %vm244, %v2219, 0
        %v2273 = vsel %vm244, %v2220, 0
        %v2276 = vsel %vm244, %v2221, 0
        %v2279 = vsel %vm244, %v2222, 0
        %v2282 = vsel %vm244, %v2223, 0
        %v2285 = vsel %vm244, %v2224, 0
        %v2288 = vsel %vm244, %v2225, 0
        %2290 = vmatprep.subr.mxu0 0.0
        %2291 = vmatpush1.msra.mxu0 %v2213
        %2292 = vmatprep.subr.mxu0 0.0
        %2293 = vmatpush1.msra.mxu0 %v2214
        %2294 = vmatprep.subr.mxu0 0.0
        %2295 = vmatpush1.msra.mxu0 %v2215
        %2296 = vmatprep.subr.mxu0 0.0
        %2297 = vmatpush1.msra.mxu0 %v2216
        %2298 = vmatprep.subr.mxu0 0.0
        %2299 = vmatpush1.msra.mxu0 0.0
        %2300 = vmatprep.subr.mxu0 0.0
        %2301 = vmatpush1.msra.mxu0 0.0
        %2302 = vmatprep.subr.mxu0 0.0
        %2303 = vmatpush1.msra.mxu0 0.0
        %2304 = vmatprep.subr.mxu0 0.0
        %2305 = vmatpush1.msra.mxu0 0.0
        %2306 = vmatprep.subr.mxu0 0.0
        %2307 = vmatpush1.msra.mxu0 0.0
        %2308 = vmatprep.subr.mxu0 0.0
        %2309 = vmatpush1.msra.mxu0 0.0
        %2310 = vmatprep.subr.mxu0 0.0
        %2311 = vmatpush1.msra.mxu0 0.0
        %2312 = vmatprep.subr.mxu0 0.0
        %2313 = vmatpush1.msra.mxu0 0.0
        %2314 = vmatprep.subr.mxu0 0.0
        %2315 = vmatpush1.msra.mxu0 0.0
        %2316 = vmatprep.subr.mxu0 0.0
        %2317 = vmatpush1.msra.mxu0 0.0
        %2318 = vmatprep.subr.mxu0 0.0
        %2319 = vmatpush1.msra.mxu0 0.0
        %2320 = vmatprep.subr.mxu0 0.0
        %2321 = vmatpush1.msra.mxu0 0.0
        %2322 = vmatprep.subr.mxu0 0.0
        %2323 = vmatpush1.msra.mxu0 0.0
        %2324 = vmatprep.subr.mxu0 0.0
        %2325 = vmatpush1.msra.mxu0 0.0
        %2326 = vmatprep.subr.mxu0 0.0
        %2327 = vmatpush1.msra.mxu0 0.0
        %2328 = vmatprep.subr.mxu0 0.0
        %2329 = vmatpush1.msra.mxu0 0.0
        %2330 = vmatprep.subr.mxu0 0.0
        %2331 = vmatpush1.msra.mxu0 0.0
        %2332 = vmatprep.subr.mxu0 0.0
        %2333 = vmatpush1.msra.mxu0 0.0
        %2334 = vmatprep.subr.mxu0 0.0
        %2335 = vmatpush1.msra.mxu0 0.0
        %2336 = vmatprep.subr.mxu0 0.0
        %2337 = vmatpush1.msra.mxu0 0.0
        %2338 = vmatprep.subr.mxu0 0.0
        %2339 = vmatpush1.msra.mxu0 0.0
        %2340 = vmatprep.subr.mxu0 0.0
        %2341 = vmatpush1.msra.mxu0 0.0
        %2342 = vmatprep.subr.mxu0 0.0
        %2343 = vmatpush1.msra.mxu0 0.0
        %2344 = vmatprep.subr.mxu0 0.0
        %2345 = vmatpush1.msra.mxu0 0.0
        %2346 = vmatprep.subr.mxu0 0.0
        %2347 = vmatpush1.msra.mxu0 0.0
        %2348 = vmatprep.subr.mxu0 0.0
        %2349 = vmatpush1.msra.mxu0 0.0
        %2350 = vmatprep.subr.mxu0 0.0
        %2351 = vmatpush1.msra.mxu0 0.0
        %2352 = vmatprep.subr.mxu0 0.0
        %2353 = vmatpush1.msra.mxu0 0.0
        %2354 = vmatprep.mubr.f32.mxu0 0.0
        %2355 = vmatmul.mubr.f32.gmra.mrb[0].mxu0 %v2267
        %v2356 = vpop.f32.mrb[0].mxu0
        %v2357 = vadd.f32 0.0, %v2356
        %v2358 = vpop.f32.mrb[0].mxu0
        %2359 = vmatprep.mubr.f32.mxu0 0.0
        %2360 = vmatmul.mubr.f32.gmra.mrb[0].mxu0 %v2270
        %v2361 = vpop.f32.mrb[0].mxu0
        %v2362 = vadd.f32 0.0, %v2361
        %v2363 = vpop.f32.mrb[0].mxu0
        %2364 = vmatprep.mubr.f32.mxu0 0.0
        %2365 = vmatmul.mubr.f32.gmra.mrb[0].mxu0 %v2273
        %v2366 = vpop.f32.mrb[0].mxu0
        %v2367 = vadd.f32 0.0, %v2366
        %v2368 = vpop.f32.mrb[0].mxu0
        %2369 = vmatprep.mubr.f32.mxu0 0.0
        %2370 = vmatmul.mubr.f32.gmra.mrb[0].mxu0 %v2276
        %v2371 = vpop.f32.mrb[0].mxu0
        %v2372 = vadd.f32 0.0, %v2371
        %v2373 = vpop.f32.mrb[0].mxu0
        %2374 = vmatprep.mubr.f32.mxu0 0.0
        %2375 = vmatmul.mubr.f32.gmra.mrb[0].mxu0 %v2279
        %v2376 = vpop.f32.mrb[0].mxu0
        %v2377 = vadd.f32 0.0, %v2376
        %v2378 = vpop.f32.mrb[0].mxu0
        %2379 = vmatprep.mubr.f32.mxu0 0.0
        %2380 = vmatmul.mubr.f32.gmra.mrb[0].mxu0 %v2282
        %v2381 = vpop.f32.mrb[0].mxu0
        %v2382 = vadd.f32 0.0, %v2381
        %v2383 = vpop.f32.mrb[0].mxu0
        %2384 = vmatprep.mubr.f32.mxu0 0.0
        %2385 = vmatmul.mubr.f32.gmra.mrb[0].mxu0 %v2285
        %v2386 = vpop.f32.mrb[0].mxu0
        %v2387 = vadd.f32 0.0, %v2386
        %v2388 = vpop.f32.mrb[0].mxu0
        %2389 = vmatprep.mubr.f32.mxu0 0.0
        %2390 = vmatmul.mubr.f32.gmra.mrb[0].mxu0 %v2288
        %v2391 = vpop.f32.mrb[0].mxu0
        %v2392 = vadd.f32 0.0, %v2391
        %v2393 = vpop.f32.mrb[0].mxu0
        %2394 = vdwg.mxu0
        %v2395 = vsub.f32 %v2357, %v2258
        %v2396 = vsub.f32 %v2362, %v2259
        %v2397 = vsub.f32 %v2367, %v2260
        %v2398 = vsub.f32 %v2372, %v2261
        %v2399 = vsub.f32 %v2377, %v2262
        %v2400 = vsub.f32 %v2382, %v2263
        %v2401 = vsub.f32 %v2387, %v2264
        %v2402 = vsub.f32 %v2392, %v2265
        %v2403 = vsel %vm414, %v2395, -inf
        %v2404 = vsel %vm414, %v2396, -inf
        %v2405 = vsel %vm414, %v2397, -inf
        %v2406 = vsel %vm414, %v2398, -inf
        %v2407 = vsel %vm414, %v2399, -inf
        %v2408 = vmax.f32 %v2403, %v2407
        %v2409 = vsel %vm414, %v2400, -inf
        %v2410 = vmax.f32 %v2404, %v2409
        %v2411 = vsel %vm414, %v2401, -inf
        %v2412 = vmax.f32 %v2405, %v2411
        %v2413 = vsel %vm414, %v2402, -inf
        %v2414 = vmax.f32 %v2406, %v2413
        %v2415 = vmax.f32 %v2408, %v2410
        %v2416 = vmax.f32 %v2412, %v2414
        %v2417 = vmax.f32 %v2415, %v2416
        %v2418 = vrot.slane %v2417, 4
        %v2419 = vmax.f32 %v2417, %v2418
        %v2420 = vrot.slane %v2419, 2
        %v2421 = vmax.f32 %v2419, %v2420
        %v2422 = vrot.slane %v2421, 1
        %v2423 = vmax.f32 %v2421, %v2422
        %vm2424 = vcmp.eq.f32.partialorder %v2395, %v2423
        %vm2425 = vcmp.eq.f32.partialorder %v2396, %v2423
        %vm2426 = vcmp.eq.f32.partialorder %v2397, %v2423
        %vm2427 = vcmp.eq.f32.partialorder %v2398, %v2423
        %vm2428 = vcmp.eq.f32.partialorder %v2399, %v2423
        %vm2429 = vcmp.eq.f32.partialorder %v2400, %v2423
        %vm2430 = vcmp.eq.f32.partialorder %v2401, %v2423
        %vm2431 = vcmp.eq.f32.partialorder %v2402, %v2423
        %v2432 = vsel %vm2424, %v220, 64
        %v2433 = vsel %vm2425, %v221, 64
        %v2434 = vsel %vm2426, %v222, 64
        %v2435 = vsel %vm2427, %v223, 64
        %v2436 = vsel %vm2428, %v224, 64
        %v2437 = vsel %vm2429, %v225, 64
        %v2438 = vsel %vm2430, %v226, 64
        %v2439 = vsel %vm2431, %v227, 64
        %v2440 = vsel %vm414, %v2432, 2147483647
        %v2441 = vsel %vm414, %v2433, 2147483647
        %v2442 = vsel %vm414, %v2434, 2147483647
        %v2443 = vsel %vm414, %v2435, 2147483647
        %v2444 = vsel %vm414, %v2436, 2147483647
        %vm2445 = vcmp.lt.s32.totalorder %v2440, %v2444
        %v2446 = vsel %vm2445, %v2440, %v2444
        %v2447 = vsel %vm414, %v2437, 2147483647
        %vm2448 = vcmp.lt.s32.totalorder %v2441, %v2447
        %v2449 = vsel %vm2448, %v2441, %v2447
        %v2450 = vsel %vm414, %v2438, 2147483647
        %vm2451 = vcmp.lt.s32.totalorder %v2442, %v2450
        %v2452 = vsel %vm2451, %v2442, %v2450
        %v2453 = vsel %vm414, %v2439, 2147483647
        %vm2454 = vcmp.lt.s32.totalorder %v2443, %v2453
        %v2455 = vsel %vm2454, %v2443, %v2453
        %vm2456 = vcmp.lt.s32.totalorder %v2446, %v2449
        %v2457 = vsel %vm2456, %v2446, %v2449
        %vm2458 = vcmp.lt.s32.totalorder %v2452, %v2455
        %v2459 = vsel %vm2458, %v2452, %v2455
        %vm2460 = vcmp.lt.s32.totalorder %v2457, %v2459
        %v2461 = vsel %vm2460, %v2457, %v2459
        %v2462 = vrot.slane %v2461, 4
        %vm2463 = vcmp.lt.s32.totalorder %v2461, %v2462
        %v2464 = vsel %vm2463, %v2461, %v2462
        %v2465 = vrot.slane %v2464, 2
        %vm2466 = vcmp.lt.s32.totalorder %v2464, %v2465
        %v2467 = vsel %vm2466, %v2464, %v2465
        %v2468 = vrot.slane %v2467, 1
        %vm2469 = vcmp.lt.s32.totalorder %v2467, %v2468
        %v2470 = vsel %vm2469, %v2467, %v2468
        %2471 = vst.msk [vmem:[%s198 + $0x2] sm:$0x1] %vm483, %v2470
        %vm2472 = vcmp.eq.s32.totalorder %v220, %v2470
        %vm2473 = vcmp.eq.s32.totalorder %v221, %v2470
        %vm2474 = vcmp.eq.s32.totalorder %v222, %v2470
        %vm2475 = vcmp.eq.s32.totalorder %v223, %v2470
        %vm2476 = vcmp.eq.s32.totalorder %v224, %v2470
        %vm2477 = vcmp.eq.s32.totalorder %v225, %v2470
        %vm2478 = vcmp.eq.s32.totalorder %v226, %v2470
        %vm2479 = vcmp.eq.s32.totalorder %v227, %v2470
        %v2480 = vsel %vm2472, 1, 0
        %v2481 = vsel %vm2473, 1, 0
        %v2482 = vsel %vm2474, 1, 0
        %v2483 = vsel %vm2475, 1, 0
        %v2484 = vsel %vm2476, 1, 0
        %v2485 = vsel %vm2477, 1, 0
        %v2486 = vsel %vm2478, 1, 0
        %v2487 = vsel %vm2479, 1, 0
        %v2488 = vcvt.s32.f32 %v2480
        %v2489 = vcvt.s32.f32 %v2481
        %v2490 = vcvt.s32.f32 %v2482
        %v2491 = vcvt.s32.f32 %v2483
        %v2492 = vcvt.s32.f32 %v2484
        %v2493 = vcvt.s32.f32 %v2485
        %v2494 = vcvt.s32.f32 %v2486
        %v2495 = vcvt.s32.f32 %v2487
        %2496 = vxpose.xlu0.b32.start [1/16] %v2218, 128
        %2497 = vxpose.xlu0.b32.cont [2/16] %v2219, 128
        %2498 = vxpose.xlu0.b32.cont [3/16] %v2220, 128
        %2499 = vxpose.xlu0.b32.cont [4/16] %v2221, 128
        %2500 = vxpose.xlu0.b32.cont [5/16] %v2222, 128
        %2501 = vxpose.xlu0.b32.cont [6/16] %v2223, 128
        %2502 = vxpose.xlu0.b32.cont [7/16] %v2224, 128
        %2503 = vxpose.xlu0.b32.cont [8/16] %v2225, 128
        %2504 = vxpose.xlu0.b32.cont [9/16] 0.0, 128
        %2505 = vxpose.xlu0.b32.cont [10/16] 0.0, 128
        %2506 = vxpose.xlu0.b32.cont [11/16] 0.0, 128
        %2507 = vxpose.xlu0.b32.cont [12/16] 0.0, 128
        %2508 = vxpose.xlu0.b32.cont [13/16] 0.0, 128
        %2509 = vxpose.xlu0.b32.cont [14/16] 0.0, 128
        %2510 = vxpose.xlu0.b32.cont [15/16] 0.0, 128
        %2511 = vxpose.xlu0.b32.end [16/16] 0.0, 128
        %v2512 = vpop.trf.xlu0
        %v2513 = vpop.trf.xlu0
        %v2514 = vpop.trf.xlu0
        %v2515 = vpop.trf.xlu0
        %v2516 = vpop.trf.xlu0
        %v2517 = vpop.trf.xlu0
        %v2518 = vpop.trf.xlu0
        %v2519 = vpop.trf.xlu0
        %v2520 = vpop.trf.xlu0
        %v2521 = vpop.trf.xlu0
        %v2522 = vpop.trf.xlu0
        %v2523 = vpop.trf.xlu0
        %v2524 = vpop.trf.xlu0
        %v2525 = vpop.trf.xlu0
        %v2526 = vpop.trf.xlu0
        %v2527 = vpop.trf.xlu0
        %v2529 = vsel %vm541, %v2512, 0
        %v2532 = vsel %vm541, %v2513, 0
        %v2535 = vsel %vm541, %v2514, 0
        %v2538 = vsel %vm541, %v2515, 0
        %2540 = vmatprep.subr.mxu0 0.0
        %v2541 = vand.u32 %v2488, 4294901760
        %2542 = vmatpush1.msra.mxu0 %v2541
        %2543 = vmatprep.subr.mxu0 0.0
        %v2544 = vand.u32 %v2489, 4294901760
        %2545 = vmatpush1.msra.mxu0 %v2544
        %2546 = vmatprep.subr.mxu0 0.0
        %v2547 = vand.u32 %v2490, 4294901760
        %2548 = vmatpush1.msra.mxu0 %v2547
        %2549 = vmatprep.subr.mxu0 0.0
        %v2550 = vand.u32 %v2491, 4294901760
        %2551 = vmatpush1.msra.mxu0 %v2550
        %2552 = vmatprep.subr.mxu0 0.0
        %v2553 = vand.u32 %v2492, 4294901760
        %2554 = vmatpush1.msra.mxu0 %v2553
        %2555 = vmatprep.subr.mxu0 0.0
        %v2556 = vand.u32 %v2493, 4294901760
        %2557 = vmatpush1.msra.mxu0 %v2556
        %2558 = vmatprep.subr.mxu0 0.0
        %v2559 = vand.u32 %v2494, 4294901760
        %2560 = vmatpush1.msra.mxu0 %v2559
        %2561 = vmatprep.subr.mxu0 0.0
        %v2562 = vand.u32 %v2495, 4294901760
        %2563 = vmatpush1.msra.mxu0 %v2562
        %2564 = vmatprep.subr.mxu0 0.0
        %2565 = vmatpush1.msra.mxu0 0.0
        %2566 = vmatprep.subr.mxu0 0.0
        %2567 = vmatpush1.msra.mxu0 0.0
        %2568 = vmatprep.subr.mxu0 0.0
        %2569 = vmatpush1.msra.mxu0 0.0
        %2570 = vmatprep.subr.mxu0 0.0
        %2571 = vmatpush1.msra.mxu0 0.0
        %2572 = vmatprep.subr.mxu0 0.0
        %2573 = vmatpush1.msra.mxu0 0.0
        %2574 = vmatprep.subr.mxu0 0.0
        %2575 = vmatpush1.msra.mxu0 0.0
        %2576 = vmatprep.subr.mxu0 0.0
        %2577 = vmatpush1.msra.mxu0 0.0
        %2578 = vmatprep.subr.mxu0 0.0
        %2579 = vmatpush1.msra.mxu0 0.0
        %2580 = vmatprep.subr.mxu0 0.0
        %2581 = vmatpush1.msra.mxu0 0.0
        %2582 = vmatprep.subr.mxu0 0.0
        %2583 = vmatpush1.msra.mxu0 0.0
        %2584 = vmatprep.subr.mxu0 0.0
        %2585 = vmatpush1.msra.mxu0 0.0
        %2586 = vmatprep.subr.mxu0 0.0
        %2587 = vmatpush1.msra.mxu0 0.0
        %2588 = vmatprep.subr.mxu0 0.0
        %2589 = vmatpush1.msra.mxu0 0.0
        %2590 = vmatprep.subr.mxu0 0.0
        %2591 = vmatpush1.msra.mxu0 0.0
        %2592 = vmatprep.subr.mxu0 0.0
        %2593 = vmatpush1.msra.mxu0 0.0
        %2594 = vmatprep.subr.mxu0 0.0
        %2595 = vmatpush1.msra.mxu0 0.0
        %2596 = vmatprep.subr.mxu0 0.0
        %2597 = vmatpush1.msra.mxu0 0.0
        %2598 = vmatprep.subr.mxu0 0.0
        %2599 = vmatpush1.msra.mxu0 0.0
        %2600 = vmatprep.subr.mxu0 0.0
        %2601 = vmatpush1.msra.mxu0 0.0
        %2602 = vmatprep.subr.mxu0 0.0
        %2603 = vmatpush1.msra.mxu0 0.0
        %2604 = vmatprep.subr.mxu0 0.0
        %2605 = vmatpush1.msra.mxu0 0.0
        %2606 = vmatprep.subr.mxu0 0.0
        %2607 = vmatpush1.msra.mxu0 0.0
        %2608 = vmatprep.subr.mxu0 0.0
        %2609 = vmatpush1.msra.mxu0 0.0
        %2610 = vmatprep.subr.mxu0 0.0
        %2611 = vmatpush1.msra.mxu0 0.0
        %2612 = vmatprep.mubr.f32.mxu0 0.0
        %v2613 = vand.u32 %v2529, 4294901760
        %v2614 = vsub.f32 %v2529, %v2613
        %v2615 = vand.u32 %v2614, 4294901760
        %v2616 = vsub.f32 %v2614, %v2615
        %v2617 = vand.u32 %v2616, 4294901760
        %2618 = vmatmul.mubr.f32.gmra.mrb[0].mxu0 %v2617
        %v2619 = vpop.f32.mrb[0].mxu0
        %v2620 = vadd.f32 0.0, %v2619
        %v2621 = vpop.f32.mrb[0].mxu0
        %2622 = vmatprep.mubr.f32.mxu0 0.0
        %v2623 = vand.u32 %v2532, 4294901760
        %v2624 = vsub.f32 %v2532, %v2623
        %v2625 = vand.u32 %v2624, 4294901760
        %v2626 = vsub.f32 %v2624, %v2625
        %v2627 = vand.u32 %v2626, 4294901760
        %2628 = vmatmul.mubr.f32.gmra.mrb[0].mxu0 %v2627
        %v2629 = vpop.f32.mrb[0].mxu0
        %v2630 = vadd.f32 0.0, %v2629
        %v2631 = vpop.f32.mrb[0].mxu0
        %2632 = vmatprep.mubr.f32.mxu0 0.0
        %v2633 = vand.u32 %v2535, 4294901760
        %v2634 = vsub.f32 %v2535, %v2633
        %v2635 = vand.u32 %v2634, 4294901760
        %v2636 = vsub.f32 %v2634, %v2635
        %v2637 = vand.u32 %v2636, 4294901760
        %2638 = vmatmul.mubr.f32.gmra.mrb[0].mxu0 %v2637
        %v2639 = vpop.f32.mrb[0].mxu0
        %v2640 = vadd.f32 0.0, %v2639
        %v2641 = vpop.f32.mrb[0].mxu0
        %2642 = vmatprep.mubr.f32.mxu0 0.0
        %v2643 = vand.u32 %v2538, 4294901760
        %v2644 = vsub.f32 %v2538, %v2643
        %v2645 = vand.u32 %v2644, 4294901760
        %v2646 = vsub.f32 %v2644, %v2645
        %v2647 = vand.u32 %v2646, 4294901760
        %2648 = vmatmul.mubr.f32.gmra.mrb[0].mxu0 %v2647
        %v2649 = vpop.f32.mrb[0].mxu0
        %v2650 = vadd.f32 0.0, %v2649
        %v2651 = vpop.f32.mrb[0].mxu0
        %2652 = vdwg.mxu0
        %2653 = vmatprep.subr.mxu0 0.0
        %v2654 = vand.u32 %v2488, 4294901760
        %v2655 = vsub.f32 %v2488, %v2654
        %v2656 = vand.u32 %v2655, 4294901760
        %v2657 = vsub.f32 %v2655, %v2656
        %v2658 = vand.u32 %v2657, 4294901760
        %2659 = vmatpush1.msra.mxu0 %v2658
        %2660 = vmatprep.subr.mxu0 0.0
        %v2661 = vand.u32 %v2489, 4294901760
        %v2662 = vsub.f32 %v2489, %v2661
        %v2663 = vand.u32 %v2662, 4294901760
        %v2664 = vsub.f32 %v2662, %v2663
        %v2665 = vand.u32 %v2664, 4294901760
        %2666 = vmatpush1.msra.mxu0 %v2665
        %2667 = vmatprep.subr.mxu0 0.0
        %v2668 = vand.u32 %v2490, 4294901760
        %v2669 = vsub.f32 %v2490, %v2668
        %v2670 = vand.u32 %v2669, 4294901760
        %v2671 = vsub.f32 %v2669, %v2670
        %v2672 = vand.u32 %v2671, 4294901760
        %2673 = vmatpush1.msra.mxu0 %v2672
        %2674 = vmatprep.subr.mxu0 0.0
        %v2675 = vand.u32 %v2491, 4294901760
        %v2676 = vsub.f32 %v2491, %v2675
        %v2677 = vand.u32 %v2676, 4294901760
        %v2678 = vsub.f32 %v2676, %v2677
        %v2679 = vand.u32 %v2678, 4294901760
        %2680 = vmatpush1.msra.mxu0 %v2679
        %2681 = vmatprep.subr.mxu0 0.0
        %v2682 = vand.u32 %v2492, 4294901760
        %v2683 = vsub.f32 %v2492, %v2682
        %v2684 = vand.u32 %v2683, 4294901760
        %v2685 = vsub.f32 %v2683, %v2684
        %v2686 = vand.u32 %v2685, 4294901760
        %2687 = vmatpush1.msra.mxu0 %v2686
        %2688 = vmatprep.subr.mxu0 0.0
        %v2689 = vand.u32 %v2493, 4294901760
        %v2690 = vsub.f32 %v2493, %v2689
        %v2691 = vand.u32 %v2690, 4294901760
        %v2692 = vsub.f32 %v2690, %v2691
        %v2693 = vand.u32 %v2692, 4294901760
        %2694 = vmatpush1.msra.mxu0 %v2693
        %2695 = vmatprep.subr.mxu0 0.0
        %v2696 = vand.u32 %v2494, 4294901760
        %v2697 = vsub.f32 %v2494, %v2696
        %v2698 = vand.u32 %v2697, 4294901760
        %v2699 = vsub.f32 %v2697, %v2698
        %v2700 = vand.u32 %v2699, 4294901760
        %2701 = vmatpush1.msra.mxu0 %v2700
        %2702 = vmatprep.subr.mxu0 0.0
        %v2703 = vand.u32 %v2495, 4294901760
        %v2704 = vsub.f32 %v2495, %v2703
        %v2705 = vand.u32 %v2704, 4294901760
        %v2706 = vsub.f32 %v2704, %v2705
        %v2707 = vand.u32 %v2706, 4294901760
        %2708 = vmatpush1.msra.mxu0 %v2707
        %2709 = vmatprep.subr.mxu0 0.0
        %2710 = vmatpush1.msra.mxu0 0.0
        %2711 = vmatprep.subr.mxu0 0.0
        %2712 = vmatpush1.msra.mxu0 0.0
        %2713 = vmatprep.subr.mxu0 0.0
        %2714 = vmatpush1.msra.mxu0 0.0
        %2715 = vmatprep.subr.mxu0 0.0
        %2716 = vmatpush1.msra.mxu0 0.0
        %2717 = vmatprep.subr.mxu0 0.0
        %2718 = vmatpush1.msra.mxu0 0.0
        %2719 = vmatprep.subr.mxu0 0.0
        %2720 = vmatpush1.msra.mxu0 0.0
        %2721 = vmatprep.subr.mxu0 0.0
        %2722 = vmatpush1.msra.mxu0 0.0
        %2723 = vmatprep.subr.mxu0 0.0
        %2724 = vmatpush1.msra.mxu0 0.0
        %2725 = vmatprep.subr.mxu0 0.0
        %2726 = vmatpush1.msra.mxu0 0.0
        %2727 = vmatprep.subr.mxu0 0.0
        %2728 = vmatpush1.msra.mxu0 0.0
        %2729 = vmatprep.subr.mxu0 0.0
        %2730 = vmatpush1.msra.mxu0 0.0
        %2731 = vmatprep.subr.mxu0 0.0
        %2732 = vmatpush1.msra.mxu0 0.0
        %2733 = vmatprep.subr.mxu0 0.0
        %2734 = vmatpush1.msra.mxu0 0.0
        %2735 = vmatprep.subr.mxu0 0.0
        %2736 = vmatpush1.msra.mxu0 0.0
        %2737 = vmatprep.subr.mxu0 0.0
        %2738 = vmatpush1.msra.mxu0 0.0
        %2739 = vmatprep.subr.mxu0 0.0
        %2740 = vmatpush1.msra.mxu0 0.0
        %2741 = vmatprep.subr.mxu0 0.0
        %2742 = vmatpush1.msra.mxu0 0.0
        %2743 = vmatprep.subr.mxu0 0.0
        %2744 = vmatpush1.msra.mxu0 0.0
        %2745 = vmatprep.subr.mxu0 0.0
        %2746 = vmatpush1.msra.mxu0 0.0
        %2747 = vmatprep.subr.mxu0 0.0
        %2748 = vmatpush1.msra.mxu0 0.0
        %2749 = vmatprep.subr.mxu0 0.0
        %2750 = vmatpush1.msra.mxu0 0.0
        %2751 = vmatprep.subr.mxu0 0.0
        %2752 = vmatpush1.msra.mxu0 0.0
        %2753 = vmatprep.subr.mxu0 0.0
        %2754 = vmatpush1.msra.mxu0 0.0
        %2755 = vmatprep.subr.mxu0 0.0
        %2756 = vmatpush1.msra.mxu0 0.0
        %2757 = vmatprep.mubr.f32.mxu0 0.0
        %v2758 = vand.u32 %v2529, 4294901760
        %2759 = vmatmul.mubr.f32.gmra.mrb[0].mxu0 %v2758
        %v2760 = vpop.f32.mrb[0].mxu0
        %v2761 = vadd.f32 %v2620, %v2760
        %v2762 = vpop.f32.mrb[0].mxu0
        %2763 = vmatprep.mubr.f32.mxu0 0.0
        %v2764 = vand.u32 %v2532, 4294901760
        %2765 = vmatmul.mubr.f32.gmra.mrb[0].mxu0 %v2764
        %v2766 = vpop.f32.mrb[0].mxu0
        %v2767 = vadd.f32 %v2630, %v2766
        %v2768 = vpop.f32.mrb[0].mxu0
        %2769 = vmatprep.mubr.f32.mxu0 0.0
        %v2770 = vand.u32 %v2535, 4294901760
        %2771 = vmatmul.mubr.f32.gmra.mrb[0].mxu0 %v2770
        %v2772 = vpop.f32.mrb[0].mxu0
        %v2773 = vadd.f32 %v2640, %v2772
        %v2774 = vpop.f32.mrb[0].mxu0
        %2775 = vmatprep.mubr.f32.mxu0 0.0
        %v2776 = vand.u32 %v2538, 4294901760
        %2777 = vmatmul.mubr.f32.gmra.mrb[0].mxu0 %v2776
        %v2778 = vpop.f32.mrb[0].mxu0
        %v2779 = vadd.f32 %v2650, %v2778
        %v2780 = vpop.f32.mrb[0].mxu0
        %2781 = vdwg.mxu0
        %2782 = vmatprep.subr.mxu0 0.0
        %v2783 = vand.u32 %v2488, 4294901760
        %v2784 = vsub.f32 %v2488, %v2783
        %2785 = vmatpush1.msra.mxu0 %v2784
        %2786 = vmatprep.subr.mxu0 0.0
        %v2787 = vand.u32 %v2489, 4294901760
        %v2788 = vsub.f32 %v2489, %v2787
        %2789 = vmatpush1.msra.mxu0 %v2788
        %2790 = vmatprep.subr.mxu0 0.0
        %v2791 = vand.u32 %v2490, 4294901760
        %v2792 = vsub.f32 %v2490, %v2791
        %2793 = vmatpush1.msra.mxu0 %v2792
        %2794 = vmatprep.subr.mxu0 0.0
        %v2795 = vand.u32 %v2491, 4294901760
        %v2796 = vsub.f32 %v2491, %v2795
        %2797 = vmatpush1.msra.mxu0 %v2796
        %2798 = vmatprep.subr.mxu0 0.0
        %v2799 = vand.u32 %v2492, 4294901760
        %v2800 = vsub.f32 %v2492, %v2799
        %2801 = vmatpush1.msra.mxu0 %v2800
        %2802 = vmatprep.subr.mxu0 0.0
        %v2803 = vand.u32 %v2493, 4294901760
        %v2804 = vsub.f32 %v2493, %v2803
        %2805 = vmatpush1.msra.mxu0 %v2804
        %2806 = vmatprep.subr.mxu0 0.0
        %v2807 = vand.u32 %v2494, 4294901760
        %v2808 = vsub.f32 %v2494, %v2807
        %2809 = vmatpush1.msra.mxu0 %v2808
        %2810 = vmatprep.subr.mxu0 0.0
        %v2811 = vand.u32 %v2495, 4294901760
        %v2812 = vsub.f32 %v2495, %v2811
        %2813 = vmatpush1.msra.mxu0 %v2812
        %2814 = vmatprep.subr.mxu0 0.0
        %2815 = vmatpush1.msra.mxu0 0.0
        %2816 = vmatprep.subr.mxu0 0.0
        %2817 = vmatpush1.msra.mxu0 0.0
        %2818 = vmatprep.subr.mxu0 0.0
        %2819 = vmatpush1.msra.mxu0 0.0
        %2820 = vmatprep.subr.mxu0 0.0
        %2821 = vmatpush1.msra.mxu0 0.0
        %2822 = vmatprep.subr.mxu0 0.0
        %2823 = vmatpush1.msra.mxu0 0.0
        %2824 = vmatprep.subr.mxu0 0.0
        %2825 = vmatpush1.msra.mxu0 0.0
        %2826 = vmatprep.subr.mxu0 0.0
        %2827 = vmatpush1.msra.mxu0 0.0
        %2828 = vmatprep.subr.mxu0 0.0
        %2829 = vmatpush1.msra.mxu0 0.0
        %2830 = vmatprep.subr.mxu0 0.0
        %2831 = vmatpush1.msra.mxu0 0.0
        %2832 = vmatprep.subr.mxu0 0.0
        %2833 = vmatpush1.msra.mxu0 0.0
        %2834 = vmatprep.subr.mxu0 0.0
        %2835 = vmatpush1.msra.mxu0 0.0
        %2836 = vmatprep.subr.mxu0 0.0
        %2837 = vmatpush1.msra.mxu0 0.0
        %2838 = vmatprep.subr.mxu0 0.0
        %2839 = vmatpush1.msra.mxu0 0.0
        %2840 = vmatprep.subr.mxu0 0.0
        %2841 = vmatpush1.msra.mxu0 0.0
        %2842 = vmatprep.subr.mxu0 0.0
        %2843 = vmatpush1.msra.mxu0 0.0
        %2844 = vmatprep.subr.mxu0 0.0
        %2845 = vmatpush1.msra.mxu0 0.0
        %2846 = vmatprep.subr.mxu0 0.0
        %2847 = vmatpush1.msra.mxu0 0.0
        %2848 = vmatprep.subr.mxu0 0.0
        %2849 = vmatpush1.msra.mxu0 0.0
        %2850 = vmatprep.subr.mxu0 0.0
        %2851 = vmatpush1.msra.mxu0 0.0
        %2852 = vmatprep.subr.mxu0 0.0
        %2853 = vmatpush1.msra.mxu0 0.0
        %2854 = vmatprep.subr.mxu0 0.0
        %2855 = vmatpush1.msra.mxu0 0.0
        %2856 = vmatprep.subr.mxu0 0.0
        %2857 = vmatpush1.msra.mxu0 0.0
        %2858 = vmatprep.subr.mxu0 0.0
        %2859 = vmatpush1.msra.mxu0 0.0
        %2860 = vmatprep.subr.mxu0 0.0
        %2861 = vmatpush1.msra.mxu0 0.0
        %2862 = vmatprep.mubr.f32.mxu0 0.0
        %v2863 = vand.u32 %v2529, 4294901760
        %v2864 = vsub.f32 %v2529, %v2863
        %2865 = vmatmul.mubr.f32.gmra.mrb[0].mxu0 %v2864
        %v2866 = vpop.f32.mrb[0].mxu0
        %v2867 = vadd.f32 %v2761, %v2866
        %v2868 = vpop.f32.mrb[0].mxu0
        %2869 = vmatprep.mubr.f32.mxu0 0.0
        %v2870 = vand.u32 %v2532, 4294901760
        %v2871 = vsub.f32 %v2532, %v2870
        %2872 = vmatmul.mubr.f32.gmra.mrb[0].mxu0 %v2871
        %v2873 = vpop.f32.mrb[0].mxu0
        %v2874 = vadd.f32 %v2767, %v2873
        %v2875 = vpop.f32.mrb[0].mxu0
        %2876 = vmatprep.mubr.f32.mxu0 0.0
        %v2877 = vand.u32 %v2535, 4294901760
        %v2878 = vsub.f32 %v2535, %v2877
        %2879 = vmatmul.mubr.f32.gmra.mrb[0].mxu0 %v2878
        %v2880 = vpop.f32.mrb[0].mxu0
        %v2881 = vadd.f32 %v2773, %v2880
        %v2882 = vpop.f32.mrb[0].mxu0
        %2883 = vmatprep.mubr.f32.mxu0 0.0
        %v2884 = vand.u32 %v2538, 4294901760
        %v2885 = vsub.f32 %v2538, %v2884
        %2886 = vmatmul.mubr.f32.gmra.mrb[0].mxu0 %v2885
        %v2887 = vpop.f32.mrb[0].mxu0
        %v2888 = vadd.f32 %v2779, %v2887
        %v2889 = vpop.f32.mrb[0].mxu0
        %2890 = vdwg.mxu0
        %2891 = vmatprep.subr.mxu0 0.0
        %v2892 = vand.u32 %v2488, 4294901760
        %2893 = vmatpush1.msra.mxu0 %v2892
        %2894 = vmatprep.subr.mxu0 0.0
        %v2895 = vand.u32 %v2489, 4294901760
        %2896 = vmatpush1.msra.mxu0 %v2895
        %2897 = vmatprep.subr.mxu0 0.0
        %v2898 = vand.u32 %v2490, 4294901760
        %2899 = vmatpush1.msra.mxu0 %v2898
        %2900 = vmatprep.subr.mxu0 0.0
        %v2901 = vand.u32 %v2491, 4294901760
        %2902 = vmatpush1.msra.mxu0 %v2901
        %2903 = vmatprep.subr.mxu0 0.0
        %v2904 = vand.u32 %v2492, 4294901760
        %2905 = vmatpush1.msra.mxu0 %v2904
        %2906 = vmatprep.subr.mxu0 0.0
        %v2907 = vand.u32 %v2493, 4294901760
        %2908 = vmatpush1.msra.mxu0 %v2907
        %2909 = vmatprep.subr.mxu0 0.0
        %v2910 = vand.u32 %v2494, 4294901760
        %2911 = vmatpush1.msra.mxu0 %v2910
        %2912 = vmatprep.subr.mxu0 0.0
        %v2913 = vand.u32 %v2495, 4294901760
        %2914 = vmatpush1.msra.mxu0 %v2913
        %2915 = vmatprep.subr.mxu0 0.0
        %2916 = vmatpush1.msra.mxu0 0.0
        %2917 = vmatprep.subr.mxu0 0.0
        %2918 = vmatpush1.msra.mxu0 0.0
        %2919 = vmatprep.subr.mxu0 0.0
        %2920 = vmatpush1.msra.mxu0 0.0
        %2921 = vmatprep.subr.mxu0 0.0
        %2922 = vmatpush1.msra.mxu0 0.0
        %2923 = vmatprep.subr.mxu0 0.0
        %2924 = vmatpush1.msra.mxu0 0.0
        %2925 = vmatprep.subr.mxu0 0.0
        %2926 = vmatpush1.msra.mxu0 0.0
        %2927 = vmatprep.subr.mxu0 0.0
        %2928 = vmatpush1.msra.mxu0 0.0
        %2929 = vmatprep.subr.mxu0 0.0
        %2930 = vmatpush1.msra.mxu0 0.0
        %2931 = vmatprep.subr.mxu0 0.0
        %2932 = vmatpush1.msra.mxu0 0.0
        %2933 = vmatprep.subr.mxu0 0.0
        %2934 = vmatpush1.msra.mxu0 0.0
        %2935 = vmatprep.subr.mxu0 0.0
        %2936 = vmatpush1.msra.mxu0 0.0
        %2937 = vmatprep.subr.mxu0 0.0
        %2938 = vmatpush1.msra.mxu0 0.0
        %2939 = vmatprep.subr.mxu0 0.0
        %2940 = vmatpush1.msra.mxu0 0.0
        %2941 = vmatprep.subr.mxu0 0.0
        %2942 = vmatpush1.msra.mxu0 0.0
        %2943 = vmatprep.subr.mxu0 0.0
        %2944 = vmatpush1.msra.mxu0 0.0
        %2945 = vmatprep.subr.mxu0 0.0
        %2946 = vmatpush1.msra.mxu0 0.0
        %2947 = vmatprep.subr.mxu0 0.0
        %2948 = vmatpush1.msra.mxu0 0.0
        %2949 = vmatprep.subr.mxu0 0.0
        %2950 = vmatpush1.msra.mxu0 0.0
        %2951 = vmatprep.subr.mxu0 0.0
        %2952 = vmatpush1.msra.mxu0 0.0
        %2953 = vmatprep.subr.mxu0 0.0
        %2954 = vmatpush1.msra.mxu0 0.0
        %2955 = vmatprep.subr.mxu0 0.0
        %2956 = vmatpush1.msra.mxu0 0.0
        %2957 = vmatprep.subr.mxu0 0.0
        %2958 = vmatpush1.msra.mxu0 0.0
        %2959 = vmatprep.subr.mxu0 0.0
        %2960 = vmatpush1.msra.mxu0 0.0
        %2961 = vmatprep.subr.mxu0 0.0
        %2962 = vmatpush1.msra.mxu0 0.0
        %2963 = vmatprep.mubr.f32.mxu0 0.0
        %v2964 = vand.u32 %v2529, 4294901760
        %v2965 = vsub.f32 %v2529, %v2964
        %v2966 = vand.u32 %v2965, 4294901760
        %2967 = vmatmul.mubr.f32.gmra.mrb[0].mxu0 %v2966
        %v2968 = vpop.f32.mrb[0].mxu0
        %v2969 = vadd.f32 %v2867, %v2968
        %v2970 = vpop.f32.mrb[0].mxu0
        %2971 = vmatprep.mubr.f32.mxu0 0.0
        %v2972 = vand.u32 %v2532, 4294901760
        %v2973 = vsub.f32 %v2532, %v2972
        %v2974 = vand.u32 %v2973, 4294901760
        %2975 = vmatmul.mubr.f32.gmra.mrb[0].mxu0 %v2974
        %v2976 = vpop.f32.mrb[0].mxu0
        %v2977 = vadd.f32 %v2874, %v2976
        %v2978 = vpop.f32.mrb[0].mxu0
        %2979 = vmatprep.mubr.f32.mxu0 0.0
        %v2980 = vand.u32 %v2535, 4294901760
        %v2981 = vsub.f32 %v2535, %v2980
        %v2982 = vand.u32 %v2981, 4294901760
        %2983 = vmatmul.mubr.f32.gmra.mrb[0].mxu0 %v2982
        %v2984 = vpop.f32.mrb[0].mxu0
        %v2985 = vadd.f32 %v2881, %v2984
        %v2986 = vpop.f32.mrb[0].mxu0
        %2987 = vmatprep.mubr.f32.mxu0 0.0
        %v2988 = vand.u32 %v2538, 4294901760
        %v2989 = vsub.f32 %v2538, %v2988
        %v2990 = vand.u32 %v2989, 4294901760
        %2991 = vmatmul.mubr.f32.gmra.mrb[0].mxu0 %v2990
        %v2992 = vpop.f32.mrb[0].mxu0
        %v2993 = vadd.f32 %v2888, %v2992
        %v2994 = vpop.f32.mrb[0].mxu0
        %2995 = vdwg.mxu0
        %2996 = vmatprep.subr.mxu0 0.0
        %v2997 = vand.u32 %v2488, 4294901760
        %v2998 = vsub.f32 %v2488, %v2997
        %v2999 = vand.u32 %v2998, 4294901760
        %3000 = vmatpush1.msra.mxu0 %v2999
        %3001 = vmatprep.subr.mxu0 0.0
        %v3002 = vand.u32 %v2489, 4294901760
        %v3003 = vsub.f32 %v2489, %v3002
        %v3004 = vand.u32 %v3003, 4294901760
        %3005 = vmatpush1.msra.mxu0 %v3004
        %3006 = vmatprep.subr.mxu0 0.0
        %v3007 = vand.u32 %v2490, 4294901760
        %v3008 = vsub.f32 %v2490, %v3007
        %v3009 = vand.u32 %v3008, 4294901760
        %3010 = vmatpush1.msra.mxu0 %v3009
        %3011 = vmatprep.subr.mxu0 0.0
        %v3012 = vand.u32 %v2491, 4294901760
        %v3013 = vsub.f32 %v2491, %v3012
        %v3014 = vand.u32 %v3013, 4294901760
        %3015 = vmatpush1.msra.mxu0 %v3014
        %3016 = vmatprep.subr.mxu0 0.0
        %v3017 = vand.u32 %v2492, 4294901760
        %v3018 = vsub.f32 %v2492, %v3017
        %v3019 = vand.u32 %v3018, 4294901760
        %3020 = vmatpush1.msra.mxu0 %v3019
        %3021 = vmatprep.subr.mxu0 0.0
        %v3022 = vand.u32 %v2493, 4294901760
        %v3023 = vsub.f32 %v2493, %v3022
        %v3024 = vand.u32 %v3023, 4294901760
        %3025 = vmatpush1.msra.mxu0 %v3024
        %3026 = vmatprep.subr.mxu0 0.0
        %v3027 = vand.u32 %v2494, 4294901760
        %v3028 = vsub.f32 %v2494, %v3027
        %v3029 = vand.u32 %v3028, 4294901760
        %3030 = vmatpush1.msra.mxu0 %v3029
        %3031 = vmatprep.subr.mxu0 0.0
        %v3032 = vand.u32 %v2495, 4294901760
        %v3033 = vsub.f32 %v2495, %v3032
        %v3034 = vand.u32 %v3033, 4294901760
        %3035 = vmatpush1.msra.mxu0 %v3034
        %3036 = vmatprep.subr.mxu0 0.0
        %3037 = vmatpush1.msra.mxu0 0.0
        %3038 = vmatprep.subr.mxu0 0.0
        %3039 = vmatpush1.msra.mxu0 0.0
        %3040 = vmatprep.subr.mxu0 0.0
        %3041 = vmatpush1.msra.mxu0 0.0
        %3042 = vmatprep.subr.mxu0 0.0
        %3043 = vmatpush1.msra.mxu0 0.0
        %3044 = vmatprep.subr.mxu0 0.0
        %3045 = vmatpush1.msra.mxu0 0.0
        %3046 = vmatprep.subr.mxu0 0.0
        %3047 = vmatpush1.msra.mxu0 0.0
        %3048 = vmatprep.subr.mxu0 0.0
        %3049 = vmatpush1.msra.mxu0 0.0
        %3050 = vmatprep.subr.mxu0 0.0
        %3051 = vmatpush1.msra.mxu0 0.0
        %3052 = vmatprep.subr.mxu0 0.0
        %3053 = vmatpush1.msra.mxu0 0.0
        %3054 = vmatprep.subr.mxu0 0.0
        %3055 = vmatpush1.msra.mxu0 0.0
        %3056 = vmatprep.subr.mxu0 0.0
        %3057 = vmatpush1.msra.mxu0 0.0
        %3058 = vmatprep.subr.mxu0 0.0
        %3059 = vmatpush1.msra.mxu0 0.0
        %3060 = vmatprep.subr.mxu0 0.0
        %3061 = vmatpush1.msra.mxu0 0.0
        %3062 = vmatprep.subr.mxu0 0.0
        %3063 = vmatpush1.msra.mxu0 0.0
        %3064 = vmatprep.subr.mxu0 0.0
        %3065 = vmatpush1.msra.mxu0 0.0
        %3066 = vmatprep.subr.mxu0 0.0
        %3067 = vmatpush1.msra.mxu0 0.0
        %3068 = vmatprep.subr.mxu0 0.0
        %3069 = vmatpush1.msra.mxu0 0.0
        %3070 = vmatprep.subr.mxu0 0.0
        %3071 = vmatpush1.msra.mxu0 0.0
        %3072 = vmatprep.subr.mxu0 0.0
        %3073 = vmatpush1.msra.mxu0 0.0
        %3074 = vmatprep.subr.mxu0 0.0
        %3075 = vmatpush1.msra.mxu0 0.0
        %3076 = vmatprep.subr.mxu0 0.0
        %3077 = vmatpush1.msra.mxu0 0.0
        %3078 = vmatprep.subr.mxu0 0.0
        %3079 = vmatpush1.msra.mxu0 0.0
        %3080 = vmatprep.subr.mxu0 0.0
        %3081 = vmatpush1.msra.mxu0 0.0
        %3082 = vmatprep.subr.mxu0 0.0
        %3083 = vmatpush1.msra.mxu0 0.0
        %3084 = vmatprep.mubr.f32.mxu0 0.0
        %v3085 = vand.u32 %v2529, 4294901760
        %3086 = vmatmul.mubr.f32.gmra.mrb[0].mxu0 %v3085
        %v3087 = vpop.f32.mrb[0].mxu0
        %v3088 = vadd.f32 %v2969, %v3087
        %v3089 = vpop.f32.mrb[0].mxu0
        %3090 = vmatprep.mubr.f32.mxu0 0.0
        %v3091 = vand.u32 %v2532, 4294901760
        %3092 = vmatmul.mubr.f32.gmra.mrb[0].mxu0 %v3091
        %v3093 = vpop.f32.mrb[0].mxu0
        %v3094 = vadd.f32 %v2977, %v3093
        %v3095 = vpop.f32.mrb[0].mxu0
        %3096 = vmatprep.mubr.f32.mxu0 0.0
        %v3097 = vand.u32 %v2535, 4294901760
        %3098 = vmatmul.mubr.f32.gmra.mrb[0].mxu0 %v3097
        %v3099 = vpop.f32.mrb[0].mxu0
        %v3100 = vadd.f32 %v2985, %v3099
        %v3101 = vpop.f32.mrb[0].mxu0
        %3102 = vmatprep.mubr.f32.mxu0 0.0
        %v3103 = vand.u32 %v2538, 4294901760
        %3104 = vmatmul.mubr.f32.gmra.mrb[0].mxu0 %v3103
        %v3105 = vpop.f32.mrb[0].mxu0
        %v3106 = vadd.f32 %v2993, %v3105
        %v3107 = vpop.f32.mrb[0].mxu0
        %3108 = vdwg.mxu0
        %3109 = vmatprep.subr.mxu0 0.0
        %v3110 = vand.u32 %v2488, 4294901760
        %3111 = vmatpush1.msra.mxu0 %v3110
        %3112 = vmatprep.subr.mxu0 0.0
        %v3113 = vand.u32 %v2489, 4294901760
        %3114 = vmatpush1.msra.mxu0 %v3113
        %3115 = vmatprep.subr.mxu0 0.0
        %v3116 = vand.u32 %v2490, 4294901760
        %3117 = vmatpush1.msra.mxu0 %v3116
        %3118 = vmatprep.subr.mxu0 0.0
        %v3119 = vand.u32 %v2491, 4294901760
        %3120 = vmatpush1.msra.mxu0 %v3119
        %3121 = vmatprep.subr.mxu0 0.0
        %v3122 = vand.u32 %v2492, 4294901760
        %3123 = vmatpush1.msra.mxu0 %v3122
        %3124 = vmatprep.subr.mxu0 0.0
        %v3125 = vand.u32 %v2493, 4294901760
        %3126 = vmatpush1.msra.mxu0 %v3125
        %3127 = vmatprep.subr.mxu0 0.0
        %v3128 = vand.u32 %v2494, 4294901760
        %3129 = vmatpush1.msra.mxu0 %v3128
        %3130 = vmatprep.subr.mxu0 0.0
        %v3131 = vand.u32 %v2495, 4294901760
        %3132 = vmatpush1.msra.mxu0 %v3131
        %3133 = vmatprep.subr.mxu0 0.0
        %3134 = vmatpush1.msra.mxu0 0.0
        %3135 = vmatprep.subr.mxu0 0.0
        %3136 = vmatpush1.msra.mxu0 0.0
        %3137 = vmatprep.subr.mxu0 0.0
        %3138 = vmatpush1.msra.mxu0 0.0
        %3139 = vmatprep.subr.mxu0 0.0
        %3140 = vmatpush1.msra.mxu0 0.0
        %3141 = vmatprep.subr.mxu0 0.0
        %3142 = vmatpush1.msra.mxu0 0.0
        %3143 = vmatprep.subr.mxu0 0.0
        %3144 = vmatpush1.msra.mxu0 0.0
        %3145 = vmatprep.subr.mxu0 0.0
        %3146 = vmatpush1.msra.mxu0 0.0
        %3147 = vmatprep.subr.mxu0 0.0
        %3148 = vmatpush1.msra.mxu0 0.0
        %3149 = vmatprep.subr.mxu0 0.0
        %3150 = vmatpush1.msra.mxu0 0.0
        %3151 = vmatprep.subr.mxu0 0.0
        %3152 = vmatpush1.msra.mxu0 0.0
        %3153 = vmatprep.subr.mxu0 0.0
        %3154 = vmatpush1.msra.mxu0 0.0
        %3155 = vmatprep.subr.mxu0 0.0
        %3156 = vmatpush1.msra.mxu0 0.0
        %3157 = vmatprep.subr.mxu0 0.0
        %3158 = vmatpush1.msra.mxu0 0.0
        %3159 = vmatprep.subr.mxu0 0.0
        %3160 = vmatpush1.msra.mxu0 0.0
        %3161 = vmatprep.subr.mxu0 0.0
        %3162 = vmatpush1.msra.mxu0 0.0
        %3163 = vmatprep.subr.mxu0 0.0
        %3164 = vmatpush1.msra.mxu0 0.0
        %3165 = vmatprep.subr.mxu0 0.0
        %3166 = vmatpush1.msra.mxu0 0.0
        %3167 = vmatprep.subr.mxu0 0.0
        %3168 = vmatpush1.msra.mxu0 0.0
        %3169 = vmatprep.subr.mxu0 0.0
        %3170 = vmatpush1.msra.mxu0 0.0
        %3171 = vmatprep.subr.mxu0 0.0
        %3172 = vmatpush1.msra.mxu0 0.0
        %3173 = vmatprep.subr.mxu0 0.0
        %3174 = vmatpush1.msra.mxu0 0.0
        %3175 = vmatprep.subr.mxu0 0.0
        %3176 = vmatpush1.msra.mxu0 0.0
        %3177 = vmatprep.subr.mxu0 0.0
        %3178 = vmatpush1.msra.mxu0 0.0
        %3179 = vmatprep.subr.mxu0 0.0
        %3180 = vmatpush1.msra.mxu0 0.0
        %3181 = vmatprep.mubr.f32.mxu0 0.0
        %v3182 = vand.u32 %v2529, 4294901760
        %3183 = vmatmul.mubr.f32.gmra.mrb[0].mxu0 %v3182
        %v3184 = vpop.f32.mrb[0].mxu0
        %v3185 = vadd.f32 %v3088, %v3184
        %v3186 = vpop.f32.mrb[0].mxu0
        %3187 = vmatprep.mubr.f32.mxu0 0.0
        %v3188 = vand.u32 %v2532, 4294901760
        %3189 = vmatmul.mubr.f32.gmra.mrb[0].mxu0 %v3188
        %v3190 = vpop.f32.mrb[0].mxu0
        %v3191 = vadd.f32 %v3094, %v3190
        %v3192 = vpop.f32.mrb[0].mxu0
        %3193 = vmatprep.mubr.f32.mxu0 0.0
        %v3194 = vand.u32 %v2535, 4294901760
        %3195 = vmatmul.mubr.f32.gmra.mrb[0].mxu0 %v3194
        %v3196 = vpop.f32.mrb[0].mxu0
        %v3197 = vadd.f32 %v3100, %v3196
        %v3198 = vpop.f32.mrb[0].mxu0
        %3199 = vmatprep.mubr.f32.mxu0 0.0
        %v3200 = vand.u32 %v2538, 4294901760
        %3201 = vmatmul.mubr.f32.gmra.mrb[0].mxu0 %v3200
        %v3202 = vpop.f32.mrb[0].mxu0
        %v3203 = vadd.f32 %v3106, %v3202
        %v3204 = vpop.f32.mrb[0].mxu0
        %3205 = vdwg.mxu0
        %v3206 = vsub.f32 %v2213, %v3185
        %v3207 = vsub.f32 %v2214, %v3191
        %v3208 = vsub.f32 %v2215, %v3197
        %v3209 = vsub.f32 %v2216, %v3203
        %s3210 = scalar_lea.vmem %s1, 192
        %v3211 = vld [vmem:[%s3210] sm:$0xff]
        %v3212 = vld [vmem:[%s3210 + $0x8] sm:$0xff]
        %v3213 = vld [vmem:[%s3210 + $0x10] sm:$0xff]
        %v3214 = vld [vmem:[%s3210 + $0x18] sm:$0xff]
        %v3215 = vld [vmem:[%s3210 + $0x20] sm:$0xff]
        %v3216 = vld [vmem:[%s3210 + $0x28] sm:$0xff]
        %v3217 = vld [vmem:[%s3210 + $0x30] sm:$0xff]
        %v3218 = vld [vmem:[%s3210 + $0x38] sm:$0xff]
        %v3219 = vmul.f32 %v3211, %v3211
        %v3220 = vmul.f32 %v3212, %v3212
        %v3221 = vmul.f32 %v3213, %v3213
        %v3222 = vmul.f32 %v3214, %v3214
        %v3223 = vmul.f32 %v3215, %v3215
        %v3224 = vmul.f32 %v3216, %v3216
        %v3225 = vmul.f32 %v3217, %v3217
        %v3226 = vmul.f32 %v3218, %v3218
        %v3227 = vsel %vm244, %v3219, 0.0
        %3228 = vadd.xlane.f32.xlu0 %v3227
        %v3229 = vpop.xlane.xlu0 %3228
        %v3230 = vsel %vm244, %v3220, 0.0
        %3231 = vadd.xlane.f32.xlu0 %v3230
        %v3232 = vpop.xlane.xlu0 %3231
        %v3233 = vsel %vm244, %v3221, 0.0
        %3234 = vadd.xlane.f32.xlu0 %v3233
        %v3235 = vpop.xlane.xlu0 %3234
        %v3236 = vsel %vm244, %v3222, 0.0
        %3237 = vadd.xlane.f32.xlu0 %v3236
        %v3238 = vpop.xlane.xlu0 %3237
        %v3239 = vsel %vm244, %v3223, 0.0
        %3240 = vadd.xlane.f32.xlu0 %v3239
        %v3241 = vpop.xlane.xlu0 %3240
        %v3242 = vsel %vm244, %v3224, 0.0
        %3243 = vadd.xlane.f32.xlu0 %v3242
        %v3244 = vpop.xlane.xlu0 %3243
        %v3245 = vsel %vm244, %v3225, 0.0
        %3246 = vadd.xlane.f32.xlu0 %v3245
        %v3247 = vpop.xlane.xlu0 %3246
        %v3248 = vsel %vm244, %v3226, 0.0
        %3249 = vadd.xlane.f32.xlu0 %v3248
        %v3250 = vpop.xlane.xlu0 %3249
        %v3251 = vmul.f32 %v3229, 0.5
        %v3252 = vmul.f32 %v3232, 0.5
        %v3253 = vmul.f32 %v3235, 0.5
        %v3254 = vmul.f32 %v3238, 0.5
        %v3255 = vmul.f32 %v3241, 0.5
        %v3256 = vmul.f32 %v3244, 0.5
        %v3257 = vmul.f32 %v3247, 0.5
        %v3258 = vmul.f32 %v3250, 0.5
        %v3260 = vsel %vm244, %v3211, 0
        %v3263 = vsel %vm244, %v3212, 0
        %v3266 = vsel %vm244, %v3213, 0
        %v3269 = vsel %vm244, %v3214, 0
        %v3272 = vsel %vm244, %v3215, 0
        %v3275 = vsel %vm244, %v3216, 0
        %v3278 = vsel %vm244, %v3217, 0
        %v3281 = vsel %vm244, %v3218, 0
        %3283 = vmatprep.subr.mxu0 0.0
        %3284 = vmatpush1.msra.mxu0 %v3206
        %3285 = vmatprep.subr.mxu0 0.0
        %3286 = vmatpush1.msra.mxu0 %v3207
        %3287 = vmatprep.subr.mxu0 0.0
        %3288 = vmatpush1.msra.mxu0 %v3208
        %3289 = vmatprep.subr.mxu0 0.0
        %3290 = vmatpush1.msra.mxu0 %v3209
        %3291 = vmatprep.subr.mxu0 0.0
        %3292 = vmatpush1.msra.mxu0 0.0
        %3293 = vmatprep.subr.mxu0 0.0
        %3294 = vmatpush1.msra.mxu0 0.0
        %3295 = vmatprep.subr.mxu0 0.0
        %3296 = vmatpush1.msra.mxu0 0.0
        %3297 = vmatprep.subr.mxu0 0.0
        %3298 = vmatpush1.msra.mxu0 0.0
        %3299 = vmatprep.subr.mxu0 0.0
        %3300 = vmatpush1.msra.mxu0 0.0
        %3301 = vmatprep.subr.mxu0 0.0
        %3302 = vmatpush1.msra.mxu0 0.0
        %3303 = vmatprep.subr.mxu0 0.0
        %3304 = vmatpush1.msra.mxu0 0.0
        %3305 = vmatprep.subr.mxu0 0.0
        %3306 = vmatpush1.msra.mxu0 0.0
        %3307 = vmatprep.subr.mxu0 0.0
        %3308 = vmatpush1.msra.mxu0 0.0
        %3309 = vmatprep.subr.mxu0 0.0
        %3310 = vmatpush1.msra.mxu0 0.0
        %3311 = vmatprep.subr.mxu0 0.0
        %3312 = vmatpush1.msra.mxu0 0.0
        %3313 = vmatprep.subr.mxu0 0.0
        %3314 = vmatpush1.msra.mxu0 0.0
        %3315 = vmatprep.subr.mxu0 0.0
        %3316 = vmatpush1.msra.mxu0 0.0
        %3317 = vmatprep.subr.mxu0 0.0
        %3318 = vmatpush1.msra.mxu0 0.0
        %3319 = vmatprep.subr.mxu0 0.0
        %3320 = vmatpush1.msra.mxu0 0.0
        %3321 = vmatprep.subr.mxu0 0.0
        %3322 = vmatpush1.msra.mxu0 0.0
        %3323 = vmatprep.subr.mxu0 0.0
        %3324 = vmatpush1.msra.mxu0 0.0
        %3325 = vmatprep.subr.mxu0 0.0
        %3326 = vmatpush1.msra.mxu0 0.0
        %3327 = vmatprep.subr.mxu0 0.0
        %3328 = vmatpush1.msra.mxu0 0.0
        %3329 = vmatprep.subr.mxu0 0.0
        %3330 = vmatpush1.msra.mxu0 0.0
        %3331 = vmatprep.subr.mxu0 0.0
        %3332 = vmatpush1.msra.mxu0 0.0
        %3333 = vmatprep.subr.mxu0 0.0
        %3334 = vmatpush1.msra.mxu0 0.0
        %3335 = vmatprep.subr.mxu0 0.0
        %3336 = vmatpush1.msra.mxu0 0.0
        %3337 = vmatprep.subr.mxu0 0.0
        %3338 = vmatpush1.msra.mxu0 0.0
        %3339 = vmatprep.subr.mxu0 0.0
        %3340 = vmatpush1.msra.mxu0 0.0
        %3341 = vmatprep.subr.mxu0 0.0
        %3342 = vmatpush1.msra.mxu0 0.0
        %3343 = vmatprep.subr.mxu0 0.0
        %3344 = vmatpush1.msra.mxu0 0.0
        %3345 = vmatprep.subr.mxu0 0.0
        %3346 = vmatpush1.msra.mxu0 0.0
        %3347 = vmatprep.mubr.f32.mxu0 0.0
        %3348 = vmatmul.mubr.f32.gmra.mrb[0].mxu0 %v3260
        %v3349 = vpop.f32.mrb[0].mxu0
        %v3350 = vadd.f32 0.0, %v3349
        %v3351 = vpop.f32.mrb[0].mxu0
        %3352 = vmatprep.mubr.f32.mxu0 0.0
        %3353 = vmatmul.mubr.f32.gmra.mrb[0].mxu0 %v3263
        %v3354 = vpop.f32.mrb[0].mxu0
        %v3355 = vadd.f32 0.0, %v3354
        %v3356 = vpop.f32.mrb[0].mxu0
        %3357 = vmatprep.mubr.f32.mxu0 0.0
        %3358 = vmatmul.mubr.f32.gmra.mrb[0].mxu0 %v3266
        %v3359 = vpop.f32.mrb[0].mxu0
        %v3360 = vadd.f32 0.0, %v3359
        %v3361 = vpop.f32.mrb[0].mxu0
        %3362 = vmatprep.mubr.f32.mxu0 0.0
        %3363 = vmatmul.mubr.f32.gmra.mrb[0].mxu0 %v3269
        %v3364 = vpop.f32.mrb[0].mxu0
        %v3365 = vadd.f32 0.0, %v3364
        %v3366 = vpop.f32.mrb[0].mxu0
        %3367 = vmatprep.mubr.f32.mxu0 0.0
        %3368 = vmatmul.mubr.f32.gmra.mrb[0].mxu0 %v3272
        %v3369 = vpop.f32.mrb[0].mxu0
        %v3370 = vadd.f32 0.0, %v3369
        %v3371 = vpop.f32.mrb[0].mxu0
        %3372 = vmatprep.mubr.f32.mxu0 0.0
        %3373 = vmatmul.mubr.f32.gmra.mrb[0].mxu0 %v3275
        %v3374 = vpop.f32.mrb[0].mxu0
        %v3375 = vadd.f32 0.0, %v3374
        %v3376 = vpop.f32.mrb[0].mxu0
        %3377 = vmatprep.mubr.f32.mxu0 0.0
        %3378 = vmatmul.mubr.f32.gmra.mrb[0].mxu0 %v3278
        %v3379 = vpop.f32.mrb[0].mxu0
        %v3380 = vadd.f32 0.0, %v3379
        %v3381 = vpop.f32.mrb[0].mxu0
        %3382 = vmatprep.mubr.f32.mxu0 0.0
        %3383 = vmatmul.mubr.f32.gmra.mrb[0].mxu0 %v3281
        %v3384 = vpop.f32.mrb[0].mxu0
        %v3385 = vadd.f32 0.0, %v3384
        %v3386 = vpop.f32.mrb[0].mxu0
        %3387 = vdwg.mxu0
        %v3388 = vsub.f32 %v3350, %v3251
        %v3389 = vsub.f32 %v3355, %v3252
        %v3390 = vsub.f32 %v3360, %v3253
        %v3391 = vsub.f32 %v3365, %v3254
        %v3392 = vsub.f32 %v3370, %v3255
        %v3393 = vsub.f32 %v3375, %v3256
        %v3394 = vsub.f32 %v3380, %v3257
        %v3395 = vsub.f32 %v3385, %v3258
        %v3396 = vsel %vm414, %v3388, -inf
        %v3397 = vsel %vm414, %v3389, -inf
        %v3398 = vsel %vm414, %v3390, -inf
        %v3399 = vsel %vm414, %v3391, -inf
        %v3400 = vsel %vm414, %v3392, -inf
        %v3401 = vmax.f32 %v3396, %v3400
        %v3402 = vsel %vm414, %v3393, -inf
        %v3403 = vmax.f32 %v3397, %v3402
        %v3404 = vsel %vm414, %v3394, -inf
        %v3405 = vmax.f32 %v3398, %v3404
        %v3406 = vsel %vm414, %v3395, -inf
        %v3407 = vmax.f32 %v3399, %v3406
        %v3408 = vmax.f32 %v3401, %v3403
        %v3409 = vmax.f32 %v3405, %v3407
        %v3410 = vmax.f32 %v3408, %v3409
        %v3411 = vrot.slane %v3410, 4
        %v3412 = vmax.f32 %v3410, %v3411
        %v3413 = vrot.slane %v3412, 2
        %v3414 = vmax.f32 %v3412, %v3413
        %v3415 = vrot.slane %v3414, 1
        %v3416 = vmax.f32 %v3414, %v3415
        %vm3417 = vcmp.eq.f32.partialorder %v3388, %v3416
        %vm3418 = vcmp.eq.f32.partialorder %v3389, %v3416
        %vm3419 = vcmp.eq.f32.partialorder %v3390, %v3416
        %vm3420 = vcmp.eq.f32.partialorder %v3391, %v3416
        %vm3421 = vcmp.eq.f32.partialorder %v3392, %v3416
        %vm3422 = vcmp.eq.f32.partialorder %v3393, %v3416
        %vm3423 = vcmp.eq.f32.partialorder %v3394, %v3416
        %vm3424 = vcmp.eq.f32.partialorder %v3395, %v3416
        %v3425 = vsel %vm3417, %v220, 64
        %v3426 = vsel %vm3418, %v221, 64
        %v3427 = vsel %vm3419, %v222, 64
        %v3428 = vsel %vm3420, %v223, 64
        %v3429 = vsel %vm3421, %v224, 64
        %v3430 = vsel %vm3422, %v225, 64
        %v3431 = vsel %vm3423, %v226, 64
        %v3432 = vsel %vm3424, %v227, 64
        %v3433 = vsel %vm414, %v3425, 2147483647
        %v3434 = vsel %vm414, %v3426, 2147483647
        %v3435 = vsel %vm414, %v3427, 2147483647
        %v3436 = vsel %vm414, %v3428, 2147483647
        %v3437 = vsel %vm414, %v3429, 2147483647
        %vm3438 = vcmp.lt.s32.totalorder %v3433, %v3437
        %v3439 = vsel %vm3438, %v3433, %v3437
        %v3440 = vsel %vm414, %v3430, 2147483647
        %vm3441 = vcmp.lt.s32.totalorder %v3434, %v3440
        %v3442 = vsel %vm3441, %v3434, %v3440
        %v3443 = vsel %vm414, %v3431, 2147483647
        %vm3444 = vcmp.lt.s32.totalorder %v3435, %v3443
        %v3445 = vsel %vm3444, %v3435, %v3443
        %v3446 = vsel %vm414, %v3432, 2147483647
        %vm3447 = vcmp.lt.s32.totalorder %v3436, %v3446
        %v3448 = vsel %vm3447, %v3436, %v3446
        %vm3449 = vcmp.lt.s32.totalorder %v3439, %v3442
        %v3450 = vsel %vm3449, %v3439, %v3442
        %vm3451 = vcmp.lt.s32.totalorder %v3445, %v3448
        %v3452 = vsel %vm3451, %v3445, %v3448
        %vm3453 = vcmp.lt.s32.totalorder %v3450, %v3452
        %v3454 = vsel %vm3453, %v3450, %v3452
        %v3455 = vrot.slane %v3454, 4
        %vm3456 = vcmp.lt.s32.totalorder %v3454, %v3455
        %v3457 = vsel %vm3456, %v3454, %v3455
        %v3458 = vrot.slane %v3457, 2
        %vm3459 = vcmp.lt.s32.totalorder %v3457, %v3458
        %v3460 = vsel %vm3459, %v3457, %v3458
        %v3461 = vrot.slane %v3460, 1
        %vm3462 = vcmp.lt.s32.totalorder %v3460, %v3461
        %v3463 = vsel %vm3462, %v3460, %v3461
        %3464 = vst.msk [vmem:[%s198 + $0x3] sm:$0x1] %vm483, %v3463
        %vm3465 = vcmp.eq.s32.totalorder %v220, %v3463
        %vm3466 = vcmp.eq.s32.totalorder %v221, %v3463
        %vm3467 = vcmp.eq.s32.totalorder %v222, %v3463
        %vm3468 = vcmp.eq.s32.totalorder %v223, %v3463
        %vm3469 = vcmp.eq.s32.totalorder %v224, %v3463
        %vm3470 = vcmp.eq.s32.totalorder %v225, %v3463
        %vm3471 = vcmp.eq.s32.totalorder %v226, %v3463
        %vm3472 = vcmp.eq.s32.totalorder %v227, %v3463
        %v3473 = vsel %vm3465, 1, 0
        %v3474 = vsel %vm3466, 1, 0
        %v3475 = vsel %vm3467, 1, 0
        %v3476 = vsel %vm3468, 1, 0
        %v3477 = vsel %vm3469, 1, 0
        %v3478 = vsel %vm3470, 1, 0
        %v3479 = vsel %vm3471, 1, 0
        %v3480 = vsel %vm3472, 1, 0
        %v3481 = vcvt.s32.f32 %v3473
        %v3482 = vcvt.s32.f32 %v3474
        %v3483 = vcvt.s32.f32 %v3475
        %v3484 = vcvt.s32.f32 %v3476
        %v3485 = vcvt.s32.f32 %v3477
        %v3486 = vcvt.s32.f32 %v3478
        %v3487 = vcvt.s32.f32 %v3479
        %v3488 = vcvt.s32.f32 %v3480
        %3489 = vxpose.xlu0.b32.start [1/16] %v3211, 128
        %3490 = vxpose.xlu0.b32.cont [2/16] %v3212, 128
        %3491 = vxpose.xlu0.b32.cont [3/16] %v3213, 128
        %3492 = vxpose.xlu0.b32.cont [4/16] %v3214, 128
        %3493 = vxpose.xlu0.b32.cont [5/16] %v3215, 128
        %3494 = vxpose.xlu0.b32.cont [6/16] %v3216, 128
        %3495 = vxpose.xlu0.b32.cont [7/16] %v3217, 128
        %3496 = vxpose.xlu0.b32.cont [8/16] %v3218, 128
        %3497 = vxpose.xlu0.b32.cont [9/16] 0.0, 128
        %3498 = vxpose.xlu0.b32.cont [10/16] 0.0, 128
        %3499 = vxpose.xlu0.b32.cont [11/16] 0.0, 128
        %3500 = vxpose.xlu0.b32.cont [12/16] 0.0, 128
        %3501 = vxpose.xlu0.b32.cont [13/16] 0.0, 128
        %3502 = vxpose.xlu0.b32.cont [14/16] 0.0, 128
        %3503 = vxpose.xlu0.b32.cont [15/16] 0.0, 128
        %3504 = vxpose.xlu0.b32.end [16/16] 0.0, 128
        %v3505 = vpop.trf.xlu0
        %v3506 = vpop.trf.xlu0
        %v3507 = vpop.trf.xlu0
        %v3508 = vpop.trf.xlu0
        %v3509 = vpop.trf.xlu0
        %v3510 = vpop.trf.xlu0
        %v3511 = vpop.trf.xlu0
        %v3512 = vpop.trf.xlu0
        %v3513 = vpop.trf.xlu0
        %v3514 = vpop.trf.xlu0
        %v3515 = vpop.trf.xlu0
        %v3516 = vpop.trf.xlu0
        %v3517 = vpop.trf.xlu0
        %v3518 = vpop.trf.xlu0
        %v3519 = vpop.trf.xlu0
        %v3520 = vpop.trf.xlu0
        %v3522 = vsel %vm541, %v3505, 0
        %v3525 = vsel %vm541, %v3506, 0
        %v3528 = vsel %vm541, %v3507, 0
        %v3531 = vsel %vm541, %v3508, 0
        %3533 = vmatprep.subr.mxu0 0.0
        %v3534 = vand.u32 %v3481, 4294901760
        %3535 = vmatpush1.msra.mxu0 %v3534
        %3536 = vmatprep.subr.mxu0 0.0
        %v3537 = vand.u32 %v3482, 4294901760
        %3538 = vmatpush1.msra.mxu0 %v3537
        %3539 = vmatprep.subr.mxu0 0.0
        %v3540 = vand.u32 %v3483, 4294901760
        %3541 = vmatpush1.msra.mxu0 %v3540
        %3542 = vmatprep.subr.mxu0 0.0
        %v3543 = vand.u32 %v3484, 4294901760
        %3544 = vmatpush1.msra.mxu0 %v3543
        %3545 = vmatprep.subr.mxu0 0.0
        %v3546 = vand.u32 %v3485, 4294901760
        %3547 = vmatpush1.msra.mxu0 %v3546
        %3548 = vmatprep.subr.mxu0 0.0
        %v3549 = vand.u32 %v3486, 4294901760
        %3550 = vmatpush1.msra.mxu0 %v3549
        %3551 = vmatprep.subr.mxu0 0.0
        %v3552 = vand.u32 %v3487, 4294901760
        %3553 = vmatpush1.msra.mxu0 %v3552
        %3554 = vmatprep.subr.mxu0 0.0
        %v3555 = vand.u32 %v3488, 4294901760
        %3556 = vmatpush1.msra.mxu0 %v3555
        %3557 = vmatprep.subr.mxu0 0.0
        %3558 = vmatpush1.msra.mxu0 0.0
        %3559 = vmatprep.subr.mxu0 0.0
        %3560 = vmatpush1.msra.mxu0 0.0
        %3561 = vmatprep.subr.mxu0 0.0
        %3562 = vmatpush1.msra.mxu0 0.0
        %3563 = vmatprep.subr.mxu0 0.0
        %3564 = vmatpush1.msra.mxu0 0.0
        %3565 = vmatprep.subr.mxu0 0.0
        %3566 = vmatpush1.msra.mxu0 0.0
        %3567 = vmatprep.subr.mxu0 0.0
        %3568 = vmatpush1.msra.mxu0 0.0
        %3569 = vmatprep.subr.mxu0 0.0
        %3570 = vmatpush1.msra.mxu0 0.0
        %3571 = vmatprep.subr.mxu0 0.0
        %3572 = vmatpush1.msra.mxu0 0.0
        %3573 = vmatprep.subr.mxu0 0.0
        %3574 = vmatpush1.msra.mxu0 0.0
        %3575 = vmatprep.subr.mxu0 0.0
        %3576 = vmatpush1.msra.mxu0 0.0
        %3577 = vmatprep.subr.mxu0 0.0
        %3578 = vmatpush1.msra.mxu0 0.0
        %3579 = vmatprep.subr.mxu0 0.0
        %3580 = vmatpush1.msra.mxu0 0.0
        %3581 = vmatprep.subr.mxu0 0.0
        %3582 = vmatpush1.msra.mxu0 0.0
        %3583 = vmatprep.subr.mxu0 0.0
        %3584 = vmatpush1.msra.mxu0 0.0
        %3585 = vmatprep.subr.mxu0 0.0
        %3586 = vmatpush1.msra.mxu0 0.0
        %3587 = vmatprep.subr.mxu0 0.0
        %3588 = vmatpush1.msra.mxu0 0.0
        %3589 = vmatprep.subr.mxu0 0.0
        %3590 = vmatpush1.msra.mxu0 0.0
        %3591 = vmatprep.subr.mxu0 0.0
        %3592 = vmatpush1.msra.mxu0 0.0
        %3593 = vmatprep.subr.mxu0 0.0
        %3594 = vmatpush1.msra.mxu0 0.0
        %3595 = vmatprep.subr.mxu0 0.0
        %3596 = vmatpush1.msra.mxu0 0.0
        %3597 = vmatprep.subr.mxu0 0.0
        %3598 = vmatpush1.msra.mxu0 0.0
        %3599 = vmatprep.subr.mxu0 0.0
        %3600 = vmatpush1.msra.mxu0 0.0
        %3601 = vmatprep.subr.mxu0 0.0
        %3602 = vmatpush1.msra.mxu0 0.0
        %3603 = vmatprep.subr.mxu0 0.0
        %3604 = vmatpush1.msra.mxu0 0.0
        %3605 = vmatprep.mubr.f32.mxu0 0.0
        %v3606 = vand.u32 %v3522, 4294901760
        %v3607 = vsub.f32 %v3522, %v3606
        %v3608 = vand.u32 %v3607, 4294901760
        %v3609 = vsub.f32 %v3607, %v3608
        %v3610 = vand.u32 %v3609, 4294901760
        %3611 = vmatmul.mubr.f32.gmra.mrb[0].mxu0 %v3610
        %v3612 = vpop.f32.mrb[0].mxu0
        %v3613 = vadd.f32 0.0, %v3612
        %v3614 = vpop.f32.mrb[0].mxu0
        %3615 = vmatprep.mubr.f32.mxu0 0.0
        %v3616 = vand.u32 %v3525, 4294901760
        %v3617 = vsub.f32 %v3525, %v3616
        %v3618 = vand.u32 %v3617, 4294901760
        %v3619 = vsub.f32 %v3617, %v3618
        %v3620 = vand.u32 %v3619, 4294901760
        %3621 = vmatmul.mubr.f32.gmra.mrb[0].mxu0 %v3620
        %v3622 = vpop.f32.mrb[0].mxu0
        %v3623 = vadd.f32 0.0, %v3622
        %v3624 = vpop.f32.mrb[0].mxu0
        %3625 = vmatprep.mubr.f32.mxu0 0.0
        %v3626 = vand.u32 %v3528, 4294901760
        %v3627 = vsub.f32 %v3528, %v3626
        %v3628 = vand.u32 %v3627, 4294901760
        %v3629 = vsub.f32 %v3627, %v3628
        %v3630 = vand.u32 %v3629, 4294901760
        %3631 = vmatmul.mubr.f32.gmra.mrb[0].mxu0 %v3630
        %v3632 = vpop.f32.mrb[0].mxu0
        %v3633 = vadd.f32 0.0, %v3632
        %v3634 = vpop.f32.mrb[0].mxu0
        %3635 = vmatprep.mubr.f32.mxu0 0.0
        %v3636 = vand.u32 %v3531, 4294901760
        %v3637 = vsub.f32 %v3531, %v3636
        %v3638 = vand.u32 %v3637, 4294901760
        %v3639 = vsub.f32 %v3637, %v3638
        %v3640 = vand.u32 %v3639, 4294901760
        %3641 = vmatmul.mubr.f32.gmra.mrb[0].mxu0 %v3640
        %v3642 = vpop.f32.mrb[0].mxu0
        %v3643 = vadd.f32 0.0, %v3642
        %v3644 = vpop.f32.mrb[0].mxu0
        %3645 = vdwg.mxu0
        %3646 = vmatprep.subr.mxu0 0.0
        %v3647 = vand.u32 %v3481, 4294901760
        %v3648 = vsub.f32 %v3481, %v3647
        %v3649 = vand.u32 %v3648, 4294901760
        %v3650 = vsub.f32 %v3648, %v3649
        %v3651 = vand.u32 %v3650, 4294901760
        %3652 = vmatpush1.msra.mxu0 %v3651
        %3653 = vmatprep.subr.mxu0 0.0
        %v3654 = vand.u32 %v3482, 4294901760
        %v3655 = vsub.f32 %v3482, %v3654
        %v3656 = vand.u32 %v3655, 4294901760
        %v3657 = vsub.f32 %v3655, %v3656
        %v3658 = vand.u32 %v3657, 4294901760
        %3659 = vmatpush1.msra.mxu0 %v3658
        %3660 = vmatprep.subr.mxu0 0.0
        %v3661 = vand.u32 %v3483, 4294901760
        %v3662 = vsub.f32 %v3483, %v3661
        %v3663 = vand.u32 %v3662, 4294901760
        %v3664 = vsub.f32 %v3662, %v3663
        %v3665 = vand.u32 %v3664, 4294901760
        %3666 = vmatpush1.msra.mxu0 %v3665
        %3667 = vmatprep.subr.mxu0 0.0
        %v3668 = vand.u32 %v3484, 4294901760
        %v3669 = vsub.f32 %v3484, %v3668
        %v3670 = vand.u32 %v3669, 4294901760
        %v3671 = vsub.f32 %v3669, %v3670
        %v3672 = vand.u32 %v3671, 4294901760
        %3673 = vmatpush1.msra.mxu0 %v3672
        %3674 = vmatprep.subr.mxu0 0.0
        %v3675 = vand.u32 %v3485, 4294901760
        %v3676 = vsub.f32 %v3485, %v3675
        %v3677 = vand.u32 %v3676, 4294901760
        %v3678 = vsub.f32 %v3676, %v3677
        %v3679 = vand.u32 %v3678, 4294901760
        %3680 = vmatpush1.msra.mxu0 %v3679
        %3681 = vmatprep.subr.mxu0 0.0
        %v3682 = vand.u32 %v3486, 4294901760
        %v3683 = vsub.f32 %v3486, %v3682
        %v3684 = vand.u32 %v3683, 4294901760
        %v3685 = vsub.f32 %v3683, %v3684
        %v3686 = vand.u32 %v3685, 4294901760
        %3687 = vmatpush1.msra.mxu0 %v3686
        %3688 = vmatprep.subr.mxu0 0.0
        %v3689 = vand.u32 %v3487, 4294901760
        %v3690 = vsub.f32 %v3487, %v3689
        %v3691 = vand.u32 %v3690, 4294901760
        %v3692 = vsub.f32 %v3690, %v3691
        %v3693 = vand.u32 %v3692, 4294901760
        %3694 = vmatpush1.msra.mxu0 %v3693
        %3695 = vmatprep.subr.mxu0 0.0
        %v3696 = vand.u32 %v3488, 4294901760
        %v3697 = vsub.f32 %v3488, %v3696
        %v3698 = vand.u32 %v3697, 4294901760
        %v3699 = vsub.f32 %v3697, %v3698
        %v3700 = vand.u32 %v3699, 4294901760
        %3701 = vmatpush1.msra.mxu0 %v3700
        %3702 = vmatprep.subr.mxu0 0.0
        %3703 = vmatpush1.msra.mxu0 0.0
        %3704 = vmatprep.subr.mxu0 0.0
        %3705 = vmatpush1.msra.mxu0 0.0
        %3706 = vmatprep.subr.mxu0 0.0
        %3707 = vmatpush1.msra.mxu0 0.0
        %3708 = vmatprep.subr.mxu0 0.0
        %3709 = vmatpush1.msra.mxu0 0.0
        %3710 = vmatprep.subr.mxu0 0.0
        %3711 = vmatpush1.msra.mxu0 0.0
        %3712 = vmatprep.subr.mxu0 0.0
        %3713 = vmatpush1.msra.mxu0 0.0
        %3714 = vmatprep.subr.mxu0 0.0
        %3715 = vmatpush1.msra.mxu0 0.0
        %3716 = vmatprep.subr.mxu0 0.0
        %3717 = vmatpush1.msra.mxu0 0.0
        %3718 = vmatprep.subr.mxu0 0.0
        %3719 = vmatpush1.msra.mxu0 0.0
        %3720 = vmatprep.subr.mxu0 0.0
        %3721 = vmatpush1.msra.mxu0 0.0
        %3722 = vmatprep.subr.mxu0 0.0
        %3723 = vmatpush1.msra.mxu0 0.0
        %3724 = vmatprep.subr.mxu0 0.0
        %3725 = vmatpush1.msra.mxu0 0.0
        %3726 = vmatprep.subr.mxu0 0.0
        %3727 = vmatpush1.msra.mxu0 0.0
        %3728 = vmatprep.subr.mxu0 0.0
        %3729 = vmatpush1.msra.mxu0 0.0
        %3730 = vmatprep.subr.mxu0 0.0
        %3731 = vmatpush1.msra.mxu0 0.0
        %3732 = vmatprep.subr.mxu0 0.0
        %3733 = vmatpush1.msra.mxu0 0.0
        %3734 = vmatprep.subr.mxu0 0.0
        %3735 = vmatpush1.msra.mxu0 0.0
        %3736 = vmatprep.subr.mxu0 0.0
        %3737 = vmatpush1.msra.mxu0 0.0
        %3738 = vmatprep.subr.mxu0 0.0
        %3739 = vmatpush1.msra.mxu0 0.0
        %3740 = vmatprep.subr.mxu0 0.0
        %3741 = vmatpush1.msra.mxu0 0.0
        %3742 = vmatprep.subr.mxu0 0.0
        %3743 = vmatpush1.msra.mxu0 0.0
        %3744 = vmatprep.subr.mxu0 0.0
        %3745 = vmatpush1.msra.mxu0 0.0
        %3746 = vmatprep.subr.mxu0 0.0
        %3747 = vmatpush1.msra.mxu0 0.0
        %3748 = vmatprep.subr.mxu0 0.0
        %3749 = vmatpush1.msra.mxu0 0.0
        %3750 = vmatprep.mubr.f32.mxu0 0.0
        %v3751 = vand.u32 %v3522, 4294901760
        %3752 = vmatmul.mubr.f32.gmra.mrb[0].mxu0 %v3751
        %v3753 = vpop.f32.mrb[0].mxu0
        %v3754 = vadd.f32 %v3613, %v3753
        %v3755 = vpop.f32.mrb[0].mxu0
        %3756 = vmatprep.mubr.f32.mxu0 0.0
        %v3757 = vand.u32 %v3525, 4294901760
        %3758 = vmatmul.mubr.f32.gmra.mrb[0].mxu0 %v3757
        %v3759 = vpop.f32.mrb[0].mxu0
        %v3760 = vadd.f32 %v3623, %v3759
        %v3761 = vpop.f32.mrb[0].mxu0
        %3762 = vmatprep.mubr.f32.mxu0 0.0
        %v3763 = vand.u32 %v3528, 4294901760
        %3764 = vmatmul.mubr.f32.gmra.mrb[0].mxu0 %v3763
        %v3765 = vpop.f32.mrb[0].mxu0
        %v3766 = vadd.f32 %v3633, %v3765
        %v3767 = vpop.f32.mrb[0].mxu0
        %3768 = vmatprep.mubr.f32.mxu0 0.0
        %v3769 = vand.u32 %v3531, 4294901760
        %3770 = vmatmul.mubr.f32.gmra.mrb[0].mxu0 %v3769
        %v3771 = vpop.f32.mrb[0].mxu0
        %v3772 = vadd.f32 %v3643, %v3771
        %v3773 = vpop.f32.mrb[0].mxu0
        %3774 = vdwg.mxu0
        %3775 = vmatprep.subr.mxu0 0.0
        %v3776 = vand.u32 %v3481, 4294901760
        %v3777 = vsub.f32 %v3481, %v3776
        %3778 = vmatpush1.msra.mxu0 %v3777
        %3779 = vmatprep.subr.mxu0 0.0
        %v3780 = vand.u32 %v3482, 4294901760
        %v3781 = vsub.f32 %v3482, %v3780
        %3782 = vmatpush1.msra.mxu0 %v3781
        %3783 = vmatprep.subr.mxu0 0.0
        %v3784 = vand.u32 %v3483, 4294901760
        %v3785 = vsub.f32 %v3483, %v3784
        %3786 = vmatpush1.msra.mxu0 %v3785
        %3787 = vmatprep.subr.mxu0 0.0
        %v3788 = vand.u32 %v3484, 4294901760
        %v3789 = vsub.f32 %v3484, %v3788
        %3790 = vmatpush1.msra.mxu0 %v3789
        %3791 = vmatprep.subr.mxu0 0.0
        %v3792 = vand.u32 %v3485, 4294901760
        %v3793 = vsub.f32 %v3485, %v3792
        %3794 = vmatpush1.msra.mxu0 %v3793
        %3795 = vmatprep.subr.mxu0 0.0
        %v3796 = vand.u32 %v3486, 4294901760
        %v3797 = vsub.f32 %v3486, %v3796
        %3798 = vmatpush1.msra.mxu0 %v3797
        %3799 = vmatprep.subr.mxu0 0.0
        %v3800 = vand.u32 %v3487, 4294901760
        %v3801 = vsub.f32 %v3487, %v3800
        %3802 = vmatpush1.msra.mxu0 %v3801
        %3803 = vmatprep.subr.mxu0 0.0
        %v3804 = vand.u32 %v3488, 4294901760
        %v3805 = vsub.f32 %v3488, %v3804
        %3806 = vmatpush1.msra.mxu0 %v3805
        %3807 = vmatprep.subr.mxu0 0.0
        %3808 = vmatpush1.msra.mxu0 0.0
        %3809 = vmatprep.subr.mxu0 0.0
        %3810 = vmatpush1.msra.mxu0 0.0
        %3811 = vmatprep.subr.mxu0 0.0
        %3812 = vmatpush1.msra.mxu0 0.0
        %3813 = vmatprep.subr.mxu0 0.0
        %3814 = vmatpush1.msra.mxu0 0.0
        %3815 = vmatprep.subr.mxu0 0.0
        %3816 = vmatpush1.msra.mxu0 0.0
        %3817 = vmatprep.subr.mxu0 0.0
        %3818 = vmatpush1.msra.mxu0 0.0
        %3819 = vmatprep.subr.mxu0 0.0
        %3820 = vmatpush1.msra.mxu0 0.0
        %3821 = vmatprep.subr.mxu0 0.0
        %3822 = vmatpush1.msra.mxu0 0.0
        %3823 = vmatprep.subr.mxu0 0.0
        %3824 = vmatpush1.msra.mxu0 0.0
        %3825 = vmatprep.subr.mxu0 0.0
        %3826 = vmatpush1.msra.mxu0 0.0
        %3827 = vmatprep.subr.mxu0 0.0
        %3828 = vmatpush1.msra.mxu0 0.0
        %3829 = vmatprep.subr.mxu0 0.0
        %3830 = vmatpush1.msra.mxu0 0.0
        %3831 = vmatprep.subr.mxu0 0.0
        %3832 = vmatpush1.msra.mxu0 0.0
        %3833 = vmatprep.subr.mxu0 0.0
        %3834 = vmatpush1.msra.mxu0 0.0
        %3835 = vmatprep.subr.mxu0 0.0
        %3836 = vmatpush1.msra.mxu0 0.0
        %3837 = vmatprep.subr.mxu0 0.0
        %3838 = vmatpush1.msra.mxu0 0.0
        %3839 = vmatprep.subr.mxu0 0.0
        %3840 = vmatpush1.msra.mxu0 0.0
        %3841 = vmatprep.subr.mxu0 0.0
        %3842 = vmatpush1.msra.mxu0 0.0
        %3843 = vmatprep.subr.mxu0 0.0
        %3844 = vmatpush1.msra.mxu0 0.0
        %3845 = vmatprep.subr.mxu0 0.0
        %3846 = vmatpush1.msra.mxu0 0.0
        %3847 = vmatprep.subr.mxu0 0.0
        %3848 = vmatpush1.msra.mxu0 0.0
        %3849 = vmatprep.subr.mxu0 0.0
        %3850 = vmatpush1.msra.mxu0 0.0
        %3851 = vmatprep.subr.mxu0 0.0
        %3852 = vmatpush1.msra.mxu0 0.0
        %3853 = vmatprep.subr.mxu0 0.0
        %3854 = vmatpush1.msra.mxu0 0.0
        %3855 = vmatprep.mubr.f32.mxu0 0.0
        %v3856 = vand.u32 %v3522, 4294901760
        %v3857 = vsub.f32 %v3522, %v3856
        %3858 = vmatmul.mubr.f32.gmra.mrb[0].mxu0 %v3857
        %v3859 = vpop.f32.mrb[0].mxu0
        %v3860 = vadd.f32 %v3754, %v3859
        %v3861 = vpop.f32.mrb[0].mxu0
        %3862 = vmatprep.mubr.f32.mxu0 0.0
        %v3863 = vand.u32 %v3525, 4294901760
        %v3864 = vsub.f32 %v3525, %v3863
        %3865 = vmatmul.mubr.f32.gmra.mrb[0].mxu0 %v3864
        %v3866 = vpop.f32.mrb[0].mxu0
        %v3867 = vadd.f32 %v3760, %v3866
        %v3868 = vpop.f32.mrb[0].mxu0
        %3869 = vmatprep.mubr.f32.mxu0 0.0
        %v3870 = vand.u32 %v3528, 4294901760
        %v3871 = vsub.f32 %v3528, %v3870
        %3872 = vmatmul.mubr.f32.gmra.mrb[0].mxu0 %v3871
        %v3873 = vpop.f32.mrb[0].mxu0
        %v3874 = vadd.f32 %v3766, %v3873
        %v3875 = vpop.f32.mrb[0].mxu0
        %3876 = vmatprep.mubr.f32.mxu0 0.0
        %v3877 = vand.u32 %v3531, 4294901760
        %v3878 = vsub.f32 %v3531, %v3877
        %3879 = vmatmul.mubr.f32.gmra.mrb[0].mxu0 %v3878
        %v3880 = vpop.f32.mrb[0].mxu0
        %v3881 = vadd.f32 %v3772, %v3880
        %v3882 = vpop.f32.mrb[0].mxu0
        %3883 = vdwg.mxu0
        %3884 = vmatprep.subr.mxu0 0.0
        %v3885 = vand.u32 %v3481, 4294901760
        %3886 = vmatpush1.msra.mxu0 %v3885
        %3887 = vmatprep.subr.mxu0 0.0
        %v3888 = vand.u32 %v3482, 4294901760
        %3889 = vmatpush1.msra.mxu0 %v3888
        %3890 = vmatprep.subr.mxu0 0.0
        %v3891 = vand.u32 %v3483, 4294901760
        %3892 = vmatpush1.msra.mxu0 %v3891
        %3893 = vmatprep.subr.mxu0 0.0
        %v3894 = vand.u32 %v3484, 4294901760
        %3895 = vmatpush1.msra.mxu0 %v3894
        %3896 = vmatprep.subr.mxu0 0.0
        %v3897 = vand.u32 %v3485, 4294901760
        %3898 = vmatpush1.msra.mxu0 %v3897
        %3899 = vmatprep.subr.mxu0 0.0
        %v3900 = vand.u32 %v3486, 4294901760
        %3901 = vmatpush1.msra.mxu0 %v3900
        %3902 = vmatprep.subr.mxu0 0.0
        %v3903 = vand.u32 %v3487, 4294901760
        %3904 = vmatpush1.msra.mxu0 %v3903
        %3905 = vmatprep.subr.mxu0 0.0
        %v3906 = vand.u32 %v3488, 4294901760
        %3907 = vmatpush1.msra.mxu0 %v3906
        %3908 = vmatprep.subr.mxu0 0.0
        %3909 = vmatpush1.msra.mxu0 0.0
        %3910 = vmatprep.subr.mxu0 0.0
        %3911 = vmatpush1.msra.mxu0 0.0
        %3912 = vmatprep.subr.mxu0 0.0
        %3913 = vmatpush1.msra.mxu0 0.0
        %3914 = vmatprep.subr.mxu0 0.0
        %3915 = vmatpush1.msra.mxu0 0.0
        %3916 = vmatprep.subr.mxu0 0.0
        %3917 = vmatpush1.msra.mxu0 0.0
        %3918 = vmatprep.subr.mxu0 0.0
        %3919 = vmatpush1.msra.mxu0 0.0
        %3920 = vmatprep.subr.mxu0 0.0
        %3921 = vmatpush1.msra.mxu0 0.0
        %3922 = vmatprep.subr.mxu0 0.0
        %3923 = vmatpush1.msra.mxu0 0.0
        %3924 = vmatprep.subr.mxu0 0.0
        %3925 = vmatpush1.msra.mxu0 0.0
        %3926 = vmatprep.subr.mxu0 0.0
        %3927 = vmatpush1.msra.mxu0 0.0
        %3928 = vmatprep.subr.mxu0 0.0
        %3929 = vmatpush1.msra.mxu0 0.0
        %3930 = vmatprep.subr.mxu0 0.0
        %3931 = vmatpush1.msra.mxu0 0.0
        %3932 = vmatprep.subr.mxu0 0.0
        %3933 = vmatpush1.msra.mxu0 0.0
        %3934 = vmatprep.subr.mxu0 0.0
        %3935 = vmatpush1.msra.mxu0 0.0
        %3936 = vmatprep.subr.mxu0 0.0
        %3937 = vmatpush1.msra.mxu0 0.0
        %3938 = vmatprep.subr.mxu0 0.0
        %3939 = vmatpush1.msra.mxu0 0.0
        %3940 = vmatprep.subr.mxu0 0.0
        %3941 = vmatpush1.msra.mxu0 0.0
        %3942 = vmatprep.subr.mxu0 0.0
        %3943 = vmatpush1.msra.mxu0 0.0
        %3944 = vmatprep.subr.mxu0 0.0
        %3945 = vmatpush1.msra.mxu0 0.0
        %3946 = vmatprep.subr.mxu0 0.0
        %3947 = vmatpush1.msra.mxu0 0.0
        %3948 = vmatprep.subr.mxu0 0.0
        %3949 = vmatpush1.msra.mxu0 0.0
        %3950 = vmatprep.subr.mxu0 0.0
        %3951 = vmatpush1.msra.mxu0 0.0
        %3952 = vmatprep.subr.mxu0 0.0
        %3953 = vmatpush1.msra.mxu0 0.0
        %3954 = vmatprep.subr.mxu0 0.0
        %3955 = vmatpush1.msra.mxu0 0.0
        %3956 = vmatprep.mubr.f32.mxu0 0.0
        %v3957 = vand.u32 %v3522, 4294901760
        %v3958 = vsub.f32 %v3522, %v3957
        %v3959 = vand.u32 %v3958, 4294901760
        %3960 = vmatmul.mubr.f32.gmra.mrb[0].mxu0 %v3959
        %v3961 = vpop.f32.mrb[0].mxu0
        %v3962 = vadd.f32 %v3860, %v3961
        %v3963 = vpop.f32.mrb[0].mxu0
        %3964 = vmatprep.mubr.f32.mxu0 0.0
        %v3965 = vand.u32 %v3525, 4294901760
        %v3966 = vsub.f32 %v3525, %v3965
        %v3967 = vand.u32 %v3966, 4294901760
        %3968 = vmatmul.mubr.f32.gmra.mrb[0].mxu0 %v3967
        %v3969 = vpop.f32.mrb[0].mxu0
        %v3970 = vadd.f32 %v3867, %v3969
        %v3971 = vpop.f32.mrb[0].mxu0
        %3972 = vmatprep.mubr.f32.mxu0 0.0
        %v3973 = vand.u32 %v3528, 4294901760
        %v3974 = vsub.f32 %v3528, %v3973
        %v3975 = vand.u32 %v3974, 4294901760
        %3976 = vmatmul.mubr.f32.gmra.mrb[0].mxu0 %v3975
        %v3977 = vpop.f32.mrb[0].mxu0
        %v3978 = vadd.f32 %v3874, %v3977
        %v3979 = vpop.f32.mrb[0].mxu0
        %3980 = vmatprep.mubr.f32.mxu0 0.0
        %v3981 = vand.u32 %v3531, 4294901760
        %v3982 = vsub.f32 %v3531, %v3981
        %v3983 = vand.u32 %v3982, 4294901760
        %3984 = vmatmul.mubr.f32.gmra.mrb[0].mxu0 %v3983
        %v3985 = vpop.f32.mrb[0].mxu0
        %v3986 = vadd.f32 %v3881, %v3985
        %v3987 = vpop.f32.mrb[0].mxu0
        %3988 = vdwg.mxu0
        %3989 = vmatprep.subr.mxu0 0.0
        %v3990 = vand.u32 %v3481, 4294901760
        %v3991 = vsub.f32 %v3481, %v3990
        %v3992 = vand.u32 %v3991, 4294901760
        %3993 = vmatpush1.msra.mxu0 %v3992
        %3994 = vmatprep.subr.mxu0 0.0
        %v3995 = vand.u32 %v3482, 4294901760
        %v3996 = vsub.f32 %v3482, %v3995
        %v3997 = vand.u32 %v3996, 4294901760
        %3998 = vmatpush1.msra.mxu0 %v3997
        %3999 = vmatprep.subr.mxu0 0.0
        %v4000 = vand.u32 %v3483, 4294901760
        %v4001 = vsub.f32 %v3483, %v4000
        %v4002 = vand.u32 %v4001, 4294901760
        %4003 = vmatpush1.msra.mxu0 %v4002
        %4004 = vmatprep.subr.mxu0 0.0
        %v4005 = vand.u32 %v3484, 4294901760
        %v4006 = vsub.f32 %v3484, %v4005
        %v4007 = vand.u32 %v4006, 4294901760
        %4008 = vmatpush1.msra.mxu0 %v4007
        %4009 = vmatprep.subr.mxu0 0.0
        %v4010 = vand.u32 %v3485, 4294901760
        %v4011 = vsub.f32 %v3485, %v4010
        %v4012 = vand.u32 %v4011, 4294901760
        %4013 = vmatpush1.msra.mxu0 %v4012
        %4014 = vmatprep.subr.mxu0 0.0
        %v4015 = vand.u32 %v3486, 4294901760
        %v4016 = vsub.f32 %v3486, %v4015
        %v4017 = vand.u32 %v4016, 4294901760
        %4018 = vmatpush1.msra.mxu0 %v4017
        %4019 = vmatprep.subr.mxu0 0.0
        %v4020 = vand.u32 %v3487, 4294901760
        %v4021 = vsub.f32 %v3487, %v4020
        %v4022 = vand.u32 %v4021, 4294901760
        %4023 = vmatpush1.msra.mxu0 %v4022
        %4024 = vmatprep.subr.mxu0 0.0
        %v4025 = vand.u32 %v3488, 4294901760
        %v4026 = vsub.f32 %v3488, %v4025
        %v4027 = vand.u32 %v4026, 4294901760
        %4028 = vmatpush1.msra.mxu0 %v4027
        %4029 = vmatprep.subr.mxu0 0.0
        %4030 = vmatpush1.msra.mxu0 0.0
        %4031 = vmatprep.subr.mxu0 0.0
        %4032 = vmatpush1.msra.mxu0 0.0
        %4033 = vmatprep.subr.mxu0 0.0
        %4034 = vmatpush1.msra.mxu0 0.0
        %4035 = vmatprep.subr.mxu0 0.0
        %4036 = vmatpush1.msra.mxu0 0.0
        %4037 = vmatprep.subr.mxu0 0.0
        %4038 = vmatpush1.msra.mxu0 0.0
        %4039 = vmatprep.subr.mxu0 0.0
        %4040 = vmatpush1.msra.mxu0 0.0
        %4041 = vmatprep.subr.mxu0 0.0
        %4042 = vmatpush1.msra.mxu0 0.0
        %4043 = vmatprep.subr.mxu0 0.0
        %4044 = vmatpush1.msra.mxu0 0.0
        %4045 = vmatprep.subr.mxu0 0.0
        %4046 = vmatpush1.msra.mxu0 0.0
        %4047 = vmatprep.subr.mxu0 0.0
        %4048 = vmatpush1.msra.mxu0 0.0
        %4049 = vmatprep.subr.mxu0 0.0
        %4050 = vmatpush1.msra.mxu0 0.0
        %4051 = vmatprep.subr.mxu0 0.0
        %4052 = vmatpush1.msra.mxu0 0.0
        %4053 = vmatprep.subr.mxu0 0.0
        %4054 = vmatpush1.msra.mxu0 0.0
        %4055 = vmatprep.subr.mxu0 0.0
        %4056 = vmatpush1.msra.mxu0 0.0
        %4057 = vmatprep.subr.mxu0 0.0
        %4058 = vmatpush1.msra.mxu0 0.0
        %4059 = vmatprep.subr.mxu0 0.0
        %4060 = vmatpush1.msra.mxu0 0.0
        %4061 = vmatprep.subr.mxu0 0.0
        %4062 = vmatpush1.msra.mxu0 0.0
        %4063 = vmatprep.subr.mxu0 0.0
        %4064 = vmatpush1.msra.mxu0 0.0
        %4065 = vmatprep.subr.mxu0 0.0
        %4066 = vmatpush1.msra.mxu0 0.0
        %4067 = vmatprep.subr.mxu0 0.0
        %4068 = vmatpush1.msra.mxu0 0.0
        %4069 = vmatprep.subr.mxu0 0.0
        %4070 = vmatpush1.msra.mxu0 0.0
        %4071 = vmatprep.subr.mxu0 0.0
        %4072 = vmatpush1.msra.mxu0 0.0
        %4073 = vmatprep.subr.mxu0 0.0
        %4074 = vmatpush1.msra.mxu0 0.0
        %4075 = vmatprep.subr.mxu0 0.0
        %4076 = vmatpush1.msra.mxu0 0.0
        %4077 = vmatprep.mubr.f32.mxu0 0.0
        %v4078 = vand.u32 %v3522, 4294901760
        %4079 = vmatmul.mubr.f32.gmra.mrb[0].mxu0 %v4078
        %v4080 = vpop.f32.mrb[0].mxu0
        %v4081 = vadd.f32 %v3962, %v4080
        %v4082 = vpop.f32.mrb[0].mxu0
        %4083 = vmatprep.mubr.f32.mxu0 0.0
        %v4084 = vand.u32 %v3525, 4294901760
        %4085 = vmatmul.mubr.f32.gmra.mrb[0].mxu0 %v4084
        %v4086 = vpop.f32.mrb[0].mxu0
        %v4087 = vadd.f32 %v3970, %v4086
        %v4088 = vpop.f32.mrb[0].mxu0
        %4089 = vmatprep.mubr.f32.mxu0 0.0
        %v4090 = vand.u32 %v3528, 4294901760
        %4091 = vmatmul.mubr.f32.gmra.mrb[0].mxu0 %v4090
        %v4092 = vpop.f32.mrb[0].mxu0
        %v4093 = vadd.f32 %v3978, %v4092
        %v4094 = vpop.f32.mrb[0].mxu0
        %4095 = vmatprep.mubr.f32.mxu0 0.0
        %v4096 = vand.u32 %v3531, 4294901760
        %4097 = vmatmul.mubr.f32.gmra.mrb[0].mxu0 %v4096
        %v4098 = vpop.f32.mrb[0].mxu0
        %v4099 = vadd.f32 %v3986, %v4098
        %v4100 = vpop.f32.mrb[0].mxu0
        %4101 = vdwg.mxu0
        %4102 = vmatprep.subr.mxu0 0.0
        %v4103 = vand.u32 %v3481, 4294901760
        %4104 = vmatpush1.msra.mxu0 %v4103
        %4105 = vmatprep.subr.mxu0 0.0
        %v4106 = vand.u32 %v3482, 4294901760
        %4107 = vmatpush1.msra.mxu0 %v4106
        %4108 = vmatprep.subr.mxu0 0.0
        %v4109 = vand.u32 %v3483, 4294901760
        %4110 = vmatpush1.msra.mxu0 %v4109
        %4111 = vmatprep.subr.mxu0 0.0
        %v4112 = vand.u32 %v3484, 4294901760
        %4113 = vmatpush1.msra.mxu0 %v4112
        %4114 = vmatprep.subr.mxu0 0.0
        %v4115 = vand.u32 %v3485, 4294901760
        %4116 = vmatpush1.msra.mxu0 %v4115
        %4117 = vmatprep.subr.mxu0 0.0
        %v4118 = vand.u32 %v3486, 4294901760
        %4119 = vmatpush1.msra.mxu0 %v4118
        %4120 = vmatprep.subr.mxu0 0.0
        %v4121 = vand.u32 %v3487, 4294901760
        %4122 = vmatpush1.msra.mxu0 %v4121
        %4123 = vmatprep.subr.mxu0 0.0
        %v4124 = vand.u32 %v3488, 4294901760
        %4125 = vmatpush1.msra.mxu0 %v4124
        %4126 = vmatprep.subr.mxu0 0.0
        %4127 = vmatpush1.msra.mxu0 0.0
        %4128 = vmatprep.subr.mxu0 0.0
        %4129 = vmatpush1.msra.mxu0 0.0
        %4130 = vmatprep.subr.mxu0 0.0
        %4131 = vmatpush1.msra.mxu0 0.0
        %4132 = vmatprep.subr.mxu0 0.0
        %4133 = vmatpush1.msra.mxu0 0.0
        %4134 = vmatprep.subr.mxu0 0.0
        %4135 = vmatpush1.msra.mxu0 0.0
        %4136 = vmatprep.subr.mxu0 0.0
        %4137 = vmatpush1.msra.mxu0 0.0
        %4138 = vmatprep.subr.mxu0 0.0
        %4139 = vmatpush1.msra.mxu0 0.0
        %4140 = vmatprep.subr.mxu0 0.0
        %4141 = vmatpush1.msra.mxu0 0.0
        %4142 = vmatprep.subr.mxu0 0.0
        %4143 = vmatpush1.msra.mxu0 0.0
        %4144 = vmatprep.subr.mxu0 0.0
        %4145 = vmatpush1.msra.mxu0 0.0
        %4146 = vmatprep.subr.mxu0 0.0
        %4147 = vmatpush1.msra.mxu0 0.0
        %4148 = vmatprep.subr.mxu0 0.0
        %4149 = vmatpush1.msra.mxu0 0.0
        %4150 = vmatprep.subr.mxu0 0.0
        %4151 = vmatpush1.msra.mxu0 0.0
        %4152 = vmatprep.subr.mxu0 0.0
        %4153 = vmatpush1.msra.mxu0 0.0
        %4154 = vmatprep.subr.mxu0 0.0
        %4155 = vmatpush1.msra.mxu0 0.0
        %4156 = vmatprep.subr.mxu0 0.0
        %4157 = vmatpush1.msra.mxu0 0.0
        %4158 = vmatprep.subr.mxu0 0.0
        %4159 = vmatpush1.msra.mxu0 0.0
        %4160 = vmatprep.subr.mxu0 0.0
        %4161 = vmatpush1.msra.mxu0 0.0
        %4162 = vmatprep.subr.mxu0 0.0
        %4163 = vmatpush1.msra.mxu0 0.0
        %4164 = vmatprep.subr.mxu0 0.0
        %4165 = vmatpush1.msra.mxu0 0.0
        %4166 = vmatprep.subr.mxu0 0.0
        %4167 = vmatpush1.msra.mxu0 0.0
        %4168 = vmatprep.subr.mxu0 0.0
        %4169 = vmatpush1.msra.mxu0 0.0
        %4170 = vmatprep.subr.mxu0 0.0
        %4171 = vmatpush1.msra.mxu0 0.0
        %4172 = vmatprep.subr.mxu0 0.0
        %4173 = vmatpush1.msra.mxu0 0.0
        %4174 = vmatprep.mubr.f32.mxu0 0.0
        %v4175 = vand.u32 %v3522, 4294901760
        %4176 = vmatmul.mubr.f32.gmra.mrb[0].mxu0 %v4175
        %v4177 = vpop.f32.mrb[0].mxu0
        %v4178 = vadd.f32 %v4081, %v4177
        %v4179 = vpop.f32.mrb[0].mxu0
        %4180 = vmatprep.mubr.f32.mxu0 0.0
        %v4181 = vand.u32 %v3525, 4294901760
        %4182 = vmatmul.mubr.f32.gmra.mrb[0].mxu0 %v4181
        %v4183 = vpop.f32.mrb[0].mxu0
        %v4184 = vadd.f32 %v4087, %v4183
        %v4185 = vpop.f32.mrb[0].mxu0
        %4186 = vmatprep.mubr.f32.mxu0 0.0
        %v4187 = vand.u32 %v3528, 4294901760
        %4188 = vmatmul.mubr.f32.gmra.mrb[0].mxu0 %v4187
        %v4189 = vpop.f32.mrb[0].mxu0
        %v4190 = vadd.f32 %v4093, %v4189
        %v4191 = vpop.f32.mrb[0].mxu0
        %4192 = vmatprep.mubr.f32.mxu0 0.0
        %v4193 = vand.u32 %v3531, 4294901760
        %4194 = vmatmul.mubr.f32.gmra.mrb[0].mxu0 %v4193
        %v4195 = vpop.f32.mrb[0].mxu0
        %v4196 = vadd.f32 %v4099, %v4195
        %v4197 = vpop.f32.mrb[0].mxu0
        %4198 = vdwg.mxu0
        %v4199 = vsub.f32 %v3206, %v4178
        %v4200 = vsub.f32 %v3207, %v4184
        %v4201 = vsub.f32 %v3208, %v4190
        %v4202 = vsub.f32 %v3209, %v4196
        %v4203 = vsub.f32 %v215, %v4199
        %v4204 = vsub.f32 %v216, %v4200
        %v4205 = vsub.f32 %v217, %v4201
        %v4206 = vsub.f32 %v218, %v4202
        %4207 = vst.msk [vmem:[%s214] sm:$0xff] %vm414, %v4203
        %4208 = vst.msk [vmem:[%s214 + $0x8] sm:$0xff] %vm414, %v4204
        %4209 = vst.msk [vmem:[%s214 + $0x10] sm:$0xff] %vm414, %v4205
        %4210 = vst.msk [vmem:[%s214 + $0x18] sm:$0xff] %vm414, %v4206
        %p4211 = scmp.lt.s32.totalorder %s22, 1
        %s4212 = scalar_select %p4211, %s22, 1
        %p4213 = scmp.lt.s32.totalorder %s23, 0
        %s4214 = scalar_select %p4213, %s23, 0
        %s4215 = smul.addr %s4212, 4
        %s4216 = sadd.s32 %s4214, %s4215
        %s4217 = smul.addr %s4216, 8
        %s4218 = scalar_lea.vmem %s2, %s4217
        %s4219 = sand.u32 %s117, 1
        %s4220 = scalar_lea.sflag [#allocation3], %s4219
        %s4221 = sand.u32 %s117, 1
        %s4222 = smul.addr %s4221, 4
        %s4223 = scalar_lea.vmem [#allocation2], %s4222
        // Predicated region
        $region29: #{tpu_custom_call.1} parent=27 // pred_check
          %p4224 = pneg %p99
        $region30: #{tpu_custom_call.1} parent=27 // pred_check_branch
          %4226 = sbr.rel (%p4224) target = $region32
        $region31: #{tpu_custom_call.1} parent=27 // pred_region
          _
        $region32: #{tpu_custom_call.1} parent=27 // pred_fallthru
          _
        // Predicated region
        $region33: #{tpu_custom_call.1} parent=27 // pred_check
          %p4227 = pneg %p127
        $region34: #{tpu_custom_call.1} parent=27 // pred_check_branch
          %4229 = sbr.rel (%p4227) target = $region36
        $region35: #{tpu_custom_call.1} parent=27 // pred_region
          %s4231 = ssub.s32 64, 64
          %4232 = vsyncadd %s4220, %s4231
          %s4233 = sadd.s32 %s23, %s22
          %s4234 = smul.addr %s4233, 64
          %s4235 = scalar_lea.hbm %s3, %s4234
          %s4237 = sshll.u32 %s4223, 4
          %s4238 = int_to_ptr.vmem [resolvable:$true] %s4237
          %4240 = dma.vmem_to_hbm [thread:$0]  %s4238, 64, %s4235, %s4220
        $region36: #{tpu_custom_call.1} parent=27 // pred_fallthru
          _
      $region28: #{tpu_custom_call.1} parent=5 // pred_fallthru
        _
      %p4241 = scmp.le.s32.totalorder 2, %s13
      // Predicated region
      $region37: #{tpu_custom_call.1} parent=5 // pred_check
        %p4242 = pneg %p4241
      $region38: #{tpu_custom_call.1} parent=5 // pred_check_branch
        %4244 = sbr.rel (%p4242) target = $region40
      $region39: #{tpu_custom_call.1} parent=5 // pred_region
        %s4245 = ssub.s32 %s13, 2
        // Predicated region
        $region41: #{tpu_custom_call.1} parent=39 // pred_check
          %p4246 = pneg %p105
        $region42: #{tpu_custom_call.1} parent=39 // pred_check_branch
          %4248 = sbr.rel (%p4246) target = $region44
        $region43: #{tpu_custom_call.1} parent=39 // pred_region
          %p4249 = scmp.lt.s32.totalorder %s24, 1
          %s4250 = scalar_select %p4249, %s24, 1
          %p4251 = scmp.lt.s32.totalorder %s25, 0
          %s4252 = scalar_select %p4251, %s25, 0
          %s4253 = smul.addr %s4250, 4
          %s4254 = sadd.s32 %s4252, %s4253
          %s4255 = smul.addr %s4254, 8
          %s4256 = scalar_lea.vmem %s2, %s4255
        $region44: #{tpu_custom_call.1} parent=39 // pred_fallthru
          _
        // Predicated region
        $region45: #{tpu_custom_call.1} parent=39 // pred_check
          %p4257 = pneg %p133
        $region46: #{tpu_custom_call.1} parent=39 // pred_check_branch
          %4259 = sbr.rel (%p4257) target = $region48
        $region47: #{tpu_custom_call.1} parent=39 // pred_region
          %s4260 = sand.u32 %s118, 1
          %s4261 = scalar_lea.sflag [#allocation3], %s4260
          %s4262 = sand.u32 %s118, 1
          %s4263 = smul.addr %s4262, 4
          %s4264 = scalar_lea.vmem [#allocation2], %s4263
          %4265 = dma.done %s4261, 64
        $region48: #{tpu_custom_call.1} parent=39 // pred_fallthru
          _
      $region40: #{tpu_custom_call.1} parent=5 // pred_fallthru
        _
    $region6: #{tpu_custom_call.1} parent=1 // loop_footer
      %s17 = sadd.s32 1, %s13
    $region7: #{tpu_custom_call.1} parent=1 // loop_footer_branch
      %12 = sbr.rel target = $region3
    $region8: #{tpu_custom_call.1} parent=1 // loop_exit
      _
    %4266 = vsyncpa [#allocation3], 1
    %s4267 = scalar_lea.sflag [#allocation3], 1
    %4268 = vsyncpa %s4267, 1

// kernel: tpu_custom_call.1
$region0: #{tpu_custom_call.1}
  #allocation0 [shape = 'u32[]', space=smem, size = 0x4, offset = 0x4, fixed_abs, tag = 'smem constant byte address 0x4 - core index']
  #allocation1 [shape = 'u32[144,128]{1,0:T(1,128)}', space=vmem, size = 0x12000, scoped, tag = 'internal scratch']
  %s0 = inlined_call_operand.vmem [shape: f32[2,32,8], index: 0, kind: input, shape index: {}]
  %s1 = inlined_call_operand.vmem [shape: f32[4,64,32], index: 1, kind: input, shape index: {}]
  %s2 = inlined_call_operand.vmem [shape: f32[2,32,8], index: 2, kind: output, shape index: {0}]
  %s3 = inlined_call_operand.hbm [shape: s32[2,4,8], index: 3, kind: output, shape index: {1}]
  %4 = xla_tuple %s2, %s3
  %s5 = sld [smem:[#allocation0]]
  $region49: #{tpu_custom_call.1} parent=0
    _
  %s7 = ssub.s32 1, %s5
  %s8 = scalar_select 0, %s7, %s5
  $region1: #{tpu_custom_call.1} parent=0
    #allocation2 [shape = 'u8[4096]{0}', space=vmem, size = 0x1000, scoped, tag = 'output window, operand 1']
    #allocation3 [shape = 's32[2]{0}', space=sflag, size = 0x8, scoped, tag = 'scoped memory for tpu_custom_call.1']
    %9 = vsyncpa [#allocation3], 0
    %s10 = scalar_lea.sflag [#allocation3], 1
    %11 = vsyncpa %s10, 0
    loop: start=0, step=1, limit=4
    $region2: #{tpu_custom_call.1} parent=1 // loop_pre_header
      _
    $region3: #{tpu_custom_call.1} parent=1 // loop_header
      %s13 = sphi 0, %s17
      %p14 = scmp.ge.s32.totalorder %s13, 4
      %s20 = sphi 0, %s32
      %s21 = sphi 0, %s28
      %s22 = sphi 0, %s20
      %s23 = sphi 0, %s21
      %s24 = sphi 0, %s22
      %s25 = sphi 0, %s23
      %s37 = sphi 0, %s39
      %s40 = sphi 0, %s37
      %s41 = sphi 0, %s40
      %s57 = sphi 0, %s41
      %s61 = sphi 0, %s61
      %s63 = sphi 0, %s61
      %s64 = sphi 0, %s63
      %s78 = sphi 0, %s64
      %s86 = sphi 0, %s88
      %s89 = sphi 0, %s86
      %s90 = sphi 0, %s89
      %s106 = sphi 0, %s90
      %s114 = sphi 0, %s116
      %s117 = sphi 0, %s114
      %s118 = sphi 0, %s117
      %s134 = sphi 0, %s118
    $region4: #{tpu_custom_call.1} parent=1 // loop_header_branch
      %16 = sbr.rel (%p14) target = $region8
    $region5: #{tpu_custom_call.1} parent=1 // loop_body
      %s18 = ssub.s32 %s13, 1
      %s19 = ssub.s32 %s13, 2
      %s26 = sadd.s32 1, %s21
      %p27 = scmp.ge.s32.totalorder %s26, 1
      %s28 = scalar_select %p27, 0, %s26
      %s29 = sadd.s32 1, %s20
      %s30 = scalar_select %p27, %s29, %s20
      %p31 = scmp.ge.s32.totalorder %s30, 2
      %s32 = scalar_select %p31, 0, %s30
      %s33 = ssub.s32 %s20, %s32
      %s34 = ssub.s32 %s21, %s28
      %s35 = sor.u32 %s33, %s34
      %p36 = scmp.eq.s32.totalorder %s35, 0
      %s38 = sadd.s32 %s37, 1
      %s39 = scalar_select %p36, %s37, %s38
      %p42 = pneg %p36
      %p43 = scmp.eq.s32.totalorder %s13, 1
      %p44 = por %p42, %p43
      %p45 = scmp.ne.s32.totalorder %s37, %s40
      %p46 = scmp.eq.s32.totalorder %s13, 0
      %p47 = por %p45, %p46
      %p48 = scmp.ne.s32.totalorder %s37, %s40
      %p49 = scmp.eq.s32.totalorder %s18, 1
      %p50 = por %p48, %p49
      %p51 = scmp.ne.s32.totalorder %s40, %s41
      %p52 = scmp.eq.s32.totalorder %s18, 0
      %p53 = por %p51, %p52
      %p54 = scmp.ne.s32.totalorder %s40, %s41
      %p55 = scmp.eq.s32.totalorder %s19, 1
      %p56 = por %p54, %p55
      %p58 = scmp.ne.s32.totalorder %s41, %s57
      %p59 = scmp.eq.s32.totalorder %s19, 0
      %p60 = por %p58, %p59
      %s62 = sadd.s32 %s61, 1
      %p65 = scmp.eq.s32.totalorder %s13, 1
      %p66 = scmp.ne.s32.totalorder %s61, %s63
      %p67 = scmp.eq.s32.totalorder %s13, 0
      %p68 = por %p66, %p67
      %p69 = scmp.ne.s32.totalorder %s61, %s63
      %p70 = scmp.eq.s32.totalorder %s18, 1
      %p71 = por %p69, %p70
      %p72 = scmp.ne.s32.totalorder %s63, %s64
      %p73 = scmp.eq.s32.totalorder %s18, 0
      %p74 = por %p72, %p73
      %p75 = scmp.ne.s32.totalorder %s63, %s64
      %p76 = scmp.eq.s32.totalorder %s19, 1
      %p77 = por %p75, %p76
      %p79 = scmp.ne.s32.totalorder %s64, %s78
      %p80 = scmp.eq.s32.totalorder %s19, 0
      %p81 = por %p79, %p80
      %s82 = ssub.s32 %s20, %s32
      %s83 = ssub.s32 %s21, %s28
      %s84 = sor.u32 %s82, %s83
      %p85 = scmp.eq.s32.totalorder %s84, 0
      %s87 = sadd.s32 %s86, 1
      %s88 = scalar_select %p85, %s86, %s87
      %p91 = pneg %p85
      %p92 = scmp.eq.s32.totalorder %s13, 1
      %p93 = por %p91, %p92
      %p94 = scmp.ne.s32.totalorder %s86, %s89
      %p95 = scmp.eq.s32.totalorder %s13, 0
      %p96 = por %p94, %p95
      %p97 = scmp.ne.s32.totalorder %s86, %s89
      %p98 = scmp.eq.s32.totalorder %s18, 1
      %p99 = por %p97, %p98
      %p100 = scmp.ne.s32.totalorder %s89, %s90
      %p101 = scmp.eq.s32.totalorder %s18, 0
      %p102 = por %p100, %p101
      %p103 = scmp.ne.s32.totalorder %s89, %s90
      %p104 = scmp.eq.s32.totalorder %s19, 1
      %p105 = por %p103, %p104
      %p107 = scmp.ne.s32.totalorder %s90, %s106
      %p108 = scmp.eq.s32.totalorder %s19, 0
      %p109 = por %p107, %p108
      %s110 = ssub.s32 %s20, %s32
      %s111 = ssub.s32 %s21, %s28
      %s112 = sor.u32 %s110, %s111
      %p113 = scmp.eq.s32.totalorder %s112, 0
      %s115 = sadd.s32 %s114, 1
      %s116 = scalar_select %p113, %s114, %s115
      %p119 = pneg %p113
      %p120 = scmp.eq.s32.totalorder %s13, 1
      %p121 = por %p119, %p120
      %p122 = scmp.ne.s32.totalorder %s114, %s117
      %p123 = scmp.eq.s32.totalorder %s13, 0
      %p124 = por %p122, %p123
      %p125 = scmp.ne.s32.totalorder %s114, %s117
      %p126 = scmp.eq.s32.totalorder %s18, 1
      %p127 = por %p125, %p126
      %p128 = scmp.ne.s32.totalorder %s117, %s118
      %p129 = scmp.eq.s32.totalorder %s18, 0
      %p130 = por %p128, %p129
      %p131 = scmp.ne.s32.totalorder %s117, %s118
      %p132 = scmp.eq.s32.totalorder %s19, 1
      %p133 = por %p131, %p132
      %p135 = scmp.ne.s32.totalorder %s118, %s134
      %p136 = scmp.eq.s32.totalorder %s19, 0
      %p137 = por %p135, %p136
      %p138 = scmp.le.s32.totalorder 1, %s13
      %p139 = scmp.lt.s32.totalorder %s13, 3
      %p140 = pnand %p138, %p139
      %p141 = pneg %p140
      // Predicated region
      $region9: #{tpu_custom_call.1} parent=5 // pred_check
        _
      $region10: #{tpu_custom_call.1} parent=5 // pred_check_branch
        %143 = sbr.rel (%p140) target = $region12
      $region11: #{tpu_custom_call.1} parent=5 // pred_region
        %s144 = ssub.s32 %s13, 1
        // Predicated region
        $region13: #{tpu_custom_call.1} parent=11 // pred_check
          %p145 = pneg %p74
        $region14: #{tpu_custom_call.1} parent=11 // pred_check_branch
          %147 = sbr.rel (%p145) target = $region16
        $region15: #{tpu_custom_call.1} parent=11 // pred_region
          _
        $region16: #{tpu_custom_call.1} parent=11 // pred_fallthru
          _
      $region12: #{tpu_custom_call.1} parent=5 // pred_fallthru
        _
      %p148 = scmp.lt.s32.totalorder %s13, 2
      // Predicated region
      $region17: #{tpu_custom_call.1} parent=5 // pred_check
        %p149 = pneg %p148
      $region18: #{tpu_custom_call.1} parent=5 // pred_check_branch
        %151 = sbr.rel (%p149) target = $region20
      $region19: #{tpu_custom_call.1} parent=5 // pred_region
        // Predicated region
        $region21: #{tpu_custom_call.1} parent=19 // pred_check
          %p152 = pneg %p47
        $region22: #{tpu_custom_call.1} parent=19 // pred_check_branch
          %154 = sbr.rel (%p152) target = $region24
        $region23: #{tpu_custom_call.1} parent=19 // pred_region
          %p155 = scmp.lt.s32.totalorder %s20, 1
          %s156 = scalar_select %p155, %s20, 1
          %p157 = scmp.lt.s32.totalorder %s21, 0
          %s158 = scalar_select %p157, %s21, 0
          %s159 = smul.addr %s156, 4
          %s160 = sadd.s32 %s158, %s159
          %s161 = smul.addr %s160, 8
          %s162 = scalar_lea.vmem %s0, %s161
        $region24: #{tpu_custom_call.1} parent=19 // pred_fallthru
          _
      $region20: #{tpu_custom_call.1} parent=5 // pred_fallthru
        _
      %p163 = scmp.le.s32.totalorder 1, %s13
      %p164 = scmp.lt.s32.totalorder %s13, 3
      %p165 = pnand %p163, %p164
      %p166 = pneg %p165
      // Predicated region
      $region25: #{tpu_custom_call.1} parent=5 // pred_check
        _
      $region26: #{tpu_custom_call.1} parent=5 // pred_check_branch
        %168 = sbr.rel (%p165) target = $region28
      $region27: #{tpu_custom_call.1} parent=5 // pred_region
        %s169 = ssub.s32 %s13, 1
        %p170 = scmp.lt.s32.totalorder %s22, 1
        %s171 = scalar_select %p170, %s22, 1
        %p172 = scmp.lt.s32.totalorder %s23, 0
        %s173 = scalar_select %p172, %s23, 0
        %s174 = smul.addr %s171, 4
        %s175 = sadd.s32 %s173, %s174
        %s176 = smul.addr %s175, 8
        %s177 = scalar_lea.vmem %s0, %s176
        %p178 = pneg %p53
        %p179 = pneg %p50
        %p180 = pneg %p74
        %p181 = pneg %p71
        %p182 = pneg %p102
        %p183 = pneg %p99
        %p184 = scmp.lt.s32.totalorder %s22, 1
        %s185 = scalar_select %p184, %s22, 1
        %p186 = scmp.lt.s32.totalorder %s23, 0
        %s187 = scalar_select %p186, %s23, 0
        %s188 = smul.addr %s185, 4
        %s189 = sadd.s32 %s187, %s188
        %s190 = smul.addr %s189, 8
        %s191 = scalar_lea.vmem %s2, %s190
        %p192 = pneg %p130
        %p193 = pneg %p127
        %s194 = sand.u32 %s117, 1
        %s195 = scalar_lea.sflag [#allocation3], %s194
        %s196 = sand.u32 %s117, 1
        %s197 = smul.addr %s196, 4
        %s198 = scalar_lea.vmem [#allocation2], %s197
        %p199 = scmp.lt.s32.totalorder %s22, 1
        %s200 = scalar_select %p199, %s22, 1
        %p201 = scmp.lt.s32.totalorder %s23, 0
        %s202 = scalar_select %p201, %s23, 0
        %s203 = smul.addr %s200, 4
        %s204 = sadd.s32 %s202, %s203
        %s205 = smul.addr %s204, 8
        %s206 = scalar_lea.vmem %s0, %s205
        %p207 = scmp.lt.s32.totalorder %s22, 1
        %s208 = scalar_select %p207, %s22, 1
        %p209 = scmp.lt.s32.totalorder %s23, 0
        %s210 = scalar_select %p209, %s23, 0
        %s211 = smul.addr %s208, 4
        %s212 = sadd.s32 %s210, %s211
        %s213 = smul.addr %s212, 8
        %s214 = scalar_lea.vmem %s2, %s213
        %v215 = vld [vmem:[%s206] sm:$0xff]
        %v216 = vld [vmem:[%s206 + $0x8] sm:$0xff]
        %v217 = vld [vmem:[%s206 + $0x10] sm:$0xff]
        %v218 = vld [vmem:[%s206 + $0x18] sm:$0xff]
        %v219 = vlaneseq
        %v220 = vshrl.u32 %v219, 7
        %v221 = vadd.s32 %v220, 8
        %v222 = vadd.s32 %v220, 16
        %v223 = vadd.s32 %v220, 24
        %v224 = vadd.s32 %v220, 32
        %v225 = vadd.s32 %v220, 40
        %v226 = vadd.s32 %v220, 48
        %v227 = vadd.s32 %v220, 56
        %v228 = vld [vmem:[%s1] sm:$0xff]
        %v229 = vld [vmem:[%s1 + $0x8] sm:$0xff]
        %v230 = vld [vmem:[%s1 + $0x10] sm:$0xff]
        %v231 = vld [vmem:[%s1 + $0x18] sm:$0xff]
        %v232 = vld [vmem:[%s1 + $0x20] sm:$0xff]
        %v233 = vld [vmem:[%s1 + $0x28] sm:$0xff]
        %v234 = vld [vmem:[%s1 + $0x30] sm:$0xff]
        %v235 = vld [vmem:[%s1 + $0x38] sm:$0xff]
        %v236 = vmul.f32 %v228, %v228
        %v237 = vmul.f32 %v229, %v229
        %v238 = vmul.f32 %v230, %v230
        %v239 = vmul.f32 %v231, %v231
        %v240 = vmul.f32 %v232, %v232
        %v241 = vmul.f32 %v233, %v233
        %v242 = vmul.f32 %v234, %v234
        %v243 = vmul.f32 %v235, %v235
        %vm244 = vcmask 261120
        %v245 = vsel %vm244, %v236, 0.0
        %246 = vadd.xlane.f32.xlu0 %v245
        %v247 = vpop.xlane.xlu0 %246
        %v248 = vsel %vm244, %v237, 0.0
        %249 = vadd.xlane.f32.xlu0 %v248
        %v250 = vpop.xlane.xlu0 %249
        %v251 = vsel %vm244, %v238, 0.0
        %252 = vadd.xlane.f32.xlu0 %v251
        %v253 = vpop.xlane.xlu0 %252
        %v254 = vsel %vm244, %v239, 0.0
        %255 = vadd.xlane.f32.xlu0 %v254
        %v256 = vpop.xlane.xlu0 %255
        %v257 = vsel %vm244, %v240, 0.0
        %258 = vadd.xlane.f32.xlu0 %v257
        %v259 = vpop.xlane.xlu0 %258
        %v260 = vsel %vm244, %v241, 0.0
        %261 = vadd.xlane.f32.xlu0 %v260
        %v262 = vpop.xlane.xlu0 %261
        %v263 = vsel %vm244, %v242, 0.0
        %264 = vadd.xlane.f32.xlu0 %v263
        %v265 = vpop.xlane.xlu0 %264
        %v266 = vsel %vm244, %v243, 0.0
        %267 = vadd.xlane.f32.xlu0 %v266
        %v268 = vpop.xlane.xlu0 %267
        %v269 = vmul.f32 %v247, 0.5
        %v270 = vmul.f32 %v250, 0.5
        %v271 = vmul.f32 %v253, 0.5
        %v272 = vmul.f32 %v256, 0.5
        %v273 = vmul.f32 %v259, 0.5
        %v274 = vmul.f32 %v262, 0.5
        %v275 = vmul.f32 %v265, 0.5
        %v276 = vmul.f32 %v268, 0.5
        %v278 = vsel %vm244, %v228, 0
        %v281 = vsel %vm244, %v229, 0
        %v284 = vsel %vm244, %v230, 0
        %v287 = vsel %vm244, %v231, 0
        %v290 = vsel %vm244, %v232, 0
        %v293 = vsel %vm244, %v233, 0
        %v296 = vsel %vm244, %v234, 0
        %v299 = vsel %vm244, %v235, 0
        %301 = vmatprep.subr.mxu0 0.0
        %302 = vmatpush1.msra.mxu0 %v215
        %303 = vmatprep.subr.mxu0 0.0
        %304 = vmatpush1.msra.mxu0 %v216
        %305 = vmatprep.subr.mxu0 0.0
        %306 = vmatpush1.msra.mxu0 %v217
        %307 = vmatprep.subr.mxu0 0.0
        %308 = vmatpush1.msra.mxu0 %v218
        %309 = vmatprep.subr.mxu0 0.0
        %310 = vmatpush1.msra.mxu0 0.0
        %311 = vmatprep.subr.mxu0 0.0
        %312 = vmatpush1.msra.mxu0 0.0
        %313 = vmatprep.subr.mxu0 0.0
        %314 = vmatpush1.msra.mxu0 0.0
        %315 = vmatprep.subr.mxu0 0.0
        %316 = vmatpush1.msra.mxu0 0.0
        %317 = vmatprep.subr.mxu0 0.0
        %318 = vmatpush1.msra.mxu0 0.0
        %319 = vmatprep.subr.mxu0 0.0
        %320 = vmatpush1.msra.mxu0 0.0
        %321 = vmatprep.subr.mxu0 0.0
        %322 = vmatpush1.msra.mxu0 0.0
        %323 = vmatprep.subr.mxu0 0.0
        %324 = vmatpush1.msra.mxu0 0.0
        %325 = vmatprep.subr.mxu0 0.0
        %326 = vmatpush1.msra.mxu0 0.0
        %327 = vmatprep.subr.mxu0 0.0
        %328 = vmatpush1.msra.mxu0 0.0
        %329 = vmatprep.subr.mxu0 0.0
        %330 = vmatpush1.msra.mxu0 0.0
        %331 = vmatprep.subr.mxu0 0.0
        %332 = vmatpush1.msra.mxu0 0.0
        %333 = vmatprep.subr.mxu0 0.0
        %334 = vmatpush1.msra.mxu0 0.0
        %335 = vmatprep.subr.mxu0 0.0
        %336 = vmatpush1.msra.mxu0 0.0
        %337 = vmatprep.subr.mxu0 0.0
        %338 = vmatpush1.msra.mxu0 0.0
        %339 = vmatprep.subr.mxu0 0.0
        %340 = vmatpush1.msra.mxu0 0.0
        %341 = vmatprep.subr.mxu0 0.0
        %342 = vmatpush1.msra.mxu0 0.0
        %343 = vmatprep.subr.mxu0 0.0
        %344 = vmatpush1.msra.mxu0 0.0
        %345 = vmatprep.subr.mxu0 0.0
        %346 = vmatpush1.msra.mxu0 0.0
        %347 = vmatprep.subr.mxu0 0.0
        %348 = vmatpush1.msra.mxu0 0.0
        %349 = vmatprep.subr.mxu0 0.0
        %350 = vmatpush1.msra.mxu0 0.0
        %351 = vmatprep.subr.mxu0 0.0
        %352 = vmatpush1.msra.mxu0 0.0
        %353 = vmatprep.subr.mxu0 0.0
        %354 = vmatpush1.msra.mxu0 0.0
        %355 = vmatprep.subr.mxu0 0.0
        %356 = vmatpush1.msra.mxu0 0.0
        %357 = vmatprep.subr.mxu0 0.0
        %358 = vmatpush1.msra.mxu0 0.0
        %359 = vmatprep.subr.mxu0 0.0
        %360 = vmatpush1.msra.mxu0 0.0
        %361 = vmatprep.subr.mxu0 0.0
        %362 = vmatpush1.msra.mxu0 0.0
        %363 = vmatprep.subr.mxu0 0.0
        %364 = vmatpush1.msra.mxu0 0.0
        %365 = vmatprep.mubr.f32.mxu0 0.0
        %366 = vmatmul.mubr.f32.gmra.mrb[0].mxu0 %v278
        %v367 = vpop.f32.mrb[0].mxu0
        %v368 = vadd.f32 0.0, %v367
        %v369 = vpop.f32.mrb[0].mxu0
        %370 = vmatprep.mubr.f32.mxu0 0.0
        %371 = vmatmul.mubr.f32.gmra.mrb[0].mxu0 %v281
        %v372 = vpop.f32.mrb[0].mxu0
        %v373 = vadd.f32 0.0, %v372
        %v374 = vpop.f32.mrb[0].mxu0
        %375 = vmatprep.mubr.f32.mxu0 0.0
        %376 = vmatmul.mubr.f32.gmra.mrb[0].mxu0 %v284
        %v377 = vpop.f32.mrb[0].mxu0
        %v378 = vadd.f32 0.0, %v377
        %v379 = vpop.f32.mrb[0].mxu0
        %380 = vmatprep.mubr.f32.mxu0 0.0
        %381 = vmatmul.mubr.f32.gmra.mrb[0].mxu0 %v287
        %v382 = vpop.f32.mrb[0].mxu0
        %v383 = vadd.f32 0.0, %v382
        %v384 = vpop.f32.mrb[0].mxu0
        %385 = vmatprep.mubr.f32.mxu0 0.0
        %386 = vmatmul.mubr.f32.gmra.mrb[0].mxu0 %v290
        %v387 = vpop.f32.mrb[0].mxu0
        %v388 = vadd.f32 0.0, %v387
        %v389 = vpop.f32.mrb[0].mxu0
        %390 = vmatprep.mubr.f32.mxu0 0.0
        %391 = vmatmul.mubr.f32.gmra.mrb[0].mxu0 %v293
        %v392 = vpop.f32.mrb[0].mxu0
        %v393 = vadd.f32 0.0, %v392
        %v394 = vpop.f32.mrb[0].mxu0
        %395 = vmatprep.mubr.f32.mxu0 0.0
        %396 = vmatmul.mubr.f32.gmra.mrb[0].mxu0 %v296
        %v397 = vpop.f32.mrb[0].mxu0
        %v398 = vadd.f32 0.0, %v397
        %v399 = vpop.f32.mrb[0].mxu0
        %400 = vmatprep.mubr.f32.mxu0 0.0
        %401 = vmatmul.mubr.f32.gmra.mrb[0].mxu0 %v299
        %v402 = vpop.f32.mrb[0].mxu0
        %v403 = vadd.f32 0.0, %v402
        %v404 = vpop.f32.mrb[0].mxu0
        %405 = vdwg.mxu0
        %v406 = vsub.f32 %v368, %v269
        %v407 = vsub.f32 %v373, %v270
        %v408 = vsub.f32 %v378, %v271
        %v409 = vsub.f32 %v383, %v272
        %v410 = vsub.f32 %v388, %v273
        %v411 = vsub.f32 %v393, %v274
        %v412 = vsub.f32 %v398, %v275
        %v413 = vsub.f32 %v403, %v276
        %vm414 = vcmask 64512
        %v415 = vsel %vm414, %v406, -inf
        %v416 = vsel %vm414, %v407, -inf
        %v417 = vsel %vm414, %v408, -inf
        %v418 = vsel %vm414, %v409, -inf
        %v419 = vsel %vm414, %v410, -inf
        %v420 = vmax.f32 %v415, %v419
        %v421 = vsel %vm414, %v411, -inf
        %v422 = vmax.f32 %v416, %v421
        %v423 = vsel %vm414, %v412, -inf
        %v424 = vmax.f32 %v417, %v423
        %v425 = vsel %vm414, %v413, -inf
        %v426 = vmax.f32 %v418, %v425
        %v427 = vmax.f32 %v420, %v422
        %v428 = vmax.f32 %v424, %v426
        %v429 = vmax.f32 %v427, %v428
        %v430 = vrot.slane %v429, 4
        %v431 = vmax.f32 %v429, %v430
        %v432 = vrot.slane %v431, 2
        %v433 = vmax.f32 %v431, %v432
        %v434 = vrot.slane %v433, 1
        %v435 = vmax.f32 %v433, %v434
        %vm436 = vcmp.eq.f32.partialorder %v406, %v435
        %vm437 = vcmp.eq.f32.partialorder %v407, %v435
        %vm438 = vcmp.eq.f32.partialorder %v408, %v435
        %vm439 = vcmp.eq.f32.partialorder %v409, %v435
        %vm440 = vcmp.eq.f32.partialorder %v410, %v435
        %vm441 = vcmp.eq.f32.partialorder %v411, %v435
        %vm442 = vcmp.eq.f32.partialorder %v412, %v435
        %vm443 = vcmp.eq.f32.partialorder %v413, %v435
        %v444 = vsel %vm436, %v220, 64
        %v445 = vsel %vm437, %v221, 64
        %v446 = vsel %vm438, %v222, 64
        %v447 = vsel %vm439, %v223, 64
        %v448 = vsel %vm440, %v224, 64
        %v449 = vsel %vm441, %v225, 64
        %v450 = vsel %vm442, %v226, 64
        %v451 = vsel %vm443, %v227, 64
        %v452 = vsel %vm414, %v444, 2147483647
        %v453 = vsel %vm414, %v445, 2147483647
        %v454 = vsel %vm414, %v446, 2147483647
        %v455 = vsel %vm414, %v447, 2147483647
        %v456 = vsel %vm414, %v448, 2147483647
        %vm457 = vcmp.lt.s32.totalorder %v452, %v456
        %v458 = vsel %vm457, %v452, %v456
        %v459 = vsel %vm414, %v449, 2147483647
        %vm460 = vcmp.lt.s32.totalorder %v453, %v459
        %v461 = vsel %vm460, %v453, %v459
        %v462 = vsel %vm414, %v450, 2147483647
        %vm463 = vcmp.lt.s32.totalorder %v454, %v462
        %v464 = vsel %vm463, %v454, %v462
        %v465 = vsel %vm414, %v451, 2147483647
        %vm466 = vcmp.lt.s32.totalorder %v455, %v465
        %v467 = vsel %vm466, %v455, %v465
        %vm468 = vcmp.lt.s32.totalorder %v458, %v461
        %v469 = vsel %vm468, %v458, %v461
        %vm470 = vcmp.lt.s32.totalorder %v464, %v467
        %v471 = vsel %vm470, %v464, %v467
        %vm472 = vcmp.lt.s32.totalorder %v469, %v471
        %v473 = vsel %vm472, %v469, %v471
        %v474 = vrot.slane %v473, 4
        %vm475 = vcmp.lt.s32.totalorder %v473, %v474
        %v476 = vsel %vm475, %v473, %v474
        %v477 = vrot.slane %v476, 2
        %vm478 = vcmp.lt.s32.totalorder %v476, %v477
        %v479 = vsel %vm478, %v476, %v477
        %v480 = vrot.slane %v479, 1
        %vm481 = vcmp.lt.s32.totalorder %v479, %v480
        %v482 = vsel %vm481, %v479, %v480
        %vm483 = vcmask 57344
        %484 = vst.msk [vmem:[%s198] sm:$0x1] %vm483, %v482
        %vm485 = vcmp.eq.s32.totalorder %v220, %v482
        %vm486 = vcmp.eq.s32.totalorder %v221, %v482
        %vm487 = vcmp.eq.s32.totalorder %v222, %v482
        %vm488 = vcmp.eq.s32.totalorder %v223, %v482
        %vm489 = vcmp.eq.s32.totalorder %v224, %v482
        %vm490 = vcmp.eq.s32.totalorder %v225, %v482
        %vm491 = vcmp.eq.s32.totalorder %v226, %v482
        %vm492 = vcmp.eq.s32.totalorder %v227, %v482
        %v493 = vsel %vm485, 1, 0
        %v494 = vsel %vm486, 1, 0
        %v495 = vsel %vm487, 1, 0
        %v496 = vsel %vm488, 1, 0
        %v497 = vsel %vm489, 1, 0
        %v498 = vsel %vm490, 1, 0
        %v499 = vsel %vm491, 1, 0
        %v500 = vsel %vm492, 1, 0
        %v501 = vcvt.s32.f32 %v493
        %v502 = vcvt.s32.f32 %v494
        %v503 = vcvt.s32.f32 %v495
        %v504 = vcvt.s32.f32 %v496
        %v505 = vcvt.s32.f32 %v497
        %v506 = vcvt.s32.f32 %v498
        %v507 = vcvt.s32.f32 %v499
        %v508 = vcvt.s32.f32 %v500
        %509 = vxpose.xlu0.b32.start [1/16] %v228, 128
        %510 = vxpose.xlu0.b32.cont [2/16] %v229, 128
        %511 = vxpose.xlu0.b32.cont [3/16] %v230, 128
        %512 = vxpose.xlu0.b32.cont [4/16] %v231, 128
        %513 = vxpose.xlu0.b32.cont [5/16] %v232, 128
        %514 = vxpose.xlu0.b32.cont [6/16] %v233, 128
        %515 = vxpose.xlu0.b32.cont [7/16] %v234, 128
        %516 = vxpose.xlu0.b32.cont [8/16] %v235, 128
        %517 = vxpose.xlu0.b32.cont [9/16] 0.0, 128
        %518 = vxpose.xlu0.b32.cont [10/16] 0.0, 128
        %519 = vxpose.xlu0.b32.cont [11/16] 0.0, 128
        %520 = vxpose.xlu0.b32.cont [12/16] 0.0, 128
        %521 = vxpose.xlu0.b32.cont [13/16] 0.0, 128
        %522 = vxpose.xlu0.b32.cont [14/16] 0.0, 128
        %523 = vxpose.xlu0.b32.cont [15/16] 0.0, 128
        %524 = vxpose.xlu0.b32.end [16/16] 0.0, 128
        %v525 = vpop.trf.xlu0
        %v526 = vpop.trf.xlu0
        %v527 = vpop.trf.xlu0
        %v528 = vpop.trf.xlu0
        %v529 = vpop.trf.xlu0
        %v530 = vpop.trf.xlu0
        %v531 = vpop.trf.xlu0
        %v532 = vpop.trf.xlu0
        %v533 = vpop.trf.xlu0
        %v534 = vpop.trf.xlu0
        %v535 = vpop.trf.xlu0
        %v536 = vpop.trf.xlu0
        %v537 = vpop.trf.xlu0
        %v538 = vpop.trf.xlu0
        %v539 = vpop.trf.xlu0
        %v540 = vpop.trf.xlu0
        %vm541 = vcmask 523264
        %v543 = vsel %vm541, %v525, 0
        %v546 = vsel %vm541, %v526, 0
        %v549 = vsel %vm541, %v527, 0
        %v552 = vsel %vm541, %v528, 0
        %554 = vmatprep.subr.mxu0 0.0
        %v555 = vand.u32 %v501, 4294901760
        %556 = vmatpush1.msra.mxu0 %v555
        %557 = vmatprep.subr.mxu0 0.0
        %v558 = vand.u32 %v502, 4294901760
        %559 = vmatpush1.msra.mxu0 %v558
        %560 = vmatprep.subr.mxu0 0.0
        %v561 = vand.u32 %v503, 4294901760
        %562 = vmatpush1.msra.mxu0 %v561
        %563 = vmatprep.subr.mxu0 0.0
        %v564 = vand.u32 %v504, 4294901760
        %565 = vmatpush1.msra.mxu0 %v564
        %566 = vmatprep.subr.mxu0 0.0
        %v567 = vand.u32 %v505, 4294901760
        %568 = vmatpush1.msra.mxu0 %v567
        %569 = vmatprep.subr.mxu0 0.0
        %v570 = vand.u32 %v506, 4294901760
        %571 = vmatpush1.msra.mxu0 %v570
        %572 = vmatprep.subr.mxu0 0.0
        %v573 = vand.u32 %v507, 4294901760
        %574 = vmatpush1.msra.mxu0 %v573
        %575 = vmatprep.subr.mxu0 0.0
        %v576 = vand.u32 %v508, 4294901760
        %577 = vmatpush1.msra.mxu0 %v576
        %578 = vmatprep.subr.mxu0 0.0
        %579 = vmatpush1.msra.mxu0 0.0
        %580 = vmatprep.subr.mxu0 0.0
        %581 = vmatpush1.msra.mxu0 0.0
        %582 = vmatprep.subr.mxu0 0.0
        %583 = vmatpush1.msra.mxu0 0.0
        %584 = vmatprep.subr.mxu0 0.0
        %585 = vmatpush1.msra.mxu0 0.0
        %586 = vmatprep.subr.mxu0 0.0
        %587 = vmatpush1.msra.mxu0 0.0
        %588 = vmatprep.subr.mxu0 0.0
        %589 = vmatpush1.msra.mxu0 0.0
        %590 = vmatprep.subr.mxu0 0.0
        %591 = vmatpush1.msra.mxu0 0.0
        %592 = vmatprep.subr.mxu0 0.0
        %593 = vmatpush1.msra.mxu0 0.0
        %594 = vmatprep.subr.mxu0 0.0
        %595 = vmatpush1.msra.mxu0 0.0
        %596 = vmatprep.subr.mxu0 0.0
        %597 = vmatpush1.msra.mxu0 0.0
        %598 = vmatprep.subr.mxu0 0.0
        %599 = vmatpush1.msra.mxu0 0.0
        %600 = vmatprep.subr.mxu0 0.0
        %601 = vmatpush1.msra.mxu0 0.0
        %602 = vmatprep.subr.mxu0 0.0
        %603 = vmatpush1.msra.mxu0 0.0
        %604 = vmatprep.subr.mxu0 0.0
        %605 = vmatpush1.msra.mxu0 0.0
        %606 = vmatprep.subr.mxu0 0.0
        %607 = vmatpush1.msra.mxu0 0.0
        %608 = vmatprep.subr.mxu0 0.0
        %609 = vmatpush1.msra.mxu0 0.0
        %610 = vmatprep.subr.mxu0 0.0
        %611 = vmatpush1.msra.mxu0 0.0
        %612 = vmatprep.subr.mxu0 0.0
        %613 = vmatpush1.msra.mxu0 0.0
        %614 = vmatprep.subr.mxu0 0.0
        %615 = vmatpush1.msra.mxu0 0.0
        %616 = vmatprep.subr.mxu0 0.0
        %617 = vmatpush1.msra.mxu0 0.0
        %618 = vmatprep.subr.mxu0 0.0
        %619 = vmatpush1.msra.mxu0 0.0
        %620 = vmatprep.subr.mxu0 0.0
        %621 = vmatpush1.msra.mxu0 0.0
        %622 = vmatprep.subr.mxu0 0.0
        %623 = vmatpush1.msra.mxu0 0.0
        %624 = vmatprep.subr.mxu0 0.0
        %625 = vmatpush1.msra.mxu0 0.0
        %626 = vmatprep.mubr.f32.mxu0 0.0
        %v627 = vand.u32 %v543, 4294901760
        %v628 = vsub.f32 %v543, %v627
        %v629 = vand.u32 %v628, 4294901760
        %v630 = vsub.f32 %v628, %v629
        %v631 = vand.u32 %v630, 4294901760
        %632 = vmatmul.mubr.f32.gmra.mrb[0].mxu0 %v631
        %v633 = vpop.f32.mrb[0].mxu0
        %v634 = vadd.f32 0.0, %v633
        %v635 = vpop.f32.mrb[0].mxu0
        %636 = vmatprep.mubr.f32.mxu0 0.0
        %v637 = vand.u32 %v546, 4294901760
        %v638 = vsub.f32 %v546, %v637
        %v639 = vand.u32 %v638, 4294901760
        %v640 = vsub.f32 %v638, %v639
        %v641 = vand.u32 %v640, 4294901760
        %642 = vmatmul.mubr.f32.gmra.mrb[0].mxu0 %v641
        %v643 = vpop.f32.mrb[0].mxu0
        %v644 = vadd.f32 0.0, %v643
        %v645 = vpop.f32.mrb[0].mxu0
        %646 = vmatprep.mubr.f32.mxu0 0.0
        %v647 = vand.u32 %v549, 4294901760
        %v648 = vsub.f32 %v549, %v647
        %v649 = vand.u32 %v648, 4294901760
        %v650 = vsub.f32 %v648, %v649
        %v651 = vand.u32 %v650, 4294901760
        %652 = vmatmul.mubr.f32.gmra.mrb[0].mxu0 %v651
        %v653 = vpop.f32.mrb[0].mxu0
        %v654 = vadd.f32 0.0, %v653
        %v655 = vpop.f32.mrb[0].mxu0
        %656 = vmatprep.mubr.f32.mxu0 0.0
        %v657 = vand.u32 %v552, 4294901760
        %v658 = vsub.f32 %v552, %v657
        %v659 = vand.u32 %v658, 4294901760
        %v660 = vsub.f32 %v658, %v659
        %v661 = vand.u32 %v660, 4294901760
        %662 = vmatmul.mubr.f32.gmra.mrb[0].mxu0 %v661
        %v663 = vpop.f32.mrb[0].mxu0
        %v664 = vadd.f32 0.0, %v663
        %v665 = vpop.f32.mrb[0].mxu0
        %666 = vdwg.mxu0
        %667 = vmatprep.subr.mxu0 0.0
        %v668 = vand.u32 %v501, 4294901760
        %v669 = vsub.f32 %v501, %v668
        %v670 = vand.u32 %v669, 4294901760
        %v671 = vsub.f32 %v669, %v670
        %v672 = vand.u32 %v671, 4294901760
        %673 = vmatpush1.msra.mxu0 %v672
        %674 = vmatprep.subr.mxu0 0.0
        %v675 = vand.u32 %v502, 4294901760
        %v676 = vsub.f32 %v502, %v675
        %v677 = vand.u32 %v676, 4294901760
        %v678 = vsub.f32 %v676, %v677
        %v679 = vand.u32 %v678, 4294901760
        %680 = vmatpush1.msra.mxu0 %v679
        %681 = vmatprep.subr.mxu0 0.0
        %v682 = vand.u32 %v503, 4294901760
        %v683 = vsub.f32 %v503, %v682
        %v684 = vand.u32 %v683, 4294901760
        %v685 = vsub.f32 %v683, %v684
        %v686 = vand.u32 %v685, 4294901760
        %687 = vmatpush1.msra.mxu0 %v686
        %688 = vmatprep.subr.mxu0 0.0
        %v689 = vand.u32 %v504, 4294901760
        %v690 = vsub.f32 %v504, %v689
        %v691 = vand.u32 %v690, 4294901760
        %v692 = vsub.f32 %v690, %v691
        %v693 = vand.u32 %v692, 4294901760
        %694 = vmatpush1.msra.mxu0 %v693
        %695 = vmatprep.subr.mxu0 0.0
        %v696 = vand.u32 %v505, 4294901760
        %v697 = vsub.f32 %v505, %v696
        %v698 = vand.u32 %v697, 4294901760
        %v699 = vsub.f32 %v697, %v698
        %v700 = vand.u32 %v699, 4294901760
        %701 = vmatpush1.msra.mxu0 %v700
        %702 = vmatprep.subr.mxu0 0.0
        %v703 = vand.u32 %v506, 4294901760
        %v704 = vsub.f32 %v506, %v703
        %v705 = vand.u32 %v704, 4294901760
        %v706 = vsub.f32 %v704, %v705
        %v707 = vand.u32 %v706, 4294901760
        %708 = vmatpush1.msra.mxu0 %v707
        %709 = vmatprep.subr.mxu0 0.0
        %v710 = vand.u32 %v507, 4294901760
        %v711 = vsub.f32 %v507, %v710
        %v712 = vand.u32 %v711, 4294901760
        %v713 = vsub.f32 %v711, %v712
        %v714 = vand.u32 %v713, 4294901760
        %715 = vmatpush1.msra.mxu0 %v714
        %716 = vmatprep.subr.mxu0 0.0
        %v717 = vand.u32 %v508, 4294901760
        %v718 = vsub.f32 %v508, %v717
        %v719 = vand.u32 %v718, 4294901760
        %v720 = vsub.f32 %v718, %v719
        %v721 = vand.u32 %v720, 4294901760
        %722 = vmatpush1.msra.mxu0 %v721
        %723 = vmatprep.subr.mxu0 0.0
        %724 = vmatpush1.msra.mxu0 0.0
        %725 = vmatprep.subr.mxu0 0.0
        %726 = vmatpush1.msra.mxu0 0.0
        %727 = vmatprep.subr.mxu0 0.0
        %728 = vmatpush1.msra.mxu0 0.0
        %729 = vmatprep.subr.mxu0 0.0
        %730 = vmatpush1.msra.mxu0 0.0
        %731 = vmatprep.subr.mxu0 0.0
        %732 = vmatpush1.msra.mxu0 0.0
        %733 = vmatprep.subr.mxu0 0.0
        %734 = vmatpush1.msra.mxu0 0.0
        %735 = vmatprep.subr.mxu0 0.0
        %736 = vmatpush1.msra.mxu0 0.0
        %737 = vmatprep.subr.mxu0 0.0
        %738 = vmatpush1.msra.mxu0 0.0
        %739 = vmatprep.subr.mxu0 0.0
        %740 = vmatpush1.msra.mxu0 0.0
        %741 = vmatprep.subr.mxu0 0.0
        %742 = vmatpush1.msra.mxu0 0.0
        %743 = vmatprep.subr.mxu0 0.0
        %744 = vmatpush1.msra.mxu0 0.0
        %745 = vmatprep.subr.mxu0 0.0
        %746 = vmatpush1.msra.mxu0 0.0
        %747 = vmatprep.subr.mxu0 0.0
        %748 = vmatpush1.msra.mxu0 0.0
        %749 = vmatprep.subr.mxu0 0.0
        %750 = vmatpush1.msra.mxu0 0.0
        %751 = vmatprep.subr.mxu0 0.0
        %752 = vmatpush1.msra.mxu0 0.0
        %753 = vmatprep.subr.mxu0 0.0
        %754 = vmatpush1.msra.mxu0 0.0
        %755 = vmatprep.subr.mxu0 0.0
        %756 = vmatpush1.msra.mxu0 0.0
        %757 = vmatprep.subr.mxu0 0.0
        %758 = vmatpush1.msra.mxu0 0.0
        %759 = vmatprep.subr.mxu0 0.0
        %760 = vmatpush1.msra.mxu0 0.0
        %761 = vmatprep.subr.mxu0 0.0
        %762 = vmatpush1.msra.mxu0 0.0
        %763 = vmatprep.subr.mxu0 0.0
        %764 = vmatpush1.msra.mxu0 0.0
        %765 = vmatprep.subr.mxu0 0.0
        %766 = vmatpush1.msra.mxu0 0.0
        %767 = vmatprep.subr.mxu0 0.0
        %768 = vmatpush1.msra.mxu0 0.0
        %769 = vmatprep.subr.mxu0 0.0
        %770 = vmatpush1.msra.mxu0 0.0
        %771 = vmatprep.mubr.f32.mxu0 0.0
        %v772 = vand.u32 %v543, 4294901760
        %773 = vmatmul.mubr.f32.gmra.mrb[0].mxu0 %v772
        %v774 = vpop.f32.mrb[0].mxu0
        %v775 = vadd.f32 %v634, %v774
        %v776 = vpop.f32.mrb[0].mxu0
        %777 = vmatprep.mubr.f32.mxu0 0.0
        %v778 = vand.u32 %v546, 4294901760
        %779 = vmatmul.mubr.f32.gmra.mrb[0].mxu0 %v778
        %v780 = vpop.f32.mrb[0].mxu0
        %v781 = vadd.f32 %v644, %v780
        %v782 = vpop.f32.mrb[0].mxu0
        %783 = vmatprep.mubr.f32.mxu0 0.0
        %v784 = vand.u32 %v549, 4294901760
        %785 = vmatmul.mubr.f32.gmra.mrb[0].mxu0 %v784
        %v786 = vpop.f32.mrb[0].mxu0
        %v787 = vadd.f32 %v654, %v786
        %v788 = vpop.f32.mrb[0].mxu0
        %789 = vmatprep.mubr.f32.mxu0 0.0
        %v790 = vand.u32 %v552, 4294901760
        %791 = vmatmul.mubr.f32.gmra.mrb[0].mxu0 %v790
        %v792 = vpop.f32.mrb[0].mxu0
        %v793 = vadd.f32 %v664, %v792
        %v794 = vpop.f32.mrb[0].mxu0
        %795 = vdwg.mxu0
        %796 = vmatprep.subr.mxu0 0.0
        %v797 = vand.u32 %v501, 4294901760
        %v798 = vsub.f32 %v501, %v797
        %799 = vmatpush1.msra.mxu0 %v798
        %800 = vmatprep.subr.mxu0 0.0
        %v801 = vand.u32 %v502, 4294901760
        %v802 = vsub.f32 %v502, %v801
        %803 = vmatpush1.msra.mxu0 %v802
        %804 = vmatprep.subr.mxu0 0.0
        %v805 = vand.u32 %v503, 4294901760
        %v806 = vsub.f32 %v503, %v805
        %807 = vmatpush1.msra.mxu0 %v806
        %808 = vmatprep.subr.mxu0 0.0
        %v809 = vand.u32 %v504, 4294901760
        %v810 = vsub.f32 %v504, %v809
        %811 = vmatpush1.msra.mxu0 %v810
        %812 = vmatprep.subr.mxu0 0.0
        %v813 = vand.u32 %v505, 4294901760
        %v814 = vsub.f32 %v505, %v813
        %815 = vmatpush1.msra.mxu0 %v814
        %816 = vmatprep.subr.mxu0 0.0
        %v817 = vand.u32 %v506, 4294901760
        %v818 = vsub.f32 %v506, %v817
        %819 = vmatpush1.msra.mxu0 %v818
        %820 = vmatprep.subr.mxu0 0.0
        %v821 = vand.u32 %v507, 4294901760
        %v822 = vsub.f32 %v507, %v821
        %823 = vmatpush1.msra.mxu0 %v822
        %824 = vmatprep.subr.mxu0 0.0
        %v825 = vand.u32 %v508, 4294901760
        %v826 = vsub.f32 %v508, %v825
        %827 = vmatpush1.msra.mxu0 %v826
        %828 = vmatprep.subr.mxu0 0.0
        %829 = vmatpush1.msra.mxu0 0.0
        %830 = vmatprep.subr.mxu0 0.0
        %831 = vmatpush1.msra.mxu0 0.0
        %832 = vmatprep.subr.mxu0 0.0
        %833 = vmatpush1.msra.mxu0 0.0
        %834 = vmatprep.subr.mxu0 0.0
        %835 = vmatpush1.msra.mxu0 0.0
        %836 = vmatprep.subr.mxu0 0.0
        %837 = vmatpush1.msra.mxu0 0.0
        %838 = vmatprep.subr.mxu0 0.0
        %839 = vmatpush1.msra.mxu0 0.0
        %840 = vmatprep.subr.mxu0 0.0
        %841 = vmatpush1.msra.mxu0 0.0
        %842 = vmatprep.subr.mxu0 0.0
        %843 = vmatpush1.msra.mxu0 0.0
        %844 = vmatprep.subr.mxu0 0.0
        %845 = vmatpush1.msra.mxu0 0.0
        %846 = vmatprep.subr.mxu0 0.0
        %847 = vmatpush1.msra.mxu0 0.0
        %848 = vmatprep.subr.mxu0 0.0
        %849 = vmatpush1.msra.mxu0 0.0
        %850 = vmatprep.subr.mxu0 0.0
        %851 = vmatpush1.msra.mxu0 0.0
        %852 = vmatprep.subr.mxu0 0.0
        %853 = vmatpush1.msra.mxu0 0.0
        %854 = vmatprep.subr.mxu0 0.0
        %855 = vmatpush1.msra.mxu0 0.0
        %856 = vmatprep.subr.mxu0 0.0
        %857 = vmatpush1.msra.mxu0 0.0
        %858 = vmatprep.subr.mxu0 0.0
        %859 = vmatpush1.msra.mxu0 0.0
        %860 = vmatprep.subr.mxu0 0.0
        %861 = vmatpush1.msra.mxu0 0.0
        %862 = vmatprep.subr.mxu0 0.0
        %863 = vmatpush1.msra.mxu0 0.0
        %864 = vmatprep.subr.mxu0 0.0
        %865 = vmatpush1.msra.mxu0 0.0
        %866 = vmatprep.subr.mxu0 0.0
        %867 = vmatpush1.msra.mxu0 0.0
        %868 = vmatprep.subr.mxu0 0.0
        %869 = vmatpush1.msra.mxu0 0.0
        %870 = vmatprep.subr.mxu0 0.0
        %871 = vmatpush1.msra.mxu0 0.0
        %872 = vmatprep.subr.mxu0 0.0
        %873 = vmatpush1.msra.mxu0 0.0
        %874 = vmatprep.subr.mxu0 0.0
        %875 = vmatpush1.msra.mxu0 0.0
        %876 = vmatprep.mubr.f32.mxu0 0.0
        %v877 = vand.u32 %v543, 4294901760
        %v878 = vsub.f32 %v543, %v877
        %879 = vmatmul.mubr.f32.gmra.mrb[0].mxu0 %v878
        %v880 = vpop.f32.mrb[0].mxu0
        %v881 = vadd.f32 %v775, %v880
        %v882 = vpop.f32.mrb[0].mxu0
        %883 = vmatprep.mubr.f32.mxu0 0.0
        %v884 = vand.u32 %v546, 4294901760
        %v885 = vsub.f32 %v546, %v884
        %886 = vmatmul.mubr.f32.gmra.mrb[0].mxu0 %v885
        %v887 = vpop.f32.mrb[0].mxu0
        %v888 = vadd.f32 %v781, %v887
        %v889 = vpop.f32.mrb[0].mxu0
        %890 = vmatprep.mubr.f32.mxu0 0.0
        %v891 = vand.u32 %v549, 4294901760
        %v892 = vsub.f32 %v549, %v891
        %893 = vmatmul.mubr.f32.gmra.mrb[0].mxu0 %v892
        %v894 = vpop.f32.mrb[0].mxu0
        %v895 = vadd.f32 %v787, %v894
        %v896 = vpop.f32.mrb[0].mxu0
        %897 = vmatprep.mubr.f32.mxu0 0.0
        %v898 = vand.u32 %v552, 4294901760
        %v899 = vsub.f32 %v552, %v898
        %900 = vmatmul.mubr.f32.gmra.mrb[0].mxu0 %v899
        %v901 = vpop.f32.mrb[0].mxu0
        %v902 = vadd.f32 %v793, %v901
        %v903 = vpop.f32.mrb[0].mxu0
        %904 = vdwg.mxu0
        %905 = vmatprep.subr.mxu0 0.0
        %v906 = vand.u32 %v501, 4294901760
        %907 = vmatpush1.msra.mxu0 %v906
        %908 = vmatprep.subr.mxu0 0.0
        %v909 = vand.u32 %v502, 4294901760
        %910 = vmatpush1.msra.mxu0 %v909
        %911 = vmatprep.subr.mxu0 0.0
        %v912 = vand.u32 %v503, 4294901760
        %913 = vmatpush1.msra.mxu0 %v912
        %914 = vmatprep.subr.mxu0 0.0
        %v915 = vand.u32 %v504, 4294901760
        %916 = vmatpush1.msra.mxu0 %v915
        %917 = vmatprep.subr.mxu0 0.0
        %v918 = vand.u32 %v505, 4294901760
        %919 = vmatpush1.msra.mxu0 %v918
        %920 = vmatprep.subr.mxu0 0.0
        %v921 = vand.u32 %v506, 4294901760
        %922 = vmatpush1.msra.mxu0 %v921
        %923 = vmatprep.subr.mxu0 0.0
        %v924 = vand.u32 %v507, 4294901760
        %925 = vmatpush1.msra.mxu0 %v924
        %926 = vmatprep.subr.mxu0 0.0
        %v927 = vand.u32 %v508, 4294901760
        %928 = vmatpush1.msra.mxu0 %v927
        %929 = vmatprep.subr.mxu0 0.0
        %930 = vmatpush1.msra.mxu0 0.0
        %931 = vmatprep.subr.mxu0 0.0
        %932 = vmatpush1.msra.mxu0 0.0
        %933 = vmatprep.subr.mxu0 0.0
        %934 = vmatpush1.msra.mxu0 0.0
        %935 = vmatprep.subr.mxu0 0.0
        %936 = vmatpush1.msra.mxu0 0.0
        %937 = vmatprep.subr.mxu0 0.0
        %938 = vmatpush1.msra.mxu0 0.0
        %939 = vmatprep.subr.mxu0 0.0
        %940 = vmatpush1.msra.mxu0 0.0
        %941 = vmatprep.subr.mxu0 0.0
        %942 = vmatpush1.msra.mxu0 0.0
        %943 = vmatprep.subr.mxu0 0.0
        %944 = vmatpush1.msra.mxu0 0.0
        %945 = vmatprep.subr.mxu0 0.0
        %946 = vmatpush1.msra.mxu0 0.0
        %947 = vmatprep.subr.mxu0 0.0
        %948 = vmatpush1.msra.mxu0 0.0
        %949 = vmatprep.subr.mxu0 0.0
        %950 = vmatpush1.msra.mxu0 0.0
        %951 = vmatprep.subr.mxu0 0.0
        %952 = vmatpush1.msra.mxu0 0.0
        %953 = vmatprep.subr.mxu0 0.0
        %954 = vmatpush1.msra.mxu0 0.0
        %955 = vmatprep.subr.mxu0 0.0
        %956 = vmatpush1.msra.mxu0 0.0
        %957 = vmatprep.subr.mxu0 0.0
        %958 = vmatpush1.msra.mxu0 0.0
        %959 = vmatprep.subr.mxu0 0.0
        %960 = vmatpush1.msra.mxu0 0.0
        %961 = vmatprep.subr.mxu0 0.0
        %962 = vmatpush1.msra.mxu0 0.0
        %963 = vmatprep.subr.mxu0 0.0
        %964 = vmatpush1.msra.mxu0 0.0
        %965 = vmatprep.subr.mxu0 0.0
        %966 = vmatpush1.msra.mxu0 0.0
        %967 = vmatprep.subr.mxu0 0.0
        %968 = vmatpush1.msra.mxu0 0.0
        %969 = vmatprep.subr.mxu0 0.0
        %970 = vmatpush1.msra.mxu0 0.0
        %971 = vmatprep.subr.mxu0 0.0
        %972 = vmatpush1.msra.mxu0 0.0
        %973 = vmatprep.subr.mxu0 0.0
        %974 = vmatpush1.msra.mxu0 0.0
        %975 = vmatprep.subr.mxu0 0.0
        %976 = vmatpush1.msra.mxu0 0.0
        %977 = vmatprep.mubr.f32.mxu0 0.0
        %v978 = vand.u32 %v543, 4294901760
        %v979 = vsub.f32 %v543, %v978
        %v980 = vand.u32 %v979, 4294901760
        %981 = vmatmul.mubr.f32.gmra.mrb[0].mxu0 %v980
        %v982 = vpop.f32.mrb[0].mxu0
        %v983 = vadd.f32 %v881, %v982
        %v984 = vpop.f32.mrb[0].mxu0
        %985 = vmatprep.mubr.f32.mxu0 0.0
        %v986 = vand.u32 %v546, 4294901760
        %v987 = vsub.f32 %v546, %v986
        %v988 = vand.u32 %v987, 4294901760
        %989 = vmatmul.mubr.f32.gmra.mrb[0].mxu0 %v988
        %v990 = vpop.f32.mrb[0].mxu0
        %v991 = vadd.f32 %v888, %v990
        %v992 = vpop.f32.mrb[0].mxu0
        %993 = vmatprep.mubr.f32.mxu0 0.0
        %v994 = vand.u32 %v549, 4294901760
        %v995 = vsub.f32 %v549, %v994
        %v996 = vand.u32 %v995, 4294901760
        %997 = vmatmul.mubr.f32.gmra.mrb[0].mxu0 %v996
        %v998 = vpop.f32.mrb[0].mxu0
        %v999 = vadd.f32 %v895, %v998
        %v1000 = vpop.f32.mrb[0].mxu0
        %1001 = vmatprep.mubr.f32.mxu0 0.0
        %v1002 = vand.u32 %v552, 4294901760
        %v1003 = vsub.f32 %v552, %v1002
        %v1004 = vand.u32 %v1003, 4294901760
        %1005 = vmatmul.mubr.f32.gmra.mrb[0].mxu0 %v1004
        %v1006 = vpop.f32.mrb[0].mxu0
        %v1007 = vadd.f32 %v902, %v1006
        %v1008 = vpop.f32.mrb[0].mxu0
        %1009 = vdwg.mxu0
        %1010 = vmatprep.subr.mxu0 0.0
        %v1011 = vand.u32 %v501, 4294901760
        %v1012 = vsub.f32 %v501, %v1011
        %v1013 = vand.u32 %v1012, 4294901760
        %1014 = vmatpush1.msra.mxu0 %v1013
        %1015 = vmatprep.subr.mxu0 0.0
        %v1016 = vand.u32 %v502, 4294901760
        %v1017 = vsub.f32 %v502, %v1016
        %v1018 = vand.u32 %v1017, 4294901760
        %1019 = vmatpush1.msra.mxu0 %v1018
        %1020 = vmatprep.subr.mxu0 0.0
        %v1021 = vand.u32 %v503, 4294901760
        %v1022 = vsub.f32 %v503, %v1021
        %v1023 = vand.u32 %v1022, 4294901760
        %1024 = vmatpush1.msra.mxu0 %v1023
        %1025 = vmatprep.subr.mxu0 0.0
        %v1026 = vand.u32 %v504, 4294901760
        %v1027 = vsub.f32 %v504, %v1026
        %v1028 = vand.u32 %v1027, 4294901760
        %1029 = vmatpush1.msra.mxu0 %v1028
        %1030 = vmatprep.subr.mxu0 0.0
        %v1031 = vand.u32 %v505, 4294901760
        %v1032 = vsub.f32 %v505, %v1031
        %v1033 = vand.u32 %v1032, 4294901760
        %1034 = vmatpush1.msra.mxu0 %v1033
        %1035 = vmatprep.subr.mxu0 0.0
        %v1036 = vand.u32 %v506, 4294901760
        %v1037 = vsub.f32 %v506, %v1036
        %v1038 = vand.u32 %v1037, 4294901760
        %1039 = vmatpush1.msra.mxu0 %v1038
        %1040 = vmatprep.subr.mxu0 0.0
        %v1041 = vand.u32 %v507, 4294901760
        %v1042 = vsub.f32 %v507, %v1041
        %v1043 = vand.u32 %v1042, 4294901760
        %1044 = vmatpush1.msra.mxu0 %v1043
        %1045 = vmatprep.subr.mxu0 0.0
        %v1046 = vand.u32 %v508, 4294901760
        %v1047 = vsub.f32 %v508, %v1046
        %v1048 = vand.u32 %v1047, 4294901760
        %1049 = vmatpush1.msra.mxu0 %v1048
        %1050 = vmatprep.subr.mxu0 0.0
        %1051 = vmatpush1.msra.mxu0 0.0
        %1052 = vmatprep.subr.mxu0 0.0
        %1053 = vmatpush1.msra.mxu0 0.0
        %1054 = vmatprep.subr.mxu0 0.0
        %1055 = vmatpush1.msra.mxu0 0.0
        %1056 = vmatprep.subr.mxu0 0.0
        %1057 = vmatpush1.msra.mxu0 0.0
        %1058 = vmatprep.subr.mxu0 0.0
        %1059 = vmatpush1.msra.mxu0 0.0
        %1060 = vmatprep.subr.mxu0 0.0
        %1061 = vmatpush1.msra.mxu0 0.0
        %1062 = vmatprep.subr.mxu0 0.0
        %1063 = vmatpush1.msra.mxu0 0.0
        %1064 = vmatprep.subr.mxu0 0.0
        %1065 = vmatpush1.msra.mxu0 0.0
        %1066 = vmatprep.subr.mxu0 0.0
        %1067 = vmatpush1.msra.mxu0 0.0
        %1068 = vmatprep.subr.mxu0 0.0
        %1069 = vmatpush1.msra.mxu0 0.0
        %1070 = vmatprep.subr.mxu0 0.0
        %1071 = vmatpush1.msra.mxu0 0.0
        %1072 = vmatprep.subr.mxu0 0.0
        %1073 = vmatpush1.msra.mxu0 0.0
        %1074 = vmatprep.subr.mxu0 0.0
        %1075 = vmatpush1.msra.mxu0 0.0
        %1076 = vmatprep.subr.mxu0 0.0
        %1077 = vmatpush1.msra.mxu0 0.0
        %1078 = vmatprep.subr.mxu0 0.0
        %1079 = vmatpush1.msra.mxu0 0.0
        %1080 = vmatprep.subr.mxu0 0.0
        %1081 = vmatpush1.msra.mxu0 0.0
        %1082 = vmatprep.subr.mxu0 0.0
        %1083 = vmatpush1.msra.mxu0 0.0
        %1084 = vmatprep.subr.mxu0 0.0
        %1085 = vmatpush1.msra.mxu0 0.0
        %1086 = vmatprep.subr.mxu0 0.0
        %1087 = vmatpush1.msra.mxu0 0.0
        %1088 = vmatprep.subr.mxu0 0.0
        %1089 = vmatpush1.msra.mxu0 0.0
        %1090 = vmatprep.subr.mxu0 0.0
        %1091 = vmatpush1.msra.mxu0 0.0
        %1092 = vmatprep.subr.mxu0 0.0
        %1093 = vmatpush1.msra.mxu0 0.0
        %1094 = vmatprep.subr.mxu0 0.0
        %1095 = vmatpush1.msra.mxu0 0.0
        %1096 = vmatprep.subr.mxu0 0.0
        %1097 = vmatpush1.msra.mxu0 0.0
        %1098 = vmatprep.mubr.f32.mxu0 0.0
        %v1099 = vand.u32 %v543, 4294901760
        %1100 = vmatmul.mubr.f32.gmra.mrb[0].mxu0 %v1099
        %v1101 = vpop.f32.mrb[0].mxu0
        %v1102 = vadd.f32 %v983, %v1101
        %v1103 = vpop.f32.mrb[0].mxu0
        %1104 = vmatprep.mubr.f32.mxu0 0.0
        %v1105 = vand.u32 %v546, 4294901760
        %1106 = vmatmul.mubr.f32.gmra.mrb[0].mxu0 %v1105
        %v1107 = vpop.f32.mrb[0].mxu0
        %v1108 = vadd.f32 %v991, %v1107
        %v1109 = vpop.f32.mrb[0].mxu0
        %1110 = vmatprep.mubr.f32.mxu0 0.0
        %v1111 = vand.u32 %v549, 4294901760
        %1112 = vmatmul.mubr.f32.gmra.mrb[0].mxu0 %v1111
        %v1113 = vpop.f32.mrb[0].mxu0
        %v1114 = vadd.f32 %v999, %v1113
        %v1115 = vpop.f32.mrb[0].mxu0
        %1116 = vmatprep.mubr.f32.mxu0 0.0
        %v1117 = vand.u32 %v552, 4294901760
        %1118 = vmatmul.mubr.f32.gmra.mrb[0].mxu0 %v1117
        %v1119 = vpop.f32.mrb[0].mxu0
        %v1120 = vadd.f32 %v1007, %v1119
        %v1121 = vpop.f32.mrb[0].mxu0
        %1122 = vdwg.mxu0
        %1123 = vmatprep.subr.mxu0 0.0
        %v1124 = vand.u32 %v501, 4294901760
        %1125 = vmatpush1.msra.mxu0 %v1124
        %1126 = vmatprep.subr.mxu0 0.0
        %v1127 = vand.u32 %v502, 4294901760
        %1128 = vmatpush1.msra.mxu0 %v1127
        %1129 = vmatprep.subr.mxu0 0.0
        %v1130 = vand.u32 %v503, 4294901760
        %1131 = vmatpush1.msra.mxu0 %v1130
        %1132 = vmatprep.subr.mxu0 0.0
        %v1133 = vand.u32 %v504, 4294901760
        %1134 = vmatpush1.msra.mxu0 %v1133
        %1135 = vmatprep.subr.mxu0 0.0
        %v1136 = vand.u32 %v505, 4294901760
        %1137 = vmatpush1.msra.mxu0 %v1136
        %1138 = vmatprep.subr.mxu0 0.0
        %v1139 = vand.u32 %v506, 4294901760
        %1140 = vmatpush1.msra.mxu0 %v1139
        %1141 = vmatprep.subr.mxu0 0.0
        %v1142 = vand.u32 %v507, 4294901760
        %1143 = vmatpush1.msra.mxu0 %v1142
        %1144 = vmatprep.subr.mxu0 0.0
        %v1145 = vand.u32 %v508, 4294901760
        %1146 = vmatpush1.msra.mxu0 %v1145
        %1147 = vmatprep.subr.mxu0 0.0
        %1148 = vmatpush1.msra.mxu0 0.0
        %1149 = vmatprep.subr.mxu0 0.0
        %1150 = vmatpush1.msra.mxu0 0.0
        %1151 = vmatprep.subr.mxu0 0.0
        %1152 = vmatpush1.msra.mxu0 0.0
        %1153 = vmatprep.subr.mxu0 0.0
        %1154 = vmatpush1.msra.mxu0 0.0
        %1155 = vmatprep.subr.mxu0 0.0
        %1156 = vmatpush1.msra.mxu0 0.0
        %1157 = vmatprep.subr.mxu0 0.0
        %1158 = vmatpush1.msra.mxu0 0.0
        %1159 = vmatprep.subr.mxu0 0.0
        %1160 = vmatpush1.msra.mxu0 0.0
        %1161 = vmatprep.subr.mxu0 0.0
        %1162 = vmatpush1.msra.mxu0 0.0
        %1163 = vmatprep.subr.mxu0 0.0
        %1164 = vmatpush1.msra.mxu0 0.0
        %1165 = vmatprep.subr.mxu0 0.0
        %1166 = vmatpush1.msra.mxu0 0.0
        %1167 = vmatprep.subr.mxu0 0.0
        %1168 = vmatpush1.msra.mxu0 0.0
        %1169 = vmatprep.subr.mxu0 0.0
        %1170 = vmatpush1.msra.mxu0 0.0
        %1171 = vmatprep.subr.mxu0 0.0
        %1172 = vmatpush1.msra.mxu0 0.0
        %1173 = vmatprep.subr.mxu0 0.0
        %1174 = vmatpush1.msra.mxu0 0.0
        %1175 = vmatprep.subr.mxu0 0.0
        %1176 = vmatpush1.msra.mxu0 0.0
        %1177 = vmatprep.subr.mxu0 0.0
        %1178 = vmatpush1.msra.mxu0 0.0
        %1179 = vmatprep.subr.mxu0 0.0
        %1180 = vmatpush1.msra.mxu0 0.0
        %1181 = vmatprep.subr.mxu0 0.0
        %1182 = vmatpush1.msra.mxu0 0.0
        %1183 = vmatprep.subr.mxu0 0.0
        %1184 = vmatpush1.msra.mxu0 0.0
        %1185 = vmatprep.subr.mxu0 0.0
        %1186 = vmatpush1.msra.mxu0 0.0
        %1187 = vmatprep.subr.mxu0 0.0
        %1188 = vmatpush1.msra.mxu0 0.0
        %1189 = vmatprep.subr.mxu0 0.0
        %1190 = vmatpush1.msra.mxu0 0.0
        %1191 = vmatprep.subr.mxu0 0.0
        %1192 = vmatpush1.msra.mxu0 0.0
        %1193 = vmatprep.subr.mxu0 0.0
        %1194 = vmatpush1.msra.mxu0 0.0
        %1195 = vmatprep.mubr.f32.mxu0 0.0
        %v1196 = vand.u32 %v543, 4294901760
        %1197 = vmatmul.mubr.f32.gmra.mrb[0].mxu0 %v1196
        %v1198 = vpop.f32.mrb[0].mxu0
        %v1199 = vadd.f32 %v1102, %v1198
        %v1200 = vpop.f32.mrb[0].mxu0
        %1201 = vmatprep.mubr.f32.mxu0 0.0
        %v1202 = vand.u32 %v546, 4294901760
        %1203 = vmatmul.mubr.f32.gmra.mrb[0].mxu0 %v1202
        %v1204 = vpop.f32.mrb[0].mxu0
        %v1205 = vadd.f32 %v1108, %v1204
        %v1206 = vpop.f32.mrb[0].mxu0
        %1207 = vmatprep.mubr.f32.mxu0 0.0
        %v1208 = vand.u32 %v549, 4294901760
        %1209 = vmatmul.mubr.f32.gmra.mrb[0].mxu0 %v1208
        %v1210 = vpop.f32.mrb[0].mxu0
        %v1211 = vadd.f32 %v1114, %v1210
        %v1212 = vpop.f32.mrb[0].mxu0
        %1213 = vmatprep.mubr.f32.mxu0 0.0
        %v1214 = vand.u32 %v552, 4294901760
        %1215 = vmatmul.mubr.f32.gmra.mrb[0].mxu0 %v1214
        %v1216 = vpop.f32.mrb[0].mxu0
        %v1217 = vadd.f32 %v1120, %v1216
        %v1218 = vpop.f32.mrb[0].mxu0
        %1219 = vdwg.mxu0
        %v1220 = vsub.f32 %v215, %v1199
        %v1221 = vsub.f32 %v216, %v1205
        %v1222 = vsub.f32 %v217, %v1211
        %v1223 = vsub.f32 %v218, %v1217
        %s1224 = scalar_lea.vmem %s1, 64
        %v1225 = vld [vmem:[%s1224] sm:$0xff]
        %v1226 = vld [vmem:[%s1224 + $0x8] sm:$0xff]
        %v1227 = vld [vmem:[%s1224 + $0x10] sm:$0xff]
        %v1228 = vld [vmem:[%s1224 + $0x18] sm:$0xff]
        %v1229 = vld [vmem:[%s1224 + $0x20] sm:$0xff]
        %v1230 = vld [vmem:[%s1224 + $0x28] sm:$0xff]
        %v1231 = vld [vmem:[%s1224 + $0x30] sm:$0xff]
        %v1232 = vld [vmem:[%s1224 + $0x38] sm:$0xff]
        %v1233 = vmul.f32 %v1225, %v1225
        %v1234 = vmul.f32 %v1226, %v1226
        %v1235 = vmul.f32 %v1227, %v1227
        %v1236 = vmul.f32 %v1228, %v1228
        %v1237 = vmul.f32 %v1229, %v1229
        %v1238 = vmul.f32 %v1230, %v1230
        %v1239 = vmul.f32 %v1231, %v1231
        %v1240 = vmul.f32 %v1232, %v1232
        %v1241 = vsel %vm244, %v1233, 0.0
        %1242 = vadd.xlane.f32.xlu0 %v1241
        %v1243 = vpop.xlane.xlu0 %1242
        %v1244 = vsel %vm244, %v1234, 0.0
        %1245 = vadd.xlane.f32.xlu0 %v1244
        %v1246 = vpop.xlane.xlu0 %1245
        %v1247 = vsel %vm244, %v1235, 0.0
        %1248 = vadd.xlane.f32.xlu0 %v1247
        %v1249 = vpop.xlane.xlu0 %1248
        %v1250 = vsel %vm244, %v1236, 0.0
        %1251 = vadd.xlane.f32.xlu0 %v1250
        %v1252 = vpop.xlane.xlu0 %1251
        %v1253 = vsel %vm244, %v1237, 0.0
        %1254 = vadd.xlane.f32.xlu0 %v1253
        %v1255 = vpop.xlane.xlu0 %1254
        %v1256 = vsel %vm244, %v1238, 0.0
        %1257 = vadd.xlane.f32.xlu0 %v1256
        %v1258 = vpop.xlane.xlu0 %1257
        %v1259 = vsel %vm244, %v1239, 0.0
        %1260 = vadd.xlane.f32.xlu0 %v1259
        %v1261 = vpop.xlane.xlu0 %1260
        %v1262 = vsel %vm244, %v1240, 0.0
        %1263 = vadd.xlane.f32.xlu0 %v1262
        %v1264 = vpop.xlane.xlu0 %1263
        %v1265 = vmul.f32 %v1243, 0.5
        %v1266 = vmul.f32 %v1246, 0.5
        %v1267 = vmul.f32 %v1249, 0.5
        %v1268 = vmul.f32 %v1252, 0.5
        %v1269 = vmul.f32 %v1255, 0.5
        %v1270 = vmul.f32 %v1258, 0.5
        %v1271 = vmul.f32 %v1261, 0.5
        %v1272 = vmul.f32 %v1264, 0.5
        %v1274 = vsel %vm244, %v1225, 0
        %v1277 = vsel %vm244, %v1226, 0
        %v1280 = vsel %vm244, %v1227, 0
        %v1283 = vsel %vm244, %v1228, 0
        %v1286 = vsel %vm244, %v1229, 0
        %v1289 = vsel %vm244, %v1230, 0
        %v1292 = vsel %vm244, %v1231, 0
        %v1295 = vsel %vm244, %v1232, 0
        %1297 = vmatprep.subr.mxu0 0.0
        %1298 = vmatpush1.msra.mxu0 %v1220
        %1299 = vmatprep.subr.mxu0 0.0
        %1300 = vmatpush1.msra.mxu0 %v1221
        %1301 = vmatprep.subr.mxu0 0.0
        %1302 = vmatpush1.msra.mxu0 %v1222
        %1303 = vmatprep.subr.mxu0 0.0
        %1304 = vmatpush1.msra.mxu0 %v1223
        %1305 = vmatprep.subr.mxu0 0.0
        %1306 = vmatpush1.msra.mxu0 0.0
        %1307 = vmatprep.subr.mxu0 0.0
        %1308 = vmatpush1.msra.mxu0 0.0
        %1309 = vmatprep.subr.mxu0 0.0
        %1310 = vmatpush1.msra.mxu0 0.0
        %1311 = vmatprep.subr.mxu0 0.0
        %1312 = vmatpush1.msra.mxu0 0.0
        %1313 = vmatprep.subr.mxu0 0.0
        %1314 = vmatpush1.msra.mxu0 0.0
        %1315 = vmatprep.subr.mxu0 0.0
        %1316 = vmatpush1.msra.mxu0 0.0
        %1317 = vmatprep.subr.mxu0 0.0
        %1318 = vmatpush1.msra.mxu0 0.0
        %1319 = vmatprep.subr.mxu0 0.0
        %1320 = vmatpush1.msra.mxu0 0.0
        %1321 = vmatprep.subr.mxu0 0.0
        %1322 = vmatpush1.msra.mxu0 0.0
        %1323 = vmatprep.subr.mxu0 0.0
        %1324 = vmatpush1.msra.mxu0 0.0
        %1325 = vmatprep.subr.mxu0 0.0
        %1326 = vmatpush1.msra.mxu0 0.0
        %1327 = vmatprep.subr.mxu0 0.0
        %1328 = vmatpush1.msra.mxu0 0.0
        %1329 = vmatprep.subr.mxu0 0.0
        %1330 = vmatpush1.msra.mxu0 0.0
        %1331 = vmatprep.subr.mxu0 0.0
        %1332 = vmatpush1.msra.mxu0 0.0
        %1333 = vmatprep.subr.mxu0 0.0
        %1334 = vmatpush1.msra.mxu0 0.0
        %1335 = vmatprep.subr.mxu0 0.0
        %1336 = vmatpush1.msra.mxu0 0.0
        %1337 = vmatprep.subr.mxu0 0.0
        %1338 = vmatpush1.msra.mxu0 0.0
        %1339 = vmatprep.subr.mxu0 0.0
        %1340 = vmatpush1.msra.mxu0 0.0
        %1341 = vmatprep.subr.mxu0 0.0
        %1342 = vmatpush1.msra.mxu0 0.0
        %1343 = vmatprep.subr.mxu0 0.0
        %1344 = vmatpush1.msra.mxu0 0.0
        %1345 = vmatprep.subr.mxu0 0.0
        %1346 = vmatpush1.msra.mxu0 0.0
        %1347 = vmatprep.subr.mxu0 0.0
        %1348 = vmatpush1.msra.mxu0 0.0
        %1349 = vmatprep.subr.mxu0 0.0
        %1350 = vmatpush1.msra.mxu0 0.0
        %1351 = vmatprep.subr.mxu0 0.0
        %1352 = vmatpush1.msra.mxu0 0.0
        %1353 = vmatprep.subr.mxu0 0.0
        %1354 = vmatpush1.msra.mxu0 0.0
        %1355 = vmatprep.subr.mxu0 0.0
        %1356 = vmatpush1.msra.mxu0 0.0
        %1357 = vmatprep.subr.mxu0 0.0
        %1358 = vmatpush1.msra.mxu0 0.0
        %1359 = vmatprep.subr.mxu0 0.0
        %1360 = vmatpush1.msra.mxu0 0.0
        %1361 = vmatprep.mubr.f32.mxu0 0.0
        %1362 = vmatmul.mubr.f32.gmra.mrb[0].mxu0 %v1274
        %v1363 = vpop.f32.mrb[0].mxu0
        %v1364 = vadd.f32 0.0, %v1363
        %v1365 = vpop.f32.mrb[0].mxu0
        %1366 = vmatprep.mubr.f32.mxu0 0.0
        %1367 = vmatmul.mubr.f32.gmra.mrb[0].mxu0 %v1277
        %v1368 = vpop.f32.mrb[0].mxu0
        %v1369 = vadd.f32 0.0, %v1368
        %v1370 = vpop.f32.mrb[0].mxu0
        %1371 = vmatprep.mubr.f32.mxu0 0.0
        %1372 = vmatmul.mubr.f32.gmra.mrb[0].mxu0 %v1280
        %v1373 = vpop.f32.mrb[0].mxu0
        %v1374 = vadd.f32 0.0, %v1373
        %v1375 = vpop.f32.mrb[0].mxu0
        %1376 = vmatprep.mubr.f32.mxu0 0.0
        %1377 = vmatmul.mubr.f32.gmra.mrb[0].mxu0 %v1283
        %v1378 = vpop.f32.mrb[0].mxu0
        %v1379 = vadd.f32 0.0, %v1378
        %v1380 = vpop.f32.mrb[0].mxu0
        %1381 = vmatprep.mubr.f32.mxu0 0.0
        %1382 = vmatmul.mubr.f32.gmra.mrb[0].mxu0 %v1286
        %v1383 = vpop.f32.mrb[0].mxu0
        %v1384 = vadd.f32 0.0, %v1383
        %v1385 = vpop.f32.mrb[0].mxu0
        %1386 = vmatprep.mubr.f32.mxu0 0.0
        %1387 = vmatmul.mubr.f32.gmra.mrb[0].mxu0 %v1289
        %v1388 = vpop.f32.mrb[0].mxu0
        %v1389 = vadd.f32 0.0, %v1388
        %v1390 = vpop.f32.mrb[0].mxu0
        %1391 = vmatprep.mubr.f32.mxu0 0.0
        %1392 = vmatmul.mubr.f32.gmra.mrb[0].mxu0 %v1292
        %v1393 = vpop.f32.mrb[0].mxu0
        %v1394 = vadd.f32 0.0, %v1393
        %v1395 = vpop.f32.mrb[0].mxu0
        %1396 = vmatprep.mubr.f32.mxu0 0.0
        %1397 = vmatmul.mubr.f32.gmra.mrb[0].mxu0 %v1295
        %v1398 = vpop.f32.mrb[0].mxu0
        %v1399 = vadd.f32 0.0, %v1398
        %v1400 = vpop.f32.mrb[0].mxu0
        %1401 = vdwg.mxu0
        %v1402 = vsub.f32 %v1364, %v1265
        %v1403 = vsub.f32 %v1369, %v1266
        %v1404 = vsub.f32 %v1374, %v1267
        %v1405 = vsub.f32 %v1379, %v1268
        %v1406 = vsub.f32 %v1384, %v1269
        %v1407 = vsub.f32 %v1389, %v1270
        %v1408 = vsub.f32 %v1394, %v1271
        %v1409 = vsub.f32 %v1399, %v1272
        %v1410 = vsel %vm414, %v1402, -inf
        %v1411 = vsel %vm414, %v1403, -inf
        %v1412 = vsel %vm414, %v1404, -inf
        %v1413 = vsel %vm414, %v1405, -inf
        %v1414 = vsel %vm414, %v1406, -inf
        %v1415 = vmax.f32 %v1410, %v1414
        %v1416 = vsel %vm414, %v1407, -inf
        %v1417 = vmax.f32 %v1411, %v1416
        %v1418 = vsel %vm414, %v1408, -inf
        %v1419 = vmax.f32 %v1412, %v1418
        %v1420 = vsel %vm414, %v1409, -inf
        %v1421 = vmax.f32 %v1413, %v1420
        %v1422 = vmax.f32 %v1415, %v1417
        %v1423 = vmax.f32 %v1419, %v1421
        %v1424 = vmax.f32 %v1422, %v1423
        %v1425 = vrot.slane %v1424, 4
        %v1426 = vmax.f32 %v1424, %v1425
        %v1427 = vrot.slane %v1426, 2
        %v1428 = vmax.f32 %v1426, %v1427
        %v1429 = vrot.slane %v1428, 1
        %v1430 = vmax.f32 %v1428, %v1429
        %vm1431 = vcmp.eq.f32.partialorder %v1402, %v1430
        %vm1432 = vcmp.eq.f32.partialorder %v1403, %v1430
        %vm1433 = vcmp.eq.f32.partialorder %v1404, %v1430
        %vm1434 = vcmp.eq.f32.partialorder %v1405, %v1430
        %vm1435 = vcmp.eq.f32.partialorder %v1406, %v1430
        %vm1436 = vcmp.eq.f32.partialorder %v1407, %v1430
        %vm1437 = vcmp.eq.f32.partialorder %v1408, %v1430
        %vm1438 = vcmp.eq.f32.partialorder %v1409, %v1430
        %v1439 = vsel %vm1431, %v220, 64
        %v1440 = vsel %vm1432, %v221, 64
        %v1441 = vsel %vm1433, %v222, 64
        %v1442 = vsel %vm1434, %v223, 64
        %v1443 = vsel %vm1435, %v224, 64
        %v1444 = vsel %vm1436, %v225, 64
        %v1445 = vsel %vm1437, %v226, 64
        %v1446 = vsel %vm1438, %v227, 64
        %v1447 = vsel %vm414, %v1439, 2147483647
        %v1448 = vsel %vm414, %v1440, 2147483647
        %v1449 = vsel %vm414, %v1441, 2147483647
        %v1450 = vsel %vm414, %v1442, 2147483647
        %v1451 = vsel %vm414, %v1443, 2147483647
        %vm1452 = vcmp.lt.s32.totalorder %v1447, %v1451
        %v1453 = vsel %vm1452, %v1447, %v1451
        %v1454 = vsel %vm414, %v1444, 2147483647
        %vm1455 = vcmp.lt.s32.totalorder %v1448, %v1454
        %v1456 = vsel %vm1455, %v1448, %v1454
        %v1457 = vsel %vm414, %v1445, 2147483647
        %vm1458 = vcmp.lt.s32.totalorder %v1449, %v1457
        %v1459 = vsel %vm1458, %v1449, %v1457
        %v1460 = vsel %vm414, %v1446, 2147483647
        %vm1461 = vcmp.lt.s32.totalorder %v1450, %v1460
        %v1462 = vsel %vm1461, %v1450, %v1460
        %vm1463 = vcmp.lt.s32.totalorder %v1453, %v1456
        %v1464 = vsel %vm1463, %v1453, %v1456
        %vm1465 = vcmp.lt.s32.totalorder %v1459, %v1462
        %v1466 = vsel %vm1465, %v1459, %v1462
        %vm1467 = vcmp.lt.s32.totalorder %v1464, %v1466
        %v1468 = vsel %vm1467, %v1464, %v1466
        %v1469 = vrot.slane %v1468, 4
        %vm1470 = vcmp.lt.s32.totalorder %v1468, %v1469
        %v1471 = vsel %vm1470, %v1468, %v1469
        %v1472 = vrot.slane %v1471, 2
        %vm1473 = vcmp.lt.s32.totalorder %v1471, %v1472
        %v1474 = vsel %vm1473, %v1471, %v1472
        %v1475 = vrot.slane %v1474, 1
        %vm1476 = vcmp.lt.s32.totalorder %v1474, %v1475
        %v1477 = vsel %vm1476, %v1474, %v1475
        %1478 = vst.msk [vmem:[%s198 + $0x1] sm:$0x1] %vm483, %v1477
        %vm1479 = vcmp.eq.s32.totalorder %v220, %v1477
        %vm1480 = vcmp.eq.s32.totalorder %v221, %v1477
        %vm1481 = vcmp.eq.s32.totalorder %v222, %v1477
        %vm1482 = vcmp.eq.s32.totalorder %v223, %v1477
        %vm1483 = vcmp.eq.s32.totalorder %v224, %v1477
        %vm1484 = vcmp.eq.s32.totalorder %v225, %v1477
        %vm1485 = vcmp.eq.s32.totalorder %v226, %v1477
        %vm1486 = vcmp.eq.s32.totalorder %v227, %v1477
        %v1487 = vsel %vm1479, 1, 0
        %v1488 = vsel %vm1480, 1, 0
        %v1489 = vsel %vm1481, 1, 0
        %v1490 = vsel %vm1482, 1, 0
        %v1491 = vsel %vm1483, 1, 0
        %v1492 = vsel %vm1484, 1, 0
        %v1493 = vsel %vm1485, 1, 0
        %v1494 = vsel %vm1486, 1, 0
        %v1495 = vcvt.s32.f32 %v1487
        %v1496 = vcvt.s32.f32 %v1488
        %v1497 = vcvt.s32.f32 %v1489
        %v1498 = vcvt.s32.f32 %v1490
        %v1499 = vcvt.s32.f32 %v1491
        %v1500 = vcvt.s32.f32 %v1492
        %v1501 = vcvt.s32.f32 %v1493
        %v1502 = vcvt.s32.f32 %v1494
        %1503 = vxpose.xlu0.b32.start [1/16] %v1225, 128
        %1504 = vxpose.xlu0.b32.cont [2/16] %v1226, 128
        %1505 = vxpose.xlu0.b32.cont [3/16] %v1227, 128
        %1506 = vxpose.xlu0.b32.cont [4/16] %v1228, 128
        %1507 = vxpose.xlu0.b32.cont [5/16] %v1229, 128
        %1508 = vxpose.xlu0.b32.cont [6/16] %v1230, 128
        %1509 = vxpose.xlu0.b32.cont [7/16] %v1231, 128
        %1510 = vxpose.xlu0.b32.cont [8/16] %v1232, 128
        %1511 = vxpose.xlu0.b32.cont [9/16] 0.0, 128
        %1512 = vxpose.xlu0.b32.cont [10/16] 0.0, 128
        %1513 = vxpose.xlu0.b32.cont [11/16] 0.0, 128
        %1514 = vxpose.xlu0.b32.cont [12/16] 0.0, 128
        %1515 = vxpose.xlu0.b32.cont [13/16] 0.0, 128
        %1516 = vxpose.xlu0.b32.cont [14/16] 0.0, 128
        %1517 = vxpose.xlu0.b32.cont [15/16] 0.0, 128
        %1518 = vxpose.xlu0.b32.end [16/16] 0.0, 128
        %v1519 = vpop.trf.xlu0
        %v1520 = vpop.trf.xlu0
        %v1521 = vpop.trf.xlu0
        %v1522 = vpop.trf.xlu0
        %v1523 = vpop.trf.xlu0
        %v1524 = vpop.trf.xlu0
        %v1525 = vpop.trf.xlu0
        %v1526 = vpop.trf.xlu0
        %v1527 = vpop.trf.xlu0
        %v1528 = vpop.trf.xlu0
        %v1529 = vpop.trf.xlu0
        %v1530 = vpop.trf.xlu0
        %v1531 = vpop.trf.xlu0
        %v1532 = vpop.trf.xlu0
        %v1533 = vpop.trf.xlu0
        %v1534 = vpop.trf.xlu0
        %v1536 = vsel %vm541, %v1519, 0
        %v1539 = vsel %vm541, %v1520, 0
        %v1542 = vsel %vm541, %v1521, 0
        %v1545 = vsel %vm541, %v1522, 0
        %1547 = vmatprep.subr.mxu0 0.0
        %v1548 = vand.u32 %v1495, 4294901760
        %1549 = vmatpush1.msra.mxu0 %v1548
        %1550 = vmatprep.subr.mxu0 0.0
        %v1551 = vand.u32 %v1496, 4294901760
        %1552 = vmatpush1.msra.mxu0 %v1551
        %1553 = vmatprep.subr.mxu0 0.0
        %v1554 = vand.u32 %v1497, 4294901760
        %1555 = vmatpush1.msra.mxu0 %v1554
        %1556 = vmatprep.subr.mxu0 0.0
        %v1557 = vand.u32 %v1498, 4294901760
        %1558 = vmatpush1.msra.mxu0 %v1557
        %1559 = vmatprep.subr.mxu0 0.0
        %v1560 = vand.u32 %v1499, 4294901760
        %1561 = vmatpush1.msra.mxu0 %v1560
        %1562 = vmatprep.subr.mxu0 0.0
        %v1563 = vand.u32 %v1500, 4294901760
        %1564 = vmatpush1.msra.mxu0 %v1563
        %1565 = vmatprep.subr.mxu0 0.0
        %v1566 = vand.u32 %v1501, 4294901760
        %1567 = vmatpush1.msra.mxu0 %v1566
        %1568 = vmatprep.subr.mxu0 0.0
        %v1569 = vand.u32 %v1502, 4294901760
        %1570 = vmatpush1.msra.mxu0 %v1569
        %1571 = vmatprep.subr.mxu0 0.0
        %1572 = vmatpush1.msra.mxu0 0.0
        %1573 = vmatprep.subr.mxu0 0.0
        %1574 = vmatpush1.msra.mxu0 0.0
        %1575 = vmatprep.subr.mxu0 0.0
        %1576 = vmatpush1.msra.mxu0 0.0
        %1577 = vmatprep.subr.mxu0 0.0
        %1578 = vmatpush1.msra.mxu0 0.0
        %1579 = vmatprep.subr.mxu0 0.0
        %1580 = vmatpush1.msra.mxu0 0.0
        %1581 = vmatprep.subr.mxu0 0.0
        %1582 = vmatpush1.msra.mxu0 0.0
        %1583 = vmatprep.subr.mxu0 0.0
        %1584 = vmatpush1.msra.mxu0 0.0
        %1585 = vmatprep.subr.mxu0 0.0
        %1586 = vmatpush1.msra.mxu0 0.0
        %1587 = vmatprep.subr.mxu0 0.0
        %1588 = vmatpush1.msra.mxu0 0.0
        %1589 = vmatprep.subr.mxu0 0.0
        %1590 = vmatpush1.msra.mxu0 0.0
        %1591 = vmatprep.subr.mxu0 0.0
        %1592 = vmatpush1.msra.mxu0 0.0
        %1593 = vmatprep.subr.mxu0 0.0
        %1594 = vmatpush1.msra.mxu0 0.0
        %1595 = vmatprep.subr.mxu0 0.0
        %1596 = vmatpush1.msra.mxu0 0.0
        %1597 = vmatprep.subr.mxu0 0.0
        %1598 = vmatpush1.msra.mxu0 0.0
        %1599 = vmatprep.subr.mxu0 0.0
        %1600 = vmatpush1.msra.mxu0 0.0
        %1601 = vmatprep.subr.mxu0 0.0
        %1602 = vmatpush1.msra.mxu0 0.0
        %1603 = vmatprep.subr.mxu0 0.0
        %1604 = vmatpush1.msra.mxu0 0.0
        %1605 = vmatprep.subr.mxu0 0.0
        %1606 = vmatpush1.msra.mxu0 0.0
        %1607 = vmatprep.subr.mxu0 0.0
        %1608 = vmatpush1.msra.mxu0 0.0
        %1609 = vmatprep.subr.mxu0 0.0
        %1610 = vmatpush1.msra.mxu0 0.0
        %1611 = vmatprep.subr.mxu0 0.0
        %1612 = vmatpush1.msra.mxu0 0.0
        %1613 = vmatprep.subr.mxu0 0.0
        %1614 = vmatpush1.msra.mxu0 0.0
        %1615 = vmatprep.subr.mxu0 0.0
        %1616 = vmatpush1.msra.mxu0 0.0
        %1617 = vmatprep.subr.mxu0 0.0
        %1618 = vmatpush1.msra.mxu0 0.0
        %1619 = vmatprep.mubr.f32.mxu0 0.0
        %v1620 = vand.u32 %v1536, 4294901760
        %v1621 = vsub.f32 %v1536, %v1620
        %v1622 = vand.u32 %v1621, 4294901760
        %v1623 = vsub.f32 %v1621, %v1622
        %v1624 = vand.u32 %v1623, 4294901760
        %1625 = vmatmul.mubr.f32.gmra.mrb[0].mxu0 %v1624
        %v1626 = vpop.f32.mrb[0].mxu0
        %v1627 = vadd.f32 0.0, %v1626
        %v1628 = vpop.f32.mrb[0].mxu0
        %1629 = vmatprep.mubr.f32.mxu0 0.0
        %v1630 = vand.u32 %v1539, 4294901760
        %v1631 = vsub.f32 %v1539, %v1630
        %v1632 = vand.u32 %v1631, 4294901760
        %v1633 = vsub.f32 %v1631, %v1632
        %v1634 = vand.u32 %v1633, 4294901760
        %1635 = vmatmul.mubr.f32.gmra.mrb[0].mxu0 %v1634
        %v1636 = vpop.f32.mrb[0].mxu0
        %v1637 = vadd.f32 0.0, %v1636
        %v1638 = vpop.f32.mrb[0].mxu0
        %1639 = vmatprep.mubr.f32.mxu0 0.0
        %v1640 = vand.u32 %v1542, 4294901760
        %v1641 = vsub.f32 %v1542, %v1640
        %v1642 = vand.u32 %v1641, 4294901760
        %v1643 = vsub.f32 %v1641, %v1642
        %v1644 = vand.u32 %v1643, 4294901760
        %1645 = vmatmul.mubr.f32.gmra.mrb[0].mxu0 %v1644
        %v1646 = vpop.f32.mrb[0].mxu0
        %v1647 = vadd.f32 0.0, %v1646
        %v1648 = vpop.f32.mrb[0].mxu0
        %1649 = vmatprep.mubr.f32.mxu0 0.0
        %v1650 = vand.u32 %v1545, 4294901760
        %v1651 = vsub.f32 %v1545, %v1650
        %v1652 = vand.u32 %v1651, 4294901760
        %v1653 = vsub.f32 %v1651, %v1652
        %v1654 = vand.u32 %v1653, 4294901760
        %1655 = vmatmul.mubr.f32.gmra.mrb[0].mxu0 %v1654
        %v1656 = vpop.f32.mrb[0].mxu0
        %v1657 = vadd.f32 0.0, %v1656
        %v1658 = vpop.f32.mrb[0].mxu0
        %1659 = vdwg.mxu0
        %1660 = vmatprep.subr.mxu0 0.0
        %v1661 = vand.u32 %v1495, 4294901760
        %v1662 = vsub.f32 %v1495, %v1661
        %v1663 = vand.u32 %v1662, 4294901760
        %v1664 = vsub.f32 %v1662, %v1663
        %v1665 = vand.u32 %v1664, 4294901760
        %1666 = vmatpush1.msra.mxu0 %v1665
        %1667 = vmatprep.subr.mxu0 0.0
        %v1668 = vand.u32 %v1496, 4294901760
        %v1669 = vsub.f32 %v1496, %v1668
        %v1670 = vand.u32 %v1669, 4294901760
        %v1671 = vsub.f32 %v1669, %v1670
        %v1672 = vand.u32 %v1671, 4294901760
        %1673 = vmatpush1.msra.mxu0 %v1672
        %1674 = vmatprep.subr.mxu0 0.0
        %v1675 = vand.u32 %v1497, 4294901760
        %v1676 = vsub.f32 %v1497, %v1675
        %v1677 = vand.u32 %v1676, 4294901760
        %v1678 = vsub.f32 %v1676, %v1677
        %v1679 = vand.u32 %v1678, 4294901760
        %1680 = vmatpush1.msra.mxu0 %v1679
        %1681 = vmatprep.subr.mxu0 0.0
        %v1682 = vand.u32 %v1498, 4294901760
        %v1683 = vsub.f32 %v1498, %v1682
        %v1684 = vand.u32 %v1683, 4294901760
        %v1685 = vsub.f32 %v1683, %v1684
        %v1686 = vand.u32 %v1685, 4294901760
        %1687 = vmatpush1.msra.mxu0 %v1686
        %1688 = vmatprep.subr.mxu0 0.0
        %v1689 = vand.u32 %v1499, 4294901760
        %v1690 = vsub.f32 %v1499, %v1689
        %v1691 = vand.u32 %v1690, 4294901760
        %v1692 = vsub.f32 %v1690, %v1691
        %v1693 = vand.u32 %v1692, 4294901760
        %1694 = vmatpush1.msra.mxu0 %v1693
        %1695 = vmatprep.subr.mxu0 0.0
        %v1696 = vand.u32 %v1500, 4294901760
        %v1697 = vsub.f32 %v1500, %v1696
        %v1698 = vand.u32 %v1697, 4294901760
        %v1699 = vsub.f32 %v1697, %v1698
        %v1700 = vand.u32 %v1699, 4294901760
        %1701 = vmatpush1.msra.mxu0 %v1700
        %1702 = vmatprep.subr.mxu0 0.0
        %v1703 = vand.u32 %v1501, 4294901760
        %v1704 = vsub.f32 %v1501, %v1703
        %v1705 = vand.u32 %v1704, 4294901760
        %v1706 = vsub.f32 %v1704, %v1705
        %v1707 = vand.u32 %v1706, 4294901760
        %1708 = vmatpush1.msra.mxu0 %v1707
        %1709 = vmatprep.subr.mxu0 0.0
        %v1710 = vand.u32 %v1502, 4294901760
        %v1711 = vsub.f32 %v1502, %v1710
        %v1712 = vand.u32 %v1711, 4294901760
        %v1713 = vsub.f32 %v1711, %v1712
        %v1714 = vand.u32 %v1713, 4294901760
        %1715 = vmatpush1.msra.mxu0 %v1714
        %1716 = vmatprep.subr.mxu0 0.0
        %1717 = vmatpush1.msra.mxu0 0.0
        %1718 = vmatprep.subr.mxu0 0.0
        %1719 = vmatpush1.msra.mxu0 0.0
        %1720 = vmatprep.subr.mxu0 0.0
        %1721 = vmatpush1.msra.mxu0 0.0
        %1722 = vmatprep.subr.mxu0 0.0
        %1723 = vmatpush1.msra.mxu0 0.0
        %1724 = vmatprep.subr.mxu0 0.0
        %1725 = vmatpush1.msra.mxu0 0.0
        %1726 = vmatprep.subr.mxu0 0.0
        %1727 = vmatpush1.msra.mxu0 0.0
        %1728 = vmatprep.subr.mxu0 0.0
        %1729 = vmatpush1.msra.mxu0 0.0
        %1730 = vmatprep.subr.mxu0 0.0
        %1731 = vmatpush1.msra.mxu0 0.0
        %1732 = vmatprep.subr.mxu0 0.0
        %1733 = vmatpush1.msra.mxu0 0.0
        %1734 = vmatprep.subr.mxu0 0.0
        %1735 = vmatpush1.msra.mxu0 0.0
        %1736 = vmatprep.subr.mxu0 0.0
        %1737 = vmatpush1.msra.mxu0 0.0
        %1738 = vmatprep.subr.mxu0 0.0
        %1739 = vmatpush1.msra.mxu0 0.0
        %1740 = vmatprep.subr.mxu0 0.0
        %1741 = vmatpush1.msra.mxu0 0.0
        %1742 = vmatprep.subr.mxu0 0.0
        %1743 = vmatpush1.msra.mxu0 0.0
        %1744 = vmatprep.subr.mxu0 0.0
        %1745 = vmatpush1.msra.mxu0 0.0
        %1746 = vmatprep.subr.mxu0 0.0
        %1747 = vmatpush1.msra.mxu0 0.0
        %1748 = vmatprep.subr.mxu0 0.0
        %1749 = vmatpush1.msra.mxu0 0.0
        %1750 = vmatprep.subr.mxu0 0.0
        %1751 = vmatpush1.msra.mxu0 0.0
        %1752 = vmatprep.subr.mxu0 0.0
        %1753 = vmatpush1.msra.mxu0 0.0
        %1754 = vmatprep.subr.mxu0 0.0
        %1755 = vmatpush1.msra.mxu0 0.0
        %1756 = vmatprep.subr.mxu0 0.0
        %1757 = vmatpush1.msra.mxu0 0.0
        %1758 = vmatprep.subr.mxu0 0.0
        %1759 = vmatpush1.msra.mxu0 0.0
        %1760 = vmatprep.subr.mxu0 0.0
        %1761 = vmatpush1.msra.mxu0 0.0
        %1762 = vmatprep.subr.mxu0 0.0
        %1763 = vmatpush1.msra.mxu0 0.0
        %1764 = vmatprep.mubr.f32.mxu0 0.0
        %v1765 = vand.u32 %v1536, 4294901760
        %1766 = vmatmul.mubr.f32.gmra.mrb[0].mxu0 %v1765
        %v1767 = vpop.f32.mrb[0].mxu0
        %v1768 = vadd.f32 %v1627, %v1767
        %v1769 = vpop.f32.mrb[0].mxu0
        %1770 = vmatprep.mubr.f32.mxu0 0.0
        %v1771 = vand.u32 %v1539, 4294901760
        %1772 = vmatmul.mubr.f32.gmra.mrb[0].mxu0 %v1771
        %v1773 = vpop.f32.mrb[0].mxu0
        %v1774 = vadd.f32 %v1637, %v1773
        %v1775 = vpop.f32.mrb[0].mxu0
        %1776 = vmatprep.mubr.f32.mxu0 0.0
        %v1777 = vand.u32 %v1542, 4294901760
        %1778 = vmatmul.mubr.f32.gmra.mrb[0].mxu0 %v1777
        %v1779 = vpop.f32.mrb[0].mxu0
        %v1780 = vadd.f32 %v1647, %v1779
        %v1781 = vpop.f32.mrb[0].mxu0
        %1782 = vmatprep.mubr.f32.mxu0 0.0
        %v1783 = vand.u32 %v1545, 4294901760
        %1784 = vmatmul.mubr.f32.gmra.mrb[0].mxu0 %v1783
        %v1785 = vpop.f32.mrb[0].mxu0
        %v1786 = vadd.f32 %v1657, %v1785
        %v1787 = vpop.f32.mrb[0].mxu0
        %1788 = vdwg.mxu0
        %1789 = vmatprep.subr.mxu0 0.0
        %v1790 = vand.u32 %v1495, 4294901760
        %v1791 = vsub.f32 %v1495, %v1790
        %1792 = vmatpush1.msra.mxu0 %v1791
        %1793 = vmatprep.subr.mxu0 0.0
        %v1794 = vand.u32 %v1496, 4294901760
        %v1795 = vsub.f32 %v1496, %v1794
        %1796 = vmatpush1.msra.mxu0 %v1795
        %1797 = vmatprep.subr.mxu0 0.0
        %v1798 = vand.u32 %v1497, 4294901760
        %v1799 = vsub.f32 %v1497, %v1798
        %1800 = vmatpush1.msra.mxu0 %v1799
        %1801 = vmatprep.subr.mxu0 0.0
        %v1802 = vand.u32 %v1498, 4294901760
        %v1803 = vsub.f32 %v1498, %v1802
        %1804 = vmatpush1.msra.mxu0 %v1803
        %1805 = vmatprep.subr.mxu0 0.0
        %v1806 = vand.u32 %v1499, 4294901760
        %v1807 = vsub.f32 %v1499, %v1806
        %1808 = vmatpush1.msra.mxu0 %v1807
        %1809 = vmatprep.subr.mxu0 0.0
        %v1810 = vand.u32 %v1500, 4294901760
        %v1811 = vsub.f32 %v1500, %v1810
        %1812 = vmatpush1.msra.mxu0 %v1811
        %1813 = vmatprep.subr.mxu0 0.0
        %v1814 = vand.u32 %v1501, 4294901760
        %v1815 = vsub.f32 %v1501, %v1814
        %1816 = vmatpush1.msra.mxu0 %v1815
        %1817 = vmatprep.subr.mxu0 0.0
        %v1818 = vand.u32 %v1502, 4294901760
        %v1819 = vsub.f32 %v1502, %v1818
        %1820 = vmatpush1.msra.mxu0 %v1819
        %1821 = vmatprep.subr.mxu0 0.0
        %1822 = vmatpush1.msra.mxu0 0.0
        %1823 = vmatprep.subr.mxu0 0.0
        %1824 = vmatpush1.msra.mxu0 0.0
        %1825 = vmatprep.subr.mxu0 0.0
        %1826 = vmatpush1.msra.mxu0 0.0
        %1827 = vmatprep.subr.mxu0 0.0
        %1828 = vmatpush1.msra.mxu0 0.0
        %1829 = vmatprep.subr.mxu0 0.0
        %1830 = vmatpush1.msra.mxu0 0.0
        %1831 = vmatprep.subr.mxu0 0.0
        %1832 = vmatpush1.msra.mxu0 0.0
        %1833 = vmatprep.subr.mxu0 0.0
        %1834 = vmatpush1.msra.mxu0 0.0
        %1835 = vmatprep.subr.mxu0 0.0
        %1836 = vmatpush1.msra.mxu0 0.0
        %1837 = vmatprep.subr.mxu0 0.0
        %1838 = vmatpush1.msra.mxu0 0.0
        %1839 = vmatprep.subr.mxu0 0.0
        %1840 = vmatpush1.msra.mxu0 0.0
        %1841 = vmatprep.subr.mxu0 0.0
        %1842 = vmatpush1.msra.mxu0 0.0
        %1843 = vmatprep.subr.mxu0 0.0
        %1844 = vmatpush1.msra.mxu0 0.0
        %1845 = vmatprep.subr.mxu0 0.0
        %1846 = vmatpush1.msra.mxu0 0.0
        %1847 = vmatprep.subr.mxu0 0.0
        %1848 = vmatpush1.msra.mxu0 0.0
        %1849 = vmatprep.subr.mxu0 0.0
        %1850 = vmatpush1.msra.mxu0 0.0
        %1851 = vmatprep.subr.mxu0 0.0
        %1852 = vmatpush1.msra.mxu0 0.0
        %1853 = vmatprep.subr.mxu0 0.0
        %1854 = vmatpush1.msra.mxu0 0.0
        %1855 = vmatprep.subr.mxu0 0.0
        %1856 = vmatpush1.msra.mxu0 0.0
        %1857 = vmatprep.subr.mxu0 0.0
        %1858 = vmatpush1.msra.mxu0 0.0
        %1859 = vmatprep.subr.mxu0 0.0
        %1860 = vmatpush1.msra.mxu0 0.0
        %1861 = vmatprep.subr.mxu0 0.0
        %1862 = vmatpush1.msra.mxu0 0.0
        %1863 = vmatprep.subr.mxu0 0.0
        %1864 = vmatpush1.msra.mxu0 0.0
        %1865 = vmatprep.subr.mxu0 0.0
        %1866 = vmatpush1.msra.mxu0 0.0
        %1867 = vmatprep.subr.mxu0 0.0
        %1868 = vmatpush1.msra.mxu0 0.0
        %1869 = vmatprep.mubr.f32.mxu0 0.0
        %v1870 = vand.u32 %v1536, 4294901760
        %v1871 = vsub.f32 %v1536, %v1870
        %1872 = vmatmul.mubr.f32.gmra.mrb[0].mxu0 %v1871
        %v1873 = vpop.f32.mrb[0].mxu0
        %v1874 = vadd.f32 %v1768, %v1873
        %v1875 = vpop.f32.mrb[0].mxu0
        %1876 = vmatprep.mubr.f32.mxu0 0.0
        %v1877 = vand.u32 %v1539, 4294901760
        %v1878 = vsub.f32 %v1539, %v1877
        %1879 = vmatmul.mubr.f32.gmra.mrb[0].mxu0 %v1878
        %v1880 = vpop.f32.mrb[0].mxu0
        %v1881 = vadd.f32 %v1774, %v1880
        %v1882 = vpop.f32.mrb[0].mxu0
        %1883 = vmatprep.mubr.f32.mxu0 0.0
        %v1884 = vand.u32 %v1542, 4294901760
        %v1885 = vsub.f32 %v1542, %v1884
        %1886 = vmatmul.mubr.f32.gmra.mrb[0].mxu0 %v1885
        %v1887 = vpop.f32.mrb[0].mxu0
        %v1888 = vadd.f32 %v1780, %v1887
        %v1889 = vpop.f32.mrb[0].mxu0
        %1890 = vmatprep.mubr.f32.mxu0 0.0
        %v1891 = vand.u32 %v1545, 4294901760
        %v1892 = vsub.f32 %v1545, %v1891
        %1893 = vmatmul.mubr.f32.gmra.mrb[0].mxu0 %v1892
        %v1894 = vpop.f32.mrb[0].mxu0
        %v1895 = vadd.f32 %v1786, %v1894
        %v1896 = vpop.f32.mrb[0].mxu0
        %1897 = vdwg.mxu0
        %1898 = vmatprep.subr.mxu0 0.0
        %v1899 = vand.u32 %v1495, 4294901760
        %1900 = vmatpush1.msra.mxu0 %v1899
        %1901 = vmatprep.subr.mxu0 0.0
        %v1902 = vand.u32 %v1496, 4294901760
        %1903 = vmatpush1.msra.mxu0 %v1902
        %1904 = vmatprep.subr.mxu0 0.0
        %v1905 = vand.u32 %v1497, 4294901760
        %1906 = vmatpush1.msra.mxu0 %v1905
        %1907 = vmatprep.subr.mxu0 0.0
        %v1908 = vand.u32 %v1498, 4294901760
        %1909 = vmatpush1.msra.mxu0 %v1908
        %1910 = vmatprep.subr.mxu0 0.0
        %v1911 = vand.u32 %v1499, 4294901760
        %1912 = vmatpush1.msra.mxu0 %v1911
        %1913 = vmatprep.subr.mxu0 0.0
        %v1914 = vand.u32 %v1500, 4294901760
        %1915 = vmatpush1.msra.mxu0 %v1914
        %1916 = vmatprep.subr.mxu0 0.0
        %v1917 = vand.u32 %v1501, 4294901760
        %1918 = vmatpush1.msra.mxu0 %v1917
        %1919 = vmatprep.subr.mxu0 0.0
        %v1920 = vand.u32 %v1502, 4294901760
        %1921 = vmatpush1.msra.mxu0 %v1920
        %1922 = vmatprep.subr.mxu0 0.0
        %1923 = vmatpush1.msra.mxu0 0.0
        %1924 = vmatprep.subr.mxu0 0.0
        %1925 = vmatpush1.msra.mxu0 0.0
        %1926 = vmatprep.subr.mxu0 0.0
        %1927 = vmatpush1.msra.mxu0 0.0
        %1928 = vmatprep.subr.mxu0 0.0
        %1929 = vmatpush1.msra.mxu0 0.0
        %1930 = vmatprep.subr.mxu0 0.0
        %1931 = vmatpush1.msra.mxu0 0.0
        %1932 = vmatprep.subr.mxu0 0.0
        %1933 = vmatpush1.msra.mxu0 0.0
        %1934 = vmatprep.subr.mxu0 0.0
        %1935 = vmatpush1.msra.mxu0 0.0
        %1936 = vmatprep.subr.mxu0 0.0
        %1937 = vmatpush1.msra.mxu0 0.0
        %1938 = vmatprep.subr.mxu0 0.0
        %1939 = vmatpush1.msra.mxu0 0.0
        %1940 = vmatprep.subr.mxu0 0.0
        %1941 = vmatpush1.msra.mxu0 0.0
        %1942 = vmatprep.subr.mxu0 0.0
        %1943 = vmatpush1.msra.mxu0 0.0
        %1944 = vmatprep.subr.mxu0 0.0
        %1945 = vmatpush1.msra.mxu0 0.0
        %1946 = vmatprep.subr.mxu0 0.0
        %1947 = vmatpush1.msra.mxu0 0.0
        %1948 = vmatprep.subr.mxu0 0.0
        %1949 = vmatpush1.msra.mxu0 0.0
        %1950 = vmatprep.subr.mxu0 0.0
        %1951 = vmatpush1.msra.mxu0 0.0
        %1952 = vmatprep.subr.mxu0 0.0
        %1953 = vmatpush1.msra.mxu0 0.0
        %1954 = vmatprep.subr.mxu0 0.0
        %1955 = vmatpush1.msra.mxu0 0.0
        %1956 = vmatprep.subr.mxu0 0.0
        %1957 = vmatpush1.msra.mxu0 0.0
        %1958 = vmatprep.subr.mxu0 0.0
        %1959 = vmatpush1.msra.mxu0 0.0
        %1960 = vmatprep.subr.mxu0 0.0
        %1961 = vmatpush1.msra.mxu0 0.0
        %1962 = vmatprep.subr.mxu0 0.0
        %1963 = vmatpush1.msra.mxu0 0.0
        %1964 = vmatprep.subr.mxu0 0.0
        %1965 = vmatpush1.msra.mxu0 0.0
        %1966 = vmatprep.subr.mxu0 0.0
        %1967 = vmatpush1.msra.mxu0 0.0
        %1968 = vmatprep.subr.mxu0 0.0
        %1969 = vmatpush1.msra.mxu0 0.0
        %1970 = vmatprep.mubr.f32.mxu0 0.0
        %v1971 = vand.u32 %v1536, 4294901760
        %v1972 = vsub.f32 %v1536, %v1971
        %v1973 = vand.u32 %v1972, 4294901760
        %1974 = vmatmul.mubr.f32.gmra.mrb[0].mxu0 %v1973
        %v1975 = vpop.f32.mrb[0].mxu0
        %v1976 = vadd.f32 %v1874, %v1975
        %v1977 = vpop.f32.mrb[0].mxu0
        %1978 = vmatprep.mubr.f32.mxu0 0.0
        %v1979 = vand.u32 %v1539, 4294901760
        %v1980 = vsub.f32 %v1539, %v1979
        %v1981 = vand.u32 %v1980, 4294901760
        %1982 = vmatmul.mubr.f32.gmra.mrb[0].mxu0 %v1981
        %v1983 = vpop.f32.mrb[0].mxu0
        %v1984 = vadd.f32 %v1881, %v1983
        %v1985 = vpop.f32.mrb[0].mxu0
        %1986 = vmatprep.mubr.f32.mxu0 0.0
        %v1987 = vand.u32 %v1542, 4294901760
        %v1988 = vsub.f32 %v1542, %v1987
        %v1989 = vand.u32 %v1988, 4294901760
        %1990 = vmatmul.mubr.f32.gmra.mrb[0].mxu0 %v1989
        %v1991 = vpop.f32.mrb[0].mxu0
        %v1992 = vadd.f32 %v1888, %v1991
        %v1993 = vpop.f32.mrb[0].mxu0
        %1994 = vmatprep.mubr.f32.mxu0 0.0
        %v1995 = vand.u32 %v1545, 4294901760
        %v1996 = vsub.f32 %v1545, %v1995
        %v1997 = vand.u32 %v1996, 4294901760
        %1998 = vmatmul.mubr.f32.gmra.mrb[0].mxu0 %v1997
        %v1999 = vpop.f32.mrb[0].mxu0
        %v2000 = vadd.f32 %v1895, %v1999
        %v2001 = vpop.f32.mrb[0].mxu0
        %2002 = vdwg.mxu0
        %2003 = vmatprep.subr.mxu0 0.0
        %v2004 = vand.u32 %v1495, 4294901760
        %v2005 = vsub.f32 %v1495, %v2004
        %v2006 = vand.u32 %v2005, 4294901760
        %2007 = vmatpush1.msra.mxu0 %v2006
        %2008 = vmatprep.subr.mxu0 0.0
        %v2009 = vand.u32 %v1496, 4294901760
        %v2010 = vsub.f32 %v1496, %v2009
        %v2011 = vand.u32 %v2010, 4294901760
        %2012 = vmatpush1.msra.mxu0 %v2011
        %2013 = vmatprep.subr.mxu0 0.0
        %v2014 = vand.u32 %v1497, 4294901760
        %v2015 = vsub.f32 %v1497, %v2014
        %v2016 = vand.u32 %v2015, 4294901760
        %2017 = vmatpush1.msra.mxu0 %v2016
        %2018 = vmatprep.subr.mxu0 0.0
        %v2019 = vand.u32 %v1498, 4294901760
        %v2020 = vsub.f32 %v1498, %v2019
        %v2021 = vand.u32 %v2020, 4294901760
        %2022 = vmatpush1.msra.mxu0 %v2021
        %2023 = vmatprep.subr.mxu0 0.0
        %v2024 = vand.u32 %v1499, 4294901760
        %v2025 = vsub.f32 %v1499, %v2024
        %v2026 = vand.u32 %v2025, 4294901760
        %2027 = vmatpush1.msra.mxu0 %v2026
        %2028 = vmatprep.subr.mxu0 0.0
        %v2029 = vand.u32 %v1500, 4294901760
        %v2030 = vsub.f32 %v1500, %v2029
        %v2031 = vand.u32 %v2030, 4294901760
        %2032 = vmatpush1.msra.mxu0 %v2031
        %2033 = vmatprep.subr.mxu0 0.0
        %v2034 = vand.u32 %v1501, 4294901760
        %v2035 = vsub.f32 %v1501, %v2034
        %v2036 = vand.u32 %v2035, 4294901760
        %2037 = vmatpush1.msra.mxu0 %v2036
        %2038 = vmatprep.subr.mxu0 0.0
        %v2039 = vand.u32 %v1502, 4294901760
        %v2040 = vsub.f32 %v1502, %v2039
        %v2041 = vand.u32 %v2040, 4294901760
        %2042 = vmatpush1.msra.mxu0 %v2041
        %2043 = vmatprep.subr.mxu0 0.0
        %2044 = vmatpush1.msra.mxu0 0.0
        %2045 = vmatprep.subr.mxu0 0.0
        %2046 = vmatpush1.msra.mxu0 0.0
        %2047 = vmatprep.subr.mxu0 0.0
        %2048 = vmatpush1.msra.mxu0 0.0
        %2049 = vmatprep.subr.mxu0 0.0
        %2050 = vmatpush1.msra.mxu0 0.0
        %2051 = vmatprep.subr.mxu0 0.0
        %2052 = vmatpush1.msra.mxu0 0.0
        %2053 = vmatprep.subr.mxu0 0.0
        %2054 = vmatpush1.msra.mxu0 0.0
        %2055 = vmatprep.subr.mxu0 0.0
        %2056 = vmatpush1.msra.mxu0 0.0
        %2057 = vmatprep.subr.mxu0 0.0
        %2058 = vmatpush1.msra.mxu0 0.0
        %2059 = vmatprep.subr.mxu0 0.0
        %2060 = vmatpush1.msra.mxu0 0.0
        %2061 = vmatprep.subr.mxu0 0.0
        %2062 = vmatpush1.msra.mxu0 0.0
        %2063 = vmatprep.subr.mxu0 0.0
        %2064 = vmatpush1.msra.mxu0 0.0
        %2065 = vmatprep.subr.mxu0 0.0
        %2066 = vmatpush1.msra.mxu0 0.0
        %2067 = vmatprep.subr.mxu0 0.0
        %2068 = vmatpush1.msra.mxu0 0.0
        %2069 = vmatprep.subr.mxu0 0.0
        %2070 = vmatpush1.msra.mxu0 0.0
        %2071 = vmatprep.subr.mxu0 0.0
        %2072 = vmatpush1.msra.mxu0 0.0
        %2073 = vmatprep.subr.mxu0 0.0
        %2074 = vmatpush1.msra.mxu0 0.0
        %2075 = vmatprep.subr.mxu0 0.0
        %2076 = vmatpush1.msra.mxu0 0.0
        %2077 = vmatprep.subr.mxu0 0.0
        %2078 = vmatpush1.msra.mxu0 0.0
        %2079 = vmatprep.subr.mxu0 0.0
        %2080 = vmatpush1.msra.mxu0 0.0
        %2081 = vmatprep.subr.mxu0 0.0
        %2082 = vmatpush1.msra.mxu0 0.0
        %2083 = vmatprep.subr.mxu0 0.0
        %2084 = vmatpush1.msra.mxu0 0.0
        %2085 = vmatprep.subr.mxu0 0.0
        %2086 = vmatpush1.msra.mxu0 0.0
        %2087 = vmatprep.subr.mxu0 0.0
        %2088 = vmatpush1.msra.mxu0 0.0
        %2089 = vmatprep.subr.mxu0 0.0
        %2090 = vmatpush1.msra.mxu0 0.0
        %2091 = vmatprep.mubr.f32.mxu0 0.0
        %v2092 = vand.u32 %v1536, 4294901760
        %2093 = vmatmul.mubr.f32.gmra.mrb[0].mxu0 %v2092
        %v2094 = vpop.f32.mrb[0].mxu0
        %v2095 = vadd.f32 %v1976, %v2094
        %v2096 = vpop.f32.mrb[0].mxu0
        %2097 = vmatprep.mubr.f32.mxu0 0.0
        %v2098 = vand.u32 %v1539, 4294901760
        %2099 = vmatmul.mubr.f32.gmra.mrb[0].mxu0 %v2098
        %v2100 = vpop.f32.mrb[0].mxu0
        %v2101 = vadd.f32 %v1984, %v2100
        %v2102 = vpop.f32.mrb[0].mxu0
        %2103 = vmatprep.mubr.f32.mxu0 0.0
        %v2104 = vand.u32 %v1542, 4294901760
        %2105 = vmatmul.mubr.f32.gmra.mrb[0].mxu0 %v2104
        %v2106 = vpop.f32.mrb[0].mxu0
        %v2107 = vadd.f32 %v1992, %v2106
        %v2108 = vpop.f32.mrb[0].mxu0
        %2109 = vmatprep.mubr.f32.mxu0 0.0
        %v2110 = vand.u32 %v1545, 4294901760
        %2111 = vmatmul.mubr.f32.gmra.mrb[0].mxu0 %v2110
        %v2112 = vpop.f32.mrb[0].mxu0
        %v2113 = vadd.f32 %v2000, %v2112
        %v2114 = vpop.f32.mrb[0].mxu0
        %2115 = vdwg.mxu0
        %2116 = vmatprep.subr.mxu0 0.0
        %v2117 = vand.u32 %v1495, 4294901760
        %2118 = vmatpush1.msra.mxu0 %v2117
        %2119 = vmatprep.subr.mxu0 0.0
        %v2120 = vand.u32 %v1496, 4294901760
        %2121 = vmatpush1.msra.mxu0 %v2120
        %2122 = vmatprep.subr.mxu0 0.0
        %v2123 = vand.u32 %v1497, 4294901760
        %2124 = vmatpush1.msra.mxu0 %v2123
        %2125 = vmatprep.subr.mxu0 0.0
        %v2126 = vand.u32 %v1498, 4294901760
        %2127 = vmatpush1.msra.mxu0 %v2126
        %2128 = vmatprep.subr.mxu0 0.0
        %v2129 = vand.u32 %v1499, 4294901760
        %2130 = vmatpush1.msra.mxu0 %v2129
        %2131 = vmatprep.subr.mxu0 0.0
        %v2132 = vand.u32 %v1500, 4294901760
        %2133 = vmatpush1.msra.mxu0 %v2132
        %2134 = vmatprep.subr.mxu0 0.0
        %v2135 = vand.u32 %v1501, 4294901760
        %2136 = vmatpush1.msra.mxu0 %v2135
        %2137 = vmatprep.subr.mxu0 0.0
        %v2138 = vand.u32 %v1502, 4294901760
        %2139 = vmatpush1.msra.mxu0 %v2138
        %2140 = vmatprep.subr.mxu0 0.0
        %2141 = vmatpush1.msra.mxu0 0.0
        %2142 = vmatprep.subr.mxu0 0.0
        %2143 = vmatpush1.msra.mxu0 0.0
        %2144 = vmatprep.subr.mxu0 0.0
        %2145 = vmatpush1.msra.mxu0 0.0
        %2146 = vmatprep.subr.mxu0 0.0
        %2147 = vmatpush1.msra.mxu0 0.0
        %2148 = vmatprep.subr.mxu0 0.0
        %2149 = vmatpush1.msra.mxu0 0.0
        %2150 = vmatprep.subr.mxu0 0.0
        %2151 = vmatpush1.msra.mxu0 0.0
        %2152 = vmatprep.subr.mxu0 0.0
        %2153 = vmatpush1.msra.mxu0 0.0
        %2154 = vmatprep.subr.mxu0 0.0
        %2155 = vmatpush1.msra.mxu0 0.0
        %2156 = vmatprep.subr.mxu0 0.0
        %2157 = vmatpush1.msra.mxu0 0.0
        %2158 = vmatprep.subr.mxu0 0.0
        %2159 = vmatpush1.msra.mxu0 0.0
        %2160 = vmatprep.subr.mxu0 0.0
        %2161 = vmatpush1.msra.mxu0 0.0
        %2162 = vmatprep.subr.mxu0 0.0
        %2163 = vmatpush1.msra.mxu0 0.0
        %2164 = vmatprep.subr.mxu0 0.0
        %2165 = vmatpush1.msra.mxu0 0.0
        %2166 = vmatprep.subr.mxu0 0.0
        %2167 = vmatpush1.msra.mxu0 0.0
        %2168 = vmatprep.subr.mxu0 0.0
        %2169 = vmatpush1.msra.mxu0 0.0
        %2170 = vmatprep.subr.mxu0 0.0
        %2171 = vmatpush1.msra.mxu0 0.0
        %2172 = vmatprep.subr.mxu0 0.0
        %2173 = vmatpush1.msra.mxu0 0.0
        %2174 = vmatprep.subr.mxu0 0.0
        %2175 = vmatpush1.msra.mxu0 0.0
        %2176 = vmatprep.subr.mxu0 0.0
        %2177 = vmatpush1.msra.mxu0 0.0
        %2178 = vmatprep.subr.mxu0 0.0
        %2179 = vmatpush1.msra.mxu0 0.0
        %2180 = vmatprep.subr.mxu0 0.0
        %2181 = vmatpush1.msra.mxu0 0.0
        %2182 = vmatprep.subr.mxu0 0.0
        %2183 = vmatpush1.msra.mxu0 0.0
        %2184 = vmatprep.subr.mxu0 0.0
        %2185 = vmatpush1.msra.mxu0 0.0
        %2186 = vmatprep.subr.mxu0 0.0
        %2187 = vmatpush1.msra.mxu0 0.0
        %2188 = vmatprep.mubr.f32.mxu0 0.0
        %v2189 = vand.u32 %v1536, 4294901760
        %2190 = vmatmul.mubr.f32.gmra.mrb[0].mxu0 %v2189
        %v2191 = vpop.f32.mrb[0].mxu0
        %v2192 = vadd.f32 %v2095, %v2191
        %v2193 = vpop.f32.mrb[0].mxu0
        %2194 = vmatprep.mubr.f32.mxu0 0.0
        %v2195 = vand.u32 %v1539, 4294901760
        %2196 = vmatmul.mubr.f32.gmra.mrb[0].mxu0 %v2195
        %v2197 = vpop.f32.mrb[0].mxu0
        %v2198 = vadd.f32 %v2101, %v2197
        %v2199 = vpop.f32.mrb[0].mxu0
        %2200 = vmatprep.mubr.f32.mxu0 0.0
        %v2201 = vand.u32 %v1542, 4294901760
        %2202 = vmatmul.mubr.f32.gmra.mrb[0].mxu0 %v2201
        %v2203 = vpop.f32.mrb[0].mxu0
        %v2204 = vadd.f32 %v2107, %v2203
        %v2205 = vpop.f32.mrb[0].mxu0
        %2206 = vmatprep.mubr.f32.mxu0 0.0
        %v2207 = vand.u32 %v1545, 4294901760
        %2208 = vmatmul.mubr.f32.gmra.mrb[0].mxu0 %v2207
        %v2209 = vpop.f32.mrb[0].mxu0
        %v2210 = vadd.f32 %v2113, %v2209
        %v2211 = vpop.f32.mrb[0].mxu0
        %2212 = vdwg.mxu0
        %v2213 = vsub.f32 %v1220, %v2192
        %v2214 = vsub.f32 %v1221, %v2198
        %v2215 = vsub.f32 %v1222, %v2204
        %v2216 = vsub.f32 %v1223, %v2210
        %s2217 = scalar_lea.vmem %s1, 128
        %v2218 = vld [vmem:[%s2217] sm:$0xff]
        %v2219 = vld [vmem:[%s2217 + $0x8] sm:$0xff]
        %v2220 = vld [vmem:[%s2217 + $0x10] sm:$0xff]
        %v2221 = vld [vmem:[%s2217 + $0x18] sm:$0xff]
        %v2222 = vld [vmem:[%s2217 + $0x20] sm:$0xff]
        %v2223 = vld [vmem:[%s2217 + $0x28] sm:$0xff]
        %v2224 = vld [vmem:[%s2217 + $0x30] sm:$0xff]
        %v2225 = vld [vmem:[%s2217 + $0x38] sm:$0xff]
        %v2226 = vmul.f32 %v2218, %v2218
        %v2227 = vmul.f32 %v2219, %v2219
        %v2228 = vmul.f32 %v2220, %v2220
        %v2229 = vmul.f32 %v2221, %v2221
        %v2230 = vmul.f32 %v2222, %v2222
        %v2231 = vmul.f32 %v2223, %v2223
        %v2232 = vmul.f32 %v2224, %v2224
        %v2233 = vmul.f32 %v2225, %v2225
        %v2234 = vsel %vm244, %v2226, 0.0
        %2235 = vadd.xlane.f32.xlu0 %v2234
        %v2236 = vpop.xlane.xlu0 %2235
        %v2237 = vsel %vm244, %v2227, 0.0
        %2238 = vadd.xlane.f32.xlu0 %v2237
        %v2239 = vpop.xlane.xlu0 %2238
        %v2240 = vsel %vm244, %v2228, 0.0
        %2241 = vadd.xlane.f32.xlu0 %v2240
        %v2242 = vpop.xlane.xlu0 %2241
        %v2243 = vsel %vm244, %v2229, 0.0
        %2244 = vadd.xlane.f32.xlu0 %v2243
        %v2245 = vpop.xlane.xlu0 %2244
        %v2246 = vsel %vm244, %v2230, 0.0
        %2247 = vadd.xlane.f32.xlu0 %v2246
        %v2248 = vpop.xlane.xlu0 %2247
        %v2249 = vsel %vm244, %v2231, 0.0
        %2250 = vadd.xlane.f32.xlu0 %v2249
        %v2251 = vpop.xlane.xlu0 %2250
        %v2252 = vsel %vm244, %v2232, 0.0
        %2253 = vadd.xlane.f32.xlu0 %v2252
        %v2254 = vpop.xlane.xlu0 %2253
        %v2255 = vsel %vm244, %v2233, 0.0
        %2256 = vadd.xlane.f32.xlu0 %v2255
        %v2257 = vpop.xlane.xlu0 %2256
        %v2258 = vmul.f32 %v2236, 0.5
        %v2259 = vmul.f32 %v2239, 0.5
        %v2260 = vmul.f32 %v2242, 0.5
        %v2261 = vmul.f32 %v2245, 0.5
        %v2262 = vmul.f32 %v2248, 0.5
        %v2263 = vmul.f32 %v2251, 0.5
        %v2264 = vmul.f32 %v2254, 0.5
        %v2265 = vmul.f32 %v2257, 0.5
        %v2267 = vsel %vm244, %v2218, 0
        %v2270 = vsel %vm244, %v2219, 0
        %v2273 = vsel %vm244, %v2220, 0
        %v2276 = vsel %vm244, %v2221, 0
        %v2279 = vsel %vm244, %v2222, 0
        %v2282 = vsel %vm244, %v2223, 0
        %v2285 = vsel %vm244, %v2224, 0
        %v2288 = vsel %vm244, %v2225, 0
        %2290 = vmatprep.subr.mxu0 0.0
        %2291 = vmatpush1.msra.mxu0 %v2213
        %2292 = vmatprep.subr.mxu0 0.0
        %2293 = vmatpush1.msra.mxu0 %v2214
        %2294 = vmatprep.subr.mxu0 0.0
        %2295 = vmatpush1.msra.mxu0 %v2215
        %2296 = vmatprep.subr.mxu0 0.0
        %2297 = vmatpush1.msra.mxu0 %v2216
        %2298 = vmatprep.subr.mxu0 0.0
        %2299 = vmatpush1.msra.mxu0 0.0
        %2300 = vmatprep.subr.mxu0 0.0
        %2301 = vmatpush1.msra.mxu0 0.0
        %2302 = vmatprep.subr.mxu0 0.0
        %2303 = vmatpush1.msra.mxu0 0.0
        %2304 = vmatprep.subr.mxu0 0.0
        %2305 = vmatpush1.msra.mxu0 0.0
        %2306 = vmatprep.subr.mxu0 0.0
        %2307 = vmatpush1.msra.mxu0 0.0
        %2308 = vmatprep.subr.mxu0 0.0
        %2309 = vmatpush1.msra.mxu0 0.0
        %2310 = vmatprep.subr.mxu0 0.0
        %2311 = vmatpush1.msra.mxu0 0.0
        %2312 = vmatprep.subr.mxu0 0.0
        %2313 = vmatpush1.msra.mxu0 0.0
        %2314 = vmatprep.subr.mxu0 0.0
        %2315 = vmatpush1.msra.mxu0 0.0
        %2316 = vmatprep.subr.mxu0 0.0
        %2317 = vmatpush1.msra.mxu0 0.0
        %2318 = vmatprep.subr.mxu0 0.0
        %2319 = vmatpush1.msra.mxu0 0.0
        %2320 = vmatprep.subr.mxu0 0.0
        %2321 = vmatpush1.msra.mxu0 0.0
        %2322 = vmatprep.subr.mxu0 0.0
        %2323 = vmatpush1.msra.mxu0 0.0
        %2324 = vmatprep.subr.mxu0 0.0
        %2325 = vmatpush1.msra.mxu0 0.0
        %2326 = vmatprep.subr.mxu0 0.0
        %2327 = vmatpush1.msra.mxu0 0.0
        %2328 = vmatprep.subr.mxu0 0.0
        %2329 = vmatpush1.msra.mxu0 0.0
        %2330 = vmatprep.subr.mxu0 0.0
        %2331 = vmatpush1.msra.mxu0 0.0
        %2332 = vmatprep.subr.mxu0 0.0
        %2333 = vmatpush1.msra.mxu0 0.0
        %2334 = vmatprep.subr.mxu0 0.0
        %2335 = vmatpush1.msra.mxu0 0.0
        %2336 = vmatprep.subr.mxu0 0.0
        %2337 = vmatpush1.msra.mxu0 0.0
        %2338 = vmatprep.subr.mxu0 0.0
        %2339 = vmatpush1.msra.mxu0 0.0
        %2340 = vmatprep.subr.mxu0 0.0
        %2341 = vmatpush1.msra.mxu0 0.0
        %2342 = vmatprep.subr.mxu0 0.0
        %2343 = vmatpush1.msra.mxu0 0.0
        %2344 = vmatprep.subr.mxu0 0.0
        %2345 = vmatpush1.msra.mxu0 0.0
        %2346 = vmatprep.subr.mxu0 0.0
        %2347 = vmatpush1.msra.mxu0 0.0
        %2348 = vmatprep.subr.mxu0 0.0
        %2349 = vmatpush1.msra.mxu0 0.0
        %2350 = vmatprep.subr.mxu0 0.0
        %2351 = vmatpush1.msra.mxu0 0.0
        %2352 = vmatprep.subr.mxu0 0.0
        %2353 = vmatpush1.msra.mxu0 0.0
        %2354 = vmatprep.mubr.f32.mxu0 0.0
        %2355 = vmatmul.mubr.f32.gmra.mrb[0].mxu0 %v2267
        %v2356 = vpop.f32.mrb[0].mxu0
        %v2357 = vadd.f32 0.0, %v2356
        %v2358 = vpop.f32.mrb[0].mxu0
        %2359 = vmatprep.mubr.f32.mxu0 0.0
        %2360 = vmatmul.mubr.f32.gmra.mrb[0].mxu0 %v2270
        %v2361 = vpop.f32.mrb[0].mxu0
        %v2362 = vadd.f32 0.0, %v2361
        %v2363 = vpop.f32.mrb[0].mxu0
        %2364 = vmatprep.mubr.f32.mxu0 0.0
        %2365 = vmatmul.mubr.f32.gmra.mrb[0].mxu0 %v2273
        %v2366 = vpop.f32.mrb[0].mxu0
        %v2367 = vadd.f32 0.0, %v2366
        %v2368 = vpop.f32.mrb[0].mxu0
        %2369 = vmatprep.mubr.f32.mxu0 0.0
        %2370 = vmatmul.mubr.f32.gmra.mrb[0].mxu0 %v2276
        %v2371 = vpop.f32.mrb[0].mxu0
        %v2372 = vadd.f32 0.0, %v2371
        %v2373 = vpop.f32.mrb[0].mxu0
        %2374 = vmatprep.mubr.f32.mxu0 0.0
        %2375 = vmatmul.mubr.f32.gmra.mrb[0].mxu0 %v2279
        %v2376 = vpop.f32.mrb[0].mxu0
        %v2377 = vadd.f32 0.0, %v2376
        %v2378 = vpop.f32.mrb[0].mxu0
        %2379 = vmatprep.mubr.f32.mxu0 0.0
        %2380 = vmatmul.mubr.f32.gmra.mrb[0].mxu0 %v2282
        %v2381 = vpop.f32.mrb[0].mxu0
        %v2382 = vadd.f32 0.0, %v2381
        %v2383 = vpop.f32.mrb[0].mxu0
        %2384 = vmatprep.mubr.f32.mxu0 0.0
        %2385 = vmatmul.mubr.f32.gmra.mrb[0].mxu0 %v2285
        %v2386 = vpop.f32.mrb[0].mxu0
        %v2387 = vadd.f32 0.0, %v2386
        %v2388 = vpop.f32.mrb[0].mxu0
        %2389 = vmatprep.mubr.f32.mxu0 0.0
        %2390 = vmatmul.mubr.f32.gmra.mrb[0].mxu0 %v2288
        %v2391 = vpop.f32.mrb[0].mxu0
        %v2392 = vadd.f32 0.0, %v2391
        %v2393 = vpop.f32.mrb[0].mxu0
        %2394 = vdwg.mxu0
        %v2395 = vsub.f32 %v2357, %v2258
        %v2396 = vsub.f32 %v2362, %v2259
        %v2397 = vsub.f32 %v2367, %v2260
        %v2398 = vsub.f32 %v2372, %v2261
        %v2399 = vsub.f32 %v2377, %v2262
        %v2400 = vsub.f32 %v2382, %v2263
        %v2401 = vsub.f32 %v2387, %v2264
        %v2402 = vsub.f32 %v2392, %v2265
        %v2403 = vsel %vm414, %v2395, -inf
        %v2404 = vsel %vm414, %v2396, -inf
        %v2405 = vsel %vm414, %v2397, -inf
        %v2406 = vsel %vm414, %v2398, -inf
        %v2407 = vsel %vm414, %v2399, -inf
        %v2408 = vmax.f32 %v2403, %v2407
        %v2409 = vsel %vm414, %v2400, -inf
        %v2410 = vmax.f32 %v2404, %v2409
        %v2411 = vsel %vm414, %v2401, -inf
        %v2412 = vmax.f32 %v2405, %v2411
        %v2413 = vsel %vm414, %v2402, -inf
        %v2414 = vmax.f32 %v2406, %v2413
        %v2415 = vmax.f32 %v2408, %v2410
        %v2416 = vmax.f32 %v2412, %v2414
        %v2417 = vmax.f32 %v2415, %v2416
        %v2418 = vrot.slane %v2417, 4
        %v2419 = vmax.f32 %v2417, %v2418
        %v2420 = vrot.slane %v2419, 2
        %v2421 = vmax.f32 %v2419, %v2420
        %v2422 = vrot.slane %v2421, 1
        %v2423 = vmax.f32 %v2421, %v2422
        %vm2424 = vcmp.eq.f32.partialorder %v2395, %v2423
        %vm2425 = vcmp.eq.f32.partialorder %v2396, %v2423
        %vm2426 = vcmp.eq.f32.partialorder %v2397, %v2423
        %vm2427 = vcmp.eq.f32.partialorder %v2398, %v2423
        %vm2428 = vcmp.eq.f32.partialorder %v2399, %v2423
        %vm2429 = vcmp.eq.f32.partialorder %v2400, %v2423
        %vm2430 = vcmp.eq.f32.partialorder %v2401, %v2423
        %vm2431 = vcmp.eq.f32.partialorder %v2402, %v2423
        %v2432 = vsel %vm2424, %v220, 64
        %v2433 = vsel %vm2425, %v221, 64
        %v2434 = vsel %vm2426, %v222, 64
        %v2435 = vsel %vm2427, %v223, 64
        %v2436 = vsel %vm2428, %v224, 64
        %v2437 = vsel %vm2429, %v225, 64
        %v2438 = vsel %vm2430, %v226, 64
        %v2439 = vsel %vm2431, %v227, 64
        %v2440 = vsel %vm414, %v2432, 2147483647
        %v2441 = vsel %vm414, %v2433, 2147483647
        %v2442 = vsel %vm414, %v2434, 2147483647
        %v2443 = vsel %vm414, %v2435, 2147483647
        %v2444 = vsel %vm414, %v2436, 2147483647
        %vm2445 = vcmp.lt.s32.totalorder %v2440, %v2444
        %v2446 = vsel %vm2445, %v2440, %v2444
        %v2447 = vsel %vm414, %v2437, 2147483647
        %vm2448 = vcmp.lt.s32.totalorder %v2441, %v2447
        %v2449 = vsel %vm2448, %v2441, %v2447
        %v2450 = vsel %vm414, %v2438, 2147483647
        %vm2451 = vcmp.lt.s32.totalorder %v2442, %v2450
        %v2452 = vsel %vm2451, %v2442, %v2450
        %v2453 = vsel %vm414, %v2439, 2147483647
        %vm2454 = vcmp.lt.s32.totalorder %v2443, %v2453
        %v2455 = vsel %vm2454, %v2443, %v2453
        %vm2456 = vcmp.lt.s32.totalorder %v2446, %v2449
        %v2457 = vsel %vm2456, %v2446, %v2449
        %vm2458 = vcmp.lt.s32.totalorder %v2452, %v2455
        %v2459 = vsel %vm2458, %v2452, %v2455
        %vm2460 = vcmp.lt.s32.totalorder %v2457, %v2459
        %v2461 = vsel %vm2460, %v2457, %v2459
        %v2462 = vrot.slane %v2461, 4
        %vm2463 = vcmp.lt.s32.totalorder %v2461, %v2462
        %v2464 = vsel %vm2463, %v2461, %v2462
        %v2465 = vrot.slane %v2464, 2
        %vm2466 = vcmp.lt.s32.totalorder %v2464, %v2465
        %v2467 = vsel %vm2466, %v2464, %v2465
        %v2468 = vrot.slane %v2467, 1
        %vm2469 = vcmp.lt.s32.totalorder %v2467, %v2468
        %v2470 = vsel %vm2469, %v2467, %v2468
        %2471 = vst.msk [vmem:[%s198 + $0x2] sm:$0x1] %vm483, %v2470
        %vm2472 = vcmp.eq.s32.totalorder %v220, %v2470
        %vm2473 = vcmp.eq.s32.totalorder %v221, %v2470
        %vm2474 = vcmp.eq.s32.totalorder %v222, %v2470
        %vm2475 = vcmp.eq.s32.totalorder %v223, %v2470
        %vm2476 = vcmp.eq.s32.totalorder %v224, %v2470
        %vm2477 = vcmp.eq.s32.totalorder %v225, %v2470
        %vm2478 = vcmp.eq.s32.totalorder %v226, %v2470
        %vm2479 = vcmp.eq.s32.totalorder %v227, %v2470
        %v2480 = vsel %vm2472, 1, 0
        %v2481 = vsel %vm2473, 1, 0
        %v2482 = vsel %vm2474, 1, 0
        %v2483 = vsel %vm2475, 1, 0
        %v2484 = vsel %vm2476, 1, 0
        %v2485 = vsel %vm2477, 1, 0
        %v2486 = vsel %vm2478, 1, 0
        %v2487 = vsel %vm2479, 1, 0
        %v2488 = vcvt.s32.f32 %v2480
        %v2489 = vcvt.s32.f32 %v2481
        %v2490 = vcvt.s32.f32 %v2482
        %v2491 = vcvt.s32.f32 %v2483
        %v2492 = vcvt.s32.f32 %v2484
        %v2493 = vcvt.s32.f32 %v2485
        %v2494 = vcvt.s32.f32 %v2486
        %v2495 = vcvt.s32.f32 %v2487
        %2496 = vxpose.xlu0.b32.start [1/16] %v2218, 128
        %2497 = vxpose.xlu0.b32.cont [2/16] %v2219, 128
        %2498 = vxpose.xlu0.b32.cont [3/16] %v2220, 128
        %2499 = vxpose.xlu0.b32.cont [4/16] %v2221, 128
        %2500 = vxpose.xlu0.b32.cont [5/16] %v2222, 128
        %2501 = vxpose.xlu0.b32.cont [6/16] %v2223, 128
        %2502 = vxpose.xlu0.b32.cont [7/16] %v2224, 128
        %2503 = vxpose.xlu0.b32.cont [8/16] %v2225, 128
        %2504 = vxpose.xlu0.b32.cont [9/16] 0.0, 128
        %2505 = vxpose.xlu0.b32.cont [10/16] 0.0, 128
        %2506 = vxpose.xlu0.b32.cont [11/16] 0.0, 128
        %2507 = vxpose.xlu0.b32.cont [12/16] 0.0, 128
        %2508 = vxpose.xlu0.b32.cont [13/16] 0.0, 128
        %2509 = vxpose.xlu0.b32.cont [14/16] 0.0, 128
        %2510 = vxpose.xlu0.b32.cont [15/16] 0.0, 128
        %2511 = vxpose.xlu0.b32.end [16/16] 0.0, 128
        %v2512 = vpop.trf.xlu0
        %v2513 = vpop.trf.xlu0
        %v2514 = vpop.trf.xlu0
        %v2515 = vpop.trf.xlu0
        %v2516 = vpop.trf.xlu0
        %v2517 = vpop.trf.xlu0
        %v2518 = vpop.trf.xlu0
        %v2519 = vpop.trf.xlu0
        %v2520 = vpop.trf.xlu0
        %v2521 = vpop.trf.xlu0
        %v2522 = vpop.trf.xlu0
        %v2523 = vpop.trf.xlu0
        %v2524 = vpop.trf.xlu0
        %v2525 = vpop.trf.xlu0
        %v2526 = vpop.trf.xlu0
        %v2527 = vpop.trf.xlu0
        %v2529 = vsel %vm541, %v2512, 0
        %v2532 = vsel %vm541, %v2513, 0
        %v2535 = vsel %vm541, %v2514, 0
        %v2538 = vsel %vm541, %v2515, 0
        %2540 = vmatprep.subr.mxu0 0.0
        %v2541 = vand.u32 %v2488, 4294901760
        %2542 = vmatpush1.msra.mxu0 %v2541
        %2543 = vmatprep.subr.mxu0 0.0
        %v2544 = vand.u32 %v2489, 4294901760
        %2545 = vmatpush1.msra.mxu0 %v2544
        %2546 = vmatprep.subr.mxu0 0.0
        %v2547 = vand.u32 %v2490, 4294901760
        %2548 = vmatpush1.msra.mxu0 %v2547
        %2549 = vmatprep.subr.mxu0 0.0
        %v2550 = vand.u32 %v2491, 4294901760
        %2551 = vmatpush1.msra.mxu0 %v2550
        %2552 = vmatprep.subr.mxu0 0.0
        %v2553 = vand.u32 %v2492, 4294901760
        %2554 = vmatpush1.msra.mxu0 %v2553
        %2555 = vmatprep.subr.mxu0 0.0
        %v2556 = vand.u32 %v2493, 4294901760
        %2557 = vmatpush1.msra.mxu0 %v2556
        %2558 = vmatprep.subr.mxu0 0.0
        %v2559 = vand.u32 %v2494, 4294901760
        %2560 = vmatpush1.msra.mxu0 %v2559
        %2561 = vmatprep.subr.mxu0 0.0
        %v2562 = vand.u32 %v2495, 4294901760
        %2563 = vmatpush1.msra.mxu0 %v2562
        %2564 = vmatprep.subr.mxu0 0.0
        %2565 = vmatpush1.msra.mxu0 0.0
        %2566 = vmatprep.subr.mxu0 0.0
        %2567 = vmatpush1.msra.mxu0 0.0
        %2568 = vmatprep.subr.mxu0 0.0
        %2569 = vmatpush1.msra.mxu0 0.0
        %2570 = vmatprep.subr.mxu0 0.0
        %2571 = vmatpush1.msra.mxu0 0.0
        %2572 = vmatprep.subr.mxu0 0.0
        %2573 = vmatpush1.msra.mxu0 0.0
        %2574 = vmatprep.subr.mxu0 0.0
        %2575 = vmatpush1.msra.mxu0 0.0
        %2576 = vmatprep.subr.mxu0 0.0
        %2577 = vmatpush1.msra.mxu0 0.0
        %2578 = vmatprep.subr.mxu0 0.0
        %2579 = vmatpush1.msra.mxu0 0.0
        %2580 = vmatprep.subr.mxu0 0.0
        %2581 = vmatpush1.msra.mxu0 0.0
        %2582 = vmatprep.subr.mxu0 0.0
        %2583 = vmatpush1.msra.mxu0 0.0
        %2584 = vmatprep.subr.mxu0 0.0
        %2585 = vmatpush1.msra.mxu0 0.0
        %2586 = vmatprep.subr.mxu0 0.0
        %2587 = vmatpush1.msra.mxu0 0.0
        %2588 = vmatprep.subr.mxu0 0.0
        %2589 = vmatpush1.msra.mxu0 0.0
        %2590 = vmatprep.subr.mxu0 0.0
        %2591 = vmatpush1.msra.mxu0 0.0
        %2592 = vmatprep.subr.mxu0 0.0
        %2593 = vmatpush1.msra.mxu0 0.0
        %2594 = vmatprep.subr.mxu0 0.0
        %2595 = vmatpush1.msra.mxu0 0.0
        %2596 = vmatprep.subr.mxu0 0.0
        %2597 = vmatpush1.msra.mxu0 0.0
        %2598 = vmatprep.subr.mxu0 0.0
        %2599 = vmatpush1.msra.mxu0 0.0
        %2600 = vmatprep.subr.mxu0 0.0
        %2601 = vmatpush1.msra.mxu0 0.0
        %2602 = vmatprep.subr.mxu0 0.0
        %2603 = vmatpush1.msra.mxu0 0.0
        %2604 = vmatprep.subr.mxu0 0.0
        %2605 = vmatpush1.msra.mxu0 0.0
        %2606 = vmatprep.subr.mxu0 0.0
        %2607 = vmatpush1.msra.mxu0 0.0
        %2608 = vmatprep.subr.mxu0 0.0
        %2609 = vmatpush1.msra.mxu0 0.0
        %2610 = vmatprep.subr.mxu0 0.0
        %2611 = vmatpush1.msra.mxu0 0.0
        %2612 = vmatprep.mubr.f32.mxu0 0.0
        %v2613 = vand.u32 %v2529, 4294901760
        %v2614 = vsub.f32 %v2529, %v2613
        %v2615 = vand.u32 %v2614, 4294901760
        %v2616 = vsub.f32 %v2614, %v2615
        %v2617 = vand.u32 %v2616, 4294901760
        %2618 = vmatmul.mubr.f32.gmra.mrb[0].mxu0 %v2617
        %v2619 = vpop.f32.mrb[0].mxu0
        %v2620 = vadd.f32 0.0, %v2619
        %v2621 = vpop.f32.mrb[0].mxu0
        %2622 = vmatprep.mubr.f32.mxu0 0.0
        %v2623 = vand.u32 %v2532, 4294901760
        %v2624 = vsub.f32 %v2532, %v2623
        %v2625 = vand.u32 %v2624, 4294901760
        %v2626 = vsub.f32 %v2624, %v2625
        %v2627 = vand.u32 %v2626, 4294901760
        %2628 = vmatmul.mubr.f32.gmra.mrb[0].mxu0 %v2627
        %v2629 = vpop.f32.mrb[0].mxu0
        %v2630 = vadd.f32 0.0, %v2629
        %v2631 = vpop.f32.mrb[0].mxu0
        %2632 = vmatprep.mubr.f32.mxu0 0.0
        %v2633 = vand.u32 %v2535, 4294901760
        %v2634 = vsub.f32 %v2535, %v2633
        %v2635 = vand.u32 %v2634, 4294901760
        %v2636 = vsub.f32 %v2634, %v2635
        %v2637 = vand.u32 %v2636, 4294901760
        %2638 = vmatmul.mubr.f32.gmra.mrb[0].mxu0 %v2637
        %v2639 = vpop.f32.mrb[0].mxu0
        %v2640 = vadd.f32 0.0, %v2639
        %v2641 = vpop.f32.mrb[0].mxu0
        %2642 = vmatprep.mubr.f32.mxu0 0.0
        %v2643 = vand.u32 %v2538, 4294901760
        %v2644 = vsub.f32 %v2538, %v2643
        %v2645 = vand.u32 %v2644, 4294901760
        %v2646 = vsub.f32 %v2644, %v2645
        %v2647 = vand.u32 %v2646, 4294901760
        %2648 = vmatmul.mubr.f32.gmra.mrb[0].mxu0 %v2647
        %v2649 = vpop.f32.mrb[0].mxu0
        %v2650 = vadd.f32 0.0, %v2649
        %v2651 = vpop.f32.mrb[0].mxu0
        %2652 = vdwg.mxu0
        %2653 = vmatprep.subr.mxu0 0.0
        %v2654 = vand.u32 %v2488, 4294901760
        %v2655 = vsub.f32 %v2488, %v2654
        %v2656 = vand.u32 %v2655, 4294901760
        %v2657 = vsub.f32 %v2655, %v2656
        %v2658 = vand.u32 %v2657, 4294901760
        %2659 = vmatpush1.msra.mxu0 %v2658
        %2660 = vmatprep.subr.mxu0 0.0
        %v2661 = vand.u32 %v2489, 4294901760
        %v2662 = vsub.f32 %v2489, %v2661
        %v2663 = vand.u32 %v2662, 4294901760
        %v2664 = vsub.f32 %v2662, %v2663
        %v2665 = vand.u32 %v2664, 4294901760
        %2666 = vmatpush1.msra.mxu0 %v2665
        %2667 = vmatprep.subr.mxu0 0.0
        %v2668 = vand.u32 %v2490, 4294901760
        %v2669 = vsub.f32 %v2490, %v2668
        %v2670 = vand.u32 %v2669, 4294901760
        %v2671 = vsub.f32 %v2669, %v2670
        %v2672 = vand.u32 %v2671, 4294901760
        %2673 = vmatpush1.msra.mxu0 %v2672
        %2674 = vmatprep.subr.mxu0 0.0
        %v2675 = vand.u32 %v2491, 4294901760
        %v2676 = vsub.f32 %v2491, %v2675
        %v2677 = vand.u32 %v2676, 4294901760
        %v2678 = vsub.f32 %v2676, %v2677
        %v2679 = vand.u32 %v2678, 4294901760
        %2680 = vmatpush1.msra.mxu0 %v2679
        %2681 = vmatprep.subr.mxu0 0.0
        %v2682 = vand.u32 %v2492, 4294901760
        %v2683 = vsub.f32 %v2492, %v2682
        %v2684 = vand.u32 %v2683, 4294901760
        %v2685 = vsub.f32 %v2683, %v2684
        %v2686 = vand.u32 %v2685, 4294901760
        %2687 = vmatpush1.msra.mxu0 %v2686
        %2688 = vmatprep.subr.mxu0 0.0
        %v2689 = vand.u32 %v2493, 4294901760
        %v2690 = vsub.f32 %v2493, %v2689
        %v2691 = vand.u32 %v2690, 4294901760
        %v2692 = vsub.f32 %v2690, %v2691
        %v2693 = vand.u32 %v2692, 4294901760
        %2694 = vmatpush1.msra.mxu0 %v2693
        %2695 = vmatprep.subr.mxu0 0.0
        %v2696 = vand.u32 %v2494, 4294901760
        %v2697 = vsub.f32 %v2494, %v2696
        %v2698 = vand.u32 %v2697, 4294901760
        %v2699 = vsub.f32 %v2697, %v2698
        %v2700 = vand.u32 %v2699, 4294901760
        %2701 = vmatpush1.msra.mxu0 %v2700
        %2702 = vmatprep.subr.mxu0 0.0
        %v2703 = vand.u32 %v2495, 4294901760
        %v2704 = vsub.f32 %v2495, %v2703
        %v2705 = vand.u32 %v2704, 4294901760
        %v2706 = vsub.f32 %v2704, %v2705
        %v2707 = vand.u32 %v2706, 4294901760
        %2708 = vmatpush1.msra.mxu0 %v2707
        %2709 = vmatprep.subr.mxu0 0.0
        %2710 = vmatpush1.msra.mxu0 0.0
        %2711 = vmatprep.subr.mxu0 0.0
        %2712 = vmatpush1.msra.mxu0 0.0
        %2713 = vmatprep.subr.mxu0 0.0
        %2714 = vmatpush1.msra.mxu0 0.0
        %2715 = vmatprep.subr.mxu0 0.0
        %2716 = vmatpush1.msra.mxu0 0.0
        %2717 = vmatprep.subr.mxu0 0.0
        %2718 = vmatpush1.msra.mxu0 0.0
        %2719 = vmatprep.subr.mxu0 0.0
        %2720 = vmatpush1.msra.mxu0 0.0
        %2721 = vmatprep.subr.mxu0 0.0
        %2722 = vmatpush1.msra.mxu0 0.0
        %2723 = vmatprep.subr.mxu0 0.0
        %2724 = vmatpush1.msra.mxu0 0.0
        %2725 = vmatprep.subr.mxu0 0.0
        %2726 = vmatpush1.msra.mxu0 0.0
        %2727 = vmatprep.subr.mxu0 0.0
        %2728 = vmatpush1.msra.mxu0 0.0
        %2729 = vmatprep.subr.mxu0 0.0
        %2730 = vmatpush1.msra.mxu0 0.0
        %2731 = vmatprep.subr.mxu0 0.0
        %2732 = vmatpush1.msra.mxu0 0.0
        %2733 = vmatprep.subr.mxu0 0.0
        %2734 = vmatpush1.msra.mxu0 0.0
        %2735 = vmatprep.subr.mxu0 0.0
        %2736 = vmatpush1.msra.mxu0 0.0
        %2737 = vmatprep.subr.mxu0 0.0
        %2738 = vmatpush1.msra.mxu0 0.0
        %2739 = vmatprep.subr.mxu0 0.0
        %2740 = vmatpush1.msra.mxu0 0.0
        %2741 = vmatprep.subr.mxu0 0.0
        %2742 = vmatpush1.msra.mxu0 0.0
        %2743 = vmatprep.subr.mxu0 0.0
        %2744 = vmatpush1.msra.mxu0 0.0
        %2745 = vmatprep.subr.mxu0 0.0
        %2746 = vmatpush1.msra.mxu0 0.0
        %2747 = vmatprep.subr.mxu0 0.0
        %2748 = vmatpush1.msra.mxu0 0.0
        %2749 = vmatprep.subr.mxu0 0.0
        %2750 = vmatpush1.msra.mxu0 0.0
        %2751 = vmatprep.subr.mxu0 0.0
        %2752 = vmatpush1.msra.mxu0 0.0
        %2753 = vmatprep.subr.mxu0 0.0
        %2754 = vmatpush1.msra.mxu0 0.0
        %2755 = vmatprep.subr.mxu0 0.0
        %2756 = vmatpush1.msra.mxu0 0.0
        %2757 = vmatprep.mubr.f32.mxu0 0.0
        %v2758 = vand.u32 %v2529, 4294901760
        %2759 = vmatmul.mubr.f32.gmra.mrb[0].mxu0 %v2758
        %v2760 = vpop.f32.mrb[0].mxu0
        %v2761 = vadd.f32 %v2620, %v2760
        %v2762 = vpop.f32.mrb[0].mxu0
        %2763 = vmatprep.mubr.f32.mxu0 0.0
        %v2764 = vand.u32 %v2532, 4294901760
        %2765 = vmatmul.mubr.f32.gmra.mrb[0].mxu0 %v2764
        %v2766 = vpop.f32.mrb[0].mxu0
        %v2767 = vadd.f32 %v2630, %v2766
        %v2768 = vpop.f32.mrb[0].mxu0
        %2769 = vmatprep.mubr.f32.mxu0 0.0
        %v2770 = vand.u32 %v2535, 4294901760
        %2771 = vmatmul.mubr.f32.gmra.mrb[0].mxu0 %v2770
        %v2772 = vpop.f32.mrb[0].mxu0
        %v2773 = vadd.f32 %v2640, %v2772
        %v2774 = vpop.f32.mrb[0].mxu0
        %2775 = vmatprep.mubr.f32.mxu0 0.0
        %v2776 = vand.u32 %v2538, 4294901760
        %2777 = vmatmul.mubr.f32.gmra.mrb[0].mxu0 %v2776
        %v2778 = vpop.f32.mrb[0].mxu0
        %v2779 = vadd.f32 %v2650, %v2778
        %v2780 = vpop.f32.mrb[0].mxu0
        %2781 = vdwg.mxu0
        %2782 = vmatprep.subr.mxu0 0.0
        %v2783 = vand.u32 %v2488, 4294901760
        %v2784 = vsub.f32 %v2488, %v2783
        %2785 = vmatpush1.msra.mxu0 %v2784
        %2786 = vmatprep.subr.mxu0 0.0
        %v2787 = vand.u32 %v2489, 4294901760
        %v2788 = vsub.f32 %v2489, %v2787
        %2789 = vmatpush1.msra.mxu0 %v2788
        %2790 = vmatprep.subr.mxu0 0.0
        %v2791 = vand.u32 %v2490, 4294901760
        %v2792 = vsub.f32 %v2490, %v2791
        %2793 = vmatpush1.msra.mxu0 %v2792
        %2794 = vmatprep.subr.mxu0 0.0
        %v2795 = vand.u32 %v2491, 4294901760
        %v2796 = vsub.f32 %v2491, %v2795
        %2797 = vmatpush1.msra.mxu0 %v2796
        %2798 = vmatprep.subr.mxu0 0.0
        %v2799 = vand.u32 %v2492, 4294901760
        %v2800 = vsub.f32 %v2492, %v2799
        %2801 = vmatpush1.msra.mxu0 %v2800
        %2802 = vmatprep.subr.mxu0 0.0
        %v2803 = vand.u32 %v2493, 4294901760
        %v2804 = vsub.f32 %v2493, %v2803
        %2805 = vmatpush1.msra.mxu0 %v2804
        %2806 = vmatprep.subr.mxu0 0.0
        %v2807 = vand.u32 %v2494, 4294901760
        %v2808 = vsub.f32 %v2494, %v2807
        %2809 = vmatpush1.msra.mxu0 %v2808
        %2810 = vmatprep.subr.mxu0 0.0
        %v2811 = vand.u32 %v2495, 4294901760
        %v2812 = vsub.f32 %v2495, %v2811
        %2813 = vmatpush1.msra.mxu0 %v2812
        %2814 = vmatprep.subr.mxu0 0.0
        %2815 = vmatpush1.msra.mxu0 0.0
        %2816 = vmatprep.subr.mxu0 0.0
        %2817 = vmatpush1.msra.mxu0 0.0
        %2818 = vmatprep.subr.mxu0 0.0
        %2819 = vmatpush1.msra.mxu0 0.0
        %2820 = vmatprep.subr.mxu0 0.0
        %2821 = vmatpush1.msra.mxu0 0.0
        %2822 = vmatprep.subr.mxu0 0.0
        %2823 = vmatpush1.msra.mxu0 0.0
        %2824 = vmatprep.subr.mxu0 0.0
        %2825 = vmatpush1.msra.mxu0 0.0
        %2826 = vmatprep.subr.mxu0 0.0
        %2827 = vmatpush1.msra.mxu0 0.0
        %2828 = vmatprep.subr.mxu0 0.0
        %2829 = vmatpush1.msra.mxu0 0.0
        %2830 = vmatprep.subr.mxu0 0.0
        %2831 = vmatpush1.msra.mxu0 0.0
        %2832 = vmatprep.subr.mxu0 0.0
        %2833 = vmatpush1.msra.mxu0 0.0
        %2834 = vmatprep.subr.mxu0 0.0
        %2835 = vmatpush1.msra.mxu0 0.0
        %2836 = vmatprep.subr.mxu0 0.0
        %2837 = vmatpush1.msra.mxu0 0.0
        %2838 = vmatprep.subr.mxu0 0.0
        %2839 = vmatpush1.msra.mxu0 0.0
        %2840 = vmatprep.subr.mxu0 0.0
        %2841 = vmatpush1.msra.mxu0 0.0
        %2842 = vmatprep.subr.mxu0 0.0
        %2843 = vmatpush1.msra.mxu0 0.0
        %2844 = vmatprep.subr.mxu0 0.0
        %2845 = vmatpush1.msra.mxu0 0.0
        %2846 = vmatprep.subr.mxu0 0.0
        %2847 = vmatpush1.msra.mxu0 0.0
        %2848 = vmatprep.subr.mxu0 0.0
        %2849 = vmatpush1.msra.mxu0 0.0
        %2850 = vmatprep.subr.mxu0 0.0
        %2851 = vmatpush1.msra.mxu0 0.0
        %2852 = vmatprep.subr.mxu0 0.0
        %2853 = vmatpush1.msra.mxu0 0.0
        %2854 = vmatprep.subr.mxu0 0.0
        %2855 = vmatpush1.msra.mxu0 0.0
        %2856 = vmatprep.subr.mxu0 0.0
        %2857 = vmatpush1.msra.mxu0 0.0
        %2858 = vmatprep.subr.mxu0 0.0
        %2859 = vmatpush1.msra.mxu0 0.0
        %2860 = vmatprep.subr.mxu0 0.0
        %2861 = vmatpush1.msra.mxu0 0.0
        %2862 = vmatprep.mubr.f32.mxu0 0.0
        %v2863 = vand.u32 %v2529, 4294901760
        %v2864 = vsub.f32 %v2529, %v2863
        %2865 = vmatmul.mubr.f32.gmra.mrb[0].mxu0 %v2864
        %v2866 = vpop.f32.mrb[0].mxu0
        %v2867 = vadd.f32 %v2761, %v2866
        %v2868 = vpop.f32.mrb[0].mxu0
        %2869 = vmatprep.mubr.f32.mxu0 0.0
        %v2870 = vand.u32 %v2532, 4294901760
        %v2871 = vsub.f32 %v2532, %v2870
        %2872 = vmatmul.mubr.f32.gmra.mrb[0].mxu0 %v2871
        %v2873 = vpop.f32.mrb[0].mxu0
        %v2874 = vadd.f32 %v2767, %v2873
        %v2875 = vpop.f32.mrb[0].mxu0
        %2876 = vmatprep.mubr.f32.mxu0 0.0
        %v2877 = vand.u32 %v2535, 4294901760
        %v2878 = vsub.f32 %v2535, %v2877
        %2879 = vmatmul.mubr.f32.gmra.mrb[0].mxu0 %v2878
        %v2880 = vpop.f32.mrb[0].mxu0
        %v2881 = vadd.f32 %v2773, %v2880
        %v2882 = vpop.f32.mrb[0].mxu0
        %2883 = vmatprep.mubr.f32.mxu0 0.0
        %v2884 = vand.u32 %v2538, 4294901760
        %v2885 = vsub.f32 %v2538, %v2884
        %2886 = vmatmul.mubr.f32.gmra.mrb[0].mxu0 %v2885
        %v2887 = vpop.f32.mrb[0].mxu0
        %v2888 = vadd.f32 %v2779, %v2887
        %v2889 = vpop.f32.mrb[0].mxu0
        %2890 = vdwg.mxu0
        %2891 = vmatprep.subr.mxu0 0.0
        %v2892 = vand.u32 %v2488, 4294901760
        %2893 = vmatpush1.msra.mxu0 %v2892
        %2894 = vmatprep.subr.mxu0 0.0
        %v2895 = vand.u32 %v2489, 4294901760
        %2896 = vmatpush1.msra.mxu0 %v2895
        %2897 = vmatprep.subr.mxu0 0.0
        %v2898 = vand.u32 %v2490, 4294901760
        %2899 = vmatpush1.msra.mxu0 %v2898
        %2900 = vmatprep.subr.mxu0 0.0
        %v2901 = vand.u32 %v2491, 4294901760
        %2902 = vmatpush1.msra.mxu0 %v2901
        %2903 = vmatprep.subr.mxu0 0.0
        %v2904 = vand.u32 %v2492, 4294901760
        %2905 = vmatpush1.msra.mxu0 %v2904
        %2906 = vmatprep.subr.mxu0 0.0
        %v2907 = vand.u32 %v2493, 4294901760
        %2908 = vmatpush1.msra.mxu0 %v2907
        %2909 = vmatprep.subr.mxu0 0.0
        %v2910 = vand.u32 %v2494, 4294901760
        %2911 = vmatpush1.msra.mxu0 %v2910
        %2912 = vmatprep.subr.mxu0 0.0
        %v2913 = vand.u32 %v2495, 4294901760
        %2914 = vmatpush1.msra.mxu0 %v2913
        %2915 = vmatprep.subr.mxu0 0.0
        %2916 = vmatpush1.msra.mxu0 0.0
        %2917 = vmatprep.subr.mxu0 0.0
        %2918 = vmatpush1.msra.mxu0 0.0
        %2919 = vmatprep.subr.mxu0 0.0
        %2920 = vmatpush1.msra.mxu0 0.0
        %2921 = vmatprep.subr.mxu0 0.0
        %2922 = vmatpush1.msra.mxu0 0.0
        %2923 = vmatprep.subr.mxu0 0.0
        %2924 = vmatpush1.msra.mxu0 0.0
        %2925 = vmatprep.subr.mxu0 0.0
        %2926 = vmatpush1.msra.mxu0 0.0
        %2927 = vmatprep.subr.mxu0 0.0
        %2928 = vmatpush1.msra.mxu0 0.0
        %2929 = vmatprep.subr.mxu0 0.0
        %2930 = vmatpush1.msra.mxu0 0.0
        %2931 = vmatprep.subr.mxu0 0.0
        %2932 = vmatpush1.msra.mxu0 0.0
        %2933 = vmatprep.subr.mxu0 0.0
        %2934 = vmatpush1.msra.mxu0 0.0
        %2935 = vmatprep.subr.mxu0 0.0
        %2936 = vmatpush1.msra.mxu0 0.0
        %2937 = vmatprep.subr.mxu0 0.0
        %2938 = vmatpush1.msra.mxu0 0.0
        %2939 = vmatprep.subr.mxu0 0.0
        %2940 = vmatpush1.msra.mxu0 0.0
        %2941 = vmatprep.subr.mxu0 0.0
        %2942 = vmatpush1.msra.mxu0 0.0
        %2943 = vmatprep.subr.mxu0 0.0
        %2944 = vmatpush1.msra.mxu0 0.0
        %2945 = vmatprep.subr.mxu0 0.0
        %2946 = vmatpush1.msra.mxu0 0.0
        %2947 = vmatprep.subr.mxu0 0.0
        %2948 = vmatpush1.msra.mxu0 0.0
        %2949 = vmatprep.subr.mxu0 0.0
        %2950 = vmatpush1.msra.mxu0 0.0
        %2951 = vmatprep.subr.mxu0 0.0
        %2952 = vmatpush1.msra.mxu0 0.0
        %2953 = vmatprep.subr.mxu0 0.0
        %2954 = vmatpush1.msra.mxu0 0.0
        %2955 = vmatprep.subr.mxu0 0.0
        %2956 = vmatpush1.msra.mxu0 0.0
        %2957 = vmatprep.subr.mxu0 0.0
        %2958 = vmatpush1.msra.mxu0 0.0
        %2959 = vmatprep.subr.mxu0 0.0
        %2960 = vmatpush1.msra.mxu0 0.0
        %2961 = vmatprep.subr.mxu0 0.0
        %2962 = vmatpush1.msra.mxu0 0.0
        %2963 = vmatprep.mubr.f32.mxu0 0.0
        %v2964 = vand.u32 %v2529, 4294901760
        %v2965 = vsub.f32 %v2529, %v2964
        %v2966 = vand.u32 %v2965, 4294901760
        %2967 = vmatmul.mubr.f32.gmra.mrb[0].mxu0 %v2966
        %v2968 = vpop.f32.mrb[0].mxu0
        %v2969 = vadd.f32 %v2867, %v2968
        %v2970 = vpop.f32.mrb[0].mxu0
        %2971 = vmatprep.mubr.f32.mxu0 0.0
        %v2972 = vand.u32 %v2532, 4294901760
        %v2973 = vsub.f32 %v2532, %v2972
        %v2974 = vand.u32 %v2973, 4294901760
        %2975 = vmatmul.mubr.f32.gmra.mrb[0].mxu0 %v2974
        %v2976 = vpop.f32.mrb[0].mxu0
        %v2977 = vadd.f32 %v2874, %v2976
        %v2978 = vpop.f32.mrb[0].mxu0
        %2979 = vmatprep.mubr.f32.mxu0 0.0
        %v2980 = vand.u32 %v2535, 4294901760
        %v2981 = vsub.f32 %v2535, %v2980
        %v2982 = vand.u32 %v2981, 4294901760
        %2983 = vmatmul.mubr.f32.gmra.mrb[0].mxu0 %v2982
        %v2984 = vpop.f32.mrb[0].mxu0
        %v2985 = vadd.f32 %v2881, %v2984
        %v2986 = vpop.f32.mrb[0].mxu0
        %2987 = vmatprep.mubr.f32.mxu0 0.0
        %v2988 = vand.u32 %v2538, 4294901760
        %v2989 = vsub.f32 %v2538, %v2988
        %v2990 = vand.u32 %v2989, 4294901760
        %2991 = vmatmul.mubr.f32.gmra.mrb[0].mxu0 %v2990
        %v2992 = vpop.f32.mrb[0].mxu0
        %v2993 = vadd.f32 %v2888, %v2992
        %v2994 = vpop.f32.mrb[0].mxu0
        %2995 = vdwg.mxu0
        %2996 = vmatprep.subr.mxu0 0.0
        %v2997 = vand.u32 %v2488, 4294901760
        %v2998 = vsub.f32 %v2488, %v2997
        %v2999 = vand.u32 %v2998, 4294901760
        %3000 = vmatpush1.msra.mxu0 %v2999
        %3001 = vmatprep.subr.mxu0 0.0
        %v3002 = vand.u32 %v2489, 4294901760
        %v3003 = vsub.f32 %v2489, %v3002
        %v3004 = vand.u32 %v3003, 4294901760
        %3005 = vmatpush1.msra.mxu0 %v3004
        %3006 = vmatprep.subr.mxu0 0.0
        %v3007 = vand.u32 %v2490, 4294901760
        %v3008 = vsub.f32 %v2490, %v3007
        %v3009 = vand.u32 %v3008, 4294901760
        %3010 = vmatpush1.msra.mxu0 %v3009
        %3011 = vmatprep.subr.mxu0 0.0
        %v3012 = vand.u32 %v2491, 4294901760
        %v3013 = vsub.f32 %v2491, %v3012
        %v3014 = vand.u32 %v3013, 4294901760
        %3015 = vmatpush1.msra.mxu0 %v3014
        %3016 = vmatprep.subr.mxu0 0.0
        %v3017 = vand.u32 %v2492, 4294901760
        %v3018 = vsub.f32 %v2492, %v3017
        %v3019 = vand.u32 %v3018, 4294901760
        %3020 = vmatpush1.msra.mxu0 %v3019
        %3021 = vmatprep.subr.mxu0 0.0
        %v3022 = vand.u32 %v2493, 4294901760
        %v3023 = vsub.f32 %v2493, %v3022
        %v3024 = vand.u32 %v3023, 4294901760
        %3025 = vmatpush1.msra.mxu0 %v3024
        %3026 = vmatprep.subr.mxu0 0.0
        %v3027 = vand.u32 %v2494, 4294901760
        %v3028 = vsub.f32 %v2494, %v3027
        %v3029 = vand.u32 %v3028, 4294901760
        %3030 = vmatpush1.msra.mxu0 %v3029
        %3031 = vmatprep.subr.mxu0 0.0
        %v3032 = vand.u32 %v2495, 4294901760
        %v3033 = vsub.f32 %v2495, %v3032
        %v3034 = vand.u32 %v3033, 4294901760
        %3035 = vmatpush1.msra.mxu0 %v3034
        %3036 = vmatprep.subr.mxu0 0.0
        %3037 = vmatpush1.msra.mxu0 0.0
        %3038 = vmatprep.subr.mxu0 0.0
        %3039 = vmatpush1.msra.mxu0 0.0
        %3040 = vmatprep.subr.mxu0 0.0
        %3041 = vmatpush1.msra.mxu0 0.0
        %3042 = vmatprep.subr.mxu0 0.0
        %3043 = vmatpush1.msra.mxu0 0.0
        %3044 = vmatprep.subr.mxu0 0.0
        %3045 = vmatpush1.msra.mxu0 0.0
        %3046 = vmatprep.subr.mxu0 0.0
        %3047 = vmatpush1.msra.mxu0 0.0
        %3048 = vmatprep.subr.mxu0 0.0
        %3049 = vmatpush1.msra.mxu0 0.0
        %3050 = vmatprep.subr.mxu0 0.0
        %3051 = vmatpush1.msra.mxu0 0.0
        %3052 = vmatprep.subr.mxu0 0.0
        %3053 = vmatpush1.msra.mxu0 0.0
        %3054 = vmatprep.subr.mxu0 0.0
        %3055 = vmatpush1.msra.mxu0 0.0
        %3056 = vmatprep.subr.mxu0 0.0
        %3057 = vmatpush1.msra.mxu0 0.0
        %3058 = vmatprep.subr.mxu0 0.0
        %3059 = vmatpush1.msra.mxu0 0.0
        %3060 = vmatprep.subr.mxu0 0.0
        %3061 = vmatpush1.msra.mxu0 0.0
        %3062 = vmatprep.subr.mxu0 0.0
        %3063 = vmatpush1.msra.mxu0 0.0
        %3064 = vmatprep.subr.mxu0 0.0
        %3065 = vmatpush1.msra.mxu0 0.0
        %3066 = vmatprep.subr.mxu0 0.0
        %3067 = vmatpush1.msra.mxu0 0.0
        %3068 = vmatprep.subr.mxu0 0.0
        %3069 = vmatpush1.msra.mxu0 0.0
        %3070 = vmatprep.subr.mxu0 0.0
        %3071 = vmatpush1.msra.mxu0 0.0
        %3072 = vmatprep.subr.mxu0 0.0
        %3073 = vmatpush1.msra.mxu0 0.0
        %3074 = vmatprep.subr.mxu0 0.0
        %3075 = vmatpush1.msra.mxu0 0.0
        %3076 = vmatprep.subr.mxu0 0.0
        %3077 = vmatpush1.msra.mxu0 0.0
        %3078 = vmatprep.subr.mxu0 0.0
        %3079 = vmatpush1.msra.mxu0 0.0
        %3080 = vmatprep.subr.mxu0 0.0
        %3081 = vmatpush1.msra.mxu0 0.0
        %3082 = vmatprep.subr.mxu0 0.0
        %3083 = vmatpush1.msra.mxu0 0.0
        %3084 = vmatprep.mubr.f32.mxu0 0.0
        %v3085 = vand.u32 %v2529, 4294901760
        %3086 = vmatmul.mubr.f32.gmra.mrb[0].mxu0 %v3085
        %v3087 = vpop.f32.mrb[0].mxu0
        %v3088 = vadd.f32 %v2969, %v3087
        %v3089 = vpop.f32.mrb[0].mxu0
        %3090 = vmatprep.mubr.f32.mxu0 0.0
        %v3091 = vand.u32 %v2532, 4294901760
        %3092 = vmatmul.mubr.f32.gmra.mrb[0].mxu0 %v3091
        %v3093 = vpop.f32.mrb[0].mxu0
        %v3094 = vadd.f32 %v2977, %v3093
        %v3095 = vpop.f32.mrb[0].mxu0
        %3096 = vmatprep.mubr.f32.mxu0 0.0
        %v3097 = vand.u32 %v2535, 4294901760
        %3098 = vmatmul.mubr.f32.gmra.mrb[0].mxu0 %v3097
        %v3099 = vpop.f32.mrb[0].mxu0
        %v3100 = vadd.f32 %v2985, %v3099
        %v3101 = vpop.f32.mrb[0].mxu0
        %3102 = vmatprep.mubr.f32.mxu0 0.0
        %v3103 = vand.u32 %v2538, 4294901760
        %3104 = vmatmul.mubr.f32.gmra.mrb[0].mxu0 %v3103
        %v3105 = vpop.f32.mrb[0].mxu0
        %v3106 = vadd.f32 %v2993, %v3105
        %v3107 = vpop.f32.mrb[0].mxu0
        %3108 = vdwg.mxu0
        %3109 = vmatprep.subr.mxu0 0.0
        %v3110 = vand.u32 %v2488, 4294901760
        %3111 = vmatpush1.msra.mxu0 %v3110
        %3112 = vmatprep.subr.mxu0 0.0
        %v3113 = vand.u32 %v2489, 4294901760
        %3114 = vmatpush1.msra.mxu0 %v3113
        %3115 = vmatprep.subr.mxu0 0.0
        %v3116 = vand.u32 %v2490, 4294901760
        %3117 = vmatpush1.msra.mxu0 %v3116
        %3118 = vmatprep.subr.mxu0 0.0
        %v3119 = vand.u32 %v2491, 4294901760
        %3120 = vmatpush1.msra.mxu0 %v3119
        %3121 = vmatprep.subr.mxu0 0.0
        %v3122 = vand.u32 %v2492, 4294901760
        %3123 = vmatpush1.msra.mxu0 %v3122
        %3124 = vmatprep.subr.mxu0 0.0
        %v3125 = vand.u32 %v2493, 4294901760
        %3126 = vmatpush1.msra.mxu0 %v3125
        %3127 = vmatprep.subr.mxu0 0.0
        %v3128 = vand.u32 %v2494, 4294901760
        %3129 = vmatpush1.msra.mxu0 %v3128
        %3130 = vmatprep.subr.mxu0 0.0
        %v3131 = vand.u32 %v2495, 4294901760
        %3132 = vmatpush1.msra.mxu0 %v3131
        %3133 = vmatprep.subr.mxu0 0.0
        %3134 = vmatpush1.msra.mxu0 0.0
        %3135 = vmatprep.subr.mxu0 0.0
        %3136 = vmatpush1.msra.mxu0 0.0
        %3137 = vmatprep.subr.mxu0 0.0
        %3138 = vmatpush1.msra.mxu0 0.0
        %3139 = vmatprep.subr.mxu0 0.0
        %3140 = vmatpush1.msra.mxu0 0.0
        %3141 = vmatprep.subr.mxu0 0.0
        %3142 = vmatpush1.msra.mxu0 0.0
        %3143 = vmatprep.subr.mxu0 0.0
        %3144 = vmatpush1.msra.mxu0 0.0
        %3145 = vmatprep.subr.mxu0 0.0
        %3146 = vmatpush1.msra.mxu0 0.0
        %3147 = vmatprep.subr.mxu0 0.0
        %3148 = vmatpush1.msra.mxu0 0.0
        %3149 = vmatprep.subr.mxu0 0.0
        %3150 = vmatpush1.msra.mxu0 0.0
        %3151 = vmatprep.subr.mxu0 0.0
        %3152 = vmatpush1.msra.mxu0 0.0
        %3153 = vmatprep.subr.mxu0 0.0
        %3154 = vmatpush1.msra.mxu0 0.0
        %3155 = vmatprep.subr.mxu0 0.0
        %3156 = vmatpush1.msra.mxu0 0.0
        %3157 = vmatprep.subr.mxu0 0.0
        %3158 = vmatpush1.msra.mxu0 0.0
        %3159 = vmatprep.subr.mxu0 0.0
        %3160 = vmatpush1.msra.mxu0 0.0
        %3161 = vmatprep.subr.mxu0 0.0
        %3162 = vmatpush1.msra.mxu0 0.0
        %3163 = vmatprep.subr.mxu0 0.0
        %3164 = vmatpush1.msra.mxu0 0.0
        %3165 = vmatprep.subr.mxu0 0.0
        %3166 = vmatpush1.msra.mxu0 0.0
        %3167 = vmatprep.subr.mxu0 0.0
        %3168 = vmatpush1.msra.mxu0 0.0
        %3169 = vmatprep.subr.mxu0 0.0
        %3170 = vmatpush1.msra.mxu0 0.0
        %3171 = vmatprep.subr.mxu0 0.0
        %3172 = vmatpush1.msra.mxu0 0.0
        %3173 = vmatprep.subr.mxu0 0.0
        %3174 = vmatpush1.msra.mxu0 0.0
        %3175 = vmatprep.subr.mxu0 0.0
        %3176 = vmatpush1.msra.mxu0 0.0
        %3177 = vmatprep.subr.mxu0 0.0
        %3178 = vmatpush1.msra.mxu0 0.0
        %3179 = vmatprep.subr.mxu0 0.0
        %3180 = vmatpush1.msra.mxu0 0.0
        %3181 = vmatprep.mubr.f32.mxu0 0.0
        %v3182 = vand.u32 %v2529, 4294901760
        %3183 = vmatmul.mubr.f32.gmra.mrb[0].mxu0 %v3182
        %v3184 = vpop.f32.mrb[0].mxu0
        %v3185 = vadd.f32 %v3088, %v3184
        %v3186 = vpop.f32.mrb[0].mxu0
        %3187 = vmatprep.mubr.f32.mxu0 0.0
        %v3188 = vand.u32 %v2532, 4294901760
        %3189 = vmatmul.mubr.f32.gmra.mrb[0].mxu0 %v3188
        %v3190 = vpop.f32.mrb[0].mxu0
        %v3191 = vadd.f32 %v3094, %v3190
        %v3192 = vpop.f32.mrb[0].mxu0
        %3193 = vmatprep.mubr.f32.mxu0 0.0
        %v3194 = vand.u32 %v2535, 4294901760
        %3195 = vmatmul.mubr.f32.gmra.mrb[0].mxu0 %v3194
        %v3196 = vpop.f32.mrb[0].mxu0
        %v3197 = vadd.f32 %v3100, %v3196
        %v3198 = vpop.f32.mrb[0].mxu0
        %3199 = vmatprep.mubr.f32.mxu0 0.0
        %v3200 = vand.u32 %v2538, 4294901760
        %3201 = vmatmul.mubr.f32.gmra.mrb[0].mxu0 %v3200
        %v3202 = vpop.f32.mrb[0].mxu0
        %v3203 = vadd.f32 %v3106, %v3202
        %v3204 = vpop.f32.mrb[0].mxu0
        %3205 = vdwg.mxu0
        %v3206 = vsub.f32 %v2213, %v3185
        %v3207 = vsub.f32 %v2214, %v3191
        %v3208 = vsub.f32 %v2215, %v3197
        %v3209 = vsub.f32 %v2216, %v3203
        %s3210 = scalar_lea.vmem %s1, 192
        %v3211 = vld [vmem:[%s3210] sm:$0xff]
        %v3212 = vld [vmem:[%s3210 + $0x8] sm:$0xff]
        %v3213 = vld [vmem:[%s3210 + $0x10] sm:$0xff]
        %v3214 = vld [vmem:[%s3210 + $0x18] sm:$0xff]
        %v3215 = vld [vmem:[%s3210 + $0x20] sm:$0xff]
        %v3216 = vld [vmem:[%s3210 + $0x28] sm:$0xff]
        %v3217 = vld [vmem:[%s3210 + $0x30] sm:$0xff]
        %v3218 = vld [vmem:[%s3210 + $0x38] sm:$0xff]
        %v3219 = vmul.f32 %v3211, %v3211
        %v3220 = vmul.f32 %v3212, %v3212
        %v3221 = vmul.f32 %v3213, %v3213
        %v3222 = vmul.f32 %v3214, %v3214
        %v3223 = vmul.f32 %v3215, %v3215
        %v3224 = vmul.f32 %v3216, %v3216
        %v3225 = vmul.f32 %v3217, %v3217
        %v3226 = vmul.f32 %v3218, %v3218
        %v3227 = vsel %vm244, %v3219, 0.0
        %3228 = vadd.xlane.f32.xlu0 %v3227
        %v3229 = vpop.xlane.xlu0 %3228
        %v3230 = vsel %vm244, %v3220, 0.0
        %3231 = vadd.xlane.f32.xlu0 %v3230
        %v3232 = vpop.xlane.xlu0 %3231
        %v3233 = vsel %vm244, %v3221, 0.0
        %3234 = vadd.xlane.f32.xlu0 %v3233
        %v3235 = vpop.xlane.xlu0 %3234
        %v3236 = vsel %vm244, %v3222, 0.0
        %3237 = vadd.xlane.f32.xlu0 %v3236
        %v3238 = vpop.xlane.xlu0 %3237
        %v3239 = vsel %vm244, %v3223, 0.0
        %3240 = vadd.xlane.f32.xlu0 %v3239
        %v3241 = vpop.xlane.xlu0 %3240
        %v3242 = vsel %vm244, %v3224, 0.0
        %3243 = vadd.xlane.f32.xlu0 %v3242
        %v3244 = vpop.xlane.xlu0 %3243
        %v3245 = vsel %vm244, %v3225, 0.0
        %3246 = vadd.xlane.f32.xlu0 %v3245
        %v3247 = vpop.xlane.xlu0 %3246
        %v3248 = vsel %vm244, %v3226, 0.0
        %3249 = vadd.xlane.f32.xlu0 %v3248
        %v3250 = vpop.xlane.xlu0 %3249
        %v3251 = vmul.f32 %v3229, 0.5
        %v3252 = vmul.f32 %v3232, 0.5
        %v3253 = vmul.f32 %v3235, 0.5
        %v3254 = vmul.f32 %v3238, 0.5
        %v3255 = vmul.f32 %v3241, 0.5
        %v3256 = vmul.f32 %v3244, 0.5
        %v3257 = vmul.f32 %v3247, 0.5
        %v3258 = vmul.f32 %v3250, 0.5
        %v3260 = vsel %vm244, %v3211, 0
        %v3263 = vsel %vm244, %v3212, 0
        %v3266 = vsel %vm244, %v3213, 0
        %v3269 = vsel %vm244, %v3214, 0
        %v3272 = vsel %vm244, %v3215, 0
        %v3275 = vsel %vm244, %v3216, 0
        %v3278 = vsel %vm244, %v3217, 0
        %v3281 = vsel %vm244, %v3218, 0
        %3283 = vmatprep.subr.mxu0 0.0
        %3284 = vmatpush1.msra.mxu0 %v3206
        %3285 = vmatprep.subr.mxu0 0.0
        %3286 = vmatpush1.msra.mxu0 %v3207
        %3287 = vmatprep.subr.mxu0 0.0
        %3288 = vmatpush1.msra.mxu0 %v3208
        %3289 = vmatprep.subr.mxu0 0.0
        %3290 = vmatpush1.msra.mxu0 %v3209
        %3291 = vmatprep.subr.mxu0 0.0
        %3292 = vmatpush1.msra.mxu0 0.0
        %3293 = vmatprep.subr.mxu0 0.0
        %3294 = vmatpush1.msra.mxu0 0.0
        %3295 = vmatprep.subr.mxu0 0.0
        %3296 = vmatpush1.msra.mxu0 0.0
        %3297 = vmatprep.subr.mxu0 0.0
        %3298 = vmatpush1.msra.mxu0 0.0
        %3299 = vmatprep.subr.mxu0 0.0
        %3300 = vmatpush1.msra.mxu0 0.0
        %3301 = vmatprep.subr.mxu0 0.0
        %3302 = vmatpush1.msra.mxu0 0.0
        %3303 = vmatprep.subr.mxu0 0.0
        %3304 = vmatpush1.msra.mxu0 0.0
        %3305 = vmatprep.subr.mxu0 0.0
        %3306 = vmatpush1.msra.mxu0 0.0
        %3307 = vmatprep.subr.mxu0 0.0
        %3308 = vmatpush1.msra.mxu0 0.0
        %3309 = vmatprep.subr.mxu0 0.0
        %3310 = vmatpush1.msra.mxu0 0.0
        %3311 = vmatprep.subr.mxu0 0.0
        %3312 = vmatpush1.msra.mxu0 0.0
        %3313 = vmatprep.subr.mxu0 0.0
        %3314 = vmatpush1.msra.mxu0 0.0
        %3315 = vmatprep.subr.mxu0 0.0
        %3316 = vmatpush1.msra.mxu0 0.0
        %3317 = vmatprep.subr.mxu0 0.0
        %3318 = vmatpush1.msra.mxu0 0.0
        %3319 = vmatprep.subr.mxu0 0.0
        %3320 = vmatpush1.msra.mxu0 0.0
        %3321 = vmatprep.subr.mxu0 0.0
        %3322 = vmatpush1.msra.mxu0 0.0
        %3323 = vmatprep.subr.mxu0 0.0
        %3324 = vmatpush1.msra.mxu0 0.0
        %3325 = vmatprep.subr.mxu0 0.0
        %3326 = vmatpush1.msra.mxu0 0.0
        %3327 = vmatprep.subr.mxu0 0.0
        %3328 = vmatpush1.msra.mxu0 0.0
        %3329 = vmatprep.subr.mxu0 0.0
        %3330 = vmatpush1.msra.mxu0 0.0
        %3331 = vmatprep.subr.mxu0 0.0
        %3332 = vmatpush1.msra.mxu0 0.0
        %3333 = vmatprep.subr.mxu0 0.0
        %3334 = vmatpush1.msra.mxu0 0.0
        %3335 = vmatprep.subr.mxu0 0.0
        %3336 = vmatpush1.msra.mxu0 0.0
        %3337 = vmatprep.subr.mxu0 0.0
        %3338 = vmatpush1.msra.mxu0 0.0
        %3339 = vmatprep.subr.mxu0 0.0
        %3340 = vmatpush1.msra.mxu0 0.0
        %3341 = vmatprep.subr.mxu0 0.0
        %3342 = vmatpush1.msra.mxu0 0.0
        %3343 = vmatprep.subr.mxu0 0.0
        %3344 = vmatpush1.msra.mxu0 0.0
        %3345 = vmatprep.subr.mxu0 0.0
        %3346 = vmatpush1.msra.mxu0 0.0
        %3347 = vmatprep.mubr.f32.mxu0 0.0
        %3348 = vmatmul.mubr.f32.gmra.mrb[0].mxu0 %v3260
        %v3349 = vpop.f32.mrb[0].mxu0
        %v3350 = vadd.f32 0.0, %v3349
        %v3351 = vpop.f32.mrb[0].mxu0
        %3352 = vmatprep.mubr.f32.mxu0 0.0
        %3353 = vmatmul.mubr.f32.gmra.mrb[0].mxu0 %v3263
        %v3354 = vpop.f32.mrb[0].mxu0
        %v3355 = vadd.f32 0.0, %v3354
        %v3356 = vpop.f32.mrb[0].mxu0
        %3357 = vmatprep.mubr.f32.mxu0 0.0
        %3358 = vmatmul.mubr.f32.gmra.mrb[0].mxu0 %v3266
        %v3359 = vpop.f32.mrb[0].mxu0
        %v3360 = vadd.f32 0.0, %v3359
        %v3361 = vpop.f32.mrb[0].mxu0
        %3362 = vmatprep.mubr.f32.mxu0 0.0
        %3363 = vmatmul.mubr.f32.gmra.mrb[0].mxu0 %v3269
        %v3364 = vpop.f32.mrb[0].mxu0
        %v3365 = vadd.f32 0.0, %v3364
        %v3366 = vpop.f32.mrb[0].mxu0
        %3367 = vmatprep.mubr.f32.mxu0 0.0
        %3368 = vmatmul.mubr.f32.gmra.mrb[0].mxu0 %v3272
        %v3369 = vpop.f32.mrb[0].mxu0
        %v3370 = vadd.f32 0.0, %v3369
        %v3371 = vpop.f32.mrb[0].mxu0
        %3372 = vmatprep.mubr.f32.mxu0 0.0
        %3373 = vmatmul.mubr.f32.gmra.mrb[0].mxu0 %v3275
        %v3374 = vpop.f32.mrb[0].mxu0
        %v3375 = vadd.f32 0.0, %v3374
        %v3376 = vpop.f32.mrb[0].mxu0
        %3377 = vmatprep.mubr.f32.mxu0 0.0
        %3378 = vmatmul.mubr.f32.gmra.mrb[0].mxu0 %v3278
        %v3379 = vpop.f32.mrb[0].mxu0
        %v3380 = vadd.f32 0.0, %v3379
        %v3381 = vpop.f32.mrb[0].mxu0
        %3382 = vmatprep.mubr.f32.mxu0 0.0
        %3383 = vmatmul.mubr.f32.gmra.mrb[0].mxu0 %v3281
        %v3384 = vpop.f32.mrb[0].mxu0
        %v3385 = vadd.f32 0.0, %v3384
        %v3386 = vpop.f32.mrb[0].mxu0
        %3387 = vdwg.mxu0
        %v3388 = vsub.f32 %v3350, %v3251
        %v3389 = vsub.f32 %v3355, %v3252
        %v3390 = vsub.f32 %v3360, %v3253
        %v3391 = vsub.f32 %v3365, %v3254
        %v3392 = vsub.f32 %v3370, %v3255
        %v3393 = vsub.f32 %v3375, %v3256
        %v3394 = vsub.f32 %v3380, %v3257
        %v3395 = vsub.f32 %v3385, %v3258
        %v3396 = vsel %vm414, %v3388, -inf
        %v3397 = vsel %vm414, %v3389, -inf
        %v3398 = vsel %vm414, %v3390, -inf
        %v3399 = vsel %vm414, %v3391, -inf
        %v3400 = vsel %vm414, %v3392, -inf
        %v3401 = vmax.f32 %v3396, %v3400
        %v3402 = vsel %vm414, %v3393, -inf
        %v3403 = vmax.f32 %v3397, %v3402
        %v3404 = vsel %vm414, %v3394, -inf
        %v3405 = vmax.f32 %v3398, %v3404
        %v3406 = vsel %vm414, %v3395, -inf
        %v3407 = vmax.f32 %v3399, %v3406
        %v3408 = vmax.f32 %v3401, %v3403
        %v3409 = vmax.f32 %v3405, %v3407
        %v3410 = vmax.f32 %v3408, %v3409
        %v3411 = vrot.slane %v3410, 4
        %v3412 = vmax.f32 %v3410, %v3411
        %v3413 = vrot.slane %v3412, 2
        %v3414 = vmax.f32 %v3412, %v3413
        %v3415 = vrot.slane %v3414, 1
        %v3416 = vmax.f32 %v3414, %v3415
        %vm3417 = vcmp.eq.f32.partialorder %v3388, %v3416
        %vm3418 = vcmp.eq.f32.partialorder %v3389, %v3416
        %vm3419 = vcmp.eq.f32.partialorder %v3390, %v3416
        %vm3420 = vcmp.eq.f32.partialorder %v3391, %v3416
        %vm3421 = vcmp.eq.f32.partialorder %v3392, %v3416
        %vm3422 = vcmp.eq.f32.partialorder %v3393, %v3416
        %vm3423 = vcmp.eq.f32.partialorder %v3394, %v3416
        %vm3424 = vcmp.eq.f32.partialorder %v3395, %v3416
        %v3425 = vsel %vm3417, %v220, 64
        %v3426 = vsel %vm3418, %v221, 64
        %v3427 = vsel %vm3419, %v222, 64
        %v3428 = vsel %vm3420, %v223, 64
        %v3429 = vsel %vm3421, %v224, 64
        %v3430 = vsel %vm3422, %v225, 64
        %v3431 = vsel %vm3423, %v226, 64
        %v3432 = vsel %vm3424, %v227, 64
        %v3433 = vsel %vm414, %v3425, 2147483647
        %v3434 = vsel %vm414, %v3426, 2147483647
        %v3435 = vsel %vm414, %v3427, 2147483647
        %v3436 = vsel %vm414, %v3428, 2147483647
        %v3437 = vsel %vm414, %v3429, 2147483647
        %vm3438 = vcmp.lt.s32.totalorder %v3433, %v3437
        %v3439 = vsel %vm3438, %v3433, %v3437
        %v3440 = vsel %vm414, %v3430, 2147483647
        %vm3441 = vcmp.lt.s32.totalorder %v3434, %v3440
        %v3442 = vsel %vm3441, %v3434, %v3440
        %v3443 = vsel %vm414, %v3431, 2147483647
        %vm3444 = vcmp.lt.s32.totalorder %v3435, %v3443
        %v3445 = vsel %vm3444, %v3435, %v3443
        %v3446 = vsel %vm414, %v3432, 2147483647
        %vm3447 = vcmp.lt.s32.totalorder %v3436, %v3446
        %v3448 = vsel %vm3447, %v3436, %v3446
        %vm3449 = vcmp.lt.s32.totalorder %v3439, %v3442
        %v3450 = vsel %vm3449, %v3439, %v3442
        %vm3451 = vcmp.lt.s32.totalorder %v3445, %v3448
        %v3452 = vsel %vm3451, %v3445, %v3448
        %vm3453 = vcmp.lt.s32.totalorder %v3450, %v3452
        %v3454 = vsel %vm3453, %v3450, %v3452
        %v3455 = vrot.slane %v3454, 4
        %vm3456 = vcmp.lt.s32.totalorder %v3454, %v3455
        %v3457 = vsel %vm3456, %v3454, %v3455
        %v3458 = vrot.slane %v3457, 2
        %vm3459 = vcmp.lt.s32.totalorder %v3457, %v3458
        %v3460 = vsel %vm3459, %v3457, %v3458
        %v3461 = vrot.slane %v3460, 1
        %vm3462 = vcmp.lt.s32.totalorder %v3460, %v3461
        %v3463 = vsel %vm3462, %v3460, %v3461
        %3464 = vst.msk [vmem:[%s198 + $0x3] sm:$0x1] %vm483, %v3463
        %vm3465 = vcmp.eq.s32.totalorder %v220, %v3463
        %vm3466 = vcmp.eq.s32.totalorder %v221, %v3463
        %vm3467 = vcmp.eq.s32.totalorder %v222, %v3463
        %vm3468 = vcmp.eq.s32.totalorder %v223, %v3463
        %vm3469 = vcmp.eq.s32.totalorder %v224, %v3463
        %vm3470 = vcmp.eq.s32.totalorder %v225, %v3463
        %vm3471 = vcmp.eq.s32.totalorder %v226, %v3463
        %vm3472 = vcmp.eq.s32.totalorder %v227, %v3463
        %v3473 = vsel %vm3465, 1, 0
        %v3474 = vsel %vm3466, 1, 0
        %v3475 = vsel %vm3467, 1, 0
        %v3476 = vsel %vm3468, 1, 0
        %v3477 = vsel %vm3469, 1, 0
        %v3478 = vsel %vm3470, 1, 0
        %v3479 = vsel %vm3471, 1, 0
        %v3480 = vsel %vm3472, 1, 0
        %v3481 = vcvt.s32.f32 %v3473
        %v3482 = vcvt.s32.f32 %v3474
        %v3483 = vcvt.s32.f32 %v3475
        %v3484 = vcvt.s32.f32 %v3476
        %v3485 = vcvt.s32.f32 %v3477
        %v3486 = vcvt.s32.f32 %v3478
        %v3487 = vcvt.s32.f32 %v3479
        %v3488 = vcvt.s32.f32 %v3480
        %3489 = vxpose.xlu0.b32.start [1/16] %v3211, 128
        %3490 = vxpose.xlu0.b32.cont [2/16] %v3212, 128
        %3491 = vxpose.xlu0.b32.cont [3/16] %v3213, 128
        %3492 = vxpose.xlu0.b32.cont [4/16] %v3214, 128
        %3493 = vxpose.xlu0.b32.cont [5/16] %v3215, 128
        %3494 = vxpose.xlu0.b32.cont [6/16] %v3216, 128
        %3495 = vxpose.xlu0.b32.cont [7/16] %v3217, 128
        %3496 = vxpose.xlu0.b32.cont [8/16] %v3218, 128
        %3497 = vxpose.xlu0.b32.cont [9/16] 0.0, 128
        %3498 = vxpose.xlu0.b32.cont [10/16] 0.0, 128
        %3499 = vxpose.xlu0.b32.cont [11/16] 0.0, 128
        %3500 = vxpose.xlu0.b32.cont [12/16] 0.0, 128
        %3501 = vxpose.xlu0.b32.cont [13/16] 0.0, 128
        %3502 = vxpose.xlu0.b32.cont [14/16] 0.0, 128
        %3503 = vxpose.xlu0.b32.cont [15/16] 0.0, 128
        %3504 = vxpose.xlu0.b32.end [16/16] 0.0, 128
        %v3505 = vpop.trf.xlu0
        %v3506 = vpop.trf.xlu0
        %v3507 = vpop.trf.xlu0
        %v3508 = vpop.trf.xlu0
        %v3509 = vpop.trf.xlu0
        %v3510 = vpop.trf.xlu0
        %v3511 = vpop.trf.xlu0
        %v3512 = vpop.trf.xlu0
        %v3513 = vpop.trf.xlu0
        %v3514 = vpop.trf.xlu0
        %v3515 = vpop.trf.xlu0
        %v3516 = vpop.trf.xlu0
        %v3517 = vpop.trf.xlu0
        %v3518 = vpop.trf.xlu0
        %v3519 = vpop.trf.xlu0
        %v3520 = vpop.trf.xlu0
        %v3522 = vsel %vm541, %v3505, 0
        %v3525 = vsel %vm541, %v3506, 0
        %v3528 = vsel %vm541, %v3507, 0
        %v3531 = vsel %vm541, %v3508, 0
        %3533 = vmatprep.subr.mxu0 0.0
        %v3534 = vand.u32 %v3481, 4294901760
        %3535 = vmatpush1.msra.mxu0 %v3534
        %3536 = vmatprep.subr.mxu0 0.0
        %v3537 = vand.u32 %v3482, 4294901760
        %3538 = vmatpush1.msra.mxu0 %v3537
        %3539 = vmatprep.subr.mxu0 0.0
        %v3540 = vand.u32 %v3483, 4294901760
        %3541 = vmatpush1.msra.mxu0 %v3540
        %3542 = vmatprep.subr.mxu0 0.0
        %v3543 = vand.u32 %v3484, 4294901760
        %3544 = vmatpush1.msra.mxu0 %v3543
        %3545 = vmatprep.subr.mxu0 0.0
        %v3546 = vand.u32 %v3485, 4294901760
        %3547 = vmatpush1.msra.mxu0 %v3546
        %3548 = vmatprep.subr.mxu0 0.0
        %v3549 = vand.u32 %v3486, 4294901760
        %3550 = vmatpush1.msra.mxu0 %v3549
        %3551 = vmatprep.subr.mxu0 0.0
        %v3552 = vand.u32 %v3487, 4294901760
        %3553 = vmatpush1.msra.mxu0 %v3552
        %3554 = vmatprep.subr.mxu0 0.0
        %v3555 = vand.u32 %v3488, 4294901760
        %3556 = vmatpush1.msra.mxu0 %v3555
        %3557 = vmatprep.subr.mxu0 0.0
        %3558 = vmatpush1.msra.mxu0 0.0
        %3559 = vmatprep.subr.mxu0 0.0
        %3560 = vmatpush1.msra.mxu0 0.0
        %3561 = vmatprep.subr.mxu0 0.0
        %3562 = vmatpush1.msra.mxu0 0.0
        %3563 = vmatprep.subr.mxu0 0.0
        %3564 = vmatpush1.msra.mxu0 0.0
        %3565 = vmatprep.subr.mxu0 0.0
        %3566 = vmatpush1.msra.mxu0 0.0
        %3567 = vmatprep.subr.mxu0 0.0
        %3568 = vmatpush1.msra.mxu0 0.0
        %3569 = vmatprep.subr.mxu0 0.0
        %3570 = vmatpush1.msra.mxu0 0.0
        %3571 = vmatprep.subr.mxu0 0.0
        %3572 = vmatpush1.msra.mxu0 0.0
        %3573 = vmatprep.subr.mxu0 0.0
        %3574 = vmatpush1.msra.mxu0 0.0
        %3575 = vmatprep.subr.mxu0 0.0
        %3576 = vmatpush1.msra.mxu0 0.0
        %3577 = vmatprep.subr.mxu0 0.0
        %3578 = vmatpush1.msra.mxu0 0.0
        %3579 = vmatprep.subr.mxu0 0.0
        %3580 = vmatpush1.msra.mxu0 0.0
        %3581 = vmatprep.subr.mxu0 0.0
        %3582 = vmatpush1.msra.mxu0 0.0
        %3583 = vmatprep.subr.mxu0 0.0
        %3584 = vmatpush1.msra.mxu0 0.0
        %3585 = vmatprep.subr.mxu0 0.0
        %3586 = vmatpush1.msra.mxu0 0.0
        %3587 = vmatprep.subr.mxu0 0.0
        %3588 = vmatpush1.msra.mxu0 0.0
        %3589 = vmatprep.subr.mxu0 0.0
        %3590 = vmatpush1.msra.mxu0 0.0
        %3591 = vmatprep.subr.mxu0 0.0
        %3592 = vmatpush1.msra.mxu0 0.0
        %3593 = vmatprep.subr.mxu0 0.0
        %3594 = vmatpush1.msra.mxu0 0.0
        %3595 = vmatprep.subr.mxu0 0.0
        %3596 = vmatpush1.msra.mxu0 0.0
        %3597 = vmatprep.subr.mxu0 0.0
        %3598 = vmatpush1.msra.mxu0 0.0
        %3599 = vmatprep.subr.mxu0 0.0
        %3600 = vmatpush1.msra.mxu0 0.0
        %3601 = vmatprep.subr.mxu0 0.0
        %3602 = vmatpush1.msra.mxu0 0.0
        %3603 = vmatprep.subr.mxu0 0.0
        %3604 = vmatpush1.msra.mxu0 0.0
        %3605 = vmatprep.mubr.f32.mxu0 0.0
        %v3606 = vand.u32 %v3522, 4294901760
        %v3607 = vsub.f32 %v3522, %v3606
        %v3608 = vand.u32 %v3607, 4294901760
        %v3609 = vsub.f32 %v3607, %v3608
        %v3610 = vand.u32 %v3609, 4294901760
        %3611 = vmatmul.mubr.f32.gmra.mrb[0].mxu0 %v3610
        %v3612 = vpop.f32.mrb[0].mxu0
        %v3613 = vadd.f32 0.0, %v3612
        %v3614 = vpop.f32.mrb[0].mxu0
        %3615 = vmatprep.mubr.f32.mxu0 0.0
        %v3616 = vand.u32 %v3525, 4294901760
        %v3617 = vsub.f32 %v3525, %v3616
        %v3618 = vand.u32 %v3617, 4294901760
        %v3619 = vsub.f32 %v3617, %v3618
        %v3620 = vand.u32 %v3619, 4294901760
        %3621 = vmatmul.mubr.f32.gmra.mrb[0].mxu0 %v3620
        %v3622 = vpop.f32.mrb[0].mxu0
        %v3623 = vadd.f32 0.0, %v3622
        %v3624 = vpop.f32.mrb[0].mxu0
        %3625 = vmatprep.mubr.f32.mxu0 0.0
        %v3626 = vand.u32 %v3528, 4294901760
        %v3627 = vsub.f32 %v3528, %v3626
        %v3628 = vand.u32 %v3627, 4294901760
        %v3629 = vsub.f32 %v3627, %v3628
        %v3630 = vand.u32 %v3629, 4294901760
        %3631 = vmatmul.mubr.f32.gmra.mrb[0].mxu0 %v3630
        %v3632 = vpop.f32.mrb[0].mxu0
        %v3633 = vadd.f32 0.0, %v3632
        %v3634 = vpop.f32.mrb[0].mxu0
        %3635 = vmatprep.mubr.f32.mxu0 0.0
        %v3636 = vand.u32 %v3531, 4294901760
        %v3637 = vsub.f32 %v3531, %v3636
        %v3638 = vand.u32 %v3637, 4294901760
        %v3639 = vsub.f32 %v3637, %v3638
        %v3640 = vand.u32 %v3639, 4294901760
        %3641 = vmatmul.mubr.f32.gmra.mrb[0].mxu0 %v3640
        %v3642 = vpop.f32.mrb[0].mxu0
        %v3643 = vadd.f32 0.0, %v3642
        %v3644 = vpop.f32.mrb[0].mxu0
        %3645 = vdwg.mxu0
        %3646 = vmatprep.subr.mxu0 0.0
        %v3647 = vand.u32 %v3481, 4294901760
        %v3648 = vsub.f32 %v3481, %v3647
        %v3649 = vand.u32 %v3648, 4294901760
        %v3650 = vsub.f32 %v3648, %v3649
        %v3651 = vand.u32 %v3650, 4294901760
        %3652 = vmatpush1.msra.mxu0 %v3651
        %3653 = vmatprep.subr.mxu0 0.0
        %v3654 = vand.u32 %v3482, 4294901760
        %v3655 = vsub.f32 %v3482, %v3654
        %v3656 = vand.u32 %v3655, 4294901760
        %v3657 = vsub.f32 %v3655, %v3656
        %v3658 = vand.u32 %v3657, 4294901760
        %3659 = vmatpush1.msra.mxu0 %v3658
        %3660 = vmatprep.subr.mxu0 0.0
        %v3661 = vand.u32 %v3483, 4294901760
        %v3662 = vsub.f32 %v3483, %v3661
        %v3663 = vand.u32 %v3662, 4294901760
        %v3664 = vsub.f32 %v3662, %v3663
        %v3665 = vand.u32 %v3664, 4294901760
        %3666 = vmatpush1.msra.mxu0 %v3665
        %3667 = vmatprep.subr.mxu0 0.0
        %v3668 = vand.u32 %v3484, 4294901760
        %v3669 = vsub.f32 %v3484, %v3668
        %v3670 = vand.u32 %v3669, 4294901760
        %v3671 = vsub.f32 %v3669, %v3670
        %v3672 = vand.u32 %v3671, 4294901760
        %3673 = vmatpush1.msra.mxu0 %v3672
        %3674 = vmatprep.subr.mxu0 0.0
        %v3675 = vand.u32 %v3485, 4294901760
        %v3676 = vsub.f32 %v3485, %v3675
        %v3677 = vand.u32 %v3676, 4294901760
        %v3678 = vsub.f32 %v3676, %v3677
        %v3679 = vand.u32 %v3678, 4294901760
        %3680 = vmatpush1.msra.mxu0 %v3679
        %3681 = vmatprep.subr.mxu0 0.0
        %v3682 = vand.u32 %v3486, 4294901760
        %v3683 = vsub.f32 %v3486, %v3682
        %v3684 = vand.u32 %v3683, 4294901760
        %v3685 = vsub.f32 %v3683, %v3684
        %v3686 = vand.u32 %v3685, 4294901760
        %3687 = vmatpush1.msra.mxu0 %v3686
        %3688 = vmatprep.subr.mxu0 0.0
        %v3689 = vand.u32 %v3487, 4294901760
        %v3690 = vsub.f32 %v3487, %v3689
        %v3691 = vand.u32 %v3690, 4294901760
        %v3692 = vsub.f32 %v3690, %v3691
        %v3693 = vand.u32 %v3692, 4294901760
        %3694 = vmatpush1.msra.mxu0 %v3693
        %3695 = vmatprep.subr.mxu0 0.0
        %v3696 = vand.u32 %v3488, 4294901760
        %v3697 = vsub.f32 %v3488, %v3696
        %v3698 = vand.u32 %v3697, 4294901760
        %v3699 = vsub.f32 %v3697, %v3698
        %v3700 = vand.u32 %v3699, 4294901760
        %3701 = vmatpush1.msra.mxu0 %v3700
        %3702 = vmatprep.subr.mxu0 0.0
        %3703 = vmatpush1.msra.mxu0 0.0
        %3704 = vmatprep.subr.mxu0 0.0
        %3705 = vmatpush1.msra.mxu0 0.0
        %3706 = vmatprep.subr.mxu0 0.0
        %3707 = vmatpush1.msra.mxu0 0.0
        %3708 = vmatprep.subr.mxu0 0.0
        %3709 = vmatpush1.msra.mxu0 0.0
        %3710 = vmatprep.subr.mxu0 0.0
        %3711 = vmatpush1.msra.mxu0 0.0
        %3712 = vmatprep.subr.mxu0 0.0
        %3713 = vmatpush1.msra.mxu0 0.0
        %3714 = vmatprep.subr.mxu0 0.0
        %3715 = vmatpush1.msra.mxu0 0.0
        %3716 = vmatprep.subr.mxu0 0.0
        %3717 = vmatpush1.msra.mxu0 0.0
        %3718 = vmatprep.subr.mxu0 0.0
        %3719 = vmatpush1.msra.mxu0 0.0
        %3720 = vmatprep.subr.mxu0 0.0
        %3721 = vmatpush1.msra.mxu0 0.0
        %3722 = vmatprep.subr.mxu0 0.0
        %3723 = vmatpush1.msra.mxu0 0.0
        %3724 = vmatprep.subr.mxu0 0.0
        %3725 = vmatpush1.msra.mxu0 0.0
        %3726 = vmatprep.subr.mxu0 0.0
        %3727 = vmatpush1.msra.mxu0 0.0
        %3728 = vmatprep.subr.mxu0 0.0
        %3729 = vmatpush1.msra.mxu0 0.0
        %3730 = vmatprep.subr.mxu0 0.0
        %3731 = vmatpush1.msra.mxu0 0.0
        %3732 = vmatprep.subr.mxu0 0.0
        %3733 = vmatpush1.msra.mxu0 0.0
        %3734 = vmatprep.subr.mxu0 0.0
        %3735 = vmatpush1.msra.mxu0 0.0
        %3736 = vmatprep.subr.mxu0 0.0
        %3737 = vmatpush1.msra.mxu0 0.0
        %3738 = vmatprep.subr.mxu0 0.0
        %3739 = vmatpush1.msra.mxu0 0.0
        %3740 = vmatprep.subr.mxu0 0.0
        %3741 = vmatpush1.msra.mxu0 0.0
        %3742 = vmatprep.subr.mxu0 0.0
        %3743 = vmatpush1.msra.mxu0 0.0
        %3744 = vmatprep.subr.mxu0 0.0
        %3745 = vmatpush1.msra.mxu0 0.0
        %3746 = vmatprep.subr.mxu0 0.0
        %3747 = vmatpush1.msra.mxu0 0.0
        %3748 = vmatprep.subr.mxu0 0.0
        %3749 = vmatpush1.msra.mxu0 0.0
        %3750 = vmatprep.mubr.f32.mxu0 0.0
        %v3751 = vand.u32 %v3522, 4294901760
        %3752 = vmatmul.mubr.f32.gmra.mrb[0].mxu0 %v3751
        %v3753 = vpop.f32.mrb[0].mxu0
        %v3754 = vadd.f32 %v3613, %v3753
        %v3755 = vpop.f32.mrb[0].mxu0
        %3756 = vmatprep.mubr.f32.mxu0 0.0
        %v3757 = vand.u32 %v3525, 4294901760
        %3758 = vmatmul.mubr.f32.gmra.mrb[0].mxu0 %v3757
        %v3759 = vpop.f32.mrb[0].mxu0
        %v3760 = vadd.f32 %v3623, %v3759
        %v3761 = vpop.f32.mrb[0].mxu0
        %3762 = vmatprep.mubr.f32.mxu0 0.0
        %v3763 = vand.u32 %v3528, 4294901760
        %3764 = vmatmul.mubr.f32.gmra.mrb[0].mxu0 %v3763
        %v3765 = vpop.f32.mrb[0].mxu0
        %v3766 = vadd.f32 %v3633, %v3765
        %v3767 = vpop.f32.mrb[0].mxu0
        %3768 = vmatprep.mubr.f32.mxu0 0.0
        %v3769 = vand.u32 %v3531, 4294901760
        %3770 = vmatmul.mubr.f32.gmra.mrb[0].mxu0 %v3769
        %v3771 = vpop.f32.mrb[0].mxu0
        %v3772 = vadd.f32 %v3643, %v3771
        %v3773 = vpop.f32.mrb[0].mxu0
        %3774 = vdwg.mxu0
        %3775 = vmatprep.subr.mxu0 0.0
        %v3776 = vand.u32 %v3481, 4294901760
        %v3777 = vsub.f32 %v3481, %v3776
        %3778 = vmatpush1.msra.mxu0 %v3777
        %3779 = vmatprep.subr.mxu0 0.0
        %v3780 = vand.u32 %v3482, 4294901760
        %v3781 = vsub.f32 %v3482, %v3780
        %3782 = vmatpush1.msra.mxu0 %v3781
        %3783 = vmatprep.subr.mxu0 0.0
        %v3784 = vand.u32 %v3483, 4294901760
        %v3785 = vsub.f32 %v3483, %v3784
        %3786 = vmatpush1.msra.mxu0 %v3785
        %3787 = vmatprep.subr.mxu0 0.0
        %v3788 = vand.u32 %v3484, 4294901760
        %v3789 = vsub.f32 %v3484, %v3788
        %3790 = vmatpush1.msra.mxu0 %v3789
        %3791 = vmatprep.subr.mxu0 0.0
        %v3792 = vand.u32 %v3485, 4294901760
        %v3793 = vsub.f32 %v3485, %v3792
        %3794 = vmatpush1.msra.mxu0 %v3793
        %3795 = vmatprep.subr.mxu0 0.0
        %v3796 = vand.u32 %v3486, 4294901760
        %v3797 = vsub.f32 %v3486, %v3796
        %3798 = vmatpush1.msra.mxu0 %v3797
        %3799 = vmatprep.subr.mxu0 0.0
        %v3800 = vand.u32 %v3487, 4294901760
        %v3801 = vsub.f32 %v3487, %v3800
        %3802 = vmatpush1.msra.mxu0 %v3801
        %3803 = vmatprep.subr.mxu0 0.0
        %v3804 = vand.u32 %v3488, 4294901760
        %v3805 = vsub.f32 %v3488, %v3804
        %3806 = vmatpush1.msra.mxu0 %v3805
        %3807 = vmatprep.subr.mxu0 0.0
        %3808 = vmatpush1.msra.mxu0 0.0
        %3809 = vmatprep.subr.mxu0 0.0
        %3810 = vmatpush1.msra.mxu0 0.0
        %3811 = vmatprep.subr.mxu0 0.0
        %3812 = vmatpush1.msra.mxu0 0.0
        %3813 = vmatprep.subr.mxu0 0.0
        %3814 = vmatpush1.msra.mxu0 0.0
        %3815 = vmatprep.subr.mxu0 0.0
        %3816 = vmatpush1.msra.mxu0 0.0
        %3817 = vmatprep.subr.mxu0 0.0
        %3818 = vmatpush1.msra.mxu0 0.0
        %3819 = vmatprep.subr.mxu0 0.0
        %3820 = vmatpush1.msra.mxu0 0.0
        %3821 = vmatprep.subr.mxu0 0.0
        %3822 = vmatpush1.msra.mxu0 0.0
        %3823 = vmatprep.subr.mxu0 0.0
        %3824 = vmatpush1.msra.mxu0 0.0
        %3825 = vmatprep.subr.mxu0 0.0
        %3826 = vmatpush1.msra.mxu0 0.0
        %3827 = vmatprep.subr.mxu0 0.0
        %3828 = vmatpush1.msra.mxu0 0.0
        %3829 = vmatprep.subr.mxu0 0.0
        %3830 = vmatpush1.msra.mxu0 0.0
        %3831 = vmatprep.subr.mxu0 0.0
        %3832 = vmatpush1.msra.mxu0 0.0
        %3833 = vmatprep.subr.mxu0 0.0
        %3834 = vmatpush1.msra.mxu0 0.0
        %3835 = vmatprep.subr.mxu0 0.0
        %3836 = vmatpush1.msra.mxu0 0.0
        %3837 = vmatprep.subr.mxu0 0.0
        %3838 = vmatpush1.msra.mxu0 0.0
        %3839 = vmatprep.subr.mxu0 0.0
        %3840 = vmatpush1.msra.mxu0 0.0
        %3841 = vmatprep.subr.mxu0 0.0
        %3842 = vmatpush1.msra.mxu0 0.0
        %3843 = vmatprep.subr.mxu0 0.0
        %3844 = vmatpush1.msra.mxu0 0.0
        %3845 = vmatprep.subr.mxu0 0.0
        %3846 = vmatpush1.msra.mxu0 0.0
        %3847 = vmatprep.subr.mxu0 0.0
        %3848 = vmatpush1.msra.mxu0 0.0
        %3849 = vmatprep.subr.mxu0 0.0
        %3850 = vmatpush1.msra.mxu0 0.0
        %3851 = vmatprep.subr.mxu0 0.0
        %3852 = vmatpush1.msra.mxu0 0.0
        %3853 = vmatprep.subr.mxu0 0.0
        %3854 = vmatpush1.msra.mxu0 0.0
        %3855 = vmatprep.mubr.f32.mxu0 0.0
        %v3856 = vand.u32 %v3522, 4294901760
        %v3857 = vsub.f32 %v3522, %v3856
        %3858 = vmatmul.mubr.f32.gmra.mrb[0].mxu0 %v3857
        %v3859 = vpop.f32.mrb[0].mxu0
        %v3860 = vadd.f32 %v3754, %v3859
        %v3861 = vpop.f32.mrb[0].mxu0
        %3862 = vmatprep.mubr.f32.mxu0 0.0
        %v3863 = vand.u32 %v3525, 4294901760
        %v3864 = vsub.f32 %v3525, %v3863
        %3865 = vmatmul.mubr.f32.gmra.mrb[0].mxu0 %v3864
        %v3866 = vpop.f32.mrb[0].mxu0
        %v3867 = vadd.f32 %v3760, %v3866
        %v3868 = vpop.f32.mrb[0].mxu0
        %3869 = vmatprep.mubr.f32.mxu0 0.0
        %v3870 = vand.u32 %v3528, 4294901760
        %v3871 = vsub.f32 %v3528, %v3870
        %3872 = vmatmul.mubr.f32.gmra.mrb[0].mxu0 %v3871
        %v3873 = vpop.f32.mrb[0].mxu0
        %v3874 = vadd.f32 %v3766, %v3873
        %v3875 = vpop.f32.mrb[0].mxu0
        %3876 = vmatprep.mubr.f32.mxu0 0.0
        %v3877 = vand.u32 %v3531, 4294901760
        %v3878 = vsub.f32 %v3531, %v3877
        %3879 = vmatmul.mubr.f32.gmra.mrb[0].mxu0 %v3878
        %v3880 = vpop.f32.mrb[0].mxu0
        %v3881 = vadd.f32 %v3772, %v3880
        %v3882 = vpop.f32.mrb[0].mxu0
        %3883 = vdwg.mxu0
        %3884 = vmatprep.subr.mxu0 0.0
        %v3885 = vand.u32 %v3481, 4294901760
        %3886 = vmatpush1.msra.mxu0 %v3885
        %3887 = vmatprep.subr.mxu0 0.0
        %v3888 = vand.u32 %v3482, 4294901760
        %3889 = vmatpush1.msra.mxu0 %v3888
        %3890 = vmatprep.subr.mxu0 0.0
        %v3891 = vand.u32 %v3483, 4294901760
        %3892 = vmatpush1.msra.mxu0 %v3891
        %3893 = vmatprep.subr.mxu0 0.0
        %v3894 = vand.u32 %v3484, 4294901760
        %3895 = vmatpush1.msra.mxu0 %v3894
        %3896 = vmatprep.subr.mxu0 0.0
        %v3897 = vand.u32 %v3485, 4294901760
        %3898 = vmatpush1.msra.mxu0 %v3897
        %3899 = vmatprep.subr.mxu0 0.0
        %v3900 = vand.u32 %v3486, 4294901760
        %3901 = vmatpush1.msra.mxu0 %v3900
        %3902 = vmatprep.subr.mxu0 0.0
        %v3903 = vand.u32 %v3487, 4294901760
        %3904 = vmatpush1.msra.mxu0 %v3903
        %3905 = vmatprep.subr.mxu0 0.0
        %v3906 = vand.u32 %v3488, 4294901760
        %3907 = vmatpush1.msra.mxu0 %v3906
        %3908 = vmatprep.subr.mxu0 0.0
        %3909 = vmatpush1.msra.mxu0 0.0
        %3910 = vmatprep.subr.mxu0 0.0
        %3911 = vmatpush1.msra.mxu0 0.0
        %3912 = vmatprep.subr.mxu0 0.0
        %3913 = vmatpush1.msra.mxu0 0.0
        %3914 = vmatprep.subr.mxu0 0.0
        %3915 = vmatpush1.msra.mxu0 0.0
        %3916 = vmatprep.subr.mxu0 0.0
        %3917 = vmatpush1.msra.mxu0 0.0
        %3918 = vmatprep.subr.mxu0 0.0
        %3919 = vmatpush1.msra.mxu0 0.0
        %3920 = vmatprep.subr.mxu0 0.0
        %3921 = vmatpush1.msra.mxu0 0.0
        %3922 = vmatprep.subr.mxu0 0.0
        %3923 = vmatpush1.msra.mxu0 0.0
        %3924 = vmatprep.subr.mxu0 0.0
        %3925 = vmatpush1.msra.mxu0 0.0
        %3926 = vmatprep.subr.mxu0 0.0
        %3927 = vmatpush1.msra.mxu0 0.0
        %3928 = vmatprep.subr.mxu0 0.0
        %3929 = vmatpush1.msra.mxu0 0.0
        %3930 = vmatprep.subr.mxu0 0.0
        %3931 = vmatpush1.msra.mxu0 0.0
        %3932 = vmatprep.subr.mxu0 0.0
        %3933 = vmatpush1.msra.mxu0 0.0
        %3934 = vmatprep.subr.mxu0 0.0
        %3935 = vmatpush1.msra.mxu0 0.0
        %3936 = vmatprep.subr.mxu0 0.0
        %3937 = vmatpush1.msra.mxu0 0.0
        %3938 = vmatprep.subr.mxu0 0.0
        %3939 = vmatpush1.msra.mxu0 0.0
        %3940 = vmatprep.subr.mxu0 0.0
        %3941 = vmatpush1.msra.mxu0 0.0
        %3942 = vmatprep.subr.mxu0 0.0
        %3943 = vmatpush1.msra.mxu0 0.0
        %3944 = vmatprep.subr.mxu0 0.0
        %3945 = vmatpush1.msra.mxu0 0.0
        %3946 = vmatprep.subr.mxu0 0.0
        %3947 = vmatpush1.msra.mxu0 0.0
        %3948 = vmatprep.subr.mxu0 0.0
        %3949 = vmatpush1.msra.mxu0 0.0
        %3950 = vmatprep.subr.mxu0 0.0
        %3951 = vmatpush1.msra.mxu0 0.0
        %3952 = vmatprep.subr.mxu0 0.0
        %3953 = vmatpush1.msra.mxu0 0.0
        %3954 = vmatprep.subr.mxu0 0.0
        %3955 = vmatpush1.msra.mxu0 0.0
        %3956 = vmatprep.mubr.f32.mxu0 0.0
        %v3957 = vand.u32 %v3522, 4294901760
        %v3958 = vsub.f32 %v3522, %v3957
        %v3959 = vand.u32 %v3958, 4294901760
        %3960 = vmatmul.mubr.f32.gmra.mrb[0].mxu0 %v3959
        %v3961 = vpop.f32.mrb[0].mxu0
        %v3962 = vadd.f32 %v3860, %v3961
        %v3963 = vpop.f32.mrb[0].mxu0
        %3964 = vmatprep.mubr.f32.mxu0 0.0
        %v3965 = vand.u32 %v3525, 4294901760
        %v3966 = vsub.f32 %v3525, %v3965
        %v3967 = vand.u32 %v3966, 4294901760
        %3968 = vmatmul.mubr.f32.gmra.mrb[0].mxu0 %v3967
        %v3969 = vpop.f32.mrb[0].mxu0
        %v3970 = vadd.f32 %v3867, %v3969
        %v3971 = vpop.f32.mrb[0].mxu0
        %3972 = vmatprep.mubr.f32.mxu0 0.0
        %v3973 = vand.u32 %v3528, 4294901760
        %v3974 = vsub.f32 %v3528, %v3973
        %v3975 = vand.u32 %v3974, 4294901760
        %3976 = vmatmul.mubr.f32.gmra.mrb[0].mxu0 %v3975
        %v3977 = vpop.f32.mrb[0].mxu0
        %v3978 = vadd.f32 %v3874, %v3977
        %v3979 = vpop.f32.mrb[0].mxu0
        %3980 = vmatprep.mubr.f32.mxu0 0.0
        %v3981 = vand.u32 %v3531, 4294901760
        %v3982 = vsub.f32 %v3531, %v3981
        %v3983 = vand.u32 %v3982, 4294901760
        %3984 = vmatmul.mubr.f32.gmra.mrb[0].mxu0 %v3983
        %v3985 = vpop.f32.mrb[0].mxu0
        %v3986 = vadd.f32 %v3881, %v3985
        %v3987 = vpop.f32.mrb[0].mxu0
        %3988 = vdwg.mxu0
        %3989 = vmatprep.subr.mxu0 0.0
        %v3990 = vand.u32 %v3481, 4294901760
        %v3991 = vsub.f32 %v3481, %v3990
        %v3992 = vand.u32 %v3991, 4294901760
        %3993 = vmatpush1.msra.mxu0 %v3992
        %3994 = vmatprep.subr.mxu0 0.0
        %v3995 = vand.u32 %v3482, 4294901760
        %v3996 = vsub.f32 %v3482, %v3995
        %v3997 = vand.u32 %v3996, 4294901760
        %3998 = vmatpush1.msra.mxu0 %v3997
        %3999 = vmatprep.subr.mxu0 0.0
        %v4000 = vand.u32 %v3483, 4294901760
        %v4001 = vsub.f32 %v3483, %v4000
        %v4002 = vand.u32 %v4001, 4294901760
        %4003 = vmatpush1.msra.mxu0 %v4002
        %4004 = vmatprep.subr.mxu0 0.0
        %v4005 = vand.u32 %v3484, 4294901760
        %v4006 = vsub.f32 %v3484, %v4005
        %v4007 = vand.u32 %v4006, 4294901760
        %4008 = vmatpush1.msra.mxu0 %v4007
        %4009 = vmatprep.subr.mxu0 0.0
        %v4010 = vand.u32 %v3485, 4294901760
        %v4011 = vsub.f32 %v3485, %v4010
        %v4012 = vand.u32 %v4011, 4294901760
        %4013 = vmatpush1.msra.mxu0 %v4012
        %4014 = vmatprep.subr.mxu0 0.0
        %v4015 = vand.u32 %v3486, 4294901760
        %v4016 = vsub.f32 %v3486, %v4015
        %v4017 = vand.u32 %v4016, 4294901760
        %4018 = vmatpush1.msra.mxu0 %v4017
        %4019 = vmatprep.subr.mxu0 0.0
        %v4020 = vand.u32 %v3487, 4294901760
        %v4021 = vsub.f32 %v3487, %v4020
        %v4022 = vand.u32 %v4021, 4294901760
        %4023 = vmatpush1.msra.mxu0 %v4022
        %4024 = vmatprep.subr.mxu0 0.0
        %v4025 = vand.u32 %v3488, 4294901760
        %v4026 = vsub.f32 %v3488, %v4025
        %v4027 = vand.u32 %v4026, 4294901760
        %4028 = vmatpush1.msra.mxu0 %v4027
        %4029 = vmatprep.subr.mxu0 0.0
        %4030 = vmatpush1.msra.mxu0 0.0
        %4031 = vmatprep.subr.mxu0 0.0
        %4032 = vmatpush1.msra.mxu0 0.0
        %4033 = vmatprep.subr.mxu0 0.0
        %4034 = vmatpush1.msra.mxu0 0.0
        %4035 = vmatprep.subr.mxu0 0.0
        %4036 = vmatpush1.msra.mxu0 0.0
        %4037 = vmatprep.subr.mxu0 0.0
        %4038 = vmatpush1.msra.mxu0 0.0
        %4039 = vmatprep.subr.mxu0 0.0
        %4040 = vmatpush1.msra.mxu0 0.0
        %4041 = vmatprep.subr.mxu0 0.0
        %4042 = vmatpush1.msra.mxu0 0.0
        %4043 = vmatprep.subr.mxu0 0.0
        %4044 = vmatpush1.msra.mxu0 0.0
        %4045 = vmatprep.subr.mxu0 0.0
        %4046 = vmatpush1.msra.mxu0 0.0
        %4047 = vmatprep.subr.mxu0 0.0
        %4048 = vmatpush1.msra.mxu0 0.0
        %4049 = vmatprep.subr.mxu0 0.0
        %4050 = vmatpush1.msra.mxu0 0.0
        %4051 = vmatprep.subr.mxu0 0.0
        %4052 = vmatpush1.msra.mxu0 0.0
        %4053 = vmatprep.subr.mxu0 0.0
        %4054 = vmatpush1.msra.mxu0 0.0
        %4055 = vmatprep.subr.mxu0 0.0
        %4056 = vmatpush1.msra.mxu0 0.0
        %4057 = vmatprep.subr.mxu0 0.0
        %4058 = vmatpush1.msra.mxu0 0.0
        %4059 = vmatprep.subr.mxu0 0.0
        %4060 = vmatpush1.msra.mxu0 0.0
        %4061 = vmatprep.subr.mxu0 0.0
        %4062 = vmatpush1.msra.mxu0 0.0
        %4063 = vmatprep.subr.mxu0 0.0
        %4064 = vmatpush1.msra.mxu0 0.0
        %4065 = vmatprep.subr.mxu0 0.0
        %4066 = vmatpush1.msra.mxu0 0.0
        %4067 = vmatprep.subr.mxu0 0.0
        %4068 = vmatpush1.msra.mxu0 0.0
        %4069 = vmatprep.subr.mxu0 0.0
        %4070 = vmatpush1.msra.mxu0 0.0
        %4071 = vmatprep.subr.mxu0 0.0
        %4072 = vmatpush1.msra.mxu0 0.0
        %4073 = vmatprep.subr.mxu0 0.0
        %4074 = vmatpush1.msra.mxu0 0.0
        %4075 = vmatprep.subr.mxu0 0.0
        %4076 = vmatpush1.msra.mxu0 0.0
        %4077 = vmatprep.mubr.f32.mxu0 0.0
        %v4078 = vand.u32 %v3522, 4294901760
        %4079 = vmatmul.mubr.f32.gmra.mrb[0].mxu0 %v4078
        %v4080 = vpop.f32.mrb[0].mxu0
        %v4081 = vadd.f32 %v3962, %v4080
        %v4082 = vpop.f32.mrb[0].mxu0
        %4083 = vmatprep.mubr.f32.mxu0 0.0
        %v4084 = vand.u32 %v3525, 4294901760
        %4085 = vmatmul.mubr.f32.gmra.mrb[0].mxu0 %v4084
        %v4086 = vpop.f32.mrb[0].mxu0
        %v4087 = vadd.f32 %v3970, %v4086
        %v4088 = vpop.f32.mrb[0].mxu0
        %4089 = vmatprep.mubr.f32.mxu0 0.0
        %v4090 = vand.u32 %v3528, 4294901760
        %4091 = vmatmul.mubr.f32.gmra.mrb[0].mxu0 %v4090
        %v4092 = vpop.f32.mrb[0].mxu0
        %v4093 = vadd.f32 %v3978, %v4092
        %v4094 = vpop.f32.mrb[0].mxu0
        %4095 = vmatprep.mubr.f32.mxu0 0.0
        %v4096 = vand.u32 %v3531, 4294901760
        %4097 = vmatmul.mubr.f32.gmra.mrb[0].mxu0 %v4096
        %v4098 = vpop.f32.mrb[0].mxu0
        %v4099 = vadd.f32 %v3986, %v4098
        %v4100 = vpop.f32.mrb[0].mxu0
        %4101 = vdwg.mxu0
        %4102 = vmatprep.subr.mxu0 0.0
        %v4103 = vand.u32 %v3481, 4294901760
        %4104 = vmatpush1.msra.mxu0 %v4103
        %4105 = vmatprep.subr.mxu0 0.0
        %v4106 = vand.u32 %v3482, 4294901760
        %4107 = vmatpush1.msra.mxu0 %v4106
        %4108 = vmatprep.subr.mxu0 0.0
        %v4109 = vand.u32 %v3483, 4294901760
        %4110 = vmatpush1.msra.mxu0 %v4109
        %4111 = vmatprep.subr.mxu0 0.0
        %v4112 = vand.u32 %v3484, 4294901760
        %4113 = vmatpush1.msra.mxu0 %v4112
        %4114 = vmatprep.subr.mxu0 0.0
        %v4115 = vand.u32 %v3485, 4294901760
        %4116 = vmatpush1.msra.mxu0 %v4115
        %4117 = vmatprep.subr.mxu0 0.0
        %v4118 = vand.u32 %v3486, 4294901760
        %4119 = vmatpush1.msra.mxu0 %v4118
        %4120 = vmatprep.subr.mxu0 0.0
        %v4121 = vand.u32 %v3487, 4294901760
        %4122 = vmatpush1.msra.mxu0 %v4121
        %4123 = vmatprep.subr.mxu0 0.0
        %v4124 = vand.u32 %v3488, 4294901760
        %4125 = vmatpush1.msra.mxu0 %v4124
        %4126 = vmatprep.subr.mxu0 0.0
        %4127 = vmatpush1.msra.mxu0 0.0
        %4128 = vmatprep.subr.mxu0 0.0
        %4129 = vmatpush1.msra.mxu0 0.0
        %4130 = vmatprep.subr.mxu0 0.0
        %4131 = vmatpush1.msra.mxu0 0.0
        %4132 = vmatprep.subr.mxu0 0.0
        %4133 = vmatpush1.msra.mxu0 0.0
        %4134 = vmatprep.subr.mxu0 0.0
        %4135 = vmatpush1.msra.mxu0 0.0
        %4136 = vmatprep.subr.mxu0 0.0
        %4137 = vmatpush1.msra.mxu0 0.0
        %4138 = vmatprep.subr.mxu0 0.0
        %4139 = vmatpush1.msra.mxu0 0.0
        %4140 = vmatprep.subr.mxu0 0.0
        %4141 = vmatpush1.msra.mxu0 0.0
        %4142 = vmatprep.subr.mxu0 0.0
        %4143 = vmatpush1.msra.mxu0 0.0
        %4144 = vmatprep.subr.mxu0 0.0
        %4145 = vmatpush1.msra.mxu0 0.0
        %4146 = vmatprep.subr.mxu0 0.0
        %4147 = vmatpush1.msra.mxu0 0.0
        %4148 = vmatprep.subr.mxu0 0.0
        %4149 = vmatpush1.msra.mxu0 0.0
        %4150 = vmatprep.subr.mxu0 0.0
        %4151 = vmatpush1.msra.mxu0 0.0
        %4152 = vmatprep.subr.mxu0 0.0
        %4153 = vmatpush1.msra.mxu0 0.0
        %4154 = vmatprep.subr.mxu0 0.0
        %4155 = vmatpush1.msra.mxu0 0.0
        %4156 = vmatprep.subr.mxu0 0.0
        %4157 = vmatpush1.msra.mxu0 0.0
        %4158 = vmatprep.subr.mxu0 0.0
        %4159 = vmatpush1.msra.mxu0 0.0
        %4160 = vmatprep.subr.mxu0 0.0
        %4161 = vmatpush1.msra.mxu0 0.0
        %4162 = vmatprep.subr.mxu0 0.0
        %4163 = vmatpush1.msra.mxu0 0.0
        %4164 = vmatprep.subr.mxu0 0.0
        %4165 = vmatpush1.msra.mxu0 0.0
        %4166 = vmatprep.subr.mxu0 0.0
        %4167 = vmatpush1.msra.mxu0 0.0
        %4168 = vmatprep.subr.mxu0 0.0
        %4169 = vmatpush1.msra.mxu0 0.0
        %4170 = vmatprep.subr.mxu0 0.0
        %4171 = vmatpush1.msra.mxu0 0.0
        %4172 = vmatprep.subr.mxu0 0.0
        %4173 = vmatpush1.msra.mxu0 0.0
        %4174 = vmatprep.mubr.f32.mxu0 0.0
        %v4175 = vand.u32 %v3522, 4294901760
        %4176 = vmatmul.mubr.f32.gmra.mrb[0].mxu0 %v4175
        %v4177 = vpop.f32.mrb[0].mxu0
        %v4178 = vadd.f32 %v4081, %v4177
        %v4179 = vpop.f32.mrb[0].mxu0
        %4180 = vmatprep.mubr.f32.mxu0 0.0
        %v4181 = vand.u32 %v3525, 4294901760
        %4182 = vmatmul.mubr.f32.gmra.mrb[0].mxu0 %v4181
        %v4183 = vpop.f32.mrb[0].mxu0
        %v4184 = vadd.f32 %v4087, %v4183
        %v4185 = vpop.f32.mrb[0].mxu0
        %4186 = vmatprep.mubr.f32.mxu0 0.0
        %v4187 = vand.u32 %v3528, 4294901760
        %4188 = vmatmul.mubr.f32.gmra.mrb[0].mxu0 %v4187
        %v4189 = vpop.f32.mrb[0].mxu0
        %v4190 = vadd.f32 %v4093, %v4189
        %v4191 = vpop.f32.mrb[0].mxu0
        %4192 = vmatprep.mubr.f32.mxu0 0.0
        %v4193 = vand.u32 %v3531, 4294901760
        %4194 = vmatmul.mubr.f32.gmra.mrb[0].mxu0 %v4193
        %v4195 = vpop.f32.mrb[0].mxu0
        %v4196 = vadd.f32 %v4099, %v4195
        %v4197 = vpop.f32.mrb[0].mxu0
        %4198 = vdwg.mxu0
        %v4199 = vsub.f32 %v3206, %v4178
        %v4200 = vsub.f32 %v3207, %v4184
        %v4201 = vsub.f32 %v3208, %v4190
        %v4202 = vsub.f32 %v3209, %v4196
        %v4203 = vsub.f32 %v215, %v4199
        %v4204 = vsub.f32 %v216, %v4200
        %v4205 = vsub.f32 %v217, %v4201
        %v4206 = vsub.f32 %v218, %v4202
        %4207 = vst.msk [vmem:[%s214] sm:$0xff] %vm414, %v4203
        %4208 = vst.msk [vmem:[%s214 + $0x8] sm:$0xff] %vm414, %v4204
        %4209 = vst.msk [vmem:[%s214 + $0x10] sm:$0xff] %vm414, %v4205
        %4210 = vst.msk [vmem:[%s214 + $0x18] sm:$0xff] %vm414, %v4206
        %p4211 = scmp.lt.s32.totalorder %s22, 1
        %s4212 = scalar_select %p4211, %s22, 1
        %p4213 = scmp.lt.s32.totalorder %s23, 0
        %s4214 = scalar_select %p4213, %s23, 0
        %s4215 = smul.addr %s4212, 4
        %s4216 = sadd.s32 %s4214, %s4215
        %s4217 = smul.addr %s4216, 8
        %s4218 = scalar_lea.vmem %s2, %s4217
        %s4219 = sand.u32 %s117, 1
        %s4220 = scalar_lea.sflag [#allocation3], %s4219
        %s4221 = sand.u32 %s117, 1
        %s4222 = smul.addr %s4221, 4
        %s4223 = scalar_lea.vmem [#allocation2], %s4222
        // Predicated region
        $region29: #{tpu_custom_call.1} parent=27 // pred_check
          %p4224 = pneg %p99
        $region30: #{tpu_custom_call.1} parent=27 // pred_check_branch
          %4226 = sbr.rel (%p4224) target = $region32
        $region31: #{tpu_custom_call.1} parent=27 // pred_region
          _
        $region32: #{tpu_custom_call.1} parent=27 // pred_fallthru
          _
        // Predicated region
        $region33: #{tpu_custom_call.1} parent=27 // pred_check
          %p4227 = pneg %p127
        $region34: #{tpu_custom_call.1} parent=27 // pred_check_branch
          %4229 = sbr.rel (%p4227) target = $region36
        $region35: #{tpu_custom_call.1} parent=27 // pred_region
          %s4231 = ssub.s32 64, 64
          %4232 = vsyncadd %s4220, %s4231
          %s4233 = sadd.s32 %s23, %s22
          %s4234 = smul.addr %s4233, 64
          %s4235 = scalar_lea.hbm %s3, %s4234
          %s4237 = sshll.u32 %s4223, 4
          %s4238 = int_to_ptr.vmem [resolvable:$true] %s4237
          %4240 = dma.vmem_to_hbm [thread:$0]  %s4238, 64, %s4235, %s4220
        $region36: #{tpu_custom_call.1} parent=27 // pred_fallthru
          _
      $region28: #{tpu_custom_call.1} parent=5 // pred_fallthru
        _
      %p4241 = scmp.le.s32.totalorder 2, %s13
      // Predicated region
      $region37: #{tpu_custom_call.1} parent=5 // pred_check
        %p4242 = pneg %p4241
      $region38: #{tpu_custom_call.1} parent=5 // pred_check_branch
        %4244 = sbr.rel (%p4242) target = $region40
      $region39: #{tpu_custom_call.1} parent=5 // pred_region
        %s4245 = ssub.s32 %s13, 2
        // Predicated region
        $region41: #{tpu_custom_call.1} parent=39 // pred_check
          %p4246 = pneg %p105
        $region42: #{tpu_custom_call.1} parent=39 // pred_check_branch
          %4248 = sbr.rel (%p4246) target = $region44
        $region43: #{tpu_custom_call.1} parent=39 // pred_region
          %p4249 = scmp.lt.s32.totalorder %s24, 1
          %s4250 = scalar_select %p4249, %s24, 1
          %p4251 = scmp.lt.s32.totalorder %s25, 0
          %s4252 = scalar_select %p4251, %s25, 0
          %s4253 = smul.addr %s4250, 4
          %s4254 = sadd.s32 %s4252, %s4253
          %s4255 = smul.addr %s4254, 8
          %s4256 = scalar_lea.vmem %s2, %s4255
        $region44: #{tpu_custom_call.1} parent=39 // pred_fallthru
          _
        // Predicated region
        $region45: #{tpu_custom_call.1} parent=39 // pred_check
          %p4257 = pneg %p133
        $region46: #{tpu_custom_call.1} parent=39 // pred_check_branch
          %4259 = sbr.rel (%p4257) target = $region48
        $region47: #{tpu_custom_call.1} parent=39 // pred_region
          %s4260 = sand.u32 %s118, 1
          %s4261 = scalar_lea.sflag [#allocation3], %s4260
          %s4262 = sand.u32 %s118, 1
          %s4263 = smul.addr %s4262, 4
          %s4264 = scalar_lea.vmem [#allocation2], %s4263
          %4265 = dma.done %s4261, 64
        $region48: #{tpu_custom_call.1} parent=39 // pred_fallthru
          _
      $region40: #{tpu_custom_call.1} parent=5 // pred_fallthru
        _
    $region6: #{tpu_custom_call.1} parent=1 // loop_footer
      %s17 = sadd.s32 1, %s13
    $region7: #{tpu_custom_call.1} parent=1 // loop_footer_branch
      %12 = sbr.rel target = $region3
    $region8: #{tpu_custom_call.1} parent=1 // loop_exit
      _
    %4266 = vsyncpa [#allocation3], 1
    %s4267 = scalar_lea.sflag [#allocation3], 1
    %4268 = vsyncpa %s4267, 1

</llo_original>
